<compile_context>
chip_gen: v7x
topology: tpu7x:2x2x1
jax: 0.10.0
libtpu: 0.0.40
codegen_flags: <defaults>
</compile_context>

<pallas_src>
import functools

import jax
import jax.numpy as jnp
from jax import lax
from jax.experimental import pallas as pl
from jax.experimental.pallas import tpu as pltpu

LATENT_DIM = 100
FC1_DIM = 256
HIDDEN_DIM = 128
N_FEATURES = 1
OUT_PAD = 128      # lane-dense output width; sliced back to N_FEATURES in wrapper
EPS = 1e-5
NEG_SLOPE = 0.2


def _sigmoid(x):
    # sigmoid(x) == 0.5 * tanh(0.5 * x) + 0.5 : single EUP transcendental,
    # no f32 divide on the serial gate chain.
    return 0.5 * jnp.tanh(0.5 * x) + 0.5


def _leaky_relu(x):
    return jnp.where(x >= 0, x, NEG_SLOPE * x)


def _batchnorm_train(x, gamma, beta, n_valid):
    # PyTorch BatchNorm1d in training mode: biased batch variance over the
    # REAL batch rows only (batch may be sublane-padded with garbage rows).
    rows = lax.broadcasted_iota(jnp.int32, x.shape, 0)
    mask = (rows < n_valid).astype(x.dtype)
    inv_n = 1.0 / float(n_valid)
    mean = jnp.sum(x * mask, axis=0, keepdims=True) * inv_n
    d = x - mean
    var = jnp.sum((d * d) * mask, axis=0, keepdims=True) * inv_n
    return d * lax.rsqrt(var + EPS) * gamma + beta


def generator_kernel(seq_len, batch_real,
                     z_ref,
                     w1_ref, b1_ref, g1_ref, be1_ref,
                     w2_ref, b2_ref, g2_ref, be2_ref,
                     wih1_ref, whh1_ref, bl1_ref,
                     wih2_ref, whh2_ref, bl2_ref,
                     wout_ref, bout_ref,
                     out_ref,
                     h2all_s):
    H = HIDDEN_DIM
    B_pad = z_ref.shape[0]

    # ---------------- fc stack ----------------
    z = z_ref[...]
    x = jnp.dot(z, w1_ref[...], preferred_element_type=jnp.float32) + b1_ref[...]
    x = _leaky_relu(x)
    x = _batchnorm_train(x, g1_ref[...], be1_ref[...], batch_real)

    x = jnp.dot(x, w2_ref[...], preferred_element_type=jnp.float32) + b2_ref[...]
    x = _leaky_relu(x)
    x = _batchnorm_train(x, g2_ref[...], be2_ref[...], batch_real)
    # x: (B_pad, H) -- the (time-repeated) LSTM input at every timestep.

    # Layer-1 input contribution is time-invariant (input repeated along seq).
    gx1 = jnp.dot(x, wih1_ref[...], preferred_element_type=jnp.float32) + bl1_ref[...]

    def lstm_cell(gates, c_prev):
        # PyTorch gate order: i, f, g, o
        i = _sigmoid(gates[:, 0:H])
        f = _sigmoid(gates[:, H:2 * H])
        g = jnp.tanh(gates[:, 2 * H:3 * H])
        o = _sigmoid(gates[:, 3 * H:4 * H])
        c = f * c_prev + i * g
        h = o * jnp.tanh(c)
        return h, c

    # ---------------- 2-layer LSTM: states live in loop carries (vregs) -------
    def step(t, carry):
        h1, c1, h2, c2 = carry
        # Layer-2 recurrent contribution only needs last step's h2: issue it
        # early, off the layer-1 critical chain (overlaps with layer-1 matmul).
        gh2 = jnp.dot(h2, whh2_ref[...], preferred_element_type=jnp.float32) + bl2_ref[...]
        # Layer 1: only the h-dependent matmul is per-step.
        g1 = gx1 + jnp.dot(h1, whh1_ref[...], preferred_element_type=jnp.float32)
        h1n, c1n = lstm_cell(g1, c1)
        # Layer 2: only h1n @ W_ih_l1 sits on the dependency path.
        g2 = gh2 + jnp.dot(h1n, wih2_ref[...], preferred_element_type=jnp.float32)
        h2n, c2n = lstm_cell(g2, c2)
        h2all_s[t] = h2n   # (B_pad, H) == one vreg, off the recurrence path
        return (h1n, c1n, h2n, c2n)

    zero = jnp.zeros((B_pad, H), jnp.float32)
    lax.fori_loop(0, seq_len, step, (zero, zero, zero, zero), unroll=True)

    # ---------------- output layer + tanh ----------------
    # (seq_len, B_pad, H) -> (seq_len*B_pad, H) is tile-aligned since B_pad % 8 == 0
    h_flat = h2all_s[...].reshape(seq_len * B_pad, H)
    y = jnp.dot(h_flat, wout_ref[...], preferred_element_type=jnp.float32) + bout_ref[...]
    out_ref[...] = jnp.tanh(y)


def init_params(key):
    ks = jax.random.split(key, 12)
    s = 0.05

    def rnd(k, shape):
        return s * jax.random.normal(k, shape, dtype=jnp.float32)

    H = HIDDEN_DIM
    params = dict(
        # fc block
        w1=rnd(ks[0], (LATENT_DIM, FC1_DIM)),
        b1=rnd(ks[1], (1, FC1_DIM)),
        g1=jnp.ones((1, FC1_DIM), jnp.float32),
        be1=jnp.zeros((1, FC1_DIM), jnp.float32),
        w2=rnd(ks[2], (FC1_DIM, H)),
        b2=rnd(ks[3], (1, H)),
        g2=jnp.ones((1, H), jnp.float32),
        be2=jnp.zeros((1, H), jnp.float32),
        # LSTM layer 0 (weights stored pre-transposed: (in, 4H))
        wih1=rnd(ks[4], (H, 4 * H)),
        whh1=rnd(ks[5], (H, 4 * H)),
        bl1=rnd(ks[6], (1, 4 * H)),   # b_ih_l0 + b_hh_l0 combined
        # LSTM layer 1
        wih2=rnd(ks[7], (H, 4 * H)),
        whh2=rnd(ks[8], (H, 4 * H)),
        bl2=rnd(ks[9], (1, 4 * H)),   # b_ih_l1 + b_hh_l1 combined
        # output layer
        wout=rnd(ks[10], (H, N_FEATURES)),
        bout=rnd(ks[11], (1, N_FEATURES)),
    )
    return params


def generator_forward(z, params, seq_len):
    B, latent = z.shape
    B_pad = max(8, ((B + 7) // 8) * 8)            # full sublane tiles
    latent_pad = ((latent + 127) // 128) * 128    # lane-aligned K for first matmul

    # Zero-pad batch rows and latent columns; pad w1 rows to match (exact math).
    z_p = jnp.zeros((B_pad, latent_pad), jnp.float32).at[:B, :latent].set(z)
    w1_p = jnp.zeros((latent_pad, FC1_DIM), jnp.float32).at[:latent, :].set(params["w1"])
    # Lane-dense output projection: pad (H,1)->(H,128) and (1,1)->(1,128) with
    # zeros so the kernel's final store is an unmasked full-lane store.
    wout_p = jnp.zeros((HIDDEN_DIM, OUT_PAD), jnp.float32).at[:, :N_FEATURES].set(params["wout"])
    bout_p = jnp.zeros((1, OUT_PAD), jnp.float32).at[:, :N_FEATURES].set(params["bout"])

    ordered = [
        w1_p, params["b1"], params["g1"], params["be1"],
        params["w2"], params["b2"], params["g2"], params["be2"],
        params["wih1"], params["whh1"], params["bl1"],
        params["wih2"], params["whh2"], params["bl2"],
        wout_p, bout_p,
    ]
    n_in = 1 + len(ordered)
    kernel = functools.partial(generator_kernel, seq_len, B)

    out_flat = pl.pallas_call(
        kernel,
        out_shape=jax.ShapeDtypeStruct((seq_len * B_pad, OUT_PAD), jnp.float32),
        in_specs=[pl.BlockSpec(memory_space=pltpu.MemorySpace.VMEM)] * n_in,
        out_specs=pl.BlockSpec(memory_space=pltpu.MemorySpace.VMEM),
        scratch_shapes=[
            pltpu.VMEM((seq_len, B_pad, HIDDEN_DIM), jnp.float32),   # h2 per step
        ],
        compiler_params=pltpu.CompilerParams(vmem_limit_bytes=64 << 20),
    )(z_p, *ordered)

    # layout: (T*B_pad, OUT_PAD) -> (T, B_pad, F) real column/rows -> PyTorch (B, T, F)
    out = out_flat.reshape(seq_len, B_pad, OUT_PAD)[:, :B, :N_FEATURES]
    return jnp.transpose(out, (1, 0, 2))


if __name__ == "__main__":
    B = 4
    SEQ_LEN = 8

    key = jax.random.PRNGKey(0)
    pkey, zkey = jax.random.split(key)
    params = init_params(pkey)
    z = jax.random.normal(zkey, (B, LATENT_DIM), dtype=jnp.float32)

    out = generator_forward(z, params, SEQ_LEN)
    out = jax.block_until_ready(out)

    assert out.shape == (B, SEQ_LEN, N_FEATURES), out.shape
    assert bool(jnp.all(jnp.isfinite(out)))
    assert bool(jnp.all(jnp.abs(out) <= 1.0))     # tanh output range
    print("KERNEL_OK")
</pallas_src>

<mosaic_0001>
module attributes {stable_mosaic.version = 11 : i64} {
  func.func @generator_kernel(%arg0: memref<8x128xf32, #tpu.memory_space<vmem>>, %arg1: memref<128x256xf32, #tpu.memory_space<vmem>>, %arg2: memref<1x256xf32, #tpu.memory_space<vmem>>, %arg3: memref<1x256xf32, #tpu.memory_space<vmem>>, %arg4: memref<1x256xf32, #tpu.memory_space<vmem>>, %arg5: memref<256x128xf32, #tpu.memory_space<vmem>>, %arg6: memref<1x128xf32, #tpu.memory_space<vmem>>, %arg7: memref<1x128xf32, #tpu.memory_space<vmem>>, %arg8: memref<1x128xf32, #tpu.memory_space<vmem>>, %arg9: memref<128x512xf32, #tpu.memory_space<vmem>>, %arg10: memref<128x512xf32, #tpu.memory_space<vmem>>, %arg11: memref<1x512xf32, #tpu.memory_space<vmem>>, %arg12: memref<128x512xf32, #tpu.memory_space<vmem>>, %arg13: memref<128x512xf32, #tpu.memory_space<vmem>>, %arg14: memref<1x512xf32, #tpu.memory_space<vmem>>, %arg15: memref<128x128xf32, #tpu.memory_space<vmem>>, %arg16: memref<1x128xf32, #tpu.memory_space<vmem>>, %arg17: memref<64x128xf32, #tpu.memory_space<vmem>>, %arg18: memref<8x8x128xf32, #tpu.memory_space<vmem>>) attributes {dimension_semantics = [], scalar_prefetch = 0 : i64, scratch_operands = 1 : i64, tpu.core_type = #tpu.core_type<tc>} {
    %c0 = arith.constant 0 : index
    %c0_0 = arith.constant 0 : index
    %0 = vector.load %arg0[%c0, %c0_0] : memref<8x128xf32, #tpu.memory_space<vmem>>, vector<8x128xf32>
    %c0_1 = arith.constant 0 : index
    %c0_2 = arith.constant 0 : index
    %1 = vector.load %arg1[%c0_1, %c0_2] : memref<128x256xf32, #tpu.memory_space<vmem>>, vector<128x256xf32>
    %cst = arith.constant dense<0.000000e+00> : vector<8x256xf32>
    %2 = tpu.matmul %0, %1, %cst {dimension_numbers = #tpu.dot_dimension_numbers<[1], [0], [0], [1], [0, 0, 1, 1], [], []>} : vector<8x128xf32>, vector<128x256xf32>, vector<8x256xf32> -> vector<8x256xf32>
    %c0_3 = arith.constant 0 : index
    %c0_4 = arith.constant 0 : index
    %3 = vector.load %arg2[%c0_3, %c0_4] : memref<1x256xf32, #tpu.memory_space<vmem>>, vector<1x256xf32>
    %4 = vector.broadcast %3 : vector<1x256xf32> to vector<8x256xf32>
    %5 = arith.addf %2, %4 : vector<8x256xf32>
    %cst_5 = arith.constant 0.000000e+00 : f32
    %6 = vector.broadcast %cst_5 : f32 to vector<8x256xf32>
    %7 = arith.cmpf oge, %5, %6 : vector<8x256xf32>
    %cst_6 = arith.constant 2.000000e-01 : f32
    %8 = vector.broadcast %cst_6 : f32 to vector<8x256xf32>
    %9 = arith.mulf %8, %5 : vector<8x256xf32>
    %10 = arith.select %7, %5, %9 : vector<8x256xi1>, vector<8x256xf32>
    %c0_7 = arith.constant 0 : index
    %c0_8 = arith.constant 0 : index
    %11 = vector.load %arg3[%c0_7, %c0_8] : memref<1x256xf32, #tpu.memory_space<vmem>>, vector<1x256xf32>
    %c0_9 = arith.constant 0 : index
    %c0_10 = arith.constant 0 : index
    %12 = vector.load %arg4[%c0_9, %c0_10] : memref<1x256xf32, #tpu.memory_space<vmem>>, vector<1x256xf32>
    %13 = tpu.iota {dimensions = array<i32: 0>} : vector<8x256xi32>
    %c4_i32 = arith.constant 4 : i32
    %14 = vector.broadcast %c4_i32 : i32 to vector<8x256xi32>
    %15 = arith.cmpi slt, %13, %14 : vector<8x256xi32>
    %16 = arith.extui %15 : vector<8x256xi1> to vector<8x256xi32>
    %17 = arith.sitofp %16 : vector<8x256xi32> to vector<8x256xf32>
    %18 = arith.mulf %10, %17 : vector<8x256xf32>
    %cst_11 = arith.constant dense<0.000000e+00> : vector<256xf32>
    %19 = vector.multi_reduction <add>, %18, %cst_11 [0] : vector<8x256xf32> to vector<256xf32>
    %20 = vector.shape_cast %19 : vector<256xf32> to vector<1x256xf32>
    %cst_12 = arith.constant 2.500000e-01 : f32
    %21 = vector.broadcast %cst_12 : f32 to vector<1x256xf32>
    %22 = arith.mulf %20, %21 : vector<1x256xf32>
    %23 = vector.broadcast %22 : vector<1x256xf32> to vector<8x256xf32>
    %24 = arith.subf %10, %23 : vector<8x256xf32>
    %25 = arith.mulf %24, %24 : vector<8x256xf32>
    %26 = arith.mulf %25, %17 : vector<8x256xf32>
    %cst_13 = arith.constant dense<0.000000e+00> : vector<256xf32>
    %27 = vector.multi_reduction <add>, %26, %cst_13 [0] : vector<8x256xf32> to vector<256xf32>
    %28 = vector.shape_cast %27 : vector<256xf32> to vector<1x256xf32>
    %cst_14 = arith.constant 2.500000e-01 : f32
    %29 = vector.broadcast %cst_14 : f32 to vector<1x256xf32>
    %30 = arith.mulf %28, %29 : vector<1x256xf32>
    %cst_15 = arith.constant 9.99999974E-6 : f32
    %31 = vector.broadcast %cst_15 : f32 to vector<1x256xf32>
    %32 = arith.addf %30, %31 : vector<1x256xf32>
    %33 = math.rsqrt %32 : vector<1x256xf32>
    %34 = vector.broadcast %33 : vector<1x256xf32> to vector<8x256xf32>
    %35 = arith.mulf %24, %34 : vector<8x256xf32>
    %36 = vector.broadcast %11 : vector<1x256xf32> to vector<8x256xf32>
    %37 = arith.mulf %35, %36 : vector<8x256xf32>
    %38 = vector.broadcast %12 : vector<1x256xf32> to vector<8x256xf32>
    %39 = arith.addf %37, %38 : vector<8x256xf32>
    %c0_16 = arith.constant 0 : index
    %c0_17 = arith.constant 0 : index
    %40 = vector.load %arg5[%c0_16, %c0_17] : memref<256x128xf32, #tpu.memory_space<vmem>>, vector<256x128xf32>
    %cst_18 = arith.constant dense<0.000000e+00> : vector<8x128xf32>
    %41 = tpu.matmul %39, %40, %cst_18 {dimension_numbers = #tpu.dot_dimension_numbers<[1], [0], [0], [1], [0, 0, 1, 1], [], []>} : vector<8x256xf32>, vector<256x128xf32>, vector<8x128xf32> -> vector<8x128xf32>
    %c0_19 = arith.constant 0 : index
    %c0_20 = arith.constant 0 : index
    %42 = vector.load %arg6[%c0_19, %c0_20] : memref<1x128xf32, #tpu.memory_space<vmem>>, vector<1x128xf32>
    %43 = vector.broadcast %42 : vector<1x128xf32> to vector<8x128xf32>
    %44 = arith.addf %41, %43 : vector<8x128xf32>
    %cst_21 = arith.constant 0.000000e+00 : f32
    %45 = vector.broadcast %cst_21 : f32 to vector<8x128xf32>
    %46 = arith.cmpf oge, %44, %45 : vector<8x128xf32>
    %cst_22 = arith.constant 2.000000e-01 : f32
    %47 = vector.broadcast %cst_22 : f32 to vector<8x128xf32>
    %48 = arith.mulf %47, %44 : vector<8x128xf32>
    %49 = arith.select %46, %44, %48 : vector<8x128xi1>, vector<8x128xf32>
    %c0_23 = arith.constant 0 : index
    %c0_24 = arith.constant 0 : index
    %50 = vector.load %arg7[%c0_23, %c0_24] : memref<1x128xf32, #tpu.memory_space<vmem>>, vector<1x128xf32>
    %c0_25 = arith.constant 0 : index
    %c0_26 = arith.constant 0 : index
    %51 = vector.load %arg8[%c0_25, %c0_26] : memref<1x128xf32, #tpu.memory_space<vmem>>, vector<1x128xf32>
    %52 = tpu.iota {dimensions = array<i32: 0>} : vector<8x128xi32>
    %c4_i32_27 = arith.constant 4 : i32
    %53 = vector.broadcast %c4_i32_27 : i32 to vector<8x128xi32>
    %54 = arith.cmpi slt, %52, %53 : vector<8x128xi32>
    %55 = arith.extui %54 : vector<8x128xi1> to vector<8x128xi32>
    %56 = arith.sitofp %55 : vector<8x128xi32> to vector<8x128xf32>
    %57 = arith.mulf %49, %56 : vector<8x128xf32>
    %cst_28 = arith.constant dense<0.000000e+00> : vector<128xf32>
    %58 = vector.multi_reduction <add>, %57, %cst_28 [0] : vector<8x128xf32> to vector<128xf32>
    %59 = vector.shape_cast %58 : vector<128xf32> to vector<1x128xf32>
    %cst_29 = arith.constant 2.500000e-01 : f32
    %60 = vector.broadcast %cst_29 : f32 to vector<1x128xf32>
    %61 = arith.mulf %59, %60 : vector<1x128xf32>
    %62 = vector.broadcast %61 : vector<1x128xf32> to vector<8x128xf32>
    %63 = arith.subf %49, %62 : vector<8x128xf32>
    %64 = arith.mulf %63, %63 : vector<8x128xf32>
    %65 = arith.mulf %64, %56 : vector<8x128xf32>
    %cst_30 = arith.constant dense<0.000000e+00> : vector<128xf32>
    %66 = vector.multi_reduction <add>, %65, %cst_30 [0] : vector<8x128xf32> to vector<128xf32>
    %67 = vector.shape_cast %66 : vector<128xf32> to vector<1x128xf32>
    %cst_31 = arith.constant 2.500000e-01 : f32
    %68 = vector.broadcast %cst_31 : f32 to vector<1x128xf32>
    %69 = arith.mulf %67, %68 : vector<1x128xf32>
    %cst_32 = arith.constant 9.99999974E-6 : f32
    %70 = vector.broadcast %cst_32 : f32 to vector<1x128xf32>
    %71 = arith.addf %69, %70 : vector<1x128xf32>
    %72 = math.rsqrt %71 : vector<1x128xf32>
    %73 = vector.broadcast %72 : vector<1x128xf32> to vector<8x128xf32>
    %74 = arith.mulf %63, %73 : vector<8x128xf32>
    %75 = vector.broadcast %50 : vector<1x128xf32> to vector<8x128xf32>
    %76 = arith.mulf %74, %75 : vector<8x128xf32>
    %77 = vector.broadcast %51 : vector<1x128xf32> to vector<8x128xf32>
    %78 = arith.addf %76, %77 : vector<8x128xf32>
    %c0_33 = arith.constant 0 : index
    %c0_34 = arith.constant 0 : index
    %79 = vector.load %arg9[%c0_33, %c0_34] : memref<128x512xf32, #tpu.memory_space<vmem>>, vector<128x512xf32>
    %cst_35 = arith.constant dense<0.000000e+00> : vector<8x512xf32>
    %80 = tpu.matmul %78, %79, %cst_35 {dimension_numbers = #tpu.dot_dimension_numbers<[1], [0], [0], [1], [0, 0, 1, 1], [], []>} : vector<8x128xf32>, vector<128x512xf32>, vector<8x512xf32> -> vector<8x512xf32>
    %c0_36 = arith.constant 0 : index
    %c0_37 = arith.constant 0 : index
    %81 = vector.load %arg11[%c0_36, %c0_37] : memref<1x512xf32, #tpu.memory_space<vmem>>, vector<1x512xf32>
    %82 = vector.broadcast %81 : vector<1x512xf32> to vector<8x512xf32>
    %83 = arith.addf %80, %82 : vector<8x512xf32>
    %cst_38 = arith.constant 0.000000e+00 : f32
    %84 = vector.broadcast %cst_38 : f32 to vector<8x128xf32>
    %c0_i32 = arith.constant 0 : i32
    %c0_39 = arith.constant 0 : index
    %c0_40 = arith.constant 0 : index
    %85 = vector.load %arg13[%c0_39, %c0_40] : memref<128x512xf32, #tpu.memory_space<vmem>>, vector<128x512xf32>
    %cst_41 = arith.constant dense<0.000000e+00> : vector<8x512xf32>
    %86 = tpu.matmul %84, %85, %cst_41 {dimension_numbers = #tpu.dot_dimension_numbers<[1], [0], [0], [1], [0, 0, 1, 1], [], []>} : vector<8x128xf32>, vector<128x512xf32>, vector<8x512xf32> -> vector<8x512xf32>
    %c0_42 = arith.constant 0 : index
    %c0_43 = arith.constant 0 : index
    %87 = vector.load %arg14[%c0_42, %c0_43] : memref<1x512xf32, #tpu.memory_space<vmem>>, vector<1x512xf32>
    %88 = vector.broadcast %87 : vector<1x512xf32> to vector<8x512xf32>
    %89 = arith.addf %86, %88 : vector<8x512xf32>
    %c0_44 = arith.constant 0 : index
    %c0_45 = arith.constant 0 : index
    %90 = vector.load %arg10[%c0_44, %c0_45] : memref<128x512xf32, #tpu.memory_space<vmem>>, vector<128x512xf32>
    %cst_46 = arith.constant dense<0.000000e+00> : vector<8x512xf32>
    %91 = tpu.matmul %84, %90, %cst_46 {dimension_numbers = #tpu.dot_dimension_numbers<[1], [0], [0], [1], [0, 0, 1, 1], [], []>} : vector<8x128xf32>, vector<128x512xf32>, vector<8x512xf32> -> vector<8x512xf32>
    %92 = arith.addf %83, %91 : vector<8x512xf32>
    %93 = vector.extract_strided_slice %92 {offsets = [0, 0], sizes = [8, 128], strides = [1, 1]} : vector<8x512xf32> to vector<8x128xf32>
    %cst_47 = arith.constant 5.000000e-01 : f32
    %94 = vector.broadcast %cst_47 : f32 to vector<8x128xf32>
    %95 = arith.mulf %94, %93 : vector<8x128xf32>
    %96 = math.tanh %95 : vector<8x128xf32>
    %cst_48 = arith.constant 5.000000e-01 : f32
    %97 = vector.broadcast %cst_48 : f32 to vector<8x128xf32>
    %98 = arith.mulf %97, %96 : vector<8x128xf32>
    %cst_49 = arith.constant 5.000000e-01 : f32
    %99 = vector.broadcast %cst_49 : f32 to vector<8x128xf32>
    %100 = arith.addf %98, %99 : vector<8x128xf32>
    %101 = vector.extract_strided_slice %92 {offsets = [0, 128], sizes = [8, 128], strides = [1, 1]} : vector<8x512xf32> to vector<8x128xf32>
    %cst_50 = arith.constant 5.000000e-01 : f32
    %102 = vector.broadcast %cst_50 : f32 to vector<8x128xf32>
    %103 = arith.mulf %102, %101 : vector<8x128xf32>
    %104 = math.tanh %103 : vector<8x128xf32>
    %cst_51 = arith.constant 5.000000e-01 : f32
    %105 = vector.broadcast %cst_51 : f32 to vector<8x128xf32>
    %106 = arith.mulf %105, %104 : vector<8x128xf32>
    %cst_52 = arith.constant 5.000000e-01 : f32
    %107 = vector.broadcast %cst_52 : f32 to vector<8x128xf32>
    %108 = arith.addf %106, %107 : vector<8x128xf32>
    %109 = vector.extract_strided_slice %92 {offsets = [0, 256], sizes = [8, 128], strides = [1, 1]} : vector<8x512xf32> to vector<8x128xf32>
    %110 = math.tanh %109 : vector<8x128xf32>
    %111 = vector.extract_strided_slice %92 {offsets = [0, 384], sizes = [8, 128], strides = [1, 1]} : vector<8x512xf32> to vector<8x128xf32>
    %cst_53 = arith.constant 5.000000e-01 : f32
    %112 = vector.broadcast %cst_53 : f32 to vector<8x128xf32>
    %113 = arith.mulf %112, %111 : vector<8x128xf32>
    %114 = math.tanh %113 : vector<8x128xf32>
    %cst_54 = arith.constant 5.000000e-01 : f32
    %115 = vector.broadcast %cst_54 : f32 to vector<8x128xf32>
    %116 = arith.mulf %115, %114 : vector<8x128xf32>
    %cst_55 = arith.constant 5.000000e-01 : f32
    %117 = vector.broadcast %cst_55 : f32 to vector<8x128xf32>
    %118 = arith.addf %116, %117 : vector<8x128xf32>
    %119 = arith.mulf %108, %84 : vector<8x128xf32>
    %120 = arith.mulf %100, %110 : vector<8x128xf32>
    %121 = arith.addf %119, %120 : vector<8x128xf32>
    %122 = math.tanh %121 : vector<8x128xf32>
    %123 = arith.mulf %118, %122 : vector<8x128xf32>
    %c0_56 = arith.constant 0 : index
    %c0_57 = arith.constant 0 : index
    %124 = vector.load %arg12[%c0_56, %c0_57] : memref<128x512xf32, #tpu.memory_space<vmem>>, vector<128x512xf32>
    %cst_58 = arith.constant dense<0.000000e+00> : vector<8x512xf32>
    %125 = tpu.matmul %123, %124, %cst_58 {dimension_numbers = #tpu.dot_dimension_numbers<[1], [0], [0], [1], [0, 0, 1, 1], [], []>} : vector<8x128xf32>, vector<128x512xf32>, vector<8x512xf32> -> vector<8x512xf32>
    %126 = arith.addf %89, %125 : vector<8x512xf32>
    %127 = vector.extract_strided_slice %126 {offsets = [0, 0], sizes = [8, 128], strides = [1, 1]} : vector<8x512xf32> to vector<8x128xf32>
    %cst_59 = arith.constant 5.000000e-01 : f32
    %128 = vector.broadcast %cst_59 : f32 to vector<8x128xf32>
    %129 = arith.mulf %128, %127 : vector<8x128xf32>
    %130 = math.tanh %129 : vector<8x128xf32>
    %cst_60 = arith.constant 5.000000e-01 : f32
    %131 = vector.broadcast %cst_60 : f32 to vector<8x128xf32>
    %132 = arith.mulf %131, %130 : vector<8x128xf32>
    %cst_61 = arith.constant 5.000000e-01 : f32
    %133 = vector.broadcast %cst_61 : f32 to vector<8x128xf32>
    %134 = arith.addf %132, %133 : vector<8x128xf32>
    %135 = vector.extract_strided_slice %126 {offsets = [0, 128], sizes = [8, 128], strides = [1, 1]} : vector<8x512xf32> to vector<8x128xf32>
    %cst_62 = arith.constant 5.000000e-01 : f32
    %136 = vector.broadcast %cst_62 : f32 to vector<8x128xf32>
    %137 = arith.mulf %136, %135 : vector<8x128xf32>
    %138 = math.tanh %137 : vector<8x128xf32>
    %cst_63 = arith.constant 5.000000e-01 : f32
    %139 = vector.broadcast %cst_63 : f32 to vector<8x128xf32>
    %140 = arith.mulf %139, %138 : vector<8x128xf32>
    %cst_64 = arith.constant 5.000000e-01 : f32
    %141 = vector.broadcast %cst_64 : f32 to vector<8x128xf32>
    %142 = arith.addf %140, %141 : vector<8x128xf32>
    %143 = vector.extract_strided_slice %126 {offsets = [0, 256], sizes = [8, 128], strides = [1, 1]} : vector<8x512xf32> to vector<8x128xf32>
    %144 = math.tanh %143 : vector<8x128xf32>
    %145 = vector.extract_strided_slice %126 {offsets = [0, 384], sizes = [8, 128], strides = [1, 1]} : vector<8x512xf32> to vector<8x128xf32>
    %cst_65 = arith.constant 5.000000e-01 : f32
    %146 = vector.broadcast %cst_65 : f32 to vector<8x128xf32>
    %147 = arith.mulf %146, %145 : vector<8x128xf32>
    %148 = math.tanh %147 : vector<8x128xf32>
    %cst_66 = arith.constant 5.000000e-01 : f32
    %149 = vector.broadcast %cst_66 : f32 to vector<8x128xf32>
    %150 = arith.mulf %149, %148 : vector<8x128xf32>
    %cst_67 = arith.constant 5.000000e-01 : f32
    %151 = vector.broadcast %cst_67 : f32 to vector<8x128xf32>
    %152 = arith.addf %150, %151 : vector<8x128xf32>
    %153 = arith.mulf %142, %84 : vector<8x128xf32>
    %154 = arith.mulf %134, %144 : vector<8x128xf32>
    %155 = arith.addf %153, %154 : vector<8x128xf32>
    %156 = math.tanh %155 : vector<8x128xf32>
    %157 = arith.mulf %152, %156 : vector<8x128xf32>
    %158 = arith.index_cast %c0_i32 : i32 to index
    %c0_68 = arith.constant 0 : index
    %c0_69 = arith.constant 0 : index
    %159 = vector.load %arg18[%158, %c0_68, %c0_69] : memref<8x8x128xf32, #tpu.memory_space<vmem>>, vector<1x8x128xf32>
    %160 = vector.shape_cast %159 : vector<1x8x128xf32> to vector<8x128xf32>
    %161 = vector.shape_cast %157 : vector<8x128xf32> to vector<1x8x128xf32>
    tpu.vector_store %arg18[%158, %c0_68, %c0_69], %161 {strides = array<i32>} : memref<8x8x128xf32, #tpu.memory_space<vmem>>, vector<1x8x128xf32>,
    %c1_i32 = arith.constant 1 : i32
    %c0_70 = arith.constant 0 : index
    %c0_71 = arith.constant 0 : index
    %162 = vector.load %arg13[%c0_70, %c0_71] : memref<128x512xf32, #tpu.memory_space<vmem>>, vector<128x512xf32>
    %cst_72 = arith.constant dense<0.000000e+00> : vector<8x512xf32>
    %163 = tpu.matmul %157, %162, %cst_72 {dimension_numbers = #tpu.dot_dimension_numbers<[1], [0], [0], [1], [0, 0, 1, 1], [], []>} : vector<8x128xf32>, vector<128x512xf32>, vector<8x512xf32> -> vector<8x512xf32>
    %c0_73 = arith.constant 0 : index
    %c0_74 = arith.constant 0 : index
    %164 = vector.load %arg14[%c0_73, %c0_74] : memref<1x512xf32, #tpu.memory_space<vmem>>, vector<1x512xf32>
    %165 = vector.broadcast %164 : vector<1x512xf32> to vector<8x512xf32>
    %166 = arith.addf %163, %165 : vector<8x512xf32>
    %c0_75 = arith.constant 0 : index
    %c0_76 = arith.constant 0 : index
    %167 = vector.load %arg10[%c0_75, %c0_76] : memref<128x512xf32, #tpu.memory_space<vmem>>, vector<128x512xf32>
    %cst_77 = arith.constant dense<0.000000e+00> : vector<8x512xf32>
    %168 = tpu.matmul %123, %167, %cst_77 {dimension_numbers = #tpu.dot_dimension_numbers<[1], [0], [0], [1], [0, 0, 1, 1], [], []>} : vector<8x128xf32>, vector<128x512xf32>, vector<8x512xf32> -> vector<8x512xf32>
    %169 = arith.addf %83, %168 : vector<8x512xf32>
    %170 = vector.extract_strided_slice %169 {offsets = [0, 0], sizes = [8, 128], strides = [1, 1]} : vector<8x512xf32> to vector<8x128xf32>
    %cst_78 = arith.constant 5.000000e-01 : f32
    %171 = vector.broadcast %cst_78 : f32 to vector<8x128xf32>
    %172 = arith.mulf %171, %170 : vector<8x128xf32>
    %173 = math.tanh %172 : vector<8x128xf32>
    %cst_79 = arith.constant 5.000000e-01 : f32
    %174 = vector.broadcast %cst_79 : f32 to vector<8x128xf32>
    %175 = arith.mulf %174, %173 : vector<8x128xf32>
    %cst_80 = arith.constant 5.000000e-01 : f32
    %176 = vector.broadcast %cst_80 : f32 to vector<8x128xf32>
    %177 = arith.addf %175, %176 : vector<8x128xf32>
    %178 = vector.extract_strided_slice %169 {offsets = [0, 128], sizes = [8, 128], strides = [1, 1]} : vector<8x512xf32> to vector<8x128xf32>
    %cst_81 = arith.constant 5.000000e-01 : f32
    %179 = vector.broadcast %cst_81 : f32 to vector<8x128xf32>
    %180 = arith.mulf %179, %178 : vector<8x128xf32>
    %181 = math.tanh %180 : vector<8x128xf32>
    %cst_82 = arith.constant 5.000000e-01 : f32
    %182 = vector.broadcast %cst_82 : f32 to vector<8x128xf32>
    %183 = arith.mulf %182, %181 : vector<8x128xf32>
    %cst_83 = arith.constant 5.000000e-01 : f32
    %184 = vector.broadcast %cst_83 : f32 to vector<8x128xf32>
    %185 = arith.addf %183, %184 : vector<8x128xf32>
    %186 = vector.extract_strided_slice %169 {offsets = [0, 256], sizes = [8, 128], strides = [1, 1]} : vector<8x512xf32> to vector<8x128xf32>
    %187 = math.tanh %186 : vector<8x128xf32>
    %188 = vector.extract_strided_slice %169 {offsets = [0, 384], sizes = [8, 128], strides = [1, 1]} : vector<8x512xf32> to vector<8x128xf32>
    %cst_84 = arith.constant 5.000000e-01 : f32
    %189 = vector.broadcast %cst_84 : f32 to vector<8x128xf32>
    %190 = arith.mulf %189, %188 : vector<8x128xf32>
    %191 = math.tanh %190 : vector<8x128xf32>
    %cst_85 = arith.constant 5.000000e-01 : f32
    %192 = vector.broadcast %cst_85 : f32 to vector<8x128xf32>
    %193 = arith.mulf %192, %191 : vector<8x128xf32>
    %cst_86 = arith.constant 5.000000e-01 : f32
    %194 = vector.broadcast %cst_86 : f32 to vector<8x128xf32>
    %195 = arith.addf %193, %194 : vector<8x128xf32>
    %196 = arith.mulf %185, %121 : vector<8x128xf32>
    %197 = arith.mulf %177, %187 : vector<8x128xf32>
    %198 = arith.addf %196, %197 : vector<8x128xf32>
    %199 = math.tanh %198 : vector<8x128xf32>
    %200 = arith.mulf %195, %199 : vector<8x128xf32>
    %c0_87 = arith.constant 0 : index
    %c0_88 = arith.constant 0 : index
    %201 = vector.load %arg12[%c0_87, %c0_88] : memref<128x512xf32, #tpu.memory_space<vmem>>, vector<128x512xf32>
    %cst_89 = arith.constant dense<0.000000e+00> : vector<8x512xf32>
    %202 = tpu.matmul %200, %201, %cst_89 {dimension_numbers = #tpu.dot_dimension_numbers<[1], [0], [0], [1], [0, 0, 1, 1], [], []>} : vector<8x128xf32>, vector<128x512xf32>, vector<8x512xf32> -> vector<8x512xf32>
    %203 = arith.addf %166, %202 : vector<8x512xf32>
    %204 = vector.extract_strided_slice %203 {offsets = [0, 0], sizes = [8, 128], strides = [1, 1]} : vector<8x512xf32> to vector<8x128xf32>
    %cst_90 = arith.constant 5.000000e-01 : f32
    %205 = vector.broadcast %cst_90 : f32 to vector<8x128xf32>
    %206 = arith.mulf %205, %204 : vector<8x128xf32>
    %207 = math.tanh %206 : vector<8x128xf32>
    %cst_91 = arith.constant 5.000000e-01 : f32
    %208 = vector.broadcast %cst_91 : f32 to vector<8x128xf32>
    %209 = arith.mulf %208, %207 : vector<8x128xf32>
    %cst_92 = arith.constant 5.000000e-01 : f32
    %210 = vector.broadcast %cst_92 : f32 to vector<8x128xf32>
    %211 = arith.addf %209, %210 : vector<8x128xf32>
    %212 = vector.extract_strided_slice %203 {offsets = [0, 128], sizes = [8, 128], strides = [1, 1]} : vector<8x512xf32> to vector<8x128xf32>
    %cst_93 = arith.constant 5.000000e-01 : f32
    %213 = vector.broadcast %cst_93 : f32 to vector<8x128xf32>
    %214 = arith.mulf %213, %212 : vector<8x128xf32>
    %215 = math.tanh %214 : vector<8x128xf32>
    %cst_94 = arith.constant 5.000000e-01 : f32
    %216 = vector.broadcast %cst_94 : f32 to vector<8x128xf32>
    %217 = arith.mulf %216, %215 : vector<8x128xf32>
    %cst_95 = arith.constant 5.000000e-01 : f32
    %218 = vector.broadcast %cst_95 : f32 to vector<8x128xf32>
    %219 = arith.addf %217, %218 : vector<8x128xf32>
    %220 = vector.extract_strided_slice %203 {offsets = [0, 256], sizes = [8, 128], strides = [1, 1]} : vector<8x512xf32> to vector<8x128xf32>
    %221 = math.tanh %220 : vector<8x128xf32>
    %222 = vector.extract_strided_slice %203 {offsets = [0, 384], sizes = [8, 128], strides = [1, 1]} : vector<8x512xf32> to vector<8x128xf32>
    %cst_96 = arith.constant 5.000000e-01 : f32
    %223 = vector.broadcast %cst_96 : f32 to vector<8x128xf32>
    %224 = arith.mulf %223, %222 : vector<8x128xf32>
    %225 = math.tanh %224 : vector<8x128xf32>
    %cst_97 = arith.constant 5.000000e-01 : f32
    %226 = vector.broadcast %cst_97 : f32 to vector<8x128xf32>
    %227 = arith.mulf %226, %225 : vector<8x128xf32>
    %cst_98 = arith.constant 5.000000e-01 : f32
    %228 = vector.broadcast %cst_98 : f32 to vector<8x128xf32>
    %229 = arith.addf %227, %228 : vector<8x128xf32>
    %230 = arith.mulf %219, %155 : vector<8x128xf32>
    %231 = arith.mulf %211, %221 : vector<8x128xf32>
    %232 = arith.addf %230, %231 : vector<8x128xf32>
    %233 = math.tanh %232 : vector<8x128xf32>
    %234 = arith.mulf %229, %233 : vector<8x128xf32>
    %235 = arith.index_cast %c1_i32 : i32 to index
    %c0_99 = arith.constant 0 : index
    %c0_100 = arith.constant 0 : index
    %236 = vector.load %arg18[%235, %c0_99, %c0_100] : memref<8x8x128xf32, #tpu.memory_space<vmem>>, vector<1x8x128xf32>
    %237 = vector.shape_cast %236 : vector<1x8x128xf32> to vector<8x128xf32>
    %238 = vector.shape_cast %234 : vector<8x128xf32> to vector<1x8x128xf32>
    tpu.vector_store %arg18[%235, %c0_99, %c0_100], %238 {strides = array<i32>} : memref<8x8x128xf32, #tpu.memory_space<vmem>>, vector<1x8x128xf32>,
    %c2_i32 = arith.constant 2 : i32
    %c0_101 = arith.constant 0 : index
    %c0_102 = arith.constant 0 : index
    %239 = vector.load %arg13[%c0_101, %c0_102] : memref<128x512xf32, #tpu.memory_space<vmem>>, vector<128x512xf32>
    %cst_103 = arith.constant dense<0.000000e+00> : vector<8x512xf32>
    %240 = tpu.matmul %234, %239, %cst_103 {dimension_numbers = #tpu.dot_dimension_numbers<[1], [0], [0], [1], [0, 0, 1, 1], [], []>} : vector<8x128xf32>, vector<128x512xf32>, vector<8x512xf32> -> vector<8x512xf32>
    %c0_104 = arith.constant 0 : index
    %c0_105 = arith.constant 0 : index
    %241 = vector.load %arg14[%c0_104, %c0_105] : memref<1x512xf32, #tpu.memory_space<vmem>>, vector<1x512xf32>
    %242 = vector.broadcast %241 : vector<1x512xf32> to vector<8x512xf32>
    %243 = arith.addf %240, %242 : vector<8x512xf32>
    %c0_106 = arith.constant 0 : index
    %c0_107 = arith.constant 0 : index
    %244 = vector.load %arg10[%c0_106, %c0_107] : memref<128x512xf32, #tpu.memory_space<vmem>>, vector<128x512xf32>
    %cst_108 = arith.constant dense<0.000000e+00> : vector<8x512xf32>
    %245 = tpu.matmul %200, %244, %cst_108 {dimension_numbers = #tpu.dot_dimension_numbers<[1], [0], [0], [1], [0, 0, 1, 1], [], []>} : vector<8x128xf32>, vector<128x512xf32>, vector<8x512xf32> -> vector<8x512xf32>
    %246 = arith.addf %83, %245 : vector<8x512xf32>
    %247 = vector.extract_strided_slice %246 {offsets = [0, 0], sizes = [8, 128], strides = [1, 1]} : vector<8x512xf32> to vector<8x128xf32>
    %cst_109 = arith.constant 5.000000e-01 : f32
    %248 = vector.broadcast %cst_109 : f32 to vector<8x128xf32>
    %249 = arith.mulf %248, %247 : vector<8x128xf32>
    %250 = math.tanh %249 : vector<8x128xf32>
    %cst_110 = arith.constant 5.000000e-01 : f32
    %251 = vector.broadcast %cst_110 : f32 to vector<8x128xf32>
    %252 = arith.mulf %251, %250 : vector<8x128xf32>
    %cst_111 = arith.constant 5.000000e-01 : f32
    %253 = vector.broadcast %cst_111 : f32 to vector<8x128xf32>
    %254 = arith.addf %252, %253 : vector<8x128xf32>
    %255 = vector.extract_strided_slice %246 {offsets = [0, 128], sizes = [8, 128], strides = [1, 1]} : vector<8x512xf32> to vector<8x128xf32>
    %cst_112 = arith.constant 5.000000e-01 : f32
    %256 = vector.broadcast %cst_112 : f32 to vector<8x128xf32>
    %257 = arith.mulf %256, %255 : vector<8x128xf32>
    %258 = math.tanh %257 : vector<8x128xf32>
    %cst_113 = arith.constant 5.000000e-01 : f32
    %259 = vector.broadcast %cst_113 : f32 to vector<8x128xf32>
    %260 = arith.mulf %259, %258 : vector<8x128xf32>
    %cst_114 = arith.constant 5.000000e-01 : f32
    %261 = vector.broadcast %cst_114 : f32 to vector<8x128xf32>
    %262 = arith.addf %260, %261 : vector<8x128xf32>
    %263 = vector.extract_strided_slice %246 {offsets = [0, 256], sizes = [8, 128], strides = [1, 1]} : vector<8x512xf32> to vector<8x128xf32>
    %264 = math.tanh %263 : vector<8x128xf32>
    %265 = vector.extract_strided_slice %246 {offsets = [0, 384], sizes = [8, 128], strides = [1, 1]} : vector<8x512xf32> to vector<8x128xf32>
    %cst_115 = arith.constant 5.000000e-01 : f32
    %266 = vector.broadcast %cst_115 : f32 to vector<8x128xf32>
    %267 = arith.mulf %266, %265 : vector<8x128xf32>
    %268 = math.tanh %267 : vector<8x128xf32>
    %cst_116 = arith.constant 5.000000e-01 : f32
    %269 = vector.broadcast %cst_116 : f32 to vector<8x128xf32>
    %270 = arith.mulf %269, %268 : vector<8x128xf32>
    %cst_117 = arith.constant 5.000000e-01 : f32
    %271 = vector.broadcast %cst_117 : f32 to vector<8x128xf32>
    %272 = arith.addf %270, %271 : vector<8x128xf32>
    %273 = arith.mulf %262, %198 : vector<8x128xf32>
    %274 = arith.mulf %254, %264 : vector<8x128xf32>
    %275 = arith.addf %273, %274 : vector<8x128xf32>
    %276 = math.tanh %275 : vector<8x128xf32>
    %277 = arith.mulf %272, %276 : vector<8x128xf32>
    %c0_118 = arith.constant 0 : index
    %c0_119 = arith.constant 0 : index
    %278 = vector.load %arg12[%c0_118, %c0_119] : memref<128x512xf32, #tpu.memory_space<vmem>>, vector<128x512xf32>
    %cst_120 = arith.constant dense<0.000000e+00> : vector<8x512xf32>
    %279 = tpu.matmul %277, %278, %cst_120 {dimension_numbers = #tpu.dot_dimension_numbers<[1], [0], [0], [1], [0, 0, 1, 1], [], []>} : vector<8x128xf32>, vector<128x512xf32>, vector<8x512xf32> -> vector<8x512xf32>
    %280 = arith.addf %243, %279 : vector<8x512xf32>
    %281 = vector.extract_strided_slice %280 {offsets = [0, 0], sizes = [8, 128], strides = [1, 1]} : vector<8x512xf32> to vector<8x128xf32>
    %cst_121 = arith.constant 5.000000e-01 : f32
    %282 = vector.broadcast %cst_121 : f32 to vector<8x128xf32>
    %283 = arith.mulf %282, %281 : vector<8x128xf32>
    %284 = math.tanh %283 : vector<8x128xf32>
    %cst_122 = arith.constant 5.000000e-01 : f32
    %285 = vector.broadcast %cst_122 : f32 to vector<8x128xf32>
    %286 = arith.mulf %285, %284 : vector<8x128xf32>
    %cst_123 = arith.constant 5.000000e-01 : f32
    %287 = vector.broadcast %cst_123 : f32 to vector<8x128xf32>
    %288 = arith.addf %286, %287 : vector<8x128xf32>
    %289 = vector.extract_strided_slice %280 {offsets = [0, 128], sizes = [8, 128], strides = [1, 1]} : vector<8x512xf32> to vector<8x128xf32>
    %cst_124 = arith.constant 5.000000e-01 : f32
    %290 = vector.broadcast %cst_124 : f32 to vector<8x128xf32>
    %291 = arith.mulf %290, %289 : vector<8x128xf32>
    %292 = math.tanh %291 : vector<8x128xf32>
    %cst_125 = arith.constant 5.000000e-01 : f32
    %293 = vector.broadcast %cst_125 : f32 to vector<8x128xf32>
    %294 = arith.mulf %293, %292 : vector<8x128xf32>
    %cst_126 = arith.constant 5.000000e-01 : f32
    %295 = vector.broadcast %cst_126 : f32 to vector<8x128xf32>
    %296 = arith.addf %294, %295 : vector<8x128xf32>
    %297 = vector.extract_strided_slice %280 {offsets = [0, 256], sizes = [8, 128], strides = [1, 1]} : vector<8x512xf32> to vector<8x128xf32>
    %298 = math.tanh %297 : vector<8x128xf32>
    %299 = vector.extract_strided_slice %280 {offsets = [0, 384], sizes = [8, 128], strides = [1, 1]} : vector<8x512xf32> to vector<8x128xf32>
    %cst_127 = arith.constant 5.000000e-01 : f32
    %300 = vector.broadcast %cst_127 : f32 to vector<8x128xf32>
    %301 = arith.mulf %300, %299 : vector<8x128xf32>
    %302 = math.tanh %301 : vector<8x128xf32>
    %cst_128 = arith.constant 5.000000e-01 : f32
    %303 = vector.broadcast %cst_128 : f32 to vector<8x128xf32>
    %304 = arith.mulf %303, %302 : vector<8x128xf32>
    %cst_129 = arith.constant 5.000000e-01 : f32
    %305 = vector.broadcast %cst_129 : f32 to vector<8x128xf32>
    %306 = arith.addf %304, %305 : vector<8x128xf32>
    %307 = arith.mulf %296, %232 : vector<8x128xf32>
    %308 = arith.mulf %288, %298 : vector<8x128xf32>
    %309 = arith.addf %307, %308 : vector<8x128xf32>
    %310 = math.tanh %309 : vector<8x128xf32>
    %311 = arith.mulf %306, %310 : vector<8x128xf32>
    %312 = arith.index_cast %c2_i32 : i32 to index
    %c0_130 = arith.constant 0 : index
    %c0_131 = arith.constant 0 : index
    %313 = vector.load %arg18[%312, %c0_130, %c0_131] : memref<8x8x128xf32, #tpu.memory_space<vmem>>, vector<1x8x128xf32>
    %314 = vector.shape_cast %313 : vector<1x8x128xf32> to vector<8x128xf32>
    %315 = vector.shape_cast %311 : vector<8x128xf32> to vector<1x8x128xf32>
    tpu.vector_store %arg18[%312, %c0_130, %c0_131], %315 {strides = array<i32>} : memref<8x8x128xf32, #tpu.memory_space<vmem>>, vector<1x8x128xf32>,
    %c3_i32 = arith.constant 3 : i32
    %c0_132 = arith.constant 0 : index
    %c0_133 = arith.constant 0 : index
    %316 = vector.load %arg13[%c0_132, %c0_133] : memref<128x512xf32, #tpu.memory_space<vmem>>, vector<128x512xf32>
    %cst_134 = arith.constant dense<0.000000e+00> : vector<8x512xf32>
    %317 = tpu.matmul %311, %316, %cst_134 {dimension_numbers = #tpu.dot_dimension_numbers<[1], [0], [0], [1], [0, 0, 1, 1], [], []>} : vector<8x128xf32>, vector<128x512xf32>, vector<8x512xf32> -> vector<8x512xf32>
    %c0_135 = arith.constant 0 : index
    %c0_136 = arith.constant 0 : index
    %318 = vector.load %arg14[%c0_135, %c0_136] : memref<1x512xf32, #tpu.memory_space<vmem>>, vector<1x512xf32>
    %319 = vector.broadcast %318 : vector<1x512xf32> to vector<8x512xf32>
    %320 = arith.addf %317, %319 : vector<8x512xf32>
    %c0_137 = arith.constant 0 : index
    %c0_138 = arith.constant 0 : index
    %321 = vector.load %arg10[%c0_137, %c0_138] : memref<128x512xf32, #tpu.memory_space<vmem>>, vector<128x512xf32>
    %cst_139 = arith.constant dense<0.000000e+00> : vector<8x512xf32>
    %322 = tpu.matmul %277, %321, %cst_139 {dimension_numbers = #tpu.dot_dimension_numbers<[1], [0], [0], [1], [0, 0, 1, 1], [], []>} : vector<8x128xf32>, vector<128x512xf32>, vector<8x512xf32> -> vector<8x512xf32>
    %323 = arith.addf %83, %322 : vector<8x512xf32>
    %324 = vector.extract_strided_slice %323 {offsets = [0, 0], sizes = [8, 128], strides = [1, 1]} : vector<8x512xf32> to vector<8x128xf32>
    %cst_140 = arith.constant 5.000000e-01 : f32
    %325 = vector.broadcast %cst_140 : f32 to vector<8x128xf32>
    %326 = arith.mulf %325, %324 : vector<8x128xf32>
    %327 = math.tanh %326 : vector<8x128xf32>
    %cst_141 = arith.constant 5.000000e-01 : f32
    %328 = vector.broadcast %cst_141 : f32 to vector<8x128xf32>
    %329 = arith.mulf %328, %327 : vector<8x128xf32>
    %cst_142 = arith.constant 5.000000e-01 : f32
    %330 = vector.broadcast %cst_142 : f32 to vector<8x128xf32>
    %331 = arith.addf %329, %330 : vector<8x128xf32>
    %332 = vector.extract_strided_slice %323 {offsets = [0, 128], sizes = [8, 128], strides = [1, 1]} : vector<8x512xf32> to vector<8x128xf32>
    %cst_143 = arith.constant 5.000000e-01 : f32
    %333 = vector.broadcast %cst_143 : f32 to vector<8x128xf32>
    %334 = arith.mulf %333, %332 : vector<8x128xf32>
    %335 = math.tanh %334 : vector<8x128xf32>
    %cst_144 = arith.constant 5.000000e-01 : f32
    %336 = vector.broadcast %cst_144 : f32 to vector<8x128xf32>
    %337 = arith.mulf %336, %335 : vector<8x128xf32>
    %cst_145 = arith.constant 5.000000e-01 : f32
    %338 = vector.broadcast %cst_145 : f32 to vector<8x128xf32>
    %339 = arith.addf %337, %338 : vector<8x128xf32>
    %340 = vector.extract_strided_slice %323 {offsets = [0, 256], sizes = [8, 128], strides = [1, 1]} : vector<8x512xf32> to vector<8x128xf32>
    %341 = math.tanh %340 : vector<8x128xf32>
    %342 = vector.extract_strided_slice %323 {offsets = [0, 384], sizes = [8, 128], strides = [1, 1]} : vector<8x512xf32> to vector<8x128xf32>
    %cst_146 = arith.constant 5.000000e-01 : f32
    %343 = vector.broadcast %cst_146 : f32 to vector<8x128xf32>
    %344 = arith.mulf %343, %342 : vector<8x128xf32>
    %345 = math.tanh %344 : vector<8x128xf32>
    %cst_147 = arith.constant 5.000000e-01 : f32
    %346 = vector.broadcast %cst_147 : f32 to vector<8x128xf32>
    %347 = arith.mulf %346, %345 : vector<8x128xf32>
    %cst_148 = arith.constant 5.000000e-01 : f32
    %348 = vector.broadcast %cst_148 : f32 to vector<8x128xf32>
    %349 = arith.addf %347, %348 : vector<8x128xf32>
    %350 = arith.mulf %339, %275 : vector<8x128xf32>
    %351 = arith.mulf %331, %341 : vector<8x128xf32>
    %352 = arith.addf %350, %351 : vector<8x128xf32>
    %353 = math.tanh %352 : vector<8x128xf32>
    %354 = arith.mulf %349, %353 : vector<8x128xf32>
    %c0_149 = arith.constant 0 : index
    %c0_150 = arith.constant 0 : index
    %355 = vector.load %arg12[%c0_149, %c0_150] : memref<128x512xf32, #tpu.memory_space<vmem>>, vector<128x512xf32>
    %cst_151 = arith.constant dense<0.000000e+00> : vector<8x512xf32>
    %356 = tpu.matmul %354, %355, %cst_151 {dimension_numbers = #tpu.dot_dimension_numbers<[1], [0], [0], [1], [0, 0, 1, 1], [], []>} : vector<8x128xf32>, vector<128x512xf32>, vector<8x512xf32> -> vector<8x512xf32>
    %357 = arith.addf %320, %356 : vector<8x512xf32>
    %358 = vector.extract_strided_slice %357 {offsets = [0, 0], sizes = [8, 128], strides = [1, 1]} : vector<8x512xf32> to vector<8x128xf32>
    %cst_152 = arith.constant 5.000000e-01 : f32
    %359 = vector.broadcast %cst_152 : f32 to vector<8x128xf32>
    %360 = arith.mulf %359, %358 : vector<8x128xf32>
    %361 = math.tanh %360 : vector<8x128xf32>
    %cst_153 = arith.constant 5.000000e-01 : f32
    %362 = vector.broadcast %cst_153 : f32 to vector<8x128xf32>
    %363 = arith.mulf %362, %361 : vector<8x128xf32>
    %cst_154 = arith.constant 5.000000e-01 : f32
    %364 = vector.broadcast %cst_154 : f32 to vector<8x128xf32>
    %365 = arith.addf %363, %364 : vector<8x128xf32>
    %366 = vector.extract_strided_slice %357 {offsets = [0, 128], sizes = [8, 128], strides = [1, 1]} : vector<8x512xf32> to vector<8x128xf32>
    %cst_155 = arith.constant 5.000000e-01 : f32
    %367 = vector.broadcast %cst_155 : f32 to vector<8x128xf32>
    %368 = arith.mulf %367, %366 : vector<8x128xf32>
    %369 = math.tanh %368 : vector<8x128xf32>
    %cst_156 = arith.constant 5.000000e-01 : f32
    %370 = vector.broadcast %cst_156 : f32 to vector<8x128xf32>
    %371 = arith.mulf %370, %369 : vector<8x128xf32>
    %cst_157 = arith.constant 5.000000e-01 : f32
    %372 = vector.broadcast %cst_157 : f32 to vector<8x128xf32>
    %373 = arith.addf %371, %372 : vector<8x128xf32>
    %374 = vector.extract_strided_slice %357 {offsets = [0, 256], sizes = [8, 128], strides = [1, 1]} : vector<8x512xf32> to vector<8x128xf32>
    %375 = math.tanh %374 : vector<8x128xf32>
    %376 = vector.extract_strided_slice %357 {offsets = [0, 384], sizes = [8, 128], strides = [1, 1]} : vector<8x512xf32> to vector<8x128xf32>
    %cst_158 = arith.constant 5.000000e-01 : f32
    %377 = vector.broadcast %cst_158 : f32 to vector<8x128xf32>
    %378 = arith.mulf %377, %376 : vector<8x128xf32>
    %379 = math.tanh %378 : vector<8x128xf32>
    %cst_159 = arith.constant 5.000000e-01 : f32
    %380 = vector.broadcast %cst_159 : f32 to vector<8x128xf32>
    %381 = arith.mulf %380, %379 : vector<8x128xf32>
    %cst_160 = arith.constant 5.000000e-01 : f32
    %382 = vector.broadcast %cst_160 : f32 to vector<8x128xf32>
    %383 = arith.addf %381, %382 : vector<8x128xf32>
    %384 = arith.mulf %373, %309 : vector<8x128xf32>
    %385 = arith.mulf %365, %375 : vector<8x128xf32>
    %386 = arith.addf %384, %385 : vector<8x128xf32>
    %387 = math.tanh %386 : vector<8x128xf32>
    %388 = arith.mulf %383, %387 : vector<8x128xf32>
    %389 = arith.index_cast %c3_i32 : i32 to index
    %c0_161 = arith.constant 0 : index
    %c0_162 = arith.constant 0 : index
    %390 = vector.load %arg18[%389, %c0_161, %c0_162] : memref<8x8x128xf32, #tpu.memory_space<vmem>>, vector<1x8x128xf32>
    %391 = vector.shape_cast %390 : vector<1x8x128xf32> to vector<8x128xf32>
    %392 = vector.shape_cast %388 : vector<8x128xf32> to vector<1x8x128xf32>
    tpu.vector_store %arg18[%389, %c0_161, %c0_162], %392 {strides = array<i32>} : memref<8x8x128xf32, #tpu.memory_space<vmem>>, vector<1x8x128xf32>,
    %c4_i32_163 = arith.constant 4 : i32
    %c0_164 = arith.constant 0 : index
    %c0_165 = arith.constant 0 : index
    %393 = vector.load %arg13[%c0_164, %c0_165] : memref<128x512xf32, #tpu.memory_space<vmem>>, vector<128x512xf32>
    %cst_166 = arith.constant dense<0.000000e+00> : vector<8x512xf32>
    %394 = tpu.matmul %388, %393, %cst_166 {dimension_numbers = #tpu.dot_dimension_numbers<[1], [0], [0], [1], [0, 0, 1, 1], [], []>} : vector<8x128xf32>, vector<128x512xf32>, vector<8x512xf32> -> vector<8x512xf32>
    %c0_167 = arith.constant 0 : index
    %c0_168 = arith.constant 0 : index
    %395 = vector.load %arg14[%c0_167, %c0_168] : memref<1x512xf32, #tpu.memory_space<vmem>>, vector<1x512xf32>
    %396 = vector.broadcast %395 : vector<1x512xf32> to vector<8x512xf32>
    %397 = arith.addf %394, %396 : vector<8x512xf32>
    %c0_169 = arith.constant 0 : index
    %c0_170 = arith.constant 0 : index
    %398 = vector.load %arg10[%c0_169, %c0_170] : memref<128x512xf32, #tpu.memory_space<vmem>>, vector<128x512xf32>
    %cst_171 = arith.constant dense<0.000000e+00> : vector<8x512xf32>
    %399 = tpu.matmul %354, %398, %cst_171 {dimension_numbers = #tpu.dot_dimension_numbers<[1], [0], [0], [1], [0, 0, 1, 1], [], []>} : vector<8x128xf32>, vector<128x512xf32>, vector<8x512xf32> -> vector<8x512xf32>
    %400 = arith.addf %83, %399 : vector<8x512xf32>
    %401 = vector.extract_strided_slice %400 {offsets = [0, 0], sizes = [8, 128], strides = [1, 1]} : vector<8x512xf32> to vector<8x128xf32>
    %cst_172 = arith.constant 5.000000e-01 : f32
    %402 = vector.broadcast %cst_172 : f32 to vector<8x128xf32>
    %403 = arith.mulf %402, %401 : vector<8x128xf32>
    %404 = math.tanh %403 : vector<8x128xf32>
    %cst_173 = arith.constant 5.000000e-01 : f32
    %405 = vector.broadcast %cst_173 : f32 to vector<8x128xf32>
    %406 = arith.mulf %405, %404 : vector<8x128xf32>
    %cst_174 = arith.constant 5.000000e-01 : f32
    %407 = vector.broadcast %cst_174 : f32 to vector<8x128xf32>
    %408 = arith.addf %406, %407 : vector<8x128xf32>
    %409 = vector.extract_strided_slice %400 {offsets = [0, 128], sizes = [8, 128], strides = [1, 1]} : vector<8x512xf32> to vector<8x128xf32>
    %cst_175 = arith.constant 5.000000e-01 : f32
    %410 = vector.broadcast %cst_175 : f32 to vector<8x128xf32>
    %411 = arith.mulf %410, %409 : vector<8x128xf32>
    %412 = math.tanh %411 : vector<8x128xf32>
    %cst_176 = arith.constant 5.000000e-01 : f32
    %413 = vector.broadcast %cst_176 : f32 to vector<8x128xf32>
    %414 = arith.mulf %413, %412 : vector<8x128xf32>
    %cst_177 = arith.constant 5.000000e-01 : f32
    %415 = vector.broadcast %cst_177 : f32 to vector<8x128xf32>
    %416 = arith.addf %414, %415 : vector<8x128xf32>
    %417 = vector.extract_strided_slice %400 {offsets = [0, 256], sizes = [8, 128], strides = [1, 1]} : vector<8x512xf32> to vector<8x128xf32>
    %418 = math.tanh %417 : vector<8x128xf32>
    %419 = vector.extract_strided_slice %400 {offsets = [0, 384], sizes = [8, 128], strides = [1, 1]} : vector<8x512xf32> to vector<8x128xf32>
    %cst_178 = arith.constant 5.000000e-01 : f32
    %420 = vector.broadcast %cst_178 : f32 to vector<8x128xf32>
    %421 = arith.mulf %420, %419 : vector<8x128xf32>
    %422 = math.tanh %421 : vector<8x128xf32>
    %cst_179 = arith.constant 5.000000e-01 : f32
    %423 = vector.broadcast %cst_179 : f32 to vector<8x128xf32>
    %424 = arith.mulf %423, %422 : vector<8x128xf32>
    %cst_180 = arith.constant 5.000000e-01 : f32
    %425 = vector.broadcast %cst_180 : f32 to vector<8x128xf32>
    %426 = arith.addf %424, %425 : vector<8x128xf32>
    %427 = arith.mulf %416, %352 : vector<8x128xf32>
    %428 = arith.mulf %408, %418 : vector<8x128xf32>
    %429 = arith.addf %427, %428 : vector<8x128xf32>
    %430 = math.tanh %429 : vector<8x128xf32>
    %431 = arith.mulf %426, %430 : vector<8x128xf32>
    %c0_181 = arith.constant 0 : index
    %c0_182 = arith.constant 0 : index
    %432 = vector.load %arg12[%c0_181, %c0_182] : memref<128x512xf32, #tpu.memory_space<vmem>>, vector<128x512xf32>
    %cst_183 = arith.constant dense<0.000000e+00> : vector<8x512xf32>
    %433 = tpu.matmul %431, %432, %cst_183 {dimension_numbers = #tpu.dot_dimension_numbers<[1], [0], [0], [1], [0, 0, 1, 1], [], []>} : vector<8x128xf32>, vector<128x512xf32>, vector<8x512xf32> -> vector<8x512xf32>
    %434 = arith.addf %397, %433 : vector<8x512xf32>
    %435 = vector.extract_strided_slice %434 {offsets = [0, 0], sizes = [8, 128], strides = [1, 1]} : vector<8x512xf32> to vector<8x128xf32>
    %cst_184 = arith.constant 5.000000e-01 : f32
    %436 = vector.broadcast %cst_184 : f32 to vector<8x128xf32>
    %437 = arith.mulf %436, %435 : vector<8x128xf32>
    %438 = math.tanh %437 : vector<8x128xf32>
    %cst_185 = arith.constant 5.000000e-01 : f32
    %439 = vector.broadcast %cst_185 : f32 to vector<8x128xf32>
    %440 = arith.mulf %439, %438 : vector<8x128xf32>
    %cst_186 = arith.constant 5.000000e-01 : f32
    %441 = vector.broadcast %cst_186 : f32 to vector<8x128xf32>
    %442 = arith.addf %440, %441 : vector<8x128xf32>
    %443 = vector.extract_strided_slice %434 {offsets = [0, 128], sizes = [8, 128], strides = [1, 1]} : vector<8x512xf32> to vector<8x128xf32>
    %cst_187 = arith.constant 5.000000e-01 : f32
    %444 = vector.broadcast %cst_187 : f32 to vector<8x128xf32>
    %445 = arith.mulf %444, %443 : vector<8x128xf32>
    %446 = math.tanh %445 : vector<8x128xf32>
    %cst_188 = arith.constant 5.000000e-01 : f32
    %447 = vector.broadcast %cst_188 : f32 to vector<8x128xf32>
    %448 = arith.mulf %447, %446 : vector<8x128xf32>
    %cst_189 = arith.constant 5.000000e-01 : f32
    %449 = vector.broadcast %cst_189 : f32 to vector<8x128xf32>
    %450 = arith.addf %448, %449 : vector<8x128xf32>
    %451 = vector.extract_strided_slice %434 {offsets = [0, 256], sizes = [8, 128], strides = [1, 1]} : vector<8x512xf32> to vector<8x128xf32>
    %452 = math.tanh %451 : vector<8x128xf32>
    %453 = vector.extract_strided_slice %434 {offsets = [0, 384], sizes = [8, 128], strides = [1, 1]} : vector<8x512xf32> to vector<8x128xf32>
    %cst_190 = arith.constant 5.000000e-01 : f32
    %454 = vector.broadcast %cst_190 : f32 to vector<8x128xf32>
    %455 = arith.mulf %454, %453 : vector<8x128xf32>
    %456 = math.tanh %455 : vector<8x128xf32>
    %cst_191 = arith.constant 5.000000e-01 : f32
    %457 = vector.broadcast %cst_191 : f32 to vector<8x128xf32>
    %458 = arith.mulf %457, %456 : vector<8x128xf32>
    %cst_192 = arith.constant 5.000000e-01 : f32
    %459 = vector.broadcast %cst_192 : f32 to vector<8x128xf32>
    %460 = arith.addf %458, %459 : vector<8x128xf32>
    %461 = arith.mulf %450, %386 : vector<8x128xf32>
    %462 = arith.mulf %442, %452 : vector<8x128xf32>
    %463 = arith.addf %461, %462 : vector<8x128xf32>
    %464 = math.tanh %463 : vector<8x128xf32>
    %465 = arith.mulf %460, %464 : vector<8x128xf32>
    %466 = arith.index_cast %c4_i32_163 : i32 to index
    %c0_193 = arith.constant 0 : index
    %c0_194 = arith.constant 0 : index
    %467 = vector.load %arg18[%466, %c0_193, %c0_194] : memref<8x8x128xf32, #tpu.memory_space<vmem>>, vector<1x8x128xf32>
    %468 = vector.shape_cast %467 : vector<1x8x128xf32> to vector<8x128xf32>
    %469 = vector.shape_cast %465 : vector<8x128xf32> to vector<1x8x128xf32>
    tpu.vector_store %arg18[%466, %c0_193, %c0_194], %469 {strides = array<i32>} : memref<8x8x128xf32, #tpu.memory_space<vmem>>, vector<1x8x128xf32>,
    %c5_i32 = arith.constant 5 : i32
    %c0_195 = arith.constant 0 : index
    %c0_196 = arith.constant 0 : index
    %470 = vector.load %arg13[%c0_195, %c0_196] : memref<128x512xf32, #tpu.memory_space<vmem>>, vector<128x512xf32>
    %cst_197 = arith.constant dense<0.000000e+00> : vector<8x512xf32>
    %471 = tpu.matmul %465, %470, %cst_197 {dimension_numbers = #tpu.dot_dimension_numbers<[1], [0], [0], [1], [0, 0, 1, 1], [], []>} : vector<8x128xf32>, vector<128x512xf32>, vector<8x512xf32> -> vector<8x512xf32>
    %c0_198 = arith.constant 0 : index
    %c0_199 = arith.constant 0 : index
    %472 = vector.load %arg14[%c0_198, %c0_199] : memref<1x512xf32, #tpu.memory_space<vmem>>, vector<1x512xf32>
    %473 = vector.broadcast %472 : vector<1x512xf32> to vector<8x512xf32>
    %474 = arith.addf %471, %473 : vector<8x512xf32>
    %c0_200 = arith.constant 0 : index
    %c0_201 = arith.constant 0 : index
    %475 = vector.load %arg10[%c0_200, %c0_201] : memref<128x512xf32, #tpu.memory_space<vmem>>, vector<128x512xf32>
    %cst_202 = arith.constant dense<0.000000e+00> : vector<8x512xf32>
    %476 = tpu.matmul %431, %475, %cst_202 {dimension_numbers = #tpu.dot_dimension_numbers<[1], [0], [0], [1], [0, 0, 1, 1], [], []>} : vector<8x128xf32>, vector<128x512xf32>, vector<8x512xf32> -> vector<8x512xf32>
    %477 = arith.addf %83, %476 : vector<8x512xf32>
    %478 = vector.extract_strided_slice %477 {offsets = [0, 0], sizes = [8, 128], strides = [1, 1]} : vector<8x512xf32> to vector<8x128xf32>
    %cst_203 = arith.constant 5.000000e-01 : f32
    %479 = vector.broadcast %cst_203 : f32 to vector<8x128xf32>
    %480 = arith.mulf %479, %478 : vector<8x128xf32>
    %481 = math.tanh %480 : vector<8x128xf32>
    %cst_204 = arith.constant 5.000000e-01 : f32
    %482 = vector.broadcast %cst_204 : f32 to vector<8x128xf32>
    %483 = arith.mulf %482, %481 : vector<8x128xf32>
    %cst_205 = arith.constant 5.000000e-01 : f32
    %484 = vector.broadcast %cst_205 : f32 to vector<8x128xf32>
    %485 = arith.addf %483, %484 : vector<8x128xf32>
    %486 = vector.extract_strided_slice %477 {offsets = [0, 128], sizes = [8, 128], strides = [1, 1]} : vector<8x512xf32> to vector<8x128xf32>
    %cst_206 = arith.constant 5.000000e-01 : f32
    %487 = vector.broadcast %cst_206 : f32 to vector<8x128xf32>
    %488 = arith.mulf %487, %486 : vector<8x128xf32>
    %489 = math.tanh %488 : vector<8x128xf32>
    %cst_207 = arith.constant 5.000000e-01 : f32
    %490 = vector.broadcast %cst_207 : f32 to vector<8x128xf32>
    %491 = arith.mulf %490, %489 : vector<8x128xf32>
    %cst_208 = arith.constant 5.000000e-01 : f32
    %492 = vector.broadcast %cst_208 : f32 to vector<8x128xf32>
    %493 = arith.addf %491, %492 : vector<8x128xf32>
    %494 = vector.extract_strided_slice %477 {offsets = [0, 256], sizes = [8, 128], strides = [1, 1]} : vector<8x512xf32> to vector<8x128xf32>
    %495 = math.tanh %494 : vector<8x128xf32>
    %496 = vector.extract_strided_slice %477 {offsets = [0, 384], sizes = [8, 128], strides = [1, 1]} : vector<8x512xf32> to vector<8x128xf32>
    %cst_209 = arith.constant 5.000000e-01 : f32
    %497 = vector.broadcast %cst_209 : f32 to vector<8x128xf32>
    %498 = arith.mulf %497, %496 : vector<8x128xf32>
    %499 = math.tanh %498 : vector<8x128xf32>
    %cst_210 = arith.constant 5.000000e-01 : f32
    %500 = vector.broadcast %cst_210 : f32 to vector<8x128xf32>
    %501 = arith.mulf %500, %499 : vector<8x128xf32>
    %cst_211 = arith.constant 5.000000e-01 : f32
    %502 = vector.broadcast %cst_211 : f32 to vector<8x128xf32>
    %503 = arith.addf %501, %502 : vector<8x128xf32>
    %504 = arith.mulf %493, %429 : vector<8x128xf32>
    %505 = arith.mulf %485, %495 : vector<8x128xf32>
    %506 = arith.addf %504, %505 : vector<8x128xf32>
    %507 = math.tanh %506 : vector<8x128xf32>
    %508 = arith.mulf %503, %507 : vector<8x128xf32>
    %c0_212 = arith.constant 0 : index
    %c0_213 = arith.constant 0 : index
    %509 = vector.load %arg12[%c0_212, %c0_213] : memref<128x512xf32, #tpu.memory_space<vmem>>, vector<128x512xf32>
    %cst_214 = arith.constant dense<0.000000e+00> : vector<8x512xf32>
    %510 = tpu.matmul %508, %509, %cst_214 {dimension_numbers = #tpu.dot_dimension_numbers<[1], [0], [0], [1], [0, 0, 1, 1], [], []>} : vector<8x128xf32>, vector<128x512xf32>, vector<8x512xf32> -> vector<8x512xf32>
    %511 = arith.addf %474, %510 : vector<8x512xf32>
    %512 = vector.extract_strided_slice %511 {offsets = [0, 0], sizes = [8, 128], strides = [1, 1]} : vector<8x512xf32> to vector<8x128xf32>
    %cst_215 = arith.constant 5.000000e-01 : f32
    %513 = vector.broadcast %cst_215 : f32 to vector<8x128xf32>
    %514 = arith.mulf %513, %512 : vector<8x128xf32>
    %515 = math.tanh %514 : vector<8x128xf32>
    %cst_216 = arith.constant 5.000000e-01 : f32
    %516 = vector.broadcast %cst_216 : f32 to vector<8x128xf32>
    %517 = arith.mulf %516, %515 : vector<8x128xf32>
    %cst_217 = arith.constant 5.000000e-01 : f32
    %518 = vector.broadcast %cst_217 : f32 to vector<8x128xf32>
    %519 = arith.addf %517, %518 : vector<8x128xf32>
    %520 = vector.extract_strided_slice %511 {offsets = [0, 128], sizes = [8, 128], strides = [1, 1]} : vector<8x512xf32> to vector<8x128xf32>
    %cst_218 = arith.constant 5.000000e-01 : f32
    %521 = vector.broadcast %cst_218 : f32 to vector<8x128xf32>
    %522 = arith.mulf %521, %520 : vector<8x128xf32>
    %523 = math.tanh %522 : vector<8x128xf32>
    %cst_219 = arith.constant 5.000000e-01 : f32
    %524 = vector.broadcast %cst_219 : f32 to vector<8x128xf32>
    %525 = arith.mulf %524, %523 : vector<8x128xf32>
    %cst_220 = arith.constant 5.000000e-01 : f32
    %526 = vector.broadcast %cst_220 : f32 to vector<8x128xf32>
    %527 = arith.addf %525, %526 : vector<8x128xf32>
    %528 = vector.extract_strided_slice %511 {offsets = [0, 256], sizes = [8, 128], strides = [1, 1]} : vector<8x512xf32> to vector<8x128xf32>
    %529 = math.tanh %528 : vector<8x128xf32>
    %530 = vector.extract_strided_slice %511 {offsets = [0, 384], sizes = [8, 128], strides = [1, 1]} : vector<8x512xf32> to vector<8x128xf32>
    %cst_221 = arith.constant 5.000000e-01 : f32
    %531 = vector.broadcast %cst_221 : f32 to vector<8x128xf32>
    %532 = arith.mulf %531, %530 : vector<8x128xf32>
    %533 = math.tanh %532 : vector<8x128xf32>
    %cst_222 = arith.constant 5.000000e-01 : f32
    %534 = vector.broadcast %cst_222 : f32 to vector<8x128xf32>
    %535 = arith.mulf %534, %533 : vector<8x128xf32>
    %cst_223 = arith.constant 5.000000e-01 : f32
    %536 = vector.broadcast %cst_223 : f32 to vector<8x128xf32>
    %537 = arith.addf %535, %536 : vector<8x128xf32>
    %538 = arith.mulf %527, %463 : vector<8x128xf32>
    %539 = arith.mulf %519, %529 : vector<8x128xf32>
    %540 = arith.addf %538, %539 : vector<8x128xf32>
    %541 = math.tanh %540 : vector<8x128xf32>
    %542 = arith.mulf %537, %541 : vector<8x128xf32>
    %543 = arith.index_cast %c5_i32 : i32 to index
    %c0_224 = arith.constant 0 : index
    %c0_225 = arith.constant 0 : index
    %544 = vector.load %arg18[%543, %c0_224, %c0_225] : memref<8x8x128xf32, #tpu.memory_space<vmem>>, vector<1x8x128xf32>
    %545 = vector.shape_cast %544 : vector<1x8x128xf32> to vector<8x128xf32>
    %546 = vector.shape_cast %542 : vector<8x128xf32> to vector<1x8x128xf32>
    tpu.vector_store %arg18[%543, %c0_224, %c0_225], %546 {strides = array<i32>} : memref<8x8x128xf32, #tpu.memory_space<vmem>>, vector<1x8x128xf32>,
    %c6_i32 = arith.constant 6 : i32
    %c0_226 = arith.constant 0 : index
    %c0_227 = arith.constant 0 : index
    %547 = vector.load %arg13[%c0_226, %c0_227] : memref<128x512xf32, #tpu.memory_space<vmem>>, vector<128x512xf32>
    %cst_228 = arith.constant dense<0.000000e+00> : vector<8x512xf32>
    %548 = tpu.matmul %542, %547, %cst_228 {dimension_numbers = #tpu.dot_dimension_numbers<[1], [0], [0], [1], [0, 0, 1, 1], [], []>} : vector<8x128xf32>, vector<128x512xf32>, vector<8x512xf32> -> vector<8x512xf32>
    %c0_229 = arith.constant 0 : index
    %c0_230 = arith.constant 0 : index
    %549 = vector.load %arg14[%c0_229, %c0_230] : memref<1x512xf32, #tpu.memory_space<vmem>>, vector<1x512xf32>
    %550 = vector.broadcast %549 : vector<1x512xf32> to vector<8x512xf32>
    %551 = arith.addf %548, %550 : vector<8x512xf32>
    %c0_231 = arith.constant 0 : index
    %c0_232 = arith.constant 0 : index
    %552 = vector.load %arg10[%c0_231, %c0_232] : memref<128x512xf32, #tpu.memory_space<vmem>>, vector<128x512xf32>
    %cst_233 = arith.constant dense<0.000000e+00> : vector<8x512xf32>
    %553 = tpu.matmul %508, %552, %cst_233 {dimension_numbers = #tpu.dot_dimension_numbers<[1], [0], [0], [1], [0, 0, 1, 1], [], []>} : vector<8x128xf32>, vector<128x512xf32>, vector<8x512xf32> -> vector<8x512xf32>
    %554 = arith.addf %83, %553 : vector<8x512xf32>
    %555 = vector.extract_strided_slice %554 {offsets = [0, 0], sizes = [8, 128], strides = [1, 1]} : vector<8x512xf32> to vector<8x128xf32>
    %cst_234 = arith.constant 5.000000e-01 : f32
    %556 = vector.broadcast %cst_234 : f32 to vector<8x128xf32>
    %557 = arith.mulf %556, %555 : vector<8x128xf32>
    %558 = math.tanh %557 : vector<8x128xf32>
    %cst_235 = arith.constant 5.000000e-01 : f32
    %559 = vector.broadcast %cst_235 : f32 to vector<8x128xf32>
    %560 = arith.mulf %559, %558 : vector<8x128xf32>
    %cst_236 = arith.constant 5.000000e-01 : f32
    %561 = vector.broadcast %cst_236 : f32 to vector<8x128xf32>
    %562 = arith.addf %560, %561 : vector<8x128xf32>
    %563 = vector.extract_strided_slice %554 {offsets = [0, 128], sizes = [8, 128], strides = [1, 1]} : vector<8x512xf32> to vector<8x128xf32>
    %cst_237 = arith.constant 5.000000e-01 : f32
    %564 = vector.broadcast %cst_237 : f32 to vector<8x128xf32>
    %565 = arith.mulf %564, %563 : vector<8x128xf32>
    %566 = math.tanh %565 : vector<8x128xf32>
    %cst_238 = arith.constant 5.000000e-01 : f32
    %567 = vector.broadcast %cst_238 : f32 to vector<8x128xf32>
    %568 = arith.mulf %567, %566 : vector<8x128xf32>
    %cst_239 = arith.constant 5.000000e-01 : f32
    %569 = vector.broadcast %cst_239 : f32 to vector<8x128xf32>
    %570 = arith.addf %568, %569 : vector<8x128xf32>
    %571 = vector.extract_strided_slice %554 {offsets = [0, 256], sizes = [8, 128], strides = [1, 1]} : vector<8x512xf32> to vector<8x128xf32>
    %572 = math.tanh %571 : vector<8x128xf32>
    %573 = vector.extract_strided_slice %554 {offsets = [0, 384], sizes = [8, 128], strides = [1, 1]} : vector<8x512xf32> to vector<8x128xf32>
    %cst_240 = arith.constant 5.000000e-01 : f32
    %574 = vector.broadcast %cst_240 : f32 to vector<8x128xf32>
    %575 = arith.mulf %574, %573 : vector<8x128xf32>
    %576 = math.tanh %575 : vector<8x128xf32>
    %cst_241 = arith.constant 5.000000e-01 : f32
    %577 = vector.broadcast %cst_241 : f32 to vector<8x128xf32>
    %578 = arith.mulf %577, %576 : vector<8x128xf32>
    %cst_242 = arith.constant 5.000000e-01 : f32
    %579 = vector.broadcast %cst_242 : f32 to vector<8x128xf32>
    %580 = arith.addf %578, %579 : vector<8x128xf32>
    %581 = arith.mulf %570, %506 : vector<8x128xf32>
    %582 = arith.mulf %562, %572 : vector<8x128xf32>
    %583 = arith.addf %581, %582 : vector<8x128xf32>
    %584 = math.tanh %583 : vector<8x128xf32>
    %585 = arith.mulf %580, %584 : vector<8x128xf32>
    %c0_243 = arith.constant 0 : index
    %c0_244 = arith.constant 0 : index
    %586 = vector.load %arg12[%c0_243, %c0_244] : memref<128x512xf32, #tpu.memory_space<vmem>>, vector<128x512xf32>
    %cst_245 = arith.constant dense<0.000000e+00> : vector<8x512xf32>
    %587 = tpu.matmul %585, %586, %cst_245 {dimension_numbers = #tpu.dot_dimension_numbers<[1], [0], [0], [1], [0, 0, 1, 1], [], []>} : vector<8x128xf32>, vector<128x512xf32>, vector<8x512xf32> -> vector<8x512xf32>
    %588 = arith.addf %551, %587 : vector<8x512xf32>
    %589 = vector.extract_strided_slice %588 {offsets = [0, 0], sizes = [8, 128], strides = [1, 1]} : vector<8x512xf32> to vector<8x128xf32>
    %cst_246 = arith.constant 5.000000e-01 : f32
    %590 = vector.broadcast %cst_246 : f32 to vector<8x128xf32>
    %591 = arith.mulf %590, %589 : vector<8x128xf32>
    %592 = math.tanh %591 : vector<8x128xf32>
    %cst_247 = arith.constant 5.000000e-01 : f32
    %593 = vector.broadcast %cst_247 : f32 to vector<8x128xf32>
    %594 = arith.mulf %593, %592 : vector<8x128xf32>
    %cst_248 = arith.constant 5.000000e-01 : f32
    %595 = vector.broadcast %cst_248 : f32 to vector<8x128xf32>
    %596 = arith.addf %594, %595 : vector<8x128xf32>
    %597 = vector.extract_strided_slice %588 {offsets = [0, 128], sizes = [8, 128], strides = [1, 1]} : vector<8x512xf32> to vector<8x128xf32>
    %cst_249 = arith.constant 5.000000e-01 : f32
    %598 = vector.broadcast %cst_249 : f32 to vector<8x128xf32>
    %599 = arith.mulf %598, %597 : vector<8x128xf32>
    %600 = math.tanh %599 : vector<8x128xf32>
    %cst_250 = arith.constant 5.000000e-01 : f32
    %601 = vector.broadcast %cst_250 : f32 to vector<8x128xf32>
    %602 = arith.mulf %601, %600 : vector<8x128xf32>
    %cst_251 = arith.constant 5.000000e-01 : f32
    %603 = vector.broadcast %cst_251 : f32 to vector<8x128xf32>
    %604 = arith.addf %602, %603 : vector<8x128xf32>
    %605 = vector.extract_strided_slice %588 {offsets = [0, 256], sizes = [8, 128], strides = [1, 1]} : vector<8x512xf32> to vector<8x128xf32>
    %606 = math.tanh %605 : vector<8x128xf32>
    %607 = vector.extract_strided_slice %588 {offsets = [0, 384], sizes = [8, 128], strides = [1, 1]} : vector<8x512xf32> to vector<8x128xf32>
    %cst_252 = arith.constant 5.000000e-01 : f32
    %608 = vector.broadcast %cst_252 : f32 to vector<8x128xf32>
    %609 = arith.mulf %608, %607 : vector<8x128xf32>
    %610 = math.tanh %609 : vector<8x128xf32>
    %cst_253 = arith.constant 5.000000e-01 : f32
    %611 = vector.broadcast %cst_253 : f32 to vector<8x128xf32>
    %612 = arith.mulf %611, %610 : vector<8x128xf32>
    %cst_254 = arith.constant 5.000000e-01 : f32
    %613 = vector.broadcast %cst_254 : f32 to vector<8x128xf32>
    %614 = arith.addf %612, %613 : vector<8x128xf32>
    %615 = arith.mulf %604, %540 : vector<8x128xf32>
    %616 = arith.mulf %596, %606 : vector<8x128xf32>
    %617 = arith.addf %615, %616 : vector<8x128xf32>
    %618 = math.tanh %617 : vector<8x128xf32>
    %619 = arith.mulf %614, %618 : vector<8x128xf32>
    %620 = arith.index_cast %c6_i32 : i32 to index
    %c0_255 = arith.constant 0 : index
    %c0_256 = arith.constant 0 : index
    %621 = vector.load %arg18[%620, %c0_255, %c0_256] : memref<8x8x128xf32, #tpu.memory_space<vmem>>, vector<1x8x128xf32>
    %622 = vector.shape_cast %621 : vector<1x8x128xf32> to vector<8x128xf32>
    %623 = vector.shape_cast %619 : vector<8x128xf32> to vector<1x8x128xf32>
    tpu.vector_store %arg18[%620, %c0_255, %c0_256], %623 {strides = array<i32>} : memref<8x8x128xf32, #tpu.memory_space<vmem>>, vector<1x8x128xf32>,
    %c7_i32 = arith.constant 7 : i32
    %c0_257 = arith.constant 0 : index
    %c0_258 = arith.constant 0 : index
    %624 = vector.load %arg13[%c0_257, %c0_258] : memref<128x512xf32, #tpu.memory_space<vmem>>, vector<128x512xf32>
    %cst_259 = arith.constant dense<0.000000e+00> : vector<8x512xf32>
    %625 = tpu.matmul %619, %624, %cst_259 {dimension_numbers = #tpu.dot_dimension_numbers<[1], [0], [0], [1], [0, 0, 1, 1], [], []>} : vector<8x128xf32>, vector<128x512xf32>, vector<8x512xf32> -> vector<8x512xf32>
    %c0_260 = arith.constant 0 : index
    %c0_261 = arith.constant 0 : index
    %626 = vector.load %arg14[%c0_260, %c0_261] : memref<1x512xf32, #tpu.memory_space<vmem>>, vector<1x512xf32>
    %627 = vector.broadcast %626 : vector<1x512xf32> to vector<8x512xf32>
    %628 = arith.addf %625, %627 : vector<8x512xf32>
    %c0_262 = arith.constant 0 : index
    %c0_263 = arith.constant 0 : index
    %629 = vector.load %arg10[%c0_262, %c0_263] : memref<128x512xf32, #tpu.memory_space<vmem>>, vector<128x512xf32>
    %cst_264 = arith.constant dense<0.000000e+00> : vector<8x512xf32>
    %630 = tpu.matmul %585, %629, %cst_264 {dimension_numbers = #tpu.dot_dimension_numbers<[1], [0], [0], [1], [0, 0, 1, 1], [], []>} : vector<8x128xf32>, vector<128x512xf32>, vector<8x512xf32> -> vector<8x512xf32>
    %631 = arith.addf %83, %630 : vector<8x512xf32>
    %632 = vector.extract_strided_slice %631 {offsets = [0, 0], sizes = [8, 128], strides = [1, 1]} : vector<8x512xf32> to vector<8x128xf32>
    %cst_265 = arith.constant 5.000000e-01 : f32
    %633 = vector.broadcast %cst_265 : f32 to vector<8x128xf32>
    %634 = arith.mulf %633, %632 : vector<8x128xf32>
    %635 = math.tanh %634 : vector<8x128xf32>
    %cst_266 = arith.constant 5.000000e-01 : f32
    %636 = vector.broadcast %cst_266 : f32 to vector<8x128xf32>
    %637 = arith.mulf %636, %635 : vector<8x128xf32>
    %cst_267 = arith.constant 5.000000e-01 : f32
    %638 = vector.broadcast %cst_267 : f32 to vector<8x128xf32>
    %639 = arith.addf %637, %638 : vector<8x128xf32>
    %640 = vector.extract_strided_slice %631 {offsets = [0, 128], sizes = [8, 128], strides = [1, 1]} : vector<8x512xf32> to vector<8x128xf32>
    %cst_268 = arith.constant 5.000000e-01 : f32
    %641 = vector.broadcast %cst_268 : f32 to vector<8x128xf32>
    %642 = arith.mulf %641, %640 : vector<8x128xf32>
    %643 = math.tanh %642 : vector<8x128xf32>
    %cst_269 = arith.constant 5.000000e-01 : f32
    %644 = vector.broadcast %cst_269 : f32 to vector<8x128xf32>
    %645 = arith.mulf %644, %643 : vector<8x128xf32>
    %cst_270 = arith.constant 5.000000e-01 : f32
    %646 = vector.broadcast %cst_270 : f32 to vector<8x128xf32>
    %647 = arith.addf %645, %646 : vector<8x128xf32>
    %648 = vector.extract_strided_slice %631 {offsets = [0, 256], sizes = [8, 128], strides = [1, 1]} : vector<8x512xf32> to vector<8x128xf32>
    %649 = math.tanh %648 : vector<8x128xf32>
    %650 = vector.extract_strided_slice %631 {offsets = [0, 384], sizes = [8, 128], strides = [1, 1]} : vector<8x512xf32> to vector<8x128xf32>
    %cst_271 = arith.constant 5.000000e-01 : f32
    %651 = vector.broadcast %cst_271 : f32 to vector<8x128xf32>
    %652 = arith.mulf %651, %650 : vector<8x128xf32>
    %653 = math.tanh %652 : vector<8x128xf32>
    %cst_272 = arith.constant 5.000000e-01 : f32
    %654 = vector.broadcast %cst_272 : f32 to vector<8x128xf32>
    %655 = arith.mulf %654, %653 : vector<8x128xf32>
    %cst_273 = arith.constant 5.000000e-01 : f32
    %656 = vector.broadcast %cst_273 : f32 to vector<8x128xf32>
    %657 = arith.addf %655, %656 : vector<8x128xf32>
    %658 = arith.mulf %647, %583 : vector<8x128xf32>
    %659 = arith.mulf %639, %649 : vector<8x128xf32>
    %660 = arith.addf %658, %659 : vector<8x128xf32>
    %661 = math.tanh %660 : vector<8x128xf32>
    %662 = arith.mulf %657, %661 : vector<8x128xf32>
    %c0_274 = arith.constant 0 : index
    %c0_275 = arith.constant 0 : index
    %663 = vector.load %arg12[%c0_274, %c0_275] : memref<128x512xf32, #tpu.memory_space<vmem>>, vector<128x512xf32>
    %cst_276 = arith.constant dense<0.000000e+00> : vector<8x512xf32>
    %664 = tpu.matmul %662, %663, %cst_276 {dimension_numbers = #tpu.dot_dimension_numbers<[1], [0], [0], [1], [0, 0, 1, 1], [], []>} : vector<8x128xf32>, vector<128x512xf32>, vector<8x512xf32> -> vector<8x512xf32>
    %665 = arith.addf %628, %664 : vector<8x512xf32>
    %666 = vector.extract_strided_slice %665 {offsets = [0, 0], sizes = [8, 128], strides = [1, 1]} : vector<8x512xf32> to vector<8x128xf32>
    %cst_277 = arith.constant 5.000000e-01 : f32
    %667 = vector.broadcast %cst_277 : f32 to vector<8x128xf32>
    %668 = arith.mulf %667, %666 : vector<8x128xf32>
    %669 = math.tanh %668 : vector<8x128xf32>
    %cst_278 = arith.constant 5.000000e-01 : f32
    %670 = vector.broadcast %cst_278 : f32 to vector<8x128xf32>
    %671 = arith.mulf %670, %669 : vector<8x128xf32>
    %cst_279 = arith.constant 5.000000e-01 : f32
    %672 = vector.broadcast %cst_279 : f32 to vector<8x128xf32>
    %673 = arith.addf %671, %672 : vector<8x128xf32>
    %674 = vector.extract_strided_slice %665 {offsets = [0, 128], sizes = [8, 128], strides = [1, 1]} : vector<8x512xf32> to vector<8x128xf32>
    %cst_280 = arith.constant 5.000000e-01 : f32
    %675 = vector.broadcast %cst_280 : f32 to vector<8x128xf32>
    %676 = arith.mulf %675, %674 : vector<8x128xf32>
    %677 = math.tanh %676 : vector<8x128xf32>
    %cst_281 = arith.constant 5.000000e-01 : f32
    %678 = vector.broadcast %cst_281 : f32 to vector<8x128xf32>
    %679 = arith.mulf %678, %677 : vector<8x128xf32>
    %cst_282 = arith.constant 5.000000e-01 : f32
    %680 = vector.broadcast %cst_282 : f32 to vector<8x128xf32>
    %681 = arith.addf %679, %680 : vector<8x128xf32>
    %682 = vector.extract_strided_slice %665 {offsets = [0, 256], sizes = [8, 128], strides = [1, 1]} : vector<8x512xf32> to vector<8x128xf32>
    %683 = math.tanh %682 : vector<8x128xf32>
    %684 = vector.extract_strided_slice %665 {offsets = [0, 384], sizes = [8, 128], strides = [1, 1]} : vector<8x512xf32> to vector<8x128xf32>
    %cst_283 = arith.constant 5.000000e-01 : f32
    %685 = vector.broadcast %cst_283 : f32 to vector<8x128xf32>
    %686 = arith.mulf %685, %684 : vector<8x128xf32>
    %687 = math.tanh %686 : vector<8x128xf32>
    %cst_284 = arith.constant 5.000000e-01 : f32
    %688 = vector.broadcast %cst_284 : f32 to vector<8x128xf32>
    %689 = arith.mulf %688, %687 : vector<8x128xf32>
    %cst_285 = arith.constant 5.000000e-01 : f32
    %690 = vector.broadcast %cst_285 : f32 to vector<8x128xf32>
    %691 = arith.addf %689, %690 : vector<8x128xf32>
    %692 = arith.mulf %681, %617 : vector<8x128xf32>
    %693 = arith.mulf %673, %683 : vector<8x128xf32>
    %694 = arith.addf %692, %693 : vector<8x128xf32>
    %695 = math.tanh %694 : vector<8x128xf32>
    %696 = arith.mulf %691, %695 : vector<8x128xf32>
    %697 = arith.index_cast %c7_i32 : i32 to index
    %c0_286 = arith.constant 0 : index
    %c0_287 = arith.constant 0 : index
    %698 = vector.load %arg18[%697, %c0_286, %c0_287] : memref<8x8x128xf32, #tpu.memory_space<vmem>>, vector<1x8x128xf32>
    %699 = vector.shape_cast %698 : vector<1x8x128xf32> to vector<8x128xf32>
    %700 = vector.shape_cast %696 : vector<8x128xf32> to vector<1x8x128xf32>
    tpu.vector_store %arg18[%697, %c0_286, %c0_287], %700 {strides = array<i32>} : memref<8x8x128xf32, #tpu.memory_space<vmem>>, vector<1x8x128xf32>,
    %c8_i32 = arith.constant 8 : i32
    %c0_288 = arith.constant 0 : index
    %c0_289 = arith.constant 0 : index
    %c0_290 = arith.constant 0 : index
    %701 = vector.load %arg18[%c0_288, %c0_289, %c0_290] : memref<8x8x128xf32, #tpu.memory_space<vmem>>, vector<8x8x128xf32>
    %702 = vector.shape_cast %701 : vector<8x8x128xf32> to vector<64x128xf32>
    %c0_291 = arith.constant 0 : index
    %c0_292 = arith.constant 0 : index
    %703 = vector.load %arg15[%c0_291, %c0_292] : memref<128x128xf32, #tpu.memory_space<vmem>>, vector<128x128xf32>
    %cst_293 = arith.constant dense<0.000000e+00> : vector<64x128xf32>
    %704 = tpu.matmul %702, %703, %cst_293 {dimension_numbers = #tpu.dot_dimension_numbers<[1], [0], [0], [1], [0, 0, 1, 1], [], []>} : vector<64x128xf32>, vector<128x128xf32>, vector<64x128xf32> -> vector<64x128xf32>
    %c0_294 = arith.constant 0 : index
    %c0_295 = arith.constant 0 : index
    %705 = vector.load %arg16[%c0_294, %c0_295] : memref<1x128xf32, #tpu.memory_space<vmem>>, vector<1x128xf32>
    %706 = vector.broadcast %705 : vector<1x128xf32> to vector<64x128xf32>
    %707 = arith.addf %704, %706 : vector<64x128xf32>
    %708 = math.tanh %707 : vector<64x128xf32>
    %c0_296 = arith.constant 0 : index
    %c0_297 = arith.constant 0 : index
    %709 = vector.load %arg17[%c0_296, %c0_297] : memref<64x128xf32, #tpu.memory_space<vmem>>, vector<64x128xf32>
    tpu.vector_store %arg17[%c0_296, %c0_297], %708 {strides = array<i32>} : memref<64x128xf32, #tpu.memory_space<vmem>>, vector<64x128xf32>,
    return
  }
}

</mosaic_0001>

<llo_original>
// kernel: tpu_custom_call.1
$region0: #{tpu_custom_call.1}
  #allocation0 [shape = 'u32[]', space=smem, size = 0x4, offset = 0x4, fixed_abs, tag = 'smem constant byte address 0x4 - core index']
  #allocation1 [shape = 'u32[144,128]{1,0:T(1,128)}', space=vmem, size = 0x12000, scoped, tag = 'internal scratch']
  #allocation2 [shape = 'f32[8,8,128]{2,1,0:T(8,128)}', space=vmem, size = 0x8000, scoped, tag = 'scratch operand']
  %s0 = inlined_call_operand.hbm [shape: f32[8,128], index: 0, kind: input, shape index: {}]
  %s1 = inlined_call_operand.hbm [shape: f32[128,256], index: 1, kind: input, shape index: {}]
  %s2 = inlined_call_operand.hbm [shape: f32[1,256], index: 2, kind: input, shape index: {}]
  %s3 = inlined_call_operand.hbm [shape: f32[1,256], index: 3, kind: input, shape index: {}]
  %s4 = inlined_call_operand.hbm [shape: f32[1,256], index: 4, kind: input, shape index: {}]
  %s5 = inlined_call_operand.hbm [shape: f32[256,128], index: 5, kind: input, shape index: {}]
  %s6 = inlined_call_operand.hbm [shape: f32[1,128], index: 6, kind: input, shape index: {}]
  %s7 = inlined_call_operand.hbm [shape: f32[1,128], index: 7, kind: input, shape index: {}]
  %s8 = inlined_call_operand.hbm [shape: f32[1,128], index: 8, kind: input, shape index: {}]
  %s9 = inlined_call_operand.hbm [shape: f32[128,512], index: 9, kind: input, shape index: {}]
  %s10 = inlined_call_operand.hbm [shape: f32[128,512], index: 10, kind: input, shape index: {}]
  %s11 = inlined_call_operand.hbm [shape: f32[1,512], index: 11, kind: input, shape index: {}]
  %s12 = inlined_call_operand.hbm [shape: f32[128,512], index: 12, kind: input, shape index: {}]
  %s13 = inlined_call_operand.hbm [shape: f32[128,512], index: 13, kind: input, shape index: {}]
  %s14 = inlined_call_operand.hbm [shape: f32[1,512], index: 14, kind: input, shape index: {}]
  %s15 = inlined_call_operand.hbm [shape: f32[128,128], index: 15, kind: input, shape index: {}]
  %s16 = inlined_call_operand.hbm [shape: f32[1,128], index: 16, kind: input, shape index: {}]
  %s17 = inlined_call_operand.hbm [shape: f32[64,128], index: 17, kind: output, shape index: {}]
  %s18 = sld [smem:[#allocation0]]
  $region146: #{tpu_custom_call.1} parent=0
    _
  %s20 = ssub.s32 1, %s18
  %s21 = scalar_select 0, %s20, %s18
  $region1: #{tpu_custom_call.1} parent=0
    #allocation3 [shape = 'u8[4096]{0}', space=vmem, size = 0x1000, scoped, tag = 'input window, operand 0, single buffered']
    #allocation4 [shape = 's32[1]{0}', space=sflag, size = 0x4, scoped, tag = 'scoped memory for tpu_custom_call.1']
    #allocation5 [shape = 's32[1]{0}', space=sflag, size = 0x4, scoped, tag = 'scoped memory for tpu_custom_call.1']
    #allocation6 [shape = 'u8[131072]{0}', space=vmem, size = 0x20000, scoped, tag = 'input window, operand 1, single buffered']
    #allocation7 [shape = 's32[1]{0}', space=sflag, size = 0x4, scoped, tag = 'scoped memory for tpu_custom_call.1']
    #allocation8 [shape = 'u8[1024]{0}', space=vmem, size = 0x400, scoped, tag = 'input window, operand 2, single buffered']
    #allocation9 [shape = 'u8[1024]{0}', space=vmem, size = 0x400, scoped, tag = 'input window, operand 3, single buffered']
    #allocation10 [shape = 's32[1]{0}', space=sflag, size = 0x4, scoped, tag = 'scoped memory for tpu_custom_call.1']
    #allocation11 [shape = 'u8[1024]{0}', space=vmem, size = 0x400, scoped, tag = 'input window, operand 4, single buffered']
    #allocation12 [shape = 'u8[131072]{0}', space=vmem, size = 0x20000, scoped, tag = 'input window, operand 5, single buffered']
    #allocation13 [shape = 's32[1]{0}', space=sflag, size = 0x4, scoped, tag = 'scoped memory for tpu_custom_call.1']
    #allocation14 [shape = 'u8[512]{0}', space=vmem, size = 0x400, scoped, tag = 'input window, operand 6, single buffered']
    #allocation15 [shape = 'u8[512]{0}', space=vmem, size = 0x400, scoped, tag = 'input window, operand 7, single buffered']
    #allocation16 [shape = 's32[1]{0}', space=sflag, size = 0x4, scoped, tag = 'scoped memory for tpu_custom_call.1']
    #allocation17 [shape = 'u8[512]{0}', space=vmem, size = 0x400, scoped, tag = 'input window, operand 8, single buffered']
    #allocation18 [shape = 'u8[262144]{0}', space=vmem, size = 0x40000, scoped, tag = 'input window, operand 9, single buffered']
    #allocation19 [shape = 's32[1]{0}', space=sflag, size = 0x4, scoped, tag = 'scoped memory for tpu_custom_call.1']
    #allocation20 [shape = 'u8[262144]{0}', space=vmem, size = 0x40000, scoped, tag = 'input window, operand 10, single buffered']
    #allocation21 [shape = 'u8[2048]{0}', space=vmem, size = 0x800, scoped, tag = 'input window, operand 11, single buffered']
    #allocation22 [shape = 's32[1]{0}', space=sflag, size = 0x4, scoped, tag = 'scoped memory for tpu_custom_call.1']
    #allocation23 [shape = 'u8[262144]{0}', space=vmem, size = 0x40000, scoped, tag = 'input window, operand 12, single buffered']
    #allocation24 [shape = 'u8[262144]{0}', space=vmem, size = 0x40000, scoped, tag = 'input window, operand 13, single buffered']
    #allocation25 [shape = 's32[1]{0}', space=sflag, size = 0x4, scoped, tag = 'scoped memory for tpu_custom_call.1']
    #allocation26 [shape = 'u8[2048]{0}', space=vmem, size = 0x800, scoped, tag = 'input window, operand 14, single buffered']
    #allocation27 [shape = 'u8[65536]{0}', space=vmem, size = 0x10000, scoped, tag = 'input window, operand 15, single buffered']
    #allocation28 [shape = 's32[1]{0}', space=sflag, size = 0x4, scoped, tag = 'scoped memory for tpu_custom_call.1']
    #allocation29 [shape = 'u8[512]{0}', space=vmem, size = 0x400, scoped, tag = 'input window, operand 16, single buffered']
    #allocation30 [shape = 'u8[32768]{0}', space=vmem, size = 0x8000, scoped, tag = 'output window, operand 0, single buffered']
    %22 = vsyncpa [#allocation4], 0
    %23 = vsyncpa [#allocation7], 0
    %24 = vsyncpa [#allocation10], 0
    %25 = vsyncpa [#allocation13], 0
    %26 = vsyncpa [#allocation16], 0
    %27 = vsyncpa [#allocation19], 0
    %28 = vsyncpa [#allocation22], 0
    %29 = vsyncpa [#allocation25], 0
    %30 = vsyncpa [#allocation28], 0
    %31 = vsyncpa [#allocation5], 0
    // Predicated region
    $region2: #{tpu_custom_call.1} parent=1 // pred_check
      _
    $region3: #{tpu_custom_call.1} parent=1 // pred_check_branch
      %33 = sbr.rel (0) target = $region5
    $region4: #{tpu_custom_call.1} parent=1 // pred_region
      %s35 = ssub.s32 128, 128
      %36 = vsyncadd [#allocation4], %s35
      %s38 = sshll.u32 [#allocation3], 4
      %s39 = int_to_ptr.vmem [resolvable:$true] %s38
      %41 = dma.hbm_to_vmem [thread:$0]  %s0, 128, %s39, [#allocation4]
    $region5: #{tpu_custom_call.1} parent=1 // pred_fallthru
      _
    // Predicated region
    $region6: #{tpu_custom_call.1} parent=1 // pred_check
      _
    $region7: #{tpu_custom_call.1} parent=1 // pred_check_branch
      %43 = sbr.rel (0) target = $region9
    $region8: #{tpu_custom_call.1} parent=1 // pred_region
      %s45 = ssub.s32 4096, 4096
      %46 = vsyncadd [#allocation7], %s45
      %s47 = sshll.u32 [#allocation6], 4
      %s48 = int_to_ptr.vmem [resolvable:$true] %s47
      %53 = dma.hbm_to_vmem [thread:$0]  %s1, 4096, %s48, [#allocation7], 256, 256, 16
    $region9: #{tpu_custom_call.1} parent=1 // pred_fallthru
      _
    // Predicated region
    $region10: #{tpu_custom_call.1} parent=1 // pred_check
      _
    $region11: #{tpu_custom_call.1} parent=1 // pred_check_branch
      %55 = sbr.rel (0) target = $region13
    $region12: #{tpu_custom_call.1} parent=1 // pred_region
      %s57 = ssub.s32 32, 32
      %58 = vsyncadd [#allocation7], %s57
      %s60 = sshll.u32 [#allocation8], 4
      %s61 = int_to_ptr.vmem [resolvable:$true] %s60
      %63 = dma.hbm_to_vmem [thread:$0]  %s2, 32, %s61, [#allocation7]
    $region13: #{tpu_custom_call.1} parent=1 // pred_fallthru
      _
    // Predicated region
    $region14: #{tpu_custom_call.1} parent=1 // pred_check
      _
    $region15: #{tpu_custom_call.1} parent=1 // pred_check_branch
      %65 = sbr.rel (0) target = $region17
    $region16: #{tpu_custom_call.1} parent=1 // pred_region
      %s67 = ssub.s32 32, 32
      %68 = vsyncadd [#allocation10], %s67
      %s70 = sshll.u32 [#allocation9], 4
      %s71 = int_to_ptr.vmem [resolvable:$true] %s70
      %73 = dma.hbm_to_vmem [thread:$0]  %s3, 32, %s71, [#allocation10]
    $region17: #{tpu_custom_call.1} parent=1 // pred_fallthru
      _
    // Predicated region
    $region18: #{tpu_custom_call.1} parent=1 // pred_check
      _
    $region19: #{tpu_custom_call.1} parent=1 // pred_check_branch
      %75 = sbr.rel (0) target = $region21
    $region20: #{tpu_custom_call.1} parent=1 // pred_region
      %s77 = ssub.s32 32, 32
      %78 = vsyncadd [#allocation10], %s77
      %s80 = sshll.u32 [#allocation11], 4
      %s81 = int_to_ptr.vmem [resolvable:$true] %s80
      %83 = dma.hbm_to_vmem [thread:$0]  %s4, 32, %s81, [#allocation10]
    $region21: #{tpu_custom_call.1} parent=1 // pred_fallthru
      _
    // Predicated region
    $region22: #{tpu_custom_call.1} parent=1 // pred_check
      _
    $region23: #{tpu_custom_call.1} parent=1 // pred_check_branch
      %85 = sbr.rel (0) target = $region25
    $region24: #{tpu_custom_call.1} parent=1 // pred_region
      %s87 = ssub.s32 4096, 4096
      %88 = vsyncadd [#allocation13], %s87
      %s89 = sshll.u32 [#allocation12], 4
      %s90 = int_to_ptr.vmem [resolvable:$true] %s89
      %95 = dma.hbm_to_vmem [thread:$0]  %s5, 4096, %s90, [#allocation13], 128, 128, 8
    $region25: #{tpu_custom_call.1} parent=1 // pred_fallthru
      _
    // Predicated region
    $region26: #{tpu_custom_call.1} parent=1 // pred_check
      _
    $region27: #{tpu_custom_call.1} parent=1 // pred_check_branch
      %97 = sbr.rel (0) target = $region29
    $region28: #{tpu_custom_call.1} parent=1 // pred_region
      %s99 = ssub.s32 16, 16
      %100 = vsyncadd [#allocation13], %s99
      %s102 = sshll.u32 [#allocation14], 4
      %s103 = int_to_ptr.vmem [resolvable:$true] %s102
      %105 = dma.hbm_to_vmem [thread:$0]  %s6, 16, %s103, [#allocation13]
    $region29: #{tpu_custom_call.1} parent=1 // pred_fallthru
      _
    // Predicated region
    $region30: #{tpu_custom_call.1} parent=1 // pred_check
      _
    $region31: #{tpu_custom_call.1} parent=1 // pred_check_branch
      %107 = sbr.rel (0) target = $region33
    $region32: #{tpu_custom_call.1} parent=1 // pred_region
      %s109 = ssub.s32 16, 16
      %110 = vsyncadd [#allocation16], %s109
      %s112 = sshll.u32 [#allocation15], 4
      %s113 = int_to_ptr.vmem [resolvable:$true] %s112
      %115 = dma.hbm_to_vmem [thread:$0]  %s7, 16, %s113, [#allocation16]
    $region33: #{tpu_custom_call.1} parent=1 // pred_fallthru
      _
    // Predicated region
    $region34: #{tpu_custom_call.1} parent=1 // pred_check
      _
    $region35: #{tpu_custom_call.1} parent=1 // pred_check_branch
      %117 = sbr.rel (0) target = $region37
    $region36: #{tpu_custom_call.1} parent=1 // pred_region
      %s119 = ssub.s32 16, 16
      %120 = vsyncadd [#allocation16], %s119
      %s122 = sshll.u32 [#allocation17], 4
      %s123 = int_to_ptr.vmem [resolvable:$true] %s122
      %125 = dma.hbm_to_vmem [thread:$0]  %s8, 16, %s123, [#allocation16]
    $region37: #{tpu_custom_call.1} parent=1 // pred_fallthru
      _
    // Predicated region
    $region38: #{tpu_custom_call.1} parent=1 // pred_check
      _
    $region39: #{tpu_custom_call.1} parent=1 // pred_check_branch
      %127 = sbr.rel (0) target = $region41
    $region40: #{tpu_custom_call.1} parent=1 // pred_region
      %s129 = ssub.s32 8192, 8192
      %130 = vsyncadd [#allocation19], %s129
      %s131 = sshll.u32 [#allocation18], 4
      %s132 = int_to_ptr.vmem [resolvable:$true] %s131
      %137 = dma.hbm_to_vmem [thread:$0]  %s9, 8192, %s132, [#allocation19], 512, 512, 32
    $region41: #{tpu_custom_call.1} parent=1 // pred_fallthru
      _
    // Predicated region
    $region42: #{tpu_custom_call.1} parent=1 // pred_check
      _
    $region43: #{tpu_custom_call.1} parent=1 // pred_check_branch
      %139 = sbr.rel (0) target = $region45
    $region44: #{tpu_custom_call.1} parent=1 // pred_region
      %s141 = ssub.s32 8192, 8192
      %142 = vsyncadd [#allocation19], %s141
      %s143 = sshll.u32 [#allocation20], 4
      %s144 = int_to_ptr.vmem [resolvable:$true] %s143
      %149 = dma.hbm_to_vmem [thread:$0]  %s10, 8192, %s144, [#allocation19], 512, 512, 32
    $region45: #{tpu_custom_call.1} parent=1 // pred_fallthru
      _
    // Predicated region
    $region46: #{tpu_custom_call.1} parent=1 // pred_check
      _
    $region47: #{tpu_custom_call.1} parent=1 // pred_check_branch
      %151 = sbr.rel (0) target = $region49
    $region48: #{tpu_custom_call.1} parent=1 // pred_region
      %s153 = ssub.s32 64, 64
      %154 = vsyncadd [#allocation22], %s153
      %s156 = sshll.u32 [#allocation21], 4
      %s157 = int_to_ptr.vmem [resolvable:$true] %s156
      %159 = dma.hbm_to_vmem [thread:$0]  %s11, 64, %s157, [#allocation22]
    $region49: #{tpu_custom_call.1} parent=1 // pred_fallthru
      _
    // Predicated region
    $region50: #{tpu_custom_call.1} parent=1 // pred_check
      _
    $region51: #{tpu_custom_call.1} parent=1 // pred_check_branch
      %161 = sbr.rel (0) target = $region53
    $region52: #{tpu_custom_call.1} parent=1 // pred_region
      %s163 = ssub.s32 8192, 8192
      %164 = vsyncadd [#allocation22], %s163
      %s165 = sshll.u32 [#allocation23], 4
      %s166 = int_to_ptr.vmem [resolvable:$true] %s165
      %171 = dma.hbm_to_vmem [thread:$0]  %s12, 8192, %s166, [#allocation22], 512, 512, 32
    $region53: #{tpu_custom_call.1} parent=1 // pred_fallthru
      _
    // Predicated region
    $region54: #{tpu_custom_call.1} parent=1 // pred_check
      _
    $region55: #{tpu_custom_call.1} parent=1 // pred_check_branch
      %173 = sbr.rel (0) target = $region57
    $region56: #{tpu_custom_call.1} parent=1 // pred_region
      %s175 = ssub.s32 8192, 8192
      %176 = vsyncadd [#allocation25], %s175
      %s177 = sshll.u32 [#allocation24], 4
      %s178 = int_to_ptr.vmem [resolvable:$true] %s177
      %183 = dma.hbm_to_vmem [thread:$0]  %s13, 8192, %s178, [#allocation25], 512, 512, 32
    $region57: #{tpu_custom_call.1} parent=1 // pred_fallthru
      _
    // Predicated region
    $region58: #{tpu_custom_call.1} parent=1 // pred_check
      _
    $region59: #{tpu_custom_call.1} parent=1 // pred_check_branch
      %185 = sbr.rel (0) target = $region61
    $region60: #{tpu_custom_call.1} parent=1 // pred_region
      %s187 = ssub.s32 64, 64
      %188 = vsyncadd [#allocation25], %s187
      %s190 = sshll.u32 [#allocation26], 4
      %s191 = int_to_ptr.vmem [resolvable:$true] %s190
      %193 = dma.hbm_to_vmem [thread:$0]  %s14, 64, %s191, [#allocation25]
    $region61: #{tpu_custom_call.1} parent=1 // pred_fallthru
      _
    // Predicated region
    $region62: #{tpu_custom_call.1} parent=1 // pred_check
      _
    $region63: #{tpu_custom_call.1} parent=1 // pred_check_branch
      %195 = sbr.rel (0) target = $region65
    $region64: #{tpu_custom_call.1} parent=1 // pred_region
      %s197 = ssub.s32 2048, 2048
      %198 = vsyncadd [#allocation28], %s197
      %s199 = sshll.u32 [#allocation27], 4
      %s200 = int_to_ptr.vmem [resolvable:$true] %s199
      %205 = dma.hbm_to_vmem [thread:$0]  %s15, 2048, %s200, [#allocation28], 128, 128, 8
    $region65: #{tpu_custom_call.1} parent=1 // pred_fallthru
      _
    // Predicated region
    $region66: #{tpu_custom_call.1} parent=1 // pred_check
      _
    $region67: #{tpu_custom_call.1} parent=1 // pred_check_branch
      %207 = sbr.rel (0) target = $region69
    $region68: #{tpu_custom_call.1} parent=1 // pred_region
      %s209 = ssub.s32 16, 16
      %210 = vsyncadd [#allocation28], %s209
      %s212 = sshll.u32 [#allocation29], 4
      %s213 = int_to_ptr.vmem [resolvable:$true] %s212
      %215 = dma.hbm_to_vmem [thread:$0]  %s16, 16, %s213, [#allocation28]
    $region69: #{tpu_custom_call.1} parent=1 // pred_fallthru
      _
    // Predicated region
    $region70: #{tpu_custom_call.1} parent=1 // pred_check
      _
    $region71: #{tpu_custom_call.1} parent=1 // pred_check_branch
      %217 = sbr.rel (0) target = $region73
    $region72: #{tpu_custom_call.1} parent=1 // pred_region
      %218 = dma.done [#allocation4], 128
    $region73: #{tpu_custom_call.1} parent=1 // pred_fallthru
      _
    // Predicated region
    $region74: #{tpu_custom_call.1} parent=1 // pred_check
      _
    $region75: #{tpu_custom_call.1} parent=1 // pred_check_branch
      %220 = sbr.rel (0) target = $region77
    $region76: #{tpu_custom_call.1} parent=1 // pred_region
      %221 = dma.done [#allocation7], 4096
    $region77: #{tpu_custom_call.1} parent=1 // pred_fallthru
      _
    // Predicated region
    $region78: #{tpu_custom_call.1} parent=1 // pred_check
      _
    $region79: #{tpu_custom_call.1} parent=1 // pred_check_branch
      %223 = sbr.rel (0) target = $region81
    $region80: #{tpu_custom_call.1} parent=1 // pred_region
      %224 = dma.done [#allocation7], 32
    $region81: #{tpu_custom_call.1} parent=1 // pred_fallthru
      _
    // Predicated region
    $region82: #{tpu_custom_call.1} parent=1 // pred_check
      _
    $region83: #{tpu_custom_call.1} parent=1 // pred_check_branch
      %226 = sbr.rel (0) target = $region85
    $region84: #{tpu_custom_call.1} parent=1 // pred_region
      %227 = dma.done [#allocation10], 32
    $region85: #{tpu_custom_call.1} parent=1 // pred_fallthru
      _
    // Predicated region
    $region86: #{tpu_custom_call.1} parent=1 // pred_check
      _
    $region87: #{tpu_custom_call.1} parent=1 // pred_check_branch
      %229 = sbr.rel (0) target = $region89
    $region88: #{tpu_custom_call.1} parent=1 // pred_region
      %230 = dma.done [#allocation10], 32
    $region89: #{tpu_custom_call.1} parent=1 // pred_fallthru
      _
    // Predicated region
    $region90: #{tpu_custom_call.1} parent=1 // pred_check
      _
    $region91: #{tpu_custom_call.1} parent=1 // pred_check_branch
      %232 = sbr.rel (0) target = $region93
    $region92: #{tpu_custom_call.1} parent=1 // pred_region
      %233 = dma.done [#allocation13], 4096
    $region93: #{tpu_custom_call.1} parent=1 // pred_fallthru
      _
    // Predicated region
    $region94: #{tpu_custom_call.1} parent=1 // pred_check
      _
    $region95: #{tpu_custom_call.1} parent=1 // pred_check_branch
      %235 = sbr.rel (0) target = $region97
    $region96: #{tpu_custom_call.1} parent=1 // pred_region
      %236 = dma.done [#allocation13], 16
    $region97: #{tpu_custom_call.1} parent=1 // pred_fallthru
      _
    // Predicated region
    $region98: #{tpu_custom_call.1} parent=1 // pred_check
      _
    $region99: #{tpu_custom_call.1} parent=1 // pred_check_branch
      %238 = sbr.rel (0) target = $region101
    $region100: #{tpu_custom_call.1} parent=1 // pred_region
      %239 = dma.done [#allocation16], 16
    $region101: #{tpu_custom_call.1} parent=1 // pred_fallthru
      _
    // Predicated region
    $region102: #{tpu_custom_call.1} parent=1 // pred_check
      _
    $region103: #{tpu_custom_call.1} parent=1 // pred_check_branch
      %241 = sbr.rel (0) target = $region105
    $region104: #{tpu_custom_call.1} parent=1 // pred_region
      %242 = dma.done [#allocation16], 16
    $region105: #{tpu_custom_call.1} parent=1 // pred_fallthru
      _
    // Predicated region
    $region106: #{tpu_custom_call.1} parent=1 // pred_check
      _
    $region107: #{tpu_custom_call.1} parent=1 // pred_check_branch
      %244 = sbr.rel (0) target = $region109
    $region108: #{tpu_custom_call.1} parent=1 // pred_region
      %245 = dma.done [#allocation19], 8192
    $region109: #{tpu_custom_call.1} parent=1 // pred_fallthru
      _
    // Predicated region
    $region110: #{tpu_custom_call.1} parent=1 // pred_check
      _
    $region111: #{tpu_custom_call.1} parent=1 // pred_check_branch
      %247 = sbr.rel (0) target = $region113
    $region112: #{tpu_custom_call.1} parent=1 // pred_region
      %248 = dma.done [#allocation19], 8192
    $region113: #{tpu_custom_call.1} parent=1 // pred_fallthru
      _
    // Predicated region
    $region114: #{tpu_custom_call.1} parent=1 // pred_check
      _
    $region115: #{tpu_custom_call.1} parent=1 // pred_check_branch
      %250 = sbr.rel (0) target = $region117
    $region116: #{tpu_custom_call.1} parent=1 // pred_region
      %251 = dma.done [#allocation22], 64
    $region117: #{tpu_custom_call.1} parent=1 // pred_fallthru
      _
    // Predicated region
    $region118: #{tpu_custom_call.1} parent=1 // pred_check
      _
    $region119: #{tpu_custom_call.1} parent=1 // pred_check_branch
      %253 = sbr.rel (0) target = $region121
    $region120: #{tpu_custom_call.1} parent=1 // pred_region
      %254 = dma.done [#allocation22], 8192
    $region121: #{tpu_custom_call.1} parent=1 // pred_fallthru
      _
    // Predicated region
    $region122: #{tpu_custom_call.1} parent=1 // pred_check
      _
    $region123: #{tpu_custom_call.1} parent=1 // pred_check_branch
      %256 = sbr.rel (0) target = $region125
    $region124: #{tpu_custom_call.1} parent=1 // pred_region
      %257 = dma.done [#allocation25], 8192
    $region125: #{tpu_custom_call.1} parent=1 // pred_fallthru
      _
    // Predicated region
    $region126: #{tpu_custom_call.1} parent=1 // pred_check
      _
    $region127: #{tpu_custom_call.1} parent=1 // pred_check_branch
      %259 = sbr.rel (0) target = $region129
    $region128: #{tpu_custom_call.1} parent=1 // pred_region
      %260 = dma.done [#allocation25], 64
    $region129: #{tpu_custom_call.1} parent=1 // pred_fallthru
      _
    // Predicated region
    $region130: #{tpu_custom_call.1} parent=1 // pred_check
      _
    $region131: #{tpu_custom_call.1} parent=1 // pred_check_branch
      %262 = sbr.rel (0) target = $region133
    $region132: #{tpu_custom_call.1} parent=1 // pred_region
      %263 = dma.done [#allocation28], 2048
    $region133: #{tpu_custom_call.1} parent=1 // pred_fallthru
      _
    // Predicated region
    $region134: #{tpu_custom_call.1} parent=1 // pred_check
      _
    $region135: #{tpu_custom_call.1} parent=1 // pred_check_branch
      %265 = sbr.rel (0) target = $region137
    $region136: #{tpu_custom_call.1} parent=1 // pred_region
      %266 = dma.done [#allocation28], 16
    $region137: #{tpu_custom_call.1} parent=1 // pred_fallthru
      _
    %v267 = vld [vmem:[#allocation3] sm:$0xff]
    %v268 = vld [vmem:[#allocation6] sm:$0xff]
    %v269 = vld [vmem:[#allocation6 + $0x8] sm:$0xff]
    %v270 = vld [vmem:[#allocation6 + $0x10] sm:$0xff]
    %v271 = vld [vmem:[#allocation6 + $0x18] sm:$0xff]
    %v272 = vld [vmem:[#allocation6 + $0x20] sm:$0xff]
    %v273 = vld [vmem:[#allocation6 + $0x28] sm:$0xff]
    %v274 = vld [vmem:[#allocation6 + $0x30] sm:$0xff]
    %v275 = vld [vmem:[#allocation6 + $0x38] sm:$0xff]
    %v276 = vld [vmem:[#allocation6 + $0x40] sm:$0xff]
    %v277 = vld [vmem:[#allocation6 + $0x48] sm:$0xff]
    %v278 = vld [vmem:[#allocation6 + $0x50] sm:$0xff]
    %v279 = vld [vmem:[#allocation6 + $0x58] sm:$0xff]
    %v280 = vld [vmem:[#allocation6 + $0x60] sm:$0xff]
    %v281 = vld [vmem:[#allocation6 + $0x68] sm:$0xff]
    %v282 = vld [vmem:[#allocation6 + $0x70] sm:$0xff]
    %v283 = vld [vmem:[#allocation6 + $0x78] sm:$0xff]
    %v284 = vld [vmem:[#allocation6 + $0x80] sm:$0xff]
    %v285 = vld [vmem:[#allocation6 + $0x88] sm:$0xff]
    %v286 = vld [vmem:[#allocation6 + $0x90] sm:$0xff]
    %v287 = vld [vmem:[#allocation6 + $0x98] sm:$0xff]
    %v288 = vld [vmem:[#allocation6 + $0xa0] sm:$0xff]
    %v289 = vld [vmem:[#allocation6 + $0xa8] sm:$0xff]
    %v290 = vld [vmem:[#allocation6 + $0xb0] sm:$0xff]
    %v291 = vld [vmem:[#allocation6 + $0xb8] sm:$0xff]
    %v292 = vld [vmem:[#allocation6 + $0xc0] sm:$0xff]
    %v293 = vld [vmem:[#allocation6 + $0xc8] sm:$0xff]
    %v294 = vld [vmem:[#allocation6 + $0xd0] sm:$0xff]
    %v295 = vld [vmem:[#allocation6 + $0xd8] sm:$0xff]
    %v296 = vld [vmem:[#allocation6 + $0xe0] sm:$0xff]
    %v297 = vld [vmem:[#allocation6 + $0xe8] sm:$0xff]
    %v298 = vld [vmem:[#allocation6 + $0xf0] sm:$0xff]
    %v299 = vld [vmem:[#allocation6 + $0xf8] sm:$0xff]
    %v300 = vld [vmem:[#allocation8] sm:$0x3]
    %v302 = vlaneseq
    %v303 = vshrl.u32 %v302, 7
    %v304 = vsub.s32 0, %v303
    %v305 = vrot.slane %v300, %v304
    %v306 = vlaneseq
    %v307 = vshrl.u32 %v306, 7
    %v308 = vsub.s32 1, %v307
    %v309 = vrot.slane %v300, %v308
    %312 = vmatprep.subr.mxu0 %v269
    %313 = vmatpush1.msra.mxu0 %v268
    %314 = vmatprep.subr.mxu0 %v271
    %315 = vmatpush1.msra.mxu0 %v270
    %316 = vmatprep.subr.mxu0 %v273
    %317 = vmatpush1.msra.mxu0 %v272
    %318 = vmatprep.subr.mxu0 %v275
    %319 = vmatpush1.msra.mxu0 %v274
    %320 = vmatprep.subr.mxu0 %v277
    %321 = vmatpush1.msra.mxu0 %v276
    %322 = vmatprep.subr.mxu0 %v279
    %323 = vmatpush1.msra.mxu0 %v278
    %324 = vmatprep.subr.mxu0 %v281
    %325 = vmatpush1.msra.mxu0 %v280
    %326 = vmatprep.subr.mxu0 %v283
    %327 = vmatpush1.msra.mxu0 %v282
    %328 = vmatprep.subr.mxu0 %v285
    %329 = vmatpush1.msra.mxu0 %v284
    %330 = vmatprep.subr.mxu0 %v287
    %331 = vmatpush1.msra.mxu0 %v286
    %332 = vmatprep.subr.mxu0 %v289
    %333 = vmatpush1.msra.mxu0 %v288
    %334 = vmatprep.subr.mxu0 %v291
    %335 = vmatpush1.msra.mxu0 %v290
    %336 = vmatprep.subr.mxu0 %v293
    %337 = vmatpush1.msra.mxu0 %v292
    %338 = vmatprep.subr.mxu0 %v295
    %339 = vmatpush1.msra.mxu0 %v294
    %340 = vmatprep.subr.mxu0 %v297
    %341 = vmatpush1.msra.mxu0 %v296
    %342 = vmatprep.subr.mxu0 %v299
    %343 = vmatpush1.msra.mxu0 %v298
    %344 = vmatprep.subr.mxu0 0.0
    %345 = vmatpush1.msra.mxu0 0.0
    %346 = vmatprep.subr.mxu0 0.0
    %347 = vmatpush1.msra.mxu0 0.0
    %348 = vmatprep.subr.mxu0 0.0
    %349 = vmatpush1.msra.mxu0 0.0
    %350 = vmatprep.subr.mxu0 0.0
    %351 = vmatpush1.msra.mxu0 0.0
    %352 = vmatprep.subr.mxu0 0.0
    %353 = vmatpush1.msra.mxu0 0.0
    %354 = vmatprep.subr.mxu0 0.0
    %355 = vmatpush1.msra.mxu0 0.0
    %356 = vmatprep.subr.mxu0 0.0
    %357 = vmatpush1.msra.mxu0 0.0
    %358 = vmatprep.subr.mxu0 0.0
    %359 = vmatpush1.msra.mxu0 0.0
    %360 = vmatprep.subr.mxu0 0.0
    %361 = vmatpush1.msra.mxu0 0.0
    %362 = vmatprep.subr.mxu0 0.0
    %363 = vmatpush1.msra.mxu0 0.0
    %364 = vmatprep.subr.mxu0 0.0
    %365 = vmatpush1.msra.mxu0 0.0
    %366 = vmatprep.subr.mxu0 0.0
    %367 = vmatpush1.msra.mxu0 0.0
    %368 = vmatprep.subr.mxu0 0.0
    %369 = vmatpush1.msra.mxu0 0.0
    %370 = vmatprep.subr.mxu0 0.0
    %371 = vmatpush1.msra.mxu0 0.0
    %372 = vmatprep.subr.mxu0 0.0
    %373 = vmatpush1.msra.mxu0 0.0
    %374 = vmatprep.subr.mxu0 0.0
    %375 = vmatpush1.msra.mxu0 0.0
    %376 = vmatprep.mubr.f32.mxu0 0.0
    %377 = vmatmul.mubr.f32.gmra.mrb[0].mxu0 %v267
    %v378 = vpop.f32.mrb[0].mxu0
    %v379 = vadd.f32 %v305, %v378
    %v380 = vpop.f32.mrb[0].mxu0
    %v381 = vadd.f32 %v309, %v380
    %382 = vdwg.mxu0
    %vm383 = vcmp.ge.f32.partialorder %v379, 0.0
    %vm384 = vcmp.ge.f32.partialorder %v381, 0.0
    %v385 = vmul.f32 %v379, 0.2
    %v386 = vmul.f32 %v381, 0.2
    %v387 = vsel %vm383, %v379, %v385
    %v388 = vsel %vm384, %v381, %v386
    %v389 = vld [vmem:[#allocation9] sm:$0x3]
    %v390 = vld [vmem:[#allocation11] sm:$0x3]
    %v391 = vlaneseq
    %v392 = vshrl.u32 %v391, 7
    %vm393 = vcmp.lt.s32.totalorder %v392, 4
    %v394 = vsel %vm393, 1, 0
    %v395 = vcvt.s32.f32 %v394
    %v396 = vmul.f32 %v387, %v395
    %v397 = vmul.f32 %v388, %v395
    %v398 = vrot.slane %v396, 4
    %v399 = vadd.f32 %v396, %v398
    %v400 = vrot.slane %v399, 2
    %v401 = vadd.f32 %v399, %v400
    %v402 = vrot.slane %v401, 1
    %v403 = vadd.f32 %v401, %v402
    %v404 = vrot.slane %v397, 4
    %v405 = vadd.f32 %v397, %v404
    %v406 = vrot.slane %v405, 2
    %v407 = vadd.f32 %v405, %v406
    %v408 = vrot.slane %v407, 1
    %v409 = vadd.f32 %v407, %v408
    %v410 = vmul.f32 %v403, 0.25
    %v411 = vmul.f32 %v409, 0.25
    %v412 = vsub.f32 %v387, %v410
    %v413 = vsub.f32 %v388, %v411
    %v414 = vmul.f32 %v412, %v412
    %v415 = vmul.f32 %v413, %v413
    %v416 = vmul.f32 %v414, %v395
    %v417 = vmul.f32 %v415, %v395
    %v418 = vrot.slane %v416, 4
    %v419 = vadd.f32 %v416, %v418
    %v420 = vrot.slane %v419, 2
    %v421 = vadd.f32 %v419, %v420
    %v422 = vrot.slane %v421, 1
    %v423 = vadd.f32 %v421, %v422
    %v424 = vrot.slane %v417, 4
    %v425 = vadd.f32 %v417, %v424
    %v426 = vrot.slane %v425, 2
    %v427 = vadd.f32 %v425, %v426
    %v428 = vrot.slane %v427, 1
    %v429 = vadd.f32 %v427, %v428
    %v430 = vmul.f32 %v423, 0.25
    %v431 = vmul.f32 %v429, 0.25
    %v432 = vadd.f32 %v430, 1e-05
    %v433 = vadd.f32 %v431, 1e-05
    %v434 = vrsqrt.pop %v432
    %v435 = vrsqrt.pop %v433
    %v436 = vmul.f32 %v412, %v434
    %v437 = vmul.f32 %v413, %v435
    %v439 = vlaneseq
    %v440 = vshrl.u32 %v439, 7
    %v441 = vsub.s32 0, %v440
    %v442 = vrot.slane %v389, %v441
    %v443 = vlaneseq
    %v444 = vshrl.u32 %v443, 7
    %v445 = vsub.s32 1, %v444
    %v446 = vrot.slane %v389, %v445
    %v449 = vmul.f32 %v436, %v442
    %v450 = vmul.f32 %v437, %v446
    %v452 = vlaneseq
    %v453 = vshrl.u32 %v452, 7
    %v454 = vsub.s32 0, %v453
    %v455 = vrot.slane %v390, %v454
    %v456 = vlaneseq
    %v457 = vshrl.u32 %v456, 7
    %v458 = vsub.s32 1, %v457
    %v459 = vrot.slane %v390, %v458
    %v462 = vadd.f32 %v449, %v455
    %v463 = vadd.f32 %v450, %v459
    %v464 = vld [vmem:[#allocation12] sm:$0xff]
    %v465 = vld [vmem:[#allocation12 + $0x8] sm:$0xff]
    %v466 = vld [vmem:[#allocation12 + $0x10] sm:$0xff]
    %v467 = vld [vmem:[#allocation12 + $0x18] sm:$0xff]
    %v468 = vld [vmem:[#allocation12 + $0x20] sm:$0xff]
    %v469 = vld [vmem:[#allocation12 + $0x28] sm:$0xff]
    %v470 = vld [vmem:[#allocation12 + $0x30] sm:$0xff]
    %v471 = vld [vmem:[#allocation12 + $0x38] sm:$0xff]
    %v472 = vld [vmem:[#allocation12 + $0x40] sm:$0xff]
    %v473 = vld [vmem:[#allocation12 + $0x48] sm:$0xff]
    %v474 = vld [vmem:[#allocation12 + $0x50] sm:$0xff]
    %v475 = vld [vmem:[#allocation12 + $0x58] sm:$0xff]
    %v476 = vld [vmem:[#allocation12 + $0x60] sm:$0xff]
    %v477 = vld [vmem:[#allocation12 + $0x68] sm:$0xff]
    %v478 = vld [vmem:[#allocation12 + $0x70] sm:$0xff]
    %v479 = vld [vmem:[#allocation12 + $0x78] sm:$0xff]
    %v480 = vld [vmem:[#allocation12 + $0x80] sm:$0xff]
    %v481 = vld [vmem:[#allocation12 + $0x88] sm:$0xff]
    %v482 = vld [vmem:[#allocation12 + $0x90] sm:$0xff]
    %v483 = vld [vmem:[#allocation12 + $0x98] sm:$0xff]
    %v484 = vld [vmem:[#allocation12 + $0xa0] sm:$0xff]
    %v485 = vld [vmem:[#allocation12 + $0xa8] sm:$0xff]
    %v486 = vld [vmem:[#allocation12 + $0xb0] sm:$0xff]
    %v487 = vld [vmem:[#allocation12 + $0xb8] sm:$0xff]
    %v488 = vld [vmem:[#allocation12 + $0xc0] sm:$0xff]
    %v489 = vld [vmem:[#allocation12 + $0xc8] sm:$0xff]
    %v490 = vld [vmem:[#allocation12 + $0xd0] sm:$0xff]
    %v491 = vld [vmem:[#allocation12 + $0xd8] sm:$0xff]
    %v492 = vld [vmem:[#allocation12 + $0xe0] sm:$0xff]
    %v493 = vld [vmem:[#allocation12 + $0xe8] sm:$0xff]
    %v494 = vld [vmem:[#allocation12 + $0xf0] sm:$0xff]
    %v495 = vld [vmem:[#allocation12 + $0xf8] sm:$0xff]
    %v496 = vld [vmem:[#allocation14] sm:$0x1]
    %v498 = vlaneseq
    %v499 = vshrl.u32 %v498, 7
    %v500 = vsub.s32 0, %v499
    %v501 = vrot.slane %v496, %v500
    %503 = vmatprep.subr.mxu0 0.0
    %504 = vmatpush1.msra.mxu0 %v464
    %505 = vmatprep.subr.mxu0 0.0
    %506 = vmatpush1.msra.mxu0 %v465
    %507 = vmatprep.subr.mxu0 0.0
    %508 = vmatpush1.msra.mxu0 %v466
    %509 = vmatprep.subr.mxu0 0.0
    %510 = vmatpush1.msra.mxu0 %v467
    %511 = vmatprep.subr.mxu0 0.0
    %512 = vmatpush1.msra.mxu0 %v468
    %513 = vmatprep.subr.mxu0 0.0
    %514 = vmatpush1.msra.mxu0 %v469
    %515 = vmatprep.subr.mxu0 0.0
    %516 = vmatpush1.msra.mxu0 %v470
    %517 = vmatprep.subr.mxu0 0.0
    %518 = vmatpush1.msra.mxu0 %v471
    %519 = vmatprep.subr.mxu0 0.0
    %520 = vmatpush1.msra.mxu0 %v472
    %521 = vmatprep.subr.mxu0 0.0
    %522 = vmatpush1.msra.mxu0 %v473
    %523 = vmatprep.subr.mxu0 0.0
    %524 = vmatpush1.msra.mxu0 %v474
    %525 = vmatprep.subr.mxu0 0.0
    %526 = vmatpush1.msra.mxu0 %v475
    %527 = vmatprep.subr.mxu0 0.0
    %528 = vmatpush1.msra.mxu0 %v476
    %529 = vmatprep.subr.mxu0 0.0
    %530 = vmatpush1.msra.mxu0 %v477
    %531 = vmatprep.subr.mxu0 0.0
    %532 = vmatpush1.msra.mxu0 %v478
    %533 = vmatprep.subr.mxu0 0.0
    %534 = vmatpush1.msra.mxu0 %v479
    %535 = vmatprep.subr.mxu0 0.0
    %536 = vmatpush1.msra.mxu0 %v480
    %537 = vmatprep.subr.mxu0 0.0
    %538 = vmatpush1.msra.mxu0 %v481
    %539 = vmatprep.subr.mxu0 0.0
    %540 = vmatpush1.msra.mxu0 %v482
    %541 = vmatprep.subr.mxu0 0.0
    %542 = vmatpush1.msra.mxu0 %v483
    %543 = vmatprep.subr.mxu0 0.0
    %544 = vmatpush1.msra.mxu0 %v484
    %545 = vmatprep.subr.mxu0 0.0
    %546 = vmatpush1.msra.mxu0 %v485
    %547 = vmatprep.subr.mxu0 0.0
    %548 = vmatpush1.msra.mxu0 %v486
    %549 = vmatprep.subr.mxu0 0.0
    %550 = vmatpush1.msra.mxu0 %v487
    %551 = vmatprep.subr.mxu0 0.0
    %552 = vmatpush1.msra.mxu0 %v488
    %553 = vmatprep.subr.mxu0 0.0
    %554 = vmatpush1.msra.mxu0 %v489
    %555 = vmatprep.subr.mxu0 0.0
    %556 = vmatpush1.msra.mxu0 %v490
    %557 = vmatprep.subr.mxu0 0.0
    %558 = vmatpush1.msra.mxu0 %v491
    %559 = vmatprep.subr.mxu0 0.0
    %560 = vmatpush1.msra.mxu0 %v492
    %561 = vmatprep.subr.mxu0 0.0
    %562 = vmatpush1.msra.mxu0 %v493
    %563 = vmatprep.subr.mxu0 0.0
    %564 = vmatpush1.msra.mxu0 %v494
    %565 = vmatprep.subr.mxu0 0.0
    %566 = vmatpush1.msra.mxu0 %v495
    %567 = vmatprep.mubr.f32.mxu0 %v463
    %568 = vmatmul.mubr.f32.gmra.mrb[0].mxu0 %v462
    %v569 = vpop.f32.mrb[0].mxu0
    %v570 = vadd.f32 %v501, %v569
    %v571 = vpop.f32.mrb[0].mxu0
    %572 = vdwg.mxu0
    %vm573 = vcmp.ge.f32.partialorder %v570, 0.0
    %v574 = vmul.f32 %v570, 0.2
    %v575 = vsel %vm573, %v570, %v574
    %v576 = vld [vmem:[#allocation15] sm:$0x1]
    %v577 = vld [vmem:[#allocation17] sm:$0x1]
    %v578 = vmul.f32 %v575, %v395
    %v579 = vrot.slane %v578, 4
    %v580 = vadd.f32 %v578, %v579
    %v581 = vrot.slane %v580, 2
    %v582 = vadd.f32 %v580, %v581
    %v583 = vrot.slane %v582, 1
    %v584 = vadd.f32 %v582, %v583
    %v585 = vmul.f32 %v584, 0.25
    %v586 = vsub.f32 %v575, %v585
    %v587 = vmul.f32 %v586, %v586
    %v588 = vmul.f32 %v587, %v395
    %v589 = vrot.slane %v588, 4
    %v590 = vadd.f32 %v588, %v589
    %v591 = vrot.slane %v590, 2
    %v592 = vadd.f32 %v590, %v591
    %v593 = vrot.slane %v592, 1
    %v594 = vadd.f32 %v592, %v593
    %v595 = vmul.f32 %v594, 0.25
    %v596 = vadd.f32 %v595, 1e-05
    %v597 = vrsqrt.pop %v596
    %v598 = vmul.f32 %v586, %v597
    %v600 = vlaneseq
    %v601 = vshrl.u32 %v600, 7
    %v602 = vsub.s32 0, %v601
    %v603 = vrot.slane %v576, %v602
    %v605 = vmul.f32 %v598, %v603
    %v607 = vlaneseq
    %v608 = vshrl.u32 %v607, 7
    %v609 = vsub.s32 0, %v608
    %v610 = vrot.slane %v577, %v609
    %v612 = vadd.f32 %v605, %v610
    %v613 = vld [vmem:[#allocation18] sm:$0xff]
    %v614 = vld [vmem:[#allocation18 + $0x8] sm:$0xff]
    %v615 = vld [vmem:[#allocation18 + $0x10] sm:$0xff]
    %v616 = vld [vmem:[#allocation18 + $0x18] sm:$0xff]
    %v617 = vld [vmem:[#allocation18 + $0x20] sm:$0xff]
    %v618 = vld [vmem:[#allocation18 + $0x28] sm:$0xff]
    %v619 = vld [vmem:[#allocation18 + $0x30] sm:$0xff]
    %v620 = vld [vmem:[#allocation18 + $0x38] sm:$0xff]
    %v621 = vld [vmem:[#allocation18 + $0x40] sm:$0xff]
    %v622 = vld [vmem:[#allocation18 + $0x48] sm:$0xff]
    %v623 = vld [vmem:[#allocation18 + $0x50] sm:$0xff]
    %v624 = vld [vmem:[#allocation18 + $0x58] sm:$0xff]
    %v625 = vld [vmem:[#allocation18 + $0x60] sm:$0xff]
    %v626 = vld [vmem:[#allocation18 + $0x68] sm:$0xff]
    %v627 = vld [vmem:[#allocation18 + $0x70] sm:$0xff]
    %v628 = vld [vmem:[#allocation18 + $0x78] sm:$0xff]
    %v629 = vld [vmem:[#allocation18 + $0x80] sm:$0xff]
    %v630 = vld [vmem:[#allocation18 + $0x88] sm:$0xff]
    %v631 = vld [vmem:[#allocation18 + $0x90] sm:$0xff]
    %v632 = vld [vmem:[#allocation18 + $0x98] sm:$0xff]
    %v633 = vld [vmem:[#allocation18 + $0xa0] sm:$0xff]
    %v634 = vld [vmem:[#allocation18 + $0xa8] sm:$0xff]
    %v635 = vld [vmem:[#allocation18 + $0xb0] sm:$0xff]
    %v636 = vld [vmem:[#allocation18 + $0xb8] sm:$0xff]
    %v637 = vld [vmem:[#allocation18 + $0xc0] sm:$0xff]
    %v638 = vld [vmem:[#allocation18 + $0xc8] sm:$0xff]
    %v639 = vld [vmem:[#allocation18 + $0xd0] sm:$0xff]
    %v640 = vld [vmem:[#allocation18 + $0xd8] sm:$0xff]
    %v641 = vld [vmem:[#allocation18 + $0xe0] sm:$0xff]
    %v642 = vld [vmem:[#allocation18 + $0xe8] sm:$0xff]
    %v643 = vld [vmem:[#allocation18 + $0xf0] sm:$0xff]
    %v644 = vld [vmem:[#allocation18 + $0xf8] sm:$0xff]
    %v645 = vld [vmem:[#allocation18 + $0x100] sm:$0xff]
    %v646 = vld [vmem:[#allocation18 + $0x108] sm:$0xff]
    %v647 = vld [vmem:[#allocation18 + $0x110] sm:$0xff]
    %v648 = vld [vmem:[#allocation18 + $0x118] sm:$0xff]
    %v649 = vld [vmem:[#allocation18 + $0x120] sm:$0xff]
    %v650 = vld [vmem:[#allocation18 + $0x128] sm:$0xff]
    %v651 = vld [vmem:[#allocation18 + $0x130] sm:$0xff]
    %v652 = vld [vmem:[#allocation18 + $0x138] sm:$0xff]
    %v653 = vld [vmem:[#allocation18 + $0x140] sm:$0xff]
    %v654 = vld [vmem:[#allocation18 + $0x148] sm:$0xff]
    %v655 = vld [vmem:[#allocation18 + $0x150] sm:$0xff]
    %v656 = vld [vmem:[#allocation18 + $0x158] sm:$0xff]
    %v657 = vld [vmem:[#allocation18 + $0x160] sm:$0xff]
    %v658 = vld [vmem:[#allocation18 + $0x168] sm:$0xff]
    %v659 = vld [vmem:[#allocation18 + $0x170] sm:$0xff]
    %v660 = vld [vmem:[#allocation18 + $0x178] sm:$0xff]
    %v661 = vld [vmem:[#allocation18 + $0x180] sm:$0xff]
    %v662 = vld [vmem:[#allocation18 + $0x188] sm:$0xff]
    %v663 = vld [vmem:[#allocation18 + $0x190] sm:$0xff]
    %v664 = vld [vmem:[#allocation18 + $0x198] sm:$0xff]
    %v665 = vld [vmem:[#allocation18 + $0x1a0] sm:$0xff]
    %v666 = vld [vmem:[#allocation18 + $0x1a8] sm:$0xff]
    %v667 = vld [vmem:[#allocation18 + $0x1b0] sm:$0xff]
    %v668 = vld [vmem:[#allocation18 + $0x1b8] sm:$0xff]
    %v669 = vld [vmem:[#allocation18 + $0x1c0] sm:$0xff]
    %v670 = vld [vmem:[#allocation18 + $0x1c8] sm:$0xff]
    %v671 = vld [vmem:[#allocation18 + $0x1d0] sm:$0xff]
    %v672 = vld [vmem:[#allocation18 + $0x1d8] sm:$0xff]
    %v673 = vld [vmem:[#allocation18 + $0x1e0] sm:$0xff]
    %v674 = vld [vmem:[#allocation18 + $0x1e8] sm:$0xff]
    %v675 = vld [vmem:[#allocation18 + $0x1f0] sm:$0xff]
    %v676 = vld [vmem:[#allocation18 + $0x1f8] sm:$0xff]
    %v677 = vld [vmem:[#allocation21] sm:$0xf]
    %v679 = vlaneseq
    %v680 = vshrl.u32 %v679, 7
    %v681 = vsub.s32 0, %v680
    %v682 = vrot.slane %v677, %v681
    %v683 = vlaneseq
    %v684 = vshrl.u32 %v683, 7
    %v685 = vsub.s32 1, %v684
    %v686 = vrot.slane %v677, %v685
    %v687 = vlaneseq
    %v688 = vshrl.u32 %v687, 7
    %v689 = vsub.s32 2, %v688
    %v690 = vrot.slane %v677, %v689
    %v691 = vlaneseq
    %v692 = vshrl.u32 %v691, 7
    %v693 = vsub.s32 3, %v692
    %v694 = vrot.slane %v677, %v693
    %699 = vmatprep.subr.mxu0 %v614
    %700 = vmatpush1.msra.mxu0 %v613
    %701 = vmatprep.subr.mxu0 %v618
    %702 = vmatpush1.msra.mxu0 %v617
    %703 = vmatprep.subr.mxu0 %v622
    %704 = vmatpush1.msra.mxu0 %v621
    %705 = vmatprep.subr.mxu0 %v626
    %706 = vmatpush1.msra.mxu0 %v625
    %707 = vmatprep.subr.mxu0 %v630
    %708 = vmatpush1.msra.mxu0 %v629
    %709 = vmatprep.subr.mxu0 %v634
    %710 = vmatpush1.msra.mxu0 %v633
    %711 = vmatprep.subr.mxu0 %v638
    %712 = vmatpush1.msra.mxu0 %v637
    %713 = vmatprep.subr.mxu0 %v642
    %714 = vmatpush1.msra.mxu0 %v641
    %715 = vmatprep.subr.mxu0 %v646
    %716 = vmatpush1.msra.mxu0 %v645
    %717 = vmatprep.subr.mxu0 %v650
    %718 = vmatpush1.msra.mxu0 %v649
    %719 = vmatprep.subr.mxu0 %v654
    %720 = vmatpush1.msra.mxu0 %v653
    %721 = vmatprep.subr.mxu0 %v658
    %722 = vmatpush1.msra.mxu0 %v657
    %723 = vmatprep.subr.mxu0 %v662
    %724 = vmatpush1.msra.mxu0 %v661
    %725 = vmatprep.subr.mxu0 %v666
    %726 = vmatpush1.msra.mxu0 %v665
    %727 = vmatprep.subr.mxu0 %v670
    %728 = vmatpush1.msra.mxu0 %v669
    %729 = vmatprep.subr.mxu0 %v674
    %730 = vmatpush1.msra.mxu0 %v673
    %731 = vmatprep.subr.mxu0 0.0
    %732 = vmatpush1.msra.mxu0 0.0
    %733 = vmatprep.subr.mxu0 0.0
    %734 = vmatpush1.msra.mxu0 0.0
    %735 = vmatprep.subr.mxu0 0.0
    %736 = vmatpush1.msra.mxu0 0.0
    %737 = vmatprep.subr.mxu0 0.0
    %738 = vmatpush1.msra.mxu0 0.0
    %739 = vmatprep.subr.mxu0 0.0
    %740 = vmatpush1.msra.mxu0 0.0
    %741 = vmatprep.subr.mxu0 0.0
    %742 = vmatpush1.msra.mxu0 0.0
    %743 = vmatprep.subr.mxu0 0.0
    %744 = vmatpush1.msra.mxu0 0.0
    %745 = vmatprep.subr.mxu0 0.0
    %746 = vmatpush1.msra.mxu0 0.0
    %747 = vmatprep.subr.mxu0 0.0
    %748 = vmatpush1.msra.mxu0 0.0
    %749 = vmatprep.subr.mxu0 0.0
    %750 = vmatpush1.msra.mxu0 0.0
    %751 = vmatprep.subr.mxu0 0.0
    %752 = vmatpush1.msra.mxu0 0.0
    %753 = vmatprep.subr.mxu0 0.0
    %754 = vmatpush1.msra.mxu0 0.0
    %755 = vmatprep.subr.mxu0 0.0
    %756 = vmatpush1.msra.mxu0 0.0
    %757 = vmatprep.subr.mxu0 0.0
    %758 = vmatpush1.msra.mxu0 0.0
    %759 = vmatprep.subr.mxu0 0.0
    %760 = vmatpush1.msra.mxu0 0.0
    %761 = vmatprep.subr.mxu0 0.0
    %762 = vmatpush1.msra.mxu0 0.0
    %763 = vmatprep.mubr.f32.mxu0 0.0
    %764 = vmatmul.mubr.f32.gmra.mrb[0].mxu0 %v612
    %v765 = vpop.f32.mrb[0].mxu0
    %v766 = vadd.f32 %v682, %v765
    %v767 = vpop.f32.mrb[0].mxu0
    %v768 = vadd.f32 %v686, %v767
    %769 = vdwg.mxu0
    %770 = vmatprep.subr.mxu0 %v616
    %771 = vmatpush1.msra.mxu0 %v615
    %772 = vmatprep.subr.mxu0 %v620
    %773 = vmatpush1.msra.mxu0 %v619
    %774 = vmatprep.subr.mxu0 %v624
    %775 = vmatpush1.msra.mxu0 %v623
    %776 = vmatprep.subr.mxu0 %v628
    %777 = vmatpush1.msra.mxu0 %v627
    %778 = vmatprep.subr.mxu0 %v632
    %779 = vmatpush1.msra.mxu0 %v631
    %780 = vmatprep.subr.mxu0 %v636
    %781 = vmatpush1.msra.mxu0 %v635
    %782 = vmatprep.subr.mxu0 %v640
    %783 = vmatpush1.msra.mxu0 %v639
    %784 = vmatprep.subr.mxu0 %v644
    %785 = vmatpush1.msra.mxu0 %v643
    %786 = vmatprep.subr.mxu0 %v648
    %787 = vmatpush1.msra.mxu0 %v647
    %788 = vmatprep.subr.mxu0 %v652
    %789 = vmatpush1.msra.mxu0 %v651
    %790 = vmatprep.subr.mxu0 %v656
    %791 = vmatpush1.msra.mxu0 %v655
    %792 = vmatprep.subr.mxu0 %v660
    %793 = vmatpush1.msra.mxu0 %v659
    %794 = vmatprep.subr.mxu0 %v664
    %795 = vmatpush1.msra.mxu0 %v663
    %796 = vmatprep.subr.mxu0 %v668
    %797 = vmatpush1.msra.mxu0 %v667
    %798 = vmatprep.subr.mxu0 %v672
    %799 = vmatpush1.msra.mxu0 %v671
    %800 = vmatprep.subr.mxu0 %v676
    %801 = vmatpush1.msra.mxu0 %v675
    %802 = vmatprep.subr.mxu0 0.0
    %803 = vmatpush1.msra.mxu0 0.0
    %804 = vmatprep.subr.mxu0 0.0
    %805 = vmatpush1.msra.mxu0 0.0
    %806 = vmatprep.subr.mxu0 0.0
    %807 = vmatpush1.msra.mxu0 0.0
    %808 = vmatprep.subr.mxu0 0.0
    %809 = vmatpush1.msra.mxu0 0.0
    %810 = vmatprep.subr.mxu0 0.0
    %811 = vmatpush1.msra.mxu0 0.0
    %812 = vmatprep.subr.mxu0 0.0
    %813 = vmatpush1.msra.mxu0 0.0
    %814 = vmatprep.subr.mxu0 0.0
    %815 = vmatpush1.msra.mxu0 0.0
    %816 = vmatprep.subr.mxu0 0.0
    %817 = vmatpush1.msra.mxu0 0.0
    %818 = vmatprep.subr.mxu0 0.0
    %819 = vmatpush1.msra.mxu0 0.0
    %820 = vmatprep.subr.mxu0 0.0
    %821 = vmatpush1.msra.mxu0 0.0
    %822 = vmatprep.subr.mxu0 0.0
    %823 = vmatpush1.msra.mxu0 0.0
    %824 = vmatprep.subr.mxu0 0.0
    %825 = vmatpush1.msra.mxu0 0.0
    %826 = vmatprep.subr.mxu0 0.0
    %827 = vmatpush1.msra.mxu0 0.0
    %828 = vmatprep.subr.mxu0 0.0
    %829 = vmatpush1.msra.mxu0 0.0
    %830 = vmatprep.subr.mxu0 0.0
    %831 = vmatpush1.msra.mxu0 0.0
    %832 = vmatprep.subr.mxu0 0.0
    %833 = vmatpush1.msra.mxu0 0.0
    %834 = vmatprep.mubr.f32.mxu0 0.0
    %835 = vmatmul.mubr.f32.gmra.mrb[0].mxu0 %v612
    %v836 = vpop.f32.mrb[0].mxu0
    %v837 = vadd.f32 %v690, %v836
    %v838 = vpop.f32.mrb[0].mxu0
    %v839 = vadd.f32 %v694, %v838
    %840 = vdwg.mxu0
    %v841 = vld [vmem:[#allocation24] sm:$0xff]
    %v842 = vld [vmem:[#allocation24 + $0x8] sm:$0xff]
    %v843 = vld [vmem:[#allocation24 + $0x10] sm:$0xff]
    %v844 = vld [vmem:[#allocation24 + $0x18] sm:$0xff]
    %v845 = vld [vmem:[#allocation24 + $0x20] sm:$0xff]
    %v846 = vld [vmem:[#allocation24 + $0x28] sm:$0xff]
    %v847 = vld [vmem:[#allocation24 + $0x30] sm:$0xff]
    %v848 = vld [vmem:[#allocation24 + $0x38] sm:$0xff]
    %v849 = vld [vmem:[#allocation24 + $0x40] sm:$0xff]
    %v850 = vld [vmem:[#allocation24 + $0x48] sm:$0xff]
    %v851 = vld [vmem:[#allocation24 + $0x50] sm:$0xff]
    %v852 = vld [vmem:[#allocation24 + $0x58] sm:$0xff]
    %v853 = vld [vmem:[#allocation24 + $0x60] sm:$0xff]
    %v854 = vld [vmem:[#allocation24 + $0x68] sm:$0xff]
    %v855 = vld [vmem:[#allocation24 + $0x70] sm:$0xff]
    %v856 = vld [vmem:[#allocation24 + $0x78] sm:$0xff]
    %v857 = vld [vmem:[#allocation24 + $0x80] sm:$0xff]
    %v858 = vld [vmem:[#allocation24 + $0x88] sm:$0xff]
    %v859 = vld [vmem:[#allocation24 + $0x90] sm:$0xff]
    %v860 = vld [vmem:[#allocation24 + $0x98] sm:$0xff]
    %v861 = vld [vmem:[#allocation24 + $0xa0] sm:$0xff]
    %v862 = vld [vmem:[#allocation24 + $0xa8] sm:$0xff]
    %v863 = vld [vmem:[#allocation24 + $0xb0] sm:$0xff]
    %v864 = vld [vmem:[#allocation24 + $0xb8] sm:$0xff]
    %v865 = vld [vmem:[#allocation24 + $0xc0] sm:$0xff]
    %v866 = vld [vmem:[#allocation24 + $0xc8] sm:$0xff]
    %v867 = vld [vmem:[#allocation24 + $0xd0] sm:$0xff]
    %v868 = vld [vmem:[#allocation24 + $0xd8] sm:$0xff]
    %v869 = vld [vmem:[#allocation24 + $0xe0] sm:$0xff]
    %v870 = vld [vmem:[#allocation24 + $0xe8] sm:$0xff]
    %v871 = vld [vmem:[#allocation24 + $0xf0] sm:$0xff]
    %v872 = vld [vmem:[#allocation24 + $0xf8] sm:$0xff]
    %v873 = vld [vmem:[#allocation24 + $0x100] sm:$0xff]
    %v874 = vld [vmem:[#allocation24 + $0x108] sm:$0xff]
    %v875 = vld [vmem:[#allocation24 + $0x110] sm:$0xff]
    %v876 = vld [vmem:[#allocation24 + $0x118] sm:$0xff]
    %v877 = vld [vmem:[#allocation24 + $0x120] sm:$0xff]
    %v878 = vld [vmem:[#allocation24 + $0x128] sm:$0xff]
    %v879 = vld [vmem:[#allocation24 + $0x130] sm:$0xff]
    %v880 = vld [vmem:[#allocation24 + $0x138] sm:$0xff]
    %v881 = vld [vmem:[#allocation24 + $0x140] sm:$0xff]
    %v882 = vld [vmem:[#allocation24 + $0x148] sm:$0xff]
    %v883 = vld [vmem:[#allocation24 + $0x150] sm:$0xff]
    %v884 = vld [vmem:[#allocation24 + $0x158] sm:$0xff]
    %v885 = vld [vmem:[#allocation24 + $0x160] sm:$0xff]
    %v886 = vld [vmem:[#allocation24 + $0x168] sm:$0xff]
    %v887 = vld [vmem:[#allocation24 + $0x170] sm:$0xff]
    %v888 = vld [vmem:[#allocation24 + $0x178] sm:$0xff]
    %v889 = vld [vmem:[#allocation24 + $0x180] sm:$0xff]
    %v890 = vld [vmem:[#allocation24 + $0x188] sm:$0xff]
    %v891 = vld [vmem:[#allocation24 + $0x190] sm:$0xff]
    %v892 = vld [vmem:[#allocation24 + $0x198] sm:$0xff]
    %v893 = vld [vmem:[#allocation24 + $0x1a0] sm:$0xff]
    %v894 = vld [vmem:[#allocation24 + $0x1a8] sm:$0xff]
    %v895 = vld [vmem:[#allocation24 + $0x1b0] sm:$0xff]
    %v896 = vld [vmem:[#allocation24 + $0x1b8] sm:$0xff]
    %v897 = vld [vmem:[#allocation24 + $0x1c0] sm:$0xff]
    %v898 = vld [vmem:[#allocation24 + $0x1c8] sm:$0xff]
    %v899 = vld [vmem:[#allocation24 + $0x1d0] sm:$0xff]
    %v900 = vld [vmem:[#allocation24 + $0x1d8] sm:$0xff]
    %v901 = vld [vmem:[#allocation24 + $0x1e0] sm:$0xff]
    %v902 = vld [vmem:[#allocation24 + $0x1e8] sm:$0xff]
    %v903 = vld [vmem:[#allocation24 + $0x1f0] sm:$0xff]
    %v904 = vld [vmem:[#allocation24 + $0x1f8] sm:$0xff]
    %v905 = vld [vmem:[#allocation26] sm:$0xf]
    %v907 = vlaneseq
    %v908 = vshrl.u32 %v907, 7
    %v909 = vsub.s32 0, %v908
    %v910 = vrot.slane %v905, %v909
    %v911 = vlaneseq
    %v912 = vshrl.u32 %v911, 7
    %v913 = vsub.s32 1, %v912
    %v914 = vrot.slane %v905, %v913
    %v915 = vlaneseq
    %v916 = vshrl.u32 %v915, 7
    %v917 = vsub.s32 2, %v916
    %v918 = vrot.slane %v905, %v917
    %v919 = vlaneseq
    %v920 = vshrl.u32 %v919, 7
    %v921 = vsub.s32 3, %v920
    %v922 = vrot.slane %v905, %v921
    %927 = vmatprep.subr.mxu0 %v842
    %928 = vmatpush1.msra.mxu0 %v841
    %929 = vmatprep.subr.mxu0 %v846
    %930 = vmatpush1.msra.mxu0 %v845
    %931 = vmatprep.subr.mxu0 %v850
    %932 = vmatpush1.msra.mxu0 %v849
    %933 = vmatprep.subr.mxu0 %v854
    %934 = vmatpush1.msra.mxu0 %v853
    %935 = vmatprep.subr.mxu0 %v858
    %936 = vmatpush1.msra.mxu0 %v857
    %937 = vmatprep.subr.mxu0 %v862
    %938 = vmatpush1.msra.mxu0 %v861
    %939 = vmatprep.subr.mxu0 %v866
    %940 = vmatpush1.msra.mxu0 %v865
    %941 = vmatprep.subr.mxu0 %v870
    %942 = vmatpush1.msra.mxu0 %v869
    %943 = vmatprep.subr.mxu0 %v874
    %944 = vmatpush1.msra.mxu0 %v873
    %945 = vmatprep.subr.mxu0 %v878
    %946 = vmatpush1.msra.mxu0 %v877
    %947 = vmatprep.subr.mxu0 %v882
    %948 = vmatpush1.msra.mxu0 %v881
    %949 = vmatprep.subr.mxu0 %v886
    %950 = vmatpush1.msra.mxu0 %v885
    %951 = vmatprep.subr.mxu0 %v890
    %952 = vmatpush1.msra.mxu0 %v889
    %953 = vmatprep.subr.mxu0 %v894
    %954 = vmatpush1.msra.mxu0 %v893
    %955 = vmatprep.subr.mxu0 %v898
    %956 = vmatpush1.msra.mxu0 %v897
    %957 = vmatprep.subr.mxu0 %v902
    %958 = vmatpush1.msra.mxu0 %v901
    %959 = vmatprep.subr.mxu0 0.0
    %960 = vmatpush1.msra.mxu0 0.0
    %961 = vmatprep.subr.mxu0 0.0
    %962 = vmatpush1.msra.mxu0 0.0
    %963 = vmatprep.subr.mxu0 0.0
    %964 = vmatpush1.msra.mxu0 0.0
    %965 = vmatprep.subr.mxu0 0.0
    %966 = vmatpush1.msra.mxu0 0.0
    %967 = vmatprep.subr.mxu0 0.0
    %968 = vmatpush1.msra.mxu0 0.0
    %969 = vmatprep.subr.mxu0 0.0
    %970 = vmatpush1.msra.mxu0 0.0
    %971 = vmatprep.subr.mxu0 0.0
    %972 = vmatpush1.msra.mxu0 0.0
    %973 = vmatprep.subr.mxu0 0.0
    %974 = vmatpush1.msra.mxu0 0.0
    %975 = vmatprep.subr.mxu0 0.0
    %976 = vmatpush1.msra.mxu0 0.0
    %977 = vmatprep.subr.mxu0 0.0
    %978 = vmatpush1.msra.mxu0 0.0
    %979 = vmatprep.subr.mxu0 0.0
    %980 = vmatpush1.msra.mxu0 0.0
    %981 = vmatprep.subr.mxu0 0.0
    %982 = vmatpush1.msra.mxu0 0.0
    %983 = vmatprep.subr.mxu0 0.0
    %984 = vmatpush1.msra.mxu0 0.0
    %985 = vmatprep.subr.mxu0 0.0
    %986 = vmatpush1.msra.mxu0 0.0
    %987 = vmatprep.subr.mxu0 0.0
    %988 = vmatpush1.msra.mxu0 0.0
    %989 = vmatprep.subr.mxu0 0.0
    %990 = vmatpush1.msra.mxu0 0.0
    %991 = vmatprep.mubr.f32.mxu0 0.0
    %992 = vmatmul.mubr.f32.gmra.mrb[0].mxu0 0.0
    %v993 = vpop.f32.mrb[0].mxu0
    %v994 = vadd.f32 %v910, %v993
    %v995 = vpop.f32.mrb[0].mxu0
    %v996 = vadd.f32 %v914, %v995
    %997 = vdwg.mxu0
    %998 = vmatprep.subr.mxu0 %v844
    %999 = vmatpush1.msra.mxu0 %v843
    %1000 = vmatprep.subr.mxu0 %v848
    %1001 = vmatpush1.msra.mxu0 %v847
    %1002 = vmatprep.subr.mxu0 %v852
    %1003 = vmatpush1.msra.mxu0 %v851
    %1004 = vmatprep.subr.mxu0 %v856
    %1005 = vmatpush1.msra.mxu0 %v855
    %1006 = vmatprep.subr.mxu0 %v860
    %1007 = vmatpush1.msra.mxu0 %v859
    %1008 = vmatprep.subr.mxu0 %v864
    %1009 = vmatpush1.msra.mxu0 %v863
    %1010 = vmatprep.subr.mxu0 %v868
    %1011 = vmatpush1.msra.mxu0 %v867
    %1012 = vmatprep.subr.mxu0 %v872
    %1013 = vmatpush1.msra.mxu0 %v871
    %1014 = vmatprep.subr.mxu0 %v876
    %1015 = vmatpush1.msra.mxu0 %v875
    %1016 = vmatprep.subr.mxu0 %v880
    %1017 = vmatpush1.msra.mxu0 %v879
    %1018 = vmatprep.subr.mxu0 %v884
    %1019 = vmatpush1.msra.mxu0 %v883
    %1020 = vmatprep.subr.mxu0 %v888
    %1021 = vmatpush1.msra.mxu0 %v887
    %1022 = vmatprep.subr.mxu0 %v892
    %1023 = vmatpush1.msra.mxu0 %v891
    %1024 = vmatprep.subr.mxu0 %v896
    %1025 = vmatpush1.msra.mxu0 %v895
    %1026 = vmatprep.subr.mxu0 %v900
    %1027 = vmatpush1.msra.mxu0 %v899
    %1028 = vmatprep.subr.mxu0 %v904
    %1029 = vmatpush1.msra.mxu0 %v903
    %1030 = vmatprep.subr.mxu0 0.0
    %1031 = vmatpush1.msra.mxu0 0.0
    %1032 = vmatprep.subr.mxu0 0.0
    %1033 = vmatpush1.msra.mxu0 0.0
    %1034 = vmatprep.subr.mxu0 0.0
    %1035 = vmatpush1.msra.mxu0 0.0
    %1036 = vmatprep.subr.mxu0 0.0
    %1037 = vmatpush1.msra.mxu0 0.0
    %1038 = vmatprep.subr.mxu0 0.0
    %1039 = vmatpush1.msra.mxu0 0.0
    %1040 = vmatprep.subr.mxu0 0.0
    %1041 = vmatpush1.msra.mxu0 0.0
    %1042 = vmatprep.subr.mxu0 0.0
    %1043 = vmatpush1.msra.mxu0 0.0
    %1044 = vmatprep.subr.mxu0 0.0
    %1045 = vmatpush1.msra.mxu0 0.0
    %1046 = vmatprep.subr.mxu0 0.0
    %1047 = vmatpush1.msra.mxu0 0.0
    %1048 = vmatprep.subr.mxu0 0.0
    %1049 = vmatpush1.msra.mxu0 0.0
    %1050 = vmatprep.subr.mxu0 0.0
    %1051 = vmatpush1.msra.mxu0 0.0
    %1052 = vmatprep.subr.mxu0 0.0
    %1053 = vmatpush1.msra.mxu0 0.0
    %1054 = vmatprep.subr.mxu0 0.0
    %1055 = vmatpush1.msra.mxu0 0.0
    %1056 = vmatprep.subr.mxu0 0.0
    %1057 = vmatpush1.msra.mxu0 0.0
    %1058 = vmatprep.subr.mxu0 0.0
    %1059 = vmatpush1.msra.mxu0 0.0
    %1060 = vmatprep.subr.mxu0 0.0
    %1061 = vmatpush1.msra.mxu0 0.0
    %1062 = vmatprep.mubr.f32.mxu0 0.0
    %1063 = vmatmul.mubr.f32.gmra.mrb[0].mxu0 0.0
    %v1064 = vpop.f32.mrb[0].mxu0
    %v1065 = vadd.f32 %v918, %v1064
    %v1066 = vpop.f32.mrb[0].mxu0
    %v1067 = vadd.f32 %v922, %v1066
    %1068 = vdwg.mxu0
    %v1069 = vld [vmem:[#allocation20] sm:$0xff]
    %v1070 = vld [vmem:[#allocation20 + $0x8] sm:$0xff]
    %v1071 = vld [vmem:[#allocation20 + $0x10] sm:$0xff]
    %v1072 = vld [vmem:[#allocation20 + $0x18] sm:$0xff]
    %v1073 = vld [vmem:[#allocation20 + $0x20] sm:$0xff]
    %v1074 = vld [vmem:[#allocation20 + $0x28] sm:$0xff]
    %v1075 = vld [vmem:[#allocation20 + $0x30] sm:$0xff]
    %v1076 = vld [vmem:[#allocation20 + $0x38] sm:$0xff]
    %v1077 = vld [vmem:[#allocation20 + $0x40] sm:$0xff]
    %v1078 = vld [vmem:[#allocation20 + $0x48] sm:$0xff]
    %v1079 = vld [vmem:[#allocation20 + $0x50] sm:$0xff]
    %v1080 = vld [vmem:[#allocation20 + $0x58] sm:$0xff]
    %v1081 = vld [vmem:[#allocation20 + $0x60] sm:$0xff]
    %v1082 = vld [vmem:[#allocation20 + $0x68] sm:$0xff]
    %v1083 = vld [vmem:[#allocation20 + $0x70] sm:$0xff]
    %v1084 = vld [vmem:[#allocation20 + $0x78] sm:$0xff]
    %v1085 = vld [vmem:[#allocation20 + $0x80] sm:$0xff]
    %v1086 = vld [vmem:[#allocation20 + $0x88] sm:$0xff]
    %v1087 = vld [vmem:[#allocation20 + $0x90] sm:$0xff]
    %v1088 = vld [vmem:[#allocation20 + $0x98] sm:$0xff]
    %v1089 = vld [vmem:[#allocation20 + $0xa0] sm:$0xff]
    %v1090 = vld [vmem:[#allocation20 + $0xa8] sm:$0xff]
    %v1091 = vld [vmem:[#allocation20 + $0xb0] sm:$0xff]
    %v1092 = vld [vmem:[#allocation20 + $0xb8] sm:$0xff]
    %v1093 = vld [vmem:[#allocation20 + $0xc0] sm:$0xff]
    %v1094 = vld [vmem:[#allocation20 + $0xc8] sm:$0xff]
    %v1095 = vld [vmem:[#allocation20 + $0xd0] sm:$0xff]
    %v1096 = vld [vmem:[#allocation20 + $0xd8] sm:$0xff]
    %v1097 = vld [vmem:[#allocation20 + $0xe0] sm:$0xff]
    %v1098 = vld [vmem:[#allocation20 + $0xe8] sm:$0xff]
    %v1099 = vld [vmem:[#allocation20 + $0xf0] sm:$0xff]
    %v1100 = vld [vmem:[#allocation20 + $0xf8] sm:$0xff]
    %v1101 = vld [vmem:[#allocation20 + $0x100] sm:$0xff]
    %v1102 = vld [vmem:[#allocation20 + $0x108] sm:$0xff]
    %v1103 = vld [vmem:[#allocation20 + $0x110] sm:$0xff]
    %v1104 = vld [vmem:[#allocation20 + $0x118] sm:$0xff]
    %v1105 = vld [vmem:[#allocation20 + $0x120] sm:$0xff]
    %v1106 = vld [vmem:[#allocation20 + $0x128] sm:$0xff]
    %v1107 = vld [vmem:[#allocation20 + $0x130] sm:$0xff]
    %v1108 = vld [vmem:[#allocation20 + $0x138] sm:$0xff]
    %v1109 = vld [vmem:[#allocation20 + $0x140] sm:$0xff]
    %v1110 = vld [vmem:[#allocation20 + $0x148] sm:$0xff]
    %v1111 = vld [vmem:[#allocation20 + $0x150] sm:$0xff]
    %v1112 = vld [vmem:[#allocation20 + $0x158] sm:$0xff]
    %v1113 = vld [vmem:[#allocation20 + $0x160] sm:$0xff]
    %v1114 = vld [vmem:[#allocation20 + $0x168] sm:$0xff]
    %v1115 = vld [vmem:[#allocation20 + $0x170] sm:$0xff]
    %v1116 = vld [vmem:[#allocation20 + $0x178] sm:$0xff]
    %v1117 = vld [vmem:[#allocation20 + $0x180] sm:$0xff]
    %v1118 = vld [vmem:[#allocation20 + $0x188] sm:$0xff]
    %v1119 = vld [vmem:[#allocation20 + $0x190] sm:$0xff]
    %v1120 = vld [vmem:[#allocation20 + $0x198] sm:$0xff]
    %v1121 = vld [vmem:[#allocation20 + $0x1a0] sm:$0xff]
    %v1122 = vld [vmem:[#allocation20 + $0x1a8] sm:$0xff]
    %v1123 = vld [vmem:[#allocation20 + $0x1b0] sm:$0xff]
    %v1124 = vld [vmem:[#allocation20 + $0x1b8] sm:$0xff]
    %v1125 = vld [vmem:[#allocation20 + $0x1c0] sm:$0xff]
    %v1126 = vld [vmem:[#allocation20 + $0x1c8] sm:$0xff]
    %v1127 = vld [vmem:[#allocation20 + $0x1d0] sm:$0xff]
    %v1128 = vld [vmem:[#allocation20 + $0x1d8] sm:$0xff]
    %v1129 = vld [vmem:[#allocation20 + $0x1e0] sm:$0xff]
    %v1130 = vld [vmem:[#allocation20 + $0x1e8] sm:$0xff]
    %v1131 = vld [vmem:[#allocation20 + $0x1f0] sm:$0xff]
    %v1132 = vld [vmem:[#allocation20 + $0x1f8] sm:$0xff]
    %1133 = vmatprep.subr.mxu0 %v1070
    %1134 = vmatpush1.msra.mxu0 %v1069
    %1135 = vmatprep.subr.mxu0 %v1074
    %1136 = vmatpush1.msra.mxu0 %v1073
    %1137 = vmatprep.subr.mxu0 %v1078
    %1138 = vmatpush1.msra.mxu0 %v1077
    %1139 = vmatprep.subr.mxu0 %v1082
    %1140 = vmatpush1.msra.mxu0 %v1081
    %1141 = vmatprep.subr.mxu0 %v1086
    %1142 = vmatpush1.msra.mxu0 %v1085
    %1143 = vmatprep.subr.mxu0 %v1090
    %1144 = vmatpush1.msra.mxu0 %v1089
    %1145 = vmatprep.subr.mxu0 %v1094
    %1146 = vmatpush1.msra.mxu0 %v1093
    %1147 = vmatprep.subr.mxu0 %v1098
    %1148 = vmatpush1.msra.mxu0 %v1097
    %1149 = vmatprep.subr.mxu0 %v1102
    %1150 = vmatpush1.msra.mxu0 %v1101
    %1151 = vmatprep.subr.mxu0 %v1106
    %1152 = vmatpush1.msra.mxu0 %v1105
    %1153 = vmatprep.subr.mxu0 %v1110
    %1154 = vmatpush1.msra.mxu0 %v1109
    %1155 = vmatprep.subr.mxu0 %v1114
    %1156 = vmatpush1.msra.mxu0 %v1113
    %1157 = vmatprep.subr.mxu0 %v1118
    %1158 = vmatpush1.msra.mxu0 %v1117
    %1159 = vmatprep.subr.mxu0 %v1122
    %1160 = vmatpush1.msra.mxu0 %v1121
    %1161 = vmatprep.subr.mxu0 %v1126
    %1162 = vmatpush1.msra.mxu0 %v1125
    %1163 = vmatprep.subr.mxu0 %v1130
    %1164 = vmatpush1.msra.mxu0 %v1129
    %1165 = vmatprep.subr.mxu0 0.0
    %1166 = vmatpush1.msra.mxu0 0.0
    %1167 = vmatprep.subr.mxu0 0.0
    %1168 = vmatpush1.msra.mxu0 0.0
    %1169 = vmatprep.subr.mxu0 0.0
    %1170 = vmatpush1.msra.mxu0 0.0
    %1171 = vmatprep.subr.mxu0 0.0
    %1172 = vmatpush1.msra.mxu0 0.0
    %1173 = vmatprep.subr.mxu0 0.0
    %1174 = vmatpush1.msra.mxu0 0.0
    %1175 = vmatprep.subr.mxu0 0.0
    %1176 = vmatpush1.msra.mxu0 0.0
    %1177 = vmatprep.subr.mxu0 0.0
    %1178 = vmatpush1.msra.mxu0 0.0
    %1179 = vmatprep.subr.mxu0 0.0
    %1180 = vmatpush1.msra.mxu0 0.0
    %1181 = vmatprep.subr.mxu0 0.0
    %1182 = vmatpush1.msra.mxu0 0.0
    %1183 = vmatprep.subr.mxu0 0.0
    %1184 = vmatpush1.msra.mxu0 0.0
    %1185 = vmatprep.subr.mxu0 0.0
    %1186 = vmatpush1.msra.mxu0 0.0
    %1187 = vmatprep.subr.mxu0 0.0
    %1188 = vmatpush1.msra.mxu0 0.0
    %1189 = vmatprep.subr.mxu0 0.0
    %1190 = vmatpush1.msra.mxu0 0.0
    %1191 = vmatprep.subr.mxu0 0.0
    %1192 = vmatpush1.msra.mxu0 0.0
    %1193 = vmatprep.subr.mxu0 0.0
    %1194 = vmatpush1.msra.mxu0 0.0
    %1195 = vmatprep.subr.mxu0 0.0
    %1196 = vmatpush1.msra.mxu0 0.0
    %1197 = vmatprep.mubr.f32.mxu0 0.0
    %1198 = vmatmul.mubr.f32.gmra.mrb[0].mxu0 0.0
    %v1199 = vpop.f32.mrb[0].mxu0
    %v1200 = vadd.f32 0.0, %v1199
    %v1201 = vpop.f32.mrb[0].mxu0
    %v1202 = vadd.f32 0.0, %v1201
    %1203 = vdwg.mxu0
    %1204 = vmatprep.subr.mxu0 %v1072
    %1205 = vmatpush1.msra.mxu0 %v1071
    %1206 = vmatprep.subr.mxu0 %v1076
    %1207 = vmatpush1.msra.mxu0 %v1075
    %1208 = vmatprep.subr.mxu0 %v1080
    %1209 = vmatpush1.msra.mxu0 %v1079
    %1210 = vmatprep.subr.mxu0 %v1084
    %1211 = vmatpush1.msra.mxu0 %v1083
    %1212 = vmatprep.subr.mxu0 %v1088
    %1213 = vmatpush1.msra.mxu0 %v1087
    %1214 = vmatprep.subr.mxu0 %v1092
    %1215 = vmatpush1.msra.mxu0 %v1091
    %1216 = vmatprep.subr.mxu0 %v1096
    %1217 = vmatpush1.msra.mxu0 %v1095
    %1218 = vmatprep.subr.mxu0 %v1100
    %1219 = vmatpush1.msra.mxu0 %v1099
    %1220 = vmatprep.subr.mxu0 %v1104
    %1221 = vmatpush1.msra.mxu0 %v1103
    %1222 = vmatprep.subr.mxu0 %v1108
    %1223 = vmatpush1.msra.mxu0 %v1107
    %1224 = vmatprep.subr.mxu0 %v1112
    %1225 = vmatpush1.msra.mxu0 %v1111
    %1226 = vmatprep.subr.mxu0 %v1116
    %1227 = vmatpush1.msra.mxu0 %v1115
    %1228 = vmatprep.subr.mxu0 %v1120
    %1229 = vmatpush1.msra.mxu0 %v1119
    %1230 = vmatprep.subr.mxu0 %v1124
    %1231 = vmatpush1.msra.mxu0 %v1123
    %1232 = vmatprep.subr.mxu0 %v1128
    %1233 = vmatpush1.msra.mxu0 %v1127
    %1234 = vmatprep.subr.mxu0 %v1132
    %1235 = vmatpush1.msra.mxu0 %v1131
    %1236 = vmatprep.subr.mxu0 0.0
    %1237 = vmatpush1.msra.mxu0 0.0
    %1238 = vmatprep.subr.mxu0 0.0
    %1239 = vmatpush1.msra.mxu0 0.0
    %1240 = vmatprep.subr.mxu0 0.0
    %1241 = vmatpush1.msra.mxu0 0.0
    %1242 = vmatprep.subr.mxu0 0.0
    %1243 = vmatpush1.msra.mxu0 0.0
    %1244 = vmatprep.subr.mxu0 0.0
    %1245 = vmatpush1.msra.mxu0 0.0
    %1246 = vmatprep.subr.mxu0 0.0
    %1247 = vmatpush1.msra.mxu0 0.0
    %1248 = vmatprep.subr.mxu0 0.0
    %1249 = vmatpush1.msra.mxu0 0.0
    %1250 = vmatprep.subr.mxu0 0.0
    %1251 = vmatpush1.msra.mxu0 0.0
    %1252 = vmatprep.subr.mxu0 0.0
    %1253 = vmatpush1.msra.mxu0 0.0
    %1254 = vmatprep.subr.mxu0 0.0
    %1255 = vmatpush1.msra.mxu0 0.0
    %1256 = vmatprep.subr.mxu0 0.0
    %1257 = vmatpush1.msra.mxu0 0.0
    %1258 = vmatprep.subr.mxu0 0.0
    %1259 = vmatpush1.msra.mxu0 0.0
    %1260 = vmatprep.subr.mxu0 0.0
    %1261 = vmatpush1.msra.mxu0 0.0
    %1262 = vmatprep.subr.mxu0 0.0
    %1263 = vmatpush1.msra.mxu0 0.0
    %1264 = vmatprep.subr.mxu0 0.0
    %1265 = vmatpush1.msra.mxu0 0.0
    %1266 = vmatprep.subr.mxu0 0.0
    %1267 = vmatpush1.msra.mxu0 0.0
    %1268 = vmatprep.mubr.f32.mxu0 0.0
    %1269 = vmatmul.mubr.f32.gmra.mrb[0].mxu0 0.0
    %v1270 = vpop.f32.mrb[0].mxu0
    %v1271 = vadd.f32 0.0, %v1270
    %v1272 = vpop.f32.mrb[0].mxu0
    %v1273 = vadd.f32 0.0, %v1272
    %1274 = vdwg.mxu0
    %v1275 = vadd.f32 %v766, %v1200
    %v1276 = vadd.f32 %v768, %v1202
    %v1277 = vadd.f32 %v837, %v1271
    %v1278 = vadd.f32 %v839, %v1273
    %v1279 = vmul.f32 %v1275, 0.5
    %v1280 = vtanh.pop %v1279
    %v1281 = vmul.f32 %v1280, 0.5
    %v1282 = vadd.f32 %v1281, 0.5
    %v1283 = vmul.f32 %v1276, 0.5
    %v1284 = vtanh.pop %v1283
    %v1285 = vmul.f32 %v1284, 0.5
    %v1286 = vadd.f32 %v1285, 0.5
    %v1287 = vtanh.pop %v1277
    %v1288 = vmul.f32 %v1278, 0.5
    %v1289 = vtanh.pop %v1288
    %v1290 = vmul.f32 %v1289, 0.5
    %v1291 = vadd.f32 %v1290, 0.5
    %v1292 = vmul.f32 %v1286, 0.0
    %v1293 = vmul.f32 %v1282, %v1287
    %v1294 = vadd.f32 %v1292, %v1293
    %v1295 = vtanh.pop %v1294
    %v1296 = vmul.f32 %v1291, %v1295
    %v1297 = vld [vmem:[#allocation23] sm:$0xff]
    %v1298 = vld [vmem:[#allocation23 + $0x8] sm:$0xff]
    %v1299 = vld [vmem:[#allocation23 + $0x10] sm:$0xff]
    %v1300 = vld [vmem:[#allocation23 + $0x18] sm:$0xff]
    %v1301 = vld [vmem:[#allocation23 + $0x20] sm:$0xff]
    %v1302 = vld [vmem:[#allocation23 + $0x28] sm:$0xff]
    %v1303 = vld [vmem:[#allocation23 + $0x30] sm:$0xff]
    %v1304 = vld [vmem:[#allocation23 + $0x38] sm:$0xff]
    %v1305 = vld [vmem:[#allocation23 + $0x40] sm:$0xff]
    %v1306 = vld [vmem:[#allocation23 + $0x48] sm:$0xff]
    %v1307 = vld [vmem:[#allocation23 + $0x50] sm:$0xff]
    %v1308 = vld [vmem:[#allocation23 + $0x58] sm:$0xff]
    %v1309 = vld [vmem:[#allocation23 + $0x60] sm:$0xff]
    %v1310 = vld [vmem:[#allocation23 + $0x68] sm:$0xff]
    %v1311 = vld [vmem:[#allocation23 + $0x70] sm:$0xff]
    %v1312 = vld [vmem:[#allocation23 + $0x78] sm:$0xff]
    %v1313 = vld [vmem:[#allocation23 + $0x80] sm:$0xff]
    %v1314 = vld [vmem:[#allocation23 + $0x88] sm:$0xff]
    %v1315 = vld [vmem:[#allocation23 + $0x90] sm:$0xff]
    %v1316 = vld [vmem:[#allocation23 + $0x98] sm:$0xff]
    %v1317 = vld [vmem:[#allocation23 + $0xa0] sm:$0xff]
    %v1318 = vld [vmem:[#allocation23 + $0xa8] sm:$0xff]
    %v1319 = vld [vmem:[#allocation23 + $0xb0] sm:$0xff]
    %v1320 = vld [vmem:[#allocation23 + $0xb8] sm:$0xff]
    %v1321 = vld [vmem:[#allocation23 + $0xc0] sm:$0xff]
    %v1322 = vld [vmem:[#allocation23 + $0xc8] sm:$0xff]
    %v1323 = vld [vmem:[#allocation23 + $0xd0] sm:$0xff]
    %v1324 = vld [vmem:[#allocation23 + $0xd8] sm:$0xff]
    %v1325 = vld [vmem:[#allocation23 + $0xe0] sm:$0xff]
    %v1326 = vld [vmem:[#allocation23 + $0xe8] sm:$0xff]
    %v1327 = vld [vmem:[#allocation23 + $0xf0] sm:$0xff]
    %v1328 = vld [vmem:[#allocation23 + $0xf8] sm:$0xff]
    %v1329 = vld [vmem:[#allocation23 + $0x100] sm:$0xff]
    %v1330 = vld [vmem:[#allocation23 + $0x108] sm:$0xff]
    %v1331 = vld [vmem:[#allocation23 + $0x110] sm:$0xff]
    %v1332 = vld [vmem:[#allocation23 + $0x118] sm:$0xff]
    %v1333 = vld [vmem:[#allocation23 + $0x120] sm:$0xff]
    %v1334 = vld [vmem:[#allocation23 + $0x128] sm:$0xff]
    %v1335 = vld [vmem:[#allocation23 + $0x130] sm:$0xff]
    %v1336 = vld [vmem:[#allocation23 + $0x138] sm:$0xff]
    %v1337 = vld [vmem:[#allocation23 + $0x140] sm:$0xff]
    %v1338 = vld [vmem:[#allocation23 + $0x148] sm:$0xff]
    %v1339 = vld [vmem:[#allocation23 + $0x150] sm:$0xff]
    %v1340 = vld [vmem:[#allocation23 + $0x158] sm:$0xff]
    %v1341 = vld [vmem:[#allocation23 + $0x160] sm:$0xff]
    %v1342 = vld [vmem:[#allocation23 + $0x168] sm:$0xff]
    %v1343 = vld [vmem:[#allocation23 + $0x170] sm:$0xff]
    %v1344 = vld [vmem:[#allocation23 + $0x178] sm:$0xff]
    %v1345 = vld [vmem:[#allocation23 + $0x180] sm:$0xff]
    %v1346 = vld [vmem:[#allocation23 + $0x188] sm:$0xff]
    %v1347 = vld [vmem:[#allocation23 + $0x190] sm:$0xff]
    %v1348 = vld [vmem:[#allocation23 + $0x198] sm:$0xff]
    %v1349 = vld [vmem:[#allocation23 + $0x1a0] sm:$0xff]
    %v1350 = vld [vmem:[#allocation23 + $0x1a8] sm:$0xff]
    %v1351 = vld [vmem:[#allocation23 + $0x1b0] sm:$0xff]
    %v1352 = vld [vmem:[#allocation23 + $0x1b8] sm:$0xff]
    %v1353 = vld [vmem:[#allocation23 + $0x1c0] sm:$0xff]
    %v1354 = vld [vmem:[#allocation23 + $0x1c8] sm:$0xff]
    %v1355 = vld [vmem:[#allocation23 + $0x1d0] sm:$0xff]
    %v1356 = vld [vmem:[#allocation23 + $0x1d8] sm:$0xff]
    %v1357 = vld [vmem:[#allocation23 + $0x1e0] sm:$0xff]
    %v1358 = vld [vmem:[#allocation23 + $0x1e8] sm:$0xff]
    %v1359 = vld [vmem:[#allocation23 + $0x1f0] sm:$0xff]
    %v1360 = vld [vmem:[#allocation23 + $0x1f8] sm:$0xff]
    %1361 = vmatprep.subr.mxu0 %v1298
    %1362 = vmatpush1.msra.mxu0 %v1297
    %1363 = vmatprep.subr.mxu0 %v1302
    %1364 = vmatpush1.msra.mxu0 %v1301
    %1365 = vmatprep.subr.mxu0 %v1306
    %1366 = vmatpush1.msra.mxu0 %v1305
    %1367 = vmatprep.subr.mxu0 %v1310
    %1368 = vmatpush1.msra.mxu0 %v1309
    %1369 = vmatprep.subr.mxu0 %v1314
    %1370 = vmatpush1.msra.mxu0 %v1313
    %1371 = vmatprep.subr.mxu0 %v1318
    %1372 = vmatpush1.msra.mxu0 %v1317
    %1373 = vmatprep.subr.mxu0 %v1322
    %1374 = vmatpush1.msra.mxu0 %v1321
    %1375 = vmatprep.subr.mxu0 %v1326
    %1376 = vmatpush1.msra.mxu0 %v1325
    %1377 = vmatprep.subr.mxu0 %v1330
    %1378 = vmatpush1.msra.mxu0 %v1329
    %1379 = vmatprep.subr.mxu0 %v1334
    %1380 = vmatpush1.msra.mxu0 %v1333
    %1381 = vmatprep.subr.mxu0 %v1338
    %1382 = vmatpush1.msra.mxu0 %v1337
    %1383 = vmatprep.subr.mxu0 %v1342
    %1384 = vmatpush1.msra.mxu0 %v1341
    %1385 = vmatprep.subr.mxu0 %v1346
    %1386 = vmatpush1.msra.mxu0 %v1345
    %1387 = vmatprep.subr.mxu0 %v1350
    %1388 = vmatpush1.msra.mxu0 %v1349
    %1389 = vmatprep.subr.mxu0 %v1354
    %1390 = vmatpush1.msra.mxu0 %v1353
    %1391 = vmatprep.subr.mxu0 %v1358
    %1392 = vmatpush1.msra.mxu0 %v1357
    %1393 = vmatprep.subr.mxu0 0.0
    %1394 = vmatpush1.msra.mxu0 0.0
    %1395 = vmatprep.subr.mxu0 0.0
    %1396 = vmatpush1.msra.mxu0 0.0
    %1397 = vmatprep.subr.mxu0 0.0
    %1398 = vmatpush1.msra.mxu0 0.0
    %1399 = vmatprep.subr.mxu0 0.0
    %1400 = vmatpush1.msra.mxu0 0.0
    %1401 = vmatprep.subr.mxu0 0.0
    %1402 = vmatpush1.msra.mxu0 0.0
    %1403 = vmatprep.subr.mxu0 0.0
    %1404 = vmatpush1.msra.mxu0 0.0
    %1405 = vmatprep.subr.mxu0 0.0
    %1406 = vmatpush1.msra.mxu0 0.0
    %1407 = vmatprep.subr.mxu0 0.0
    %1408 = vmatpush1.msra.mxu0 0.0
    %1409 = vmatprep.subr.mxu0 0.0
    %1410 = vmatpush1.msra.mxu0 0.0
    %1411 = vmatprep.subr.mxu0 0.0
    %1412 = vmatpush1.msra.mxu0 0.0
    %1413 = vmatprep.subr.mxu0 0.0
    %1414 = vmatpush1.msra.mxu0 0.0
    %1415 = vmatprep.subr.mxu0 0.0
    %1416 = vmatpush1.msra.mxu0 0.0
    %1417 = vmatprep.subr.mxu0 0.0
    %1418 = vmatpush1.msra.mxu0 0.0
    %1419 = vmatprep.subr.mxu0 0.0
    %1420 = vmatpush1.msra.mxu0 0.0
    %1421 = vmatprep.subr.mxu0 0.0
    %1422 = vmatpush1.msra.mxu0 0.0
    %1423 = vmatprep.subr.mxu0 0.0
    %1424 = vmatpush1.msra.mxu0 0.0
    %1425 = vmatprep.mubr.f32.mxu0 0.0
    %1426 = vmatmul.mubr.f32.gmra.mrb[0].mxu0 %v1296
    %v1427 = vpop.f32.mrb[0].mxu0
    %v1428 = vadd.f32 0.0, %v1427
    %v1429 = vpop.f32.mrb[0].mxu0
    %v1430 = vadd.f32 0.0, %v1429
    %1431 = vdwg.mxu0
    %1432 = vmatprep.subr.mxu0 %v1300
    %1433 = vmatpush1.msra.mxu0 %v1299
    %1434 = vmatprep.subr.mxu0 %v1304
    %1435 = vmatpush1.msra.mxu0 %v1303
    %1436 = vmatprep.subr.mxu0 %v1308
    %1437 = vmatpush1.msra.mxu0 %v1307
    %1438 = vmatprep.subr.mxu0 %v1312
    %1439 = vmatpush1.msra.mxu0 %v1311
    %1440 = vmatprep.subr.mxu0 %v1316
    %1441 = vmatpush1.msra.mxu0 %v1315
    %1442 = vmatprep.subr.mxu0 %v1320
    %1443 = vmatpush1.msra.mxu0 %v1319
    %1444 = vmatprep.subr.mxu0 %v1324
    %1445 = vmatpush1.msra.mxu0 %v1323
    %1446 = vmatprep.subr.mxu0 %v1328
    %1447 = vmatpush1.msra.mxu0 %v1327
    %1448 = vmatprep.subr.mxu0 %v1332
    %1449 = vmatpush1.msra.mxu0 %v1331
    %1450 = vmatprep.subr.mxu0 %v1336
    %1451 = vmatpush1.msra.mxu0 %v1335
    %1452 = vmatprep.subr.mxu0 %v1340
    %1453 = vmatpush1.msra.mxu0 %v1339
    %1454 = vmatprep.subr.mxu0 %v1344
    %1455 = vmatpush1.msra.mxu0 %v1343
    %1456 = vmatprep.subr.mxu0 %v1348
    %1457 = vmatpush1.msra.mxu0 %v1347
    %1458 = vmatprep.subr.mxu0 %v1352
    %1459 = vmatpush1.msra.mxu0 %v1351
    %1460 = vmatprep.subr.mxu0 %v1356
    %1461 = vmatpush1.msra.mxu0 %v1355
    %1462 = vmatprep.subr.mxu0 %v1360
    %1463 = vmatpush1.msra.mxu0 %v1359
    %1464 = vmatprep.subr.mxu0 0.0
    %1465 = vmatpush1.msra.mxu0 0.0
    %1466 = vmatprep.subr.mxu0 0.0
    %1467 = vmatpush1.msra.mxu0 0.0
    %1468 = vmatprep.subr.mxu0 0.0
    %1469 = vmatpush1.msra.mxu0 0.0
    %1470 = vmatprep.subr.mxu0 0.0
    %1471 = vmatpush1.msra.mxu0 0.0
    %1472 = vmatprep.subr.mxu0 0.0
    %1473 = vmatpush1.msra.mxu0 0.0
    %1474 = vmatprep.subr.mxu0 0.0
    %1475 = vmatpush1.msra.mxu0 0.0
    %1476 = vmatprep.subr.mxu0 0.0
    %1477 = vmatpush1.msra.mxu0 0.0
    %1478 = vmatprep.subr.mxu0 0.0
    %1479 = vmatpush1.msra.mxu0 0.0
    %1480 = vmatprep.subr.mxu0 0.0
    %1481 = vmatpush1.msra.mxu0 0.0
    %1482 = vmatprep.subr.mxu0 0.0
    %1483 = vmatpush1.msra.mxu0 0.0
    %1484 = vmatprep.subr.mxu0 0.0
    %1485 = vmatpush1.msra.mxu0 0.0
    %1486 = vmatprep.subr.mxu0 0.0
    %1487 = vmatpush1.msra.mxu0 0.0
    %1488 = vmatprep.subr.mxu0 0.0
    %1489 = vmatpush1.msra.mxu0 0.0
    %1490 = vmatprep.subr.mxu0 0.0
    %1491 = vmatpush1.msra.mxu0 0.0
    %1492 = vmatprep.subr.mxu0 0.0
    %1493 = vmatpush1.msra.mxu0 0.0
    %1494 = vmatprep.subr.mxu0 0.0
    %1495 = vmatpush1.msra.mxu0 0.0
    %1496 = vmatprep.mubr.f32.mxu0 0.0
    %1497 = vmatmul.mubr.f32.gmra.mrb[0].mxu0 %v1296
    %v1498 = vpop.f32.mrb[0].mxu0
    %v1499 = vadd.f32 0.0, %v1498
    %v1500 = vpop.f32.mrb[0].mxu0
    %v1501 = vadd.f32 0.0, %v1500
    %1502 = vdwg.mxu0
    %v1503 = vadd.f32 %v994, %v1428
    %v1504 = vadd.f32 %v996, %v1430
    %v1505 = vadd.f32 %v1065, %v1499
    %v1506 = vadd.f32 %v1067, %v1501
    %v1507 = vmul.f32 %v1503, 0.5
    %v1508 = vtanh.pop %v1507
    %v1509 = vmul.f32 %v1508, 0.5
    %v1510 = vadd.f32 %v1509, 0.5
    %v1511 = vmul.f32 %v1504, 0.5
    %v1512 = vtanh.pop %v1511
    %v1513 = vmul.f32 %v1512, 0.5
    %v1514 = vadd.f32 %v1513, 0.5
    %v1515 = vtanh.pop %v1505
    %v1516 = vmul.f32 %v1506, 0.5
    %v1517 = vtanh.pop %v1516
    %v1518 = vmul.f32 %v1517, 0.5
    %v1519 = vadd.f32 %v1518, 0.5
    %v1520 = vmul.f32 %v1514, 0.0
    %v1521 = vmul.f32 %v1510, %v1515
    %v1522 = vadd.f32 %v1520, %v1521
    %v1523 = vtanh.pop %v1522
    %v1524 = vmul.f32 %v1519, %v1523
    %1525 = vst [vmem:[#allocation2] sm:$0xff] %v1524
    %v1526 = vld [vmem:[#allocation24] sm:$0xff]
    %v1527 = vld [vmem:[#allocation24 + $0x8] sm:$0xff]
    %v1528 = vld [vmem:[#allocation24 + $0x10] sm:$0xff]
    %v1529 = vld [vmem:[#allocation24 + $0x18] sm:$0xff]
    %v1530 = vld [vmem:[#allocation24 + $0x20] sm:$0xff]
    %v1531 = vld [vmem:[#allocation24 + $0x28] sm:$0xff]
    %v1532 = vld [vmem:[#allocation24 + $0x30] sm:$0xff]
    %v1533 = vld [vmem:[#allocation24 + $0x38] sm:$0xff]
    %v1534 = vld [vmem:[#allocation24 + $0x40] sm:$0xff]
    %v1535 = vld [vmem:[#allocation24 + $0x48] sm:$0xff]
    %v1536 = vld [vmem:[#allocation24 + $0x50] sm:$0xff]
    %v1537 = vld [vmem:[#allocation24 + $0x58] sm:$0xff]
    %v1538 = vld [vmem:[#allocation24 + $0x60] sm:$0xff]
    %v1539 = vld [vmem:[#allocation24 + $0x68] sm:$0xff]
    %v1540 = vld [vmem:[#allocation24 + $0x70] sm:$0xff]
    %v1541 = vld [vmem:[#allocation24 + $0x78] sm:$0xff]
    %v1542 = vld [vmem:[#allocation24 + $0x80] sm:$0xff]
    %v1543 = vld [vmem:[#allocation24 + $0x88] sm:$0xff]
    %v1544 = vld [vmem:[#allocation24 + $0x90] sm:$0xff]
    %v1545 = vld [vmem:[#allocation24 + $0x98] sm:$0xff]
    %v1546 = vld [vmem:[#allocation24 + $0xa0] sm:$0xff]
    %v1547 = vld [vmem:[#allocation24 + $0xa8] sm:$0xff]
    %v1548 = vld [vmem:[#allocation24 + $0xb0] sm:$0xff]
    %v1549 = vld [vmem:[#allocation24 + $0xb8] sm:$0xff]
    %v1550 = vld [vmem:[#allocation24 + $0xc0] sm:$0xff]
    %v1551 = vld [vmem:[#allocation24 + $0xc8] sm:$0xff]
    %v1552 = vld [vmem:[#allocation24 + $0xd0] sm:$0xff]
    %v1553 = vld [vmem:[#allocation24 + $0xd8] sm:$0xff]
    %v1554 = vld [vmem:[#allocation24 + $0xe0] sm:$0xff]
    %v1555 = vld [vmem:[#allocation24 + $0xe8] sm:$0xff]
    %v1556 = vld [vmem:[#allocation24 + $0xf0] sm:$0xff]
    %v1557 = vld [vmem:[#allocation24 + $0xf8] sm:$0xff]
    %v1558 = vld [vmem:[#allocation24 + $0x100] sm:$0xff]
    %v1559 = vld [vmem:[#allocation24 + $0x108] sm:$0xff]
    %v1560 = vld [vmem:[#allocation24 + $0x110] sm:$0xff]
    %v1561 = vld [vmem:[#allocation24 + $0x118] sm:$0xff]
    %v1562 = vld [vmem:[#allocation24 + $0x120] sm:$0xff]
    %v1563 = vld [vmem:[#allocation24 + $0x128] sm:$0xff]
    %v1564 = vld [vmem:[#allocation24 + $0x130] sm:$0xff]
    %v1565 = vld [vmem:[#allocation24 + $0x138] sm:$0xff]
    %v1566 = vld [vmem:[#allocation24 + $0x140] sm:$0xff]
    %v1567 = vld [vmem:[#allocation24 + $0x148] sm:$0xff]
    %v1568 = vld [vmem:[#allocation24 + $0x150] sm:$0xff]
    %v1569 = vld [vmem:[#allocation24 + $0x158] sm:$0xff]
    %v1570 = vld [vmem:[#allocation24 + $0x160] sm:$0xff]
    %v1571 = vld [vmem:[#allocation24 + $0x168] sm:$0xff]
    %v1572 = vld [vmem:[#allocation24 + $0x170] sm:$0xff]
    %v1573 = vld [vmem:[#allocation24 + $0x178] sm:$0xff]
    %v1574 = vld [vmem:[#allocation24 + $0x180] sm:$0xff]
    %v1575 = vld [vmem:[#allocation24 + $0x188] sm:$0xff]
    %v1576 = vld [vmem:[#allocation24 + $0x190] sm:$0xff]
    %v1577 = vld [vmem:[#allocation24 + $0x198] sm:$0xff]
    %v1578 = vld [vmem:[#allocation24 + $0x1a0] sm:$0xff]
    %v1579 = vld [vmem:[#allocation24 + $0x1a8] sm:$0xff]
    %v1580 = vld [vmem:[#allocation24 + $0x1b0] sm:$0xff]
    %v1581 = vld [vmem:[#allocation24 + $0x1b8] sm:$0xff]
    %v1582 = vld [vmem:[#allocation24 + $0x1c0] sm:$0xff]
    %v1583 = vld [vmem:[#allocation24 + $0x1c8] sm:$0xff]
    %v1584 = vld [vmem:[#allocation24 + $0x1d0] sm:$0xff]
    %v1585 = vld [vmem:[#allocation24 + $0x1d8] sm:$0xff]
    %v1586 = vld [vmem:[#allocation24 + $0x1e0] sm:$0xff]
    %v1587 = vld [vmem:[#allocation24 + $0x1e8] sm:$0xff]
    %v1588 = vld [vmem:[#allocation24 + $0x1f0] sm:$0xff]
    %v1589 = vld [vmem:[#allocation24 + $0x1f8] sm:$0xff]
    %v1590 = vld [vmem:[#allocation26] sm:$0xf]
    %v1592 = vlaneseq
    %v1593 = vshrl.u32 %v1592, 7
    %v1594 = vsub.s32 0, %v1593
    %v1595 = vrot.slane %v1590, %v1594
    %v1596 = vlaneseq
    %v1597 = vshrl.u32 %v1596, 7
    %v1598 = vsub.s32 1, %v1597
    %v1599 = vrot.slane %v1590, %v1598
    %v1600 = vlaneseq
    %v1601 = vshrl.u32 %v1600, 7
    %v1602 = vsub.s32 2, %v1601
    %v1603 = vrot.slane %v1590, %v1602
    %v1604 = vlaneseq
    %v1605 = vshrl.u32 %v1604, 7
    %v1606 = vsub.s32 3, %v1605
    %v1607 = vrot.slane %v1590, %v1606
    %1612 = vmatprep.subr.mxu0 %v1527
    %1613 = vmatpush1.msra.mxu0 %v1526
    %1614 = vmatprep.subr.mxu0 %v1531
    %1615 = vmatpush1.msra.mxu0 %v1530
    %1616 = vmatprep.subr.mxu0 %v1535
    %1617 = vmatpush1.msra.mxu0 %v1534
    %1618 = vmatprep.subr.mxu0 %v1539
    %1619 = vmatpush1.msra.mxu0 %v1538
    %1620 = vmatprep.subr.mxu0 %v1543
    %1621 = vmatpush1.msra.mxu0 %v1542
    %1622 = vmatprep.subr.mxu0 %v1547
    %1623 = vmatpush1.msra.mxu0 %v1546
    %1624 = vmatprep.subr.mxu0 %v1551
    %1625 = vmatpush1.msra.mxu0 %v1550
    %1626 = vmatprep.subr.mxu0 %v1555
    %1627 = vmatpush1.msra.mxu0 %v1554
    %1628 = vmatprep.subr.mxu0 %v1559
    %1629 = vmatpush1.msra.mxu0 %v1558
    %1630 = vmatprep.subr.mxu0 %v1563
    %1631 = vmatpush1.msra.mxu0 %v1562
    %1632 = vmatprep.subr.mxu0 %v1567
    %1633 = vmatpush1.msra.mxu0 %v1566
    %1634 = vmatprep.subr.mxu0 %v1571
    %1635 = vmatpush1.msra.mxu0 %v1570
    %1636 = vmatprep.subr.mxu0 %v1575
    %1637 = vmatpush1.msra.mxu0 %v1574
    %1638 = vmatprep.subr.mxu0 %v1579
    %1639 = vmatpush1.msra.mxu0 %v1578
    %1640 = vmatprep.subr.mxu0 %v1583
    %1641 = vmatpush1.msra.mxu0 %v1582
    %1642 = vmatprep.subr.mxu0 %v1587
    %1643 = vmatpush1.msra.mxu0 %v1586
    %1644 = vmatprep.subr.mxu0 0.0
    %1645 = vmatpush1.msra.mxu0 0.0
    %1646 = vmatprep.subr.mxu0 0.0
    %1647 = vmatpush1.msra.mxu0 0.0
    %1648 = vmatprep.subr.mxu0 0.0
    %1649 = vmatpush1.msra.mxu0 0.0
    %1650 = vmatprep.subr.mxu0 0.0
    %1651 = vmatpush1.msra.mxu0 0.0
    %1652 = vmatprep.subr.mxu0 0.0
    %1653 = vmatpush1.msra.mxu0 0.0
    %1654 = vmatprep.subr.mxu0 0.0
    %1655 = vmatpush1.msra.mxu0 0.0
    %1656 = vmatprep.subr.mxu0 0.0
    %1657 = vmatpush1.msra.mxu0 0.0
    %1658 = vmatprep.subr.mxu0 0.0
    %1659 = vmatpush1.msra.mxu0 0.0
    %1660 = vmatprep.subr.mxu0 0.0
    %1661 = vmatpush1.msra.mxu0 0.0
    %1662 = vmatprep.subr.mxu0 0.0
    %1663 = vmatpush1.msra.mxu0 0.0
    %1664 = vmatprep.subr.mxu0 0.0
    %1665 = vmatpush1.msra.mxu0 0.0
    %1666 = vmatprep.subr.mxu0 0.0
    %1667 = vmatpush1.msra.mxu0 0.0
    %1668 = vmatprep.subr.mxu0 0.0
    %1669 = vmatpush1.msra.mxu0 0.0
    %1670 = vmatprep.subr.mxu0 0.0
    %1671 = vmatpush1.msra.mxu0 0.0
    %1672 = vmatprep.subr.mxu0 0.0
    %1673 = vmatpush1.msra.mxu0 0.0
    %1674 = vmatprep.subr.mxu0 0.0
    %1675 = vmatpush1.msra.mxu0 0.0
    %1676 = vmatprep.mubr.f32.mxu0 0.0
    %1677 = vmatmul.mubr.f32.gmra.mrb[0].mxu0 %v1524
    %v1678 = vpop.f32.mrb[0].mxu0
    %v1679 = vadd.f32 %v1595, %v1678
    %v1680 = vpop.f32.mrb[0].mxu0
    %v1681 = vadd.f32 %v1599, %v1680
    %1682 = vdwg.mxu0
    %1683 = vmatprep.subr.mxu0 %v1529
    %1684 = vmatpush1.msra.mxu0 %v1528
    %1685 = vmatprep.subr.mxu0 %v1533
    %1686 = vmatpush1.msra.mxu0 %v1532
    %1687 = vmatprep.subr.mxu0 %v1537
    %1688 = vmatpush1.msra.mxu0 %v1536
    %1689 = vmatprep.subr.mxu0 %v1541
    %1690 = vmatpush1.msra.mxu0 %v1540
    %1691 = vmatprep.subr.mxu0 %v1545
    %1692 = vmatpush1.msra.mxu0 %v1544
    %1693 = vmatprep.subr.mxu0 %v1549
    %1694 = vmatpush1.msra.mxu0 %v1548
    %1695 = vmatprep.subr.mxu0 %v1553
    %1696 = vmatpush1.msra.mxu0 %v1552
    %1697 = vmatprep.subr.mxu0 %v1557
    %1698 = vmatpush1.msra.mxu0 %v1556
    %1699 = vmatprep.subr.mxu0 %v1561
    %1700 = vmatpush1.msra.mxu0 %v1560
    %1701 = vmatprep.subr.mxu0 %v1565
    %1702 = vmatpush1.msra.mxu0 %v1564
    %1703 = vmatprep.subr.mxu0 %v1569
    %1704 = vmatpush1.msra.mxu0 %v1568
    %1705 = vmatprep.subr.mxu0 %v1573
    %1706 = vmatpush1.msra.mxu0 %v1572
    %1707 = vmatprep.subr.mxu0 %v1577
    %1708 = vmatpush1.msra.mxu0 %v1576
    %1709 = vmatprep.subr.mxu0 %v1581
    %1710 = vmatpush1.msra.mxu0 %v1580
    %1711 = vmatprep.subr.mxu0 %v1585
    %1712 = vmatpush1.msra.mxu0 %v1584
    %1713 = vmatprep.subr.mxu0 %v1589
    %1714 = vmatpush1.msra.mxu0 %v1588
    %1715 = vmatprep.subr.mxu0 0.0
    %1716 = vmatpush1.msra.mxu0 0.0
    %1717 = vmatprep.subr.mxu0 0.0
    %1718 = vmatpush1.msra.mxu0 0.0
    %1719 = vmatprep.subr.mxu0 0.0
    %1720 = vmatpush1.msra.mxu0 0.0
    %1721 = vmatprep.subr.mxu0 0.0
    %1722 = vmatpush1.msra.mxu0 0.0
    %1723 = vmatprep.subr.mxu0 0.0
    %1724 = vmatpush1.msra.mxu0 0.0
    %1725 = vmatprep.subr.mxu0 0.0
    %1726 = vmatpush1.msra.mxu0 0.0
    %1727 = vmatprep.subr.mxu0 0.0
    %1728 = vmatpush1.msra.mxu0 0.0
    %1729 = vmatprep.subr.mxu0 0.0
    %1730 = vmatpush1.msra.mxu0 0.0
    %1731 = vmatprep.subr.mxu0 0.0
    %1732 = vmatpush1.msra.mxu0 0.0
    %1733 = vmatprep.subr.mxu0 0.0
    %1734 = vmatpush1.msra.mxu0 0.0
    %1735 = vmatprep.subr.mxu0 0.0
    %1736 = vmatpush1.msra.mxu0 0.0
    %1737 = vmatprep.subr.mxu0 0.0
    %1738 = vmatpush1.msra.mxu0 0.0
    %1739 = vmatprep.subr.mxu0 0.0
    %1740 = vmatpush1.msra.mxu0 0.0
    %1741 = vmatprep.subr.mxu0 0.0
    %1742 = vmatpush1.msra.mxu0 0.0
    %1743 = vmatprep.subr.mxu0 0.0
    %1744 = vmatpush1.msra.mxu0 0.0
    %1745 = vmatprep.subr.mxu0 0.0
    %1746 = vmatpush1.msra.mxu0 0.0
    %1747 = vmatprep.mubr.f32.mxu0 0.0
    %1748 = vmatmul.mubr.f32.gmra.mrb[0].mxu0 %v1524
    %v1749 = vpop.f32.mrb[0].mxu0
    %v1750 = vadd.f32 %v1603, %v1749
    %v1751 = vpop.f32.mrb[0].mxu0
    %v1752 = vadd.f32 %v1607, %v1751
    %1753 = vdwg.mxu0
    %v1754 = vld [vmem:[#allocation20] sm:$0xff]
    %v1755 = vld [vmem:[#allocation20 + $0x8] sm:$0xff]
    %v1756 = vld [vmem:[#allocation20 + $0x10] sm:$0xff]
    %v1757 = vld [vmem:[#allocation20 + $0x18] sm:$0xff]
    %v1758 = vld [vmem:[#allocation20 + $0x20] sm:$0xff]
    %v1759 = vld [vmem:[#allocation20 + $0x28] sm:$0xff]
    %v1760 = vld [vmem:[#allocation20 + $0x30] sm:$0xff]
    %v1761 = vld [vmem:[#allocation20 + $0x38] sm:$0xff]
    %v1762 = vld [vmem:[#allocation20 + $0x40] sm:$0xff]
    %v1763 = vld [vmem:[#allocation20 + $0x48] sm:$0xff]
    %v1764 = vld [vmem:[#allocation20 + $0x50] sm:$0xff]
    %v1765 = vld [vmem:[#allocation20 + $0x58] sm:$0xff]
    %v1766 = vld [vmem:[#allocation20 + $0x60] sm:$0xff]
    %v1767 = vld [vmem:[#allocation20 + $0x68] sm:$0xff]
    %v1768 = vld [vmem:[#allocation20 + $0x70] sm:$0xff]
    %v1769 = vld [vmem:[#allocation20 + $0x78] sm:$0xff]
    %v1770 = vld [vmem:[#allocation20 + $0x80] sm:$0xff]
    %v1771 = vld [vmem:[#allocation20 + $0x88] sm:$0xff]
    %v1772 = vld [vmem:[#allocation20 + $0x90] sm:$0xff]
    %v1773 = vld [vmem:[#allocation20 + $0x98] sm:$0xff]
    %v1774 = vld [vmem:[#allocation20 + $0xa0] sm:$0xff]
    %v1775 = vld [vmem:[#allocation20 + $0xa8] sm:$0xff]
    %v1776 = vld [vmem:[#allocation20 + $0xb0] sm:$0xff]
    %v1777 = vld [vmem:[#allocation20 + $0xb8] sm:$0xff]
    %v1778 = vld [vmem:[#allocation20 + $0xc0] sm:$0xff]
    %v1779 = vld [vmem:[#allocation20 + $0xc8] sm:$0xff]
    %v1780 = vld [vmem:[#allocation20 + $0xd0] sm:$0xff]
    %v1781 = vld [vmem:[#allocation20 + $0xd8] sm:$0xff]
    %v1782 = vld [vmem:[#allocation20 + $0xe0] sm:$0xff]
    %v1783 = vld [vmem:[#allocation20 + $0xe8] sm:$0xff]
    %v1784 = vld [vmem:[#allocation20 + $0xf0] sm:$0xff]
    %v1785 = vld [vmem:[#allocation20 + $0xf8] sm:$0xff]
    %v1786 = vld [vmem:[#allocation20 + $0x100] sm:$0xff]
    %v1787 = vld [vmem:[#allocation20 + $0x108] sm:$0xff]
    %v1788 = vld [vmem:[#allocation20 + $0x110] sm:$0xff]
    %v1789 = vld [vmem:[#allocation20 + $0x118] sm:$0xff]
    %v1790 = vld [vmem:[#allocation20 + $0x120] sm:$0xff]
    %v1791 = vld [vmem:[#allocation20 + $0x128] sm:$0xff]
    %v1792 = vld [vmem:[#allocation20 + $0x130] sm:$0xff]
    %v1793 = vld [vmem:[#allocation20 + $0x138] sm:$0xff]
    %v1794 = vld [vmem:[#allocation20 + $0x140] sm:$0xff]
    %v1795 = vld [vmem:[#allocation20 + $0x148] sm:$0xff]
    %v1796 = vld [vmem:[#allocation20 + $0x150] sm:$0xff]
    %v1797 = vld [vmem:[#allocation20 + $0x158] sm:$0xff]
    %v1798 = vld [vmem:[#allocation20 + $0x160] sm:$0xff]
    %v1799 = vld [vmem:[#allocation20 + $0x168] sm:$0xff]
    %v1800 = vld [vmem:[#allocation20 + $0x170] sm:$0xff]
    %v1801 = vld [vmem:[#allocation20 + $0x178] sm:$0xff]
    %v1802 = vld [vmem:[#allocation20 + $0x180] sm:$0xff]
    %v1803 = vld [vmem:[#allocation20 + $0x188] sm:$0xff]
    %v1804 = vld [vmem:[#allocation20 + $0x190] sm:$0xff]
    %v1805 = vld [vmem:[#allocation20 + $0x198] sm:$0xff]
    %v1806 = vld [vmem:[#allocation20 + $0x1a0] sm:$0xff]
    %v1807 = vld [vmem:[#allocation20 + $0x1a8] sm:$0xff]
    %v1808 = vld [vmem:[#allocation20 + $0x1b0] sm:$0xff]
    %v1809 = vld [vmem:[#allocation20 + $0x1b8] sm:$0xff]
    %v1810 = vld [vmem:[#allocation20 + $0x1c0] sm:$0xff]
    %v1811 = vld [vmem:[#allocation20 + $0x1c8] sm:$0xff]
    %v1812 = vld [vmem:[#allocation20 + $0x1d0] sm:$0xff]
    %v1813 = vld [vmem:[#allocation20 + $0x1d8] sm:$0xff]
    %v1814 = vld [vmem:[#allocation20 + $0x1e0] sm:$0xff]
    %v1815 = vld [vmem:[#allocation20 + $0x1e8] sm:$0xff]
    %v1816 = vld [vmem:[#allocation20 + $0x1f0] sm:$0xff]
    %v1817 = vld [vmem:[#allocation20 + $0x1f8] sm:$0xff]
    %1818 = vmatprep.subr.mxu0 %v1755
    %1819 = vmatpush1.msra.mxu0 %v1754
    %1820 = vmatprep.subr.mxu0 %v1759
    %1821 = vmatpush1.msra.mxu0 %v1758
    %1822 = vmatprep.subr.mxu0 %v1763
    %1823 = vmatpush1.msra.mxu0 %v1762
    %1824 = vmatprep.subr.mxu0 %v1767
    %1825 = vmatpush1.msra.mxu0 %v1766
    %1826 = vmatprep.subr.mxu0 %v1771
    %1827 = vmatpush1.msra.mxu0 %v1770
    %1828 = vmatprep.subr.mxu0 %v1775
    %1829 = vmatpush1.msra.mxu0 %v1774
    %1830 = vmatprep.subr.mxu0 %v1779
    %1831 = vmatpush1.msra.mxu0 %v1778
    %1832 = vmatprep.subr.mxu0 %v1783
    %1833 = vmatpush1.msra.mxu0 %v1782
    %1834 = vmatprep.subr.mxu0 %v1787
    %1835 = vmatpush1.msra.mxu0 %v1786
    %1836 = vmatprep.subr.mxu0 %v1791
    %1837 = vmatpush1.msra.mxu0 %v1790
    %1838 = vmatprep.subr.mxu0 %v1795
    %1839 = vmatpush1.msra.mxu0 %v1794
    %1840 = vmatprep.subr.mxu0 %v1799
    %1841 = vmatpush1.msra.mxu0 %v1798
    %1842 = vmatprep.subr.mxu0 %v1803
    %1843 = vmatpush1.msra.mxu0 %v1802
    %1844 = vmatprep.subr.mxu0 %v1807
    %1845 = vmatpush1.msra.mxu0 %v1806
    %1846 = vmatprep.subr.mxu0 %v1811
    %1847 = vmatpush1.msra.mxu0 %v1810
    %1848 = vmatprep.subr.mxu0 %v1815
    %1849 = vmatpush1.msra.mxu0 %v1814
    %1850 = vmatprep.subr.mxu0 0.0
    %1851 = vmatpush1.msra.mxu0 0.0
    %1852 = vmatprep.subr.mxu0 0.0
    %1853 = vmatpush1.msra.mxu0 0.0
    %1854 = vmatprep.subr.mxu0 0.0
    %1855 = vmatpush1.msra.mxu0 0.0
    %1856 = vmatprep.subr.mxu0 0.0
    %1857 = vmatpush1.msra.mxu0 0.0
    %1858 = vmatprep.subr.mxu0 0.0
    %1859 = vmatpush1.msra.mxu0 0.0
    %1860 = vmatprep.subr.mxu0 0.0
    %1861 = vmatpush1.msra.mxu0 0.0
    %1862 = vmatprep.subr.mxu0 0.0
    %1863 = vmatpush1.msra.mxu0 0.0
    %1864 = vmatprep.subr.mxu0 0.0
    %1865 = vmatpush1.msra.mxu0 0.0
    %1866 = vmatprep.subr.mxu0 0.0
    %1867 = vmatpush1.msra.mxu0 0.0
    %1868 = vmatprep.subr.mxu0 0.0
    %1869 = vmatpush1.msra.mxu0 0.0
    %1870 = vmatprep.subr.mxu0 0.0
    %1871 = vmatpush1.msra.mxu0 0.0
    %1872 = vmatprep.subr.mxu0 0.0
    %1873 = vmatpush1.msra.mxu0 0.0
    %1874 = vmatprep.subr.mxu0 0.0
    %1875 = vmatpush1.msra.mxu0 0.0
    %1876 = vmatprep.subr.mxu0 0.0
    %1877 = vmatpush1.msra.mxu0 0.0
    %1878 = vmatprep.subr.mxu0 0.0
    %1879 = vmatpush1.msra.mxu0 0.0
    %1880 = vmatprep.subr.mxu0 0.0
    %1881 = vmatpush1.msra.mxu0 0.0
    %1882 = vmatprep.mubr.f32.mxu0 0.0
    %1883 = vmatmul.mubr.f32.gmra.mrb[0].mxu0 %v1296
    %v1884 = vpop.f32.mrb[0].mxu0
    %v1885 = vadd.f32 0.0, %v1884
    %v1886 = vpop.f32.mrb[0].mxu0
    %v1887 = vadd.f32 0.0, %v1886
    %1888 = vdwg.mxu0
    %1889 = vmatprep.subr.mxu0 %v1757
    %1890 = vmatpush1.msra.mxu0 %v1756
    %1891 = vmatprep.subr.mxu0 %v1761
    %1892 = vmatpush1.msra.mxu0 %v1760
    %1893 = vmatprep.subr.mxu0 %v1765
    %1894 = vmatpush1.msra.mxu0 %v1764
    %1895 = vmatprep.subr.mxu0 %v1769
    %1896 = vmatpush1.msra.mxu0 %v1768
    %1897 = vmatprep.subr.mxu0 %v1773
    %1898 = vmatpush1.msra.mxu0 %v1772
    %1899 = vmatprep.subr.mxu0 %v1777
    %1900 = vmatpush1.msra.mxu0 %v1776
    %1901 = vmatprep.subr.mxu0 %v1781
    %1902 = vmatpush1.msra.mxu0 %v1780
    %1903 = vmatprep.subr.mxu0 %v1785
    %1904 = vmatpush1.msra.mxu0 %v1784
    %1905 = vmatprep.subr.mxu0 %v1789
    %1906 = vmatpush1.msra.mxu0 %v1788
    %1907 = vmatprep.subr.mxu0 %v1793
    %1908 = vmatpush1.msra.mxu0 %v1792
    %1909 = vmatprep.subr.mxu0 %v1797
    %1910 = vmatpush1.msra.mxu0 %v1796
    %1911 = vmatprep.subr.mxu0 %v1801
    %1912 = vmatpush1.msra.mxu0 %v1800
    %1913 = vmatprep.subr.mxu0 %v1805
    %1914 = vmatpush1.msra.mxu0 %v1804
    %1915 = vmatprep.subr.mxu0 %v1809
    %1916 = vmatpush1.msra.mxu0 %v1808
    %1917 = vmatprep.subr.mxu0 %v1813
    %1918 = vmatpush1.msra.mxu0 %v1812
    %1919 = vmatprep.subr.mxu0 %v1817
    %1920 = vmatpush1.msra.mxu0 %v1816
    %1921 = vmatprep.subr.mxu0 0.0
    %1922 = vmatpush1.msra.mxu0 0.0
    %1923 = vmatprep.subr.mxu0 0.0
    %1924 = vmatpush1.msra.mxu0 0.0
    %1925 = vmatprep.subr.mxu0 0.0
    %1926 = vmatpush1.msra.mxu0 0.0
    %1927 = vmatprep.subr.mxu0 0.0
    %1928 = vmatpush1.msra.mxu0 0.0
    %1929 = vmatprep.subr.mxu0 0.0
    %1930 = vmatpush1.msra.mxu0 0.0
    %1931 = vmatprep.subr.mxu0 0.0
    %1932 = vmatpush1.msra.mxu0 0.0
    %1933 = vmatprep.subr.mxu0 0.0
    %1934 = vmatpush1.msra.mxu0 0.0
    %1935 = vmatprep.subr.mxu0 0.0
    %1936 = vmatpush1.msra.mxu0 0.0
    %1937 = vmatprep.subr.mxu0 0.0
    %1938 = vmatpush1.msra.mxu0 0.0
    %1939 = vmatprep.subr.mxu0 0.0
    %1940 = vmatpush1.msra.mxu0 0.0
    %1941 = vmatprep.subr.mxu0 0.0
    %1942 = vmatpush1.msra.mxu0 0.0
    %1943 = vmatprep.subr.mxu0 0.0
    %1944 = vmatpush1.msra.mxu0 0.0
    %1945 = vmatprep.subr.mxu0 0.0
    %1946 = vmatpush1.msra.mxu0 0.0
    %1947 = vmatprep.subr.mxu0 0.0
    %1948 = vmatpush1.msra.mxu0 0.0
    %1949 = vmatprep.subr.mxu0 0.0
    %1950 = vmatpush1.msra.mxu0 0.0
    %1951 = vmatprep.subr.mxu0 0.0
    %1952 = vmatpush1.msra.mxu0 0.0
    %1953 = vmatprep.mubr.f32.mxu0 0.0
    %1954 = vmatmul.mubr.f32.gmra.mrb[0].mxu0 %v1296
    %v1955 = vpop.f32.mrb[0].mxu0
    %v1956 = vadd.f32 0.0, %v1955
    %v1957 = vpop.f32.mrb[0].mxu0
    %v1958 = vadd.f32 0.0, %v1957
    %1959 = vdwg.mxu0
    %v1960 = vadd.f32 %v766, %v1885
    %v1961 = vadd.f32 %v768, %v1887
    %v1962 = vadd.f32 %v837, %v1956
    %v1963 = vadd.f32 %v839, %v1958
    %v1964 = vmul.f32 %v1960, 0.5
    %v1965 = vtanh.pop %v1964
    %v1966 = vmul.f32 %v1965, 0.5
    %v1967 = vadd.f32 %v1966, 0.5
    %v1968 = vmul.f32 %v1961, 0.5
    %v1969 = vtanh.pop %v1968
    %v1970 = vmul.f32 %v1969, 0.5
    %v1971 = vadd.f32 %v1970, 0.5
    %v1972 = vtanh.pop %v1962
    %v1973 = vmul.f32 %v1963, 0.5
    %v1974 = vtanh.pop %v1973
    %v1975 = vmul.f32 %v1974, 0.5
    %v1976 = vadd.f32 %v1975, 0.5
    %v1977 = vmul.f32 %v1971, %v1294
    %v1978 = vmul.f32 %v1967, %v1972
    %v1979 = vadd.f32 %v1977, %v1978
    %v1980 = vtanh.pop %v1979
    %v1981 = vmul.f32 %v1976, %v1980
    %v1982 = vld [vmem:[#allocation23] sm:$0xff]
    %v1983 = vld [vmem:[#allocation23 + $0x8] sm:$0xff]
    %v1984 = vld [vmem:[#allocation23 + $0x10] sm:$0xff]
    %v1985 = vld [vmem:[#allocation23 + $0x18] sm:$0xff]
    %v1986 = vld [vmem:[#allocation23 + $0x20] sm:$0xff]
    %v1987 = vld [vmem:[#allocation23 + $0x28] sm:$0xff]
    %v1988 = vld [vmem:[#allocation23 + $0x30] sm:$0xff]
    %v1989 = vld [vmem:[#allocation23 + $0x38] sm:$0xff]
    %v1990 = vld [vmem:[#allocation23 + $0x40] sm:$0xff]
    %v1991 = vld [vmem:[#allocation23 + $0x48] sm:$0xff]
    %v1992 = vld [vmem:[#allocation23 + $0x50] sm:$0xff]
    %v1993 = vld [vmem:[#allocation23 + $0x58] sm:$0xff]
    %v1994 = vld [vmem:[#allocation23 + $0x60] sm:$0xff]
    %v1995 = vld [vmem:[#allocation23 + $0x68] sm:$0xff]
    %v1996 = vld [vmem:[#allocation23 + $0x70] sm:$0xff]
    %v1997 = vld [vmem:[#allocation23 + $0x78] sm:$0xff]
    %v1998 = vld [vmem:[#allocation23 + $0x80] sm:$0xff]
    %v1999 = vld [vmem:[#allocation23 + $0x88] sm:$0xff]
    %v2000 = vld [vmem:[#allocation23 + $0x90] sm:$0xff]
    %v2001 = vld [vmem:[#allocation23 + $0x98] sm:$0xff]
    %v2002 = vld [vmem:[#allocation23 + $0xa0] sm:$0xff]
    %v2003 = vld [vmem:[#allocation23 + $0xa8] sm:$0xff]
    %v2004 = vld [vmem:[#allocation23 + $0xb0] sm:$0xff]
    %v2005 = vld [vmem:[#allocation23 + $0xb8] sm:$0xff]
    %v2006 = vld [vmem:[#allocation23 + $0xc0] sm:$0xff]
    %v2007 = vld [vmem:[#allocation23 + $0xc8] sm:$0xff]
    %v2008 = vld [vmem:[#allocation23 + $0xd0] sm:$0xff]
    %v2009 = vld [vmem:[#allocation23 + $0xd8] sm:$0xff]
    %v2010 = vld [vmem:[#allocation23 + $0xe0] sm:$0xff]
    %v2011 = vld [vmem:[#allocation23 + $0xe8] sm:$0xff]
    %v2012 = vld [vmem:[#allocation23 + $0xf0] sm:$0xff]
    %v2013 = vld [vmem:[#allocation23 + $0xf8] sm:$0xff]
    %v2014 = vld [vmem:[#allocation23 + $0x100] sm:$0xff]
    %v2015 = vld [vmem:[#allocation23 + $0x108] sm:$0xff]
    %v2016 = vld [vmem:[#allocation23 + $0x110] sm:$0xff]
    %v2017 = vld [vmem:[#allocation23 + $0x118] sm:$0xff]
    %v2018 = vld [vmem:[#allocation23 + $0x120] sm:$0xff]
    %v2019 = vld [vmem:[#allocation23 + $0x128] sm:$0xff]
    %v2020 = vld [vmem:[#allocation23 + $0x130] sm:$0xff]
    %v2021 = vld [vmem:[#allocation23 + $0x138] sm:$0xff]
    %v2022 = vld [vmem:[#allocation23 + $0x140] sm:$0xff]
    %v2023 = vld [vmem:[#allocation23 + $0x148] sm:$0xff]
    %v2024 = vld [vmem:[#allocation23 + $0x150] sm:$0xff]
    %v2025 = vld [vmem:[#allocation23 + $0x158] sm:$0xff]
    %v2026 = vld [vmem:[#allocation23 + $0x160] sm:$0xff]
    %v2027 = vld [vmem:[#allocation23 + $0x168] sm:$0xff]
    %v2028 = vld [vmem:[#allocation23 + $0x170] sm:$0xff]
    %v2029 = vld [vmem:[#allocation23 + $0x178] sm:$0xff]
    %v2030 = vld [vmem:[#allocation23 + $0x180] sm:$0xff]
    %v2031 = vld [vmem:[#allocation23 + $0x188] sm:$0xff]
    %v2032 = vld [vmem:[#allocation23 + $0x190] sm:$0xff]
    %v2033 = vld [vmem:[#allocation23 + $0x198] sm:$0xff]
    %v2034 = vld [vmem:[#allocation23 + $0x1a0] sm:$0xff]
    %v2035 = vld [vmem:[#allocation23 + $0x1a8] sm:$0xff]
    %v2036 = vld [vmem:[#allocation23 + $0x1b0] sm:$0xff]
    %v2037 = vld [vmem:[#allocation23 + $0x1b8] sm:$0xff]
    %v2038 = vld [vmem:[#allocation23 + $0x1c0] sm:$0xff]
    %v2039 = vld [vmem:[#allocation23 + $0x1c8] sm:$0xff]
    %v2040 = vld [vmem:[#allocation23 + $0x1d0] sm:$0xff]
    %v2041 = vld [vmem:[#allocation23 + $0x1d8] sm:$0xff]
    %v2042 = vld [vmem:[#allocation23 + $0x1e0] sm:$0xff]
    %v2043 = vld [vmem:[#allocation23 + $0x1e8] sm:$0xff]
    %v2044 = vld [vmem:[#allocation23 + $0x1f0] sm:$0xff]
    %v2045 = vld [vmem:[#allocation23 + $0x1f8] sm:$0xff]
    %2046 = vmatprep.subr.mxu0 %v1983
    %2047 = vmatpush1.msra.mxu0 %v1982
    %2048 = vmatprep.subr.mxu0 %v1987
    %2049 = vmatpush1.msra.mxu0 %v1986
    %2050 = vmatprep.subr.mxu0 %v1991
    %2051 = vmatpush1.msra.mxu0 %v1990
    %2052 = vmatprep.subr.mxu0 %v1995
    %2053 = vmatpush1.msra.mxu0 %v1994
    %2054 = vmatprep.subr.mxu0 %v1999
    %2055 = vmatpush1.msra.mxu0 %v1998
    %2056 = vmatprep.subr.mxu0 %v2003
    %2057 = vmatpush1.msra.mxu0 %v2002
    %2058 = vmatprep.subr.mxu0 %v2007
    %2059 = vmatpush1.msra.mxu0 %v2006
    %2060 = vmatprep.subr.mxu0 %v2011
    %2061 = vmatpush1.msra.mxu0 %v2010
    %2062 = vmatprep.subr.mxu0 %v2015
    %2063 = vmatpush1.msra.mxu0 %v2014
    %2064 = vmatprep.subr.mxu0 %v2019
    %2065 = vmatpush1.msra.mxu0 %v2018
    %2066 = vmatprep.subr.mxu0 %v2023
    %2067 = vmatpush1.msra.mxu0 %v2022
    %2068 = vmatprep.subr.mxu0 %v2027
    %2069 = vmatpush1.msra.mxu0 %v2026
    %2070 = vmatprep.subr.mxu0 %v2031
    %2071 = vmatpush1.msra.mxu0 %v2030
    %2072 = vmatprep.subr.mxu0 %v2035
    %2073 = vmatpush1.msra.mxu0 %v2034
    %2074 = vmatprep.subr.mxu0 %v2039
    %2075 = vmatpush1.msra.mxu0 %v2038
    %2076 = vmatprep.subr.mxu0 %v2043
    %2077 = vmatpush1.msra.mxu0 %v2042
    %2078 = vmatprep.subr.mxu0 0.0
    %2079 = vmatpush1.msra.mxu0 0.0
    %2080 = vmatprep.subr.mxu0 0.0
    %2081 = vmatpush1.msra.mxu0 0.0
    %2082 = vmatprep.subr.mxu0 0.0
    %2083 = vmatpush1.msra.mxu0 0.0
    %2084 = vmatprep.subr.mxu0 0.0
    %2085 = vmatpush1.msra.mxu0 0.0
    %2086 = vmatprep.subr.mxu0 0.0
    %2087 = vmatpush1.msra.mxu0 0.0
    %2088 = vmatprep.subr.mxu0 0.0
    %2089 = vmatpush1.msra.mxu0 0.0
    %2090 = vmatprep.subr.mxu0 0.0
    %2091 = vmatpush1.msra.mxu0 0.0
    %2092 = vmatprep.subr.mxu0 0.0
    %2093 = vmatpush1.msra.mxu0 0.0
    %2094 = vmatprep.subr.mxu0 0.0
    %2095 = vmatpush1.msra.mxu0 0.0
    %2096 = vmatprep.subr.mxu0 0.0
    %2097 = vmatpush1.msra.mxu0 0.0
    %2098 = vmatprep.subr.mxu0 0.0
    %2099 = vmatpush1.msra.mxu0 0.0
    %2100 = vmatprep.subr.mxu0 0.0
    %2101 = vmatpush1.msra.mxu0 0.0
    %2102 = vmatprep.subr.mxu0 0.0
    %2103 = vmatpush1.msra.mxu0 0.0
    %2104 = vmatprep.subr.mxu0 0.0
    %2105 = vmatpush1.msra.mxu0 0.0
    %2106 = vmatprep.subr.mxu0 0.0
    %2107 = vmatpush1.msra.mxu0 0.0
    %2108 = vmatprep.subr.mxu0 0.0
    %2109 = vmatpush1.msra.mxu0 0.0
    %2110 = vmatprep.mubr.f32.mxu0 0.0
    %2111 = vmatmul.mubr.f32.gmra.mrb[0].mxu0 %v1981
    %v2112 = vpop.f32.mrb[0].mxu0
    %v2113 = vadd.f32 0.0, %v2112
    %v2114 = vpop.f32.mrb[0].mxu0
    %v2115 = vadd.f32 0.0, %v2114
    %2116 = vdwg.mxu0
    %2117 = vmatprep.subr.mxu0 %v1985
    %2118 = vmatpush1.msra.mxu0 %v1984
    %2119 = vmatprep.subr.mxu0 %v1989
    %2120 = vmatpush1.msra.mxu0 %v1988
    %2121 = vmatprep.subr.mxu0 %v1993
    %2122 = vmatpush1.msra.mxu0 %v1992
    %2123 = vmatprep.subr.mxu0 %v1997
    %2124 = vmatpush1.msra.mxu0 %v1996
    %2125 = vmatprep.subr.mxu0 %v2001
    %2126 = vmatpush1.msra.mxu0 %v2000
    %2127 = vmatprep.subr.mxu0 %v2005
    %2128 = vmatpush1.msra.mxu0 %v2004
    %2129 = vmatprep.subr.mxu0 %v2009
    %2130 = vmatpush1.msra.mxu0 %v2008
    %2131 = vmatprep.subr.mxu0 %v2013
    %2132 = vmatpush1.msra.mxu0 %v2012
    %2133 = vmatprep.subr.mxu0 %v2017
    %2134 = vmatpush1.msra.mxu0 %v2016
    %2135 = vmatprep.subr.mxu0 %v2021
    %2136 = vmatpush1.msra.mxu0 %v2020
    %2137 = vmatprep.subr.mxu0 %v2025
    %2138 = vmatpush1.msra.mxu0 %v2024
    %2139 = vmatprep.subr.mxu0 %v2029
    %2140 = vmatpush1.msra.mxu0 %v2028
    %2141 = vmatprep.subr.mxu0 %v2033
    %2142 = vmatpush1.msra.mxu0 %v2032
    %2143 = vmatprep.subr.mxu0 %v2037
    %2144 = vmatpush1.msra.mxu0 %v2036
    %2145 = vmatprep.subr.mxu0 %v2041
    %2146 = vmatpush1.msra.mxu0 %v2040
    %2147 = vmatprep.subr.mxu0 %v2045
    %2148 = vmatpush1.msra.mxu0 %v2044
    %2149 = vmatprep.subr.mxu0 0.0
    %2150 = vmatpush1.msra.mxu0 0.0
    %2151 = vmatprep.subr.mxu0 0.0
    %2152 = vmatpush1.msra.mxu0 0.0
    %2153 = vmatprep.subr.mxu0 0.0
    %2154 = vmatpush1.msra.mxu0 0.0
    %2155 = vmatprep.subr.mxu0 0.0
    %2156 = vmatpush1.msra.mxu0 0.0
    %2157 = vmatprep.subr.mxu0 0.0
    %2158 = vmatpush1.msra.mxu0 0.0
    %2159 = vmatprep.subr.mxu0 0.0
    %2160 = vmatpush1.msra.mxu0 0.0
    %2161 = vmatprep.subr.mxu0 0.0
    %2162 = vmatpush1.msra.mxu0 0.0
    %2163 = vmatprep.subr.mxu0 0.0
    %2164 = vmatpush1.msra.mxu0 0.0
    %2165 = vmatprep.subr.mxu0 0.0
    %2166 = vmatpush1.msra.mxu0 0.0
    %2167 = vmatprep.subr.mxu0 0.0
    %2168 = vmatpush1.msra.mxu0 0.0
    %2169 = vmatprep.subr.mxu0 0.0
    %2170 = vmatpush1.msra.mxu0 0.0
    %2171 = vmatprep.subr.mxu0 0.0
    %2172 = vmatpush1.msra.mxu0 0.0
    %2173 = vmatprep.subr.mxu0 0.0
    %2174 = vmatpush1.msra.mxu0 0.0
    %2175 = vmatprep.subr.mxu0 0.0
    %2176 = vmatpush1.msra.mxu0 0.0
    %2177 = vmatprep.subr.mxu0 0.0
    %2178 = vmatpush1.msra.mxu0 0.0
    %2179 = vmatprep.subr.mxu0 0.0
    %2180 = vmatpush1.msra.mxu0 0.0
    %2181 = vmatprep.mubr.f32.mxu0 0.0
    %2182 = vmatmul.mubr.f32.gmra.mrb[0].mxu0 %v1981
    %v2183 = vpop.f32.mrb[0].mxu0
    %v2184 = vadd.f32 0.0, %v2183
    %v2185 = vpop.f32.mrb[0].mxu0
    %v2186 = vadd.f32 0.0, %v2185
    %2187 = vdwg.mxu0
    %v2188 = vadd.f32 %v1679, %v2113
    %v2189 = vadd.f32 %v1681, %v2115
    %v2190 = vadd.f32 %v1750, %v2184
    %v2191 = vadd.f32 %v1752, %v2186
    %v2192 = vmul.f32 %v2188, 0.5
    %v2193 = vtanh.pop %v2192
    %v2194 = vmul.f32 %v2193, 0.5
    %v2195 = vadd.f32 %v2194, 0.5
    %v2196 = vmul.f32 %v2189, 0.5
    %v2197 = vtanh.pop %v2196
    %v2198 = vmul.f32 %v2197, 0.5
    %v2199 = vadd.f32 %v2198, 0.5
    %v2200 = vtanh.pop %v2190
    %v2201 = vmul.f32 %v2191, 0.5
    %v2202 = vtanh.pop %v2201
    %v2203 = vmul.f32 %v2202, 0.5
    %v2204 = vadd.f32 %v2203, 0.5
    %v2205 = vmul.f32 %v2199, %v1522
    %v2206 = vmul.f32 %v2195, %v2200
    %v2207 = vadd.f32 %v2205, %v2206
    %v2208 = vtanh.pop %v2207
    %v2209 = vmul.f32 %v2204, %v2208
    %s2210 = scalar_lea.vmem [#allocation2], 8
    %2211 = vst [vmem:[%s2210] sm:$0xff] %v2209
    %v2212 = vld [vmem:[#allocation24] sm:$0xff]
    %v2213 = vld [vmem:[#allocation24 + $0x8] sm:$0xff]
    %v2214 = vld [vmem:[#allocation24 + $0x10] sm:$0xff]
    %v2215 = vld [vmem:[#allocation24 + $0x18] sm:$0xff]
    %v2216 = vld [vmem:[#allocation24 + $0x20] sm:$0xff]
    %v2217 = vld [vmem:[#allocation24 + $0x28] sm:$0xff]
    %v2218 = vld [vmem:[#allocation24 + $0x30] sm:$0xff]
    %v2219 = vld [vmem:[#allocation24 + $0x38] sm:$0xff]
    %v2220 = vld [vmem:[#allocation24 + $0x40] sm:$0xff]
    %v2221 = vld [vmem:[#allocation24 + $0x48] sm:$0xff]
    %v2222 = vld [vmem:[#allocation24 + $0x50] sm:$0xff]
    %v2223 = vld [vmem:[#allocation24 + $0x58] sm:$0xff]
    %v2224 = vld [vmem:[#allocation24 + $0x60] sm:$0xff]
    %v2225 = vld [vmem:[#allocation24 + $0x68] sm:$0xff]
    %v2226 = vld [vmem:[#allocation24 + $0x70] sm:$0xff]
    %v2227 = vld [vmem:[#allocation24 + $0x78] sm:$0xff]
    %v2228 = vld [vmem:[#allocation24 + $0x80] sm:$0xff]
    %v2229 = vld [vmem:[#allocation24 + $0x88] sm:$0xff]
    %v2230 = vld [vmem:[#allocation24 + $0x90] sm:$0xff]
    %v2231 = vld [vmem:[#allocation24 + $0x98] sm:$0xff]
    %v2232 = vld [vmem:[#allocation24 + $0xa0] sm:$0xff]
    %v2233 = vld [vmem:[#allocation24 + $0xa8] sm:$0xff]
    %v2234 = vld [vmem:[#allocation24 + $0xb0] sm:$0xff]
    %v2235 = vld [vmem:[#allocation24 + $0xb8] sm:$0xff]
    %v2236 = vld [vmem:[#allocation24 + $0xc0] sm:$0xff]
    %v2237 = vld [vmem:[#allocation24 + $0xc8] sm:$0xff]
    %v2238 = vld [vmem:[#allocation24 + $0xd0] sm:$0xff]
    %v2239 = vld [vmem:[#allocation24 + $0xd8] sm:$0xff]
    %v2240 = vld [vmem:[#allocation24 + $0xe0] sm:$0xff]
    %v2241 = vld [vmem:[#allocation24 + $0xe8] sm:$0xff]
    %v2242 = vld [vmem:[#allocation24 + $0xf0] sm:$0xff]
    %v2243 = vld [vmem:[#allocation24 + $0xf8] sm:$0xff]
    %v2244 = vld [vmem:[#allocation24 + $0x100] sm:$0xff]
    %v2245 = vld [vmem:[#allocation24 + $0x108] sm:$0xff]
    %v2246 = vld [vmem:[#allocation24 + $0x110] sm:$0xff]
    %v2247 = vld [vmem:[#allocation24 + $0x118] sm:$0xff]
    %v2248 = vld [vmem:[#allocation24 + $0x120] sm:$0xff]
    %v2249 = vld [vmem:[#allocation24 + $0x128] sm:$0xff]
    %v2250 = vld [vmem:[#allocation24 + $0x130] sm:$0xff]
    %v2251 = vld [vmem:[#allocation24 + $0x138] sm:$0xff]
    %v2252 = vld [vmem:[#allocation24 + $0x140] sm:$0xff]
    %v2253 = vld [vmem:[#allocation24 + $0x148] sm:$0xff]
    %v2254 = vld [vmem:[#allocation24 + $0x150] sm:$0xff]
    %v2255 = vld [vmem:[#allocation24 + $0x158] sm:$0xff]
    %v2256 = vld [vmem:[#allocation24 + $0x160] sm:$0xff]
    %v2257 = vld [vmem:[#allocation24 + $0x168] sm:$0xff]
    %v2258 = vld [vmem:[#allocation24 + $0x170] sm:$0xff]
    %v2259 = vld [vmem:[#allocation24 + $0x178] sm:$0xff]
    %v2260 = vld [vmem:[#allocation24 + $0x180] sm:$0xff]
    %v2261 = vld [vmem:[#allocation24 + $0x188] sm:$0xff]
    %v2262 = vld [vmem:[#allocation24 + $0x190] sm:$0xff]
    %v2263 = vld [vmem:[#allocation24 + $0x198] sm:$0xff]
    %v2264 = vld [vmem:[#allocation24 + $0x1a0] sm:$0xff]
    %v2265 = vld [vmem:[#allocation24 + $0x1a8] sm:$0xff]
    %v2266 = vld [vmem:[#allocation24 + $0x1b0] sm:$0xff]
    %v2267 = vld [vmem:[#allocation24 + $0x1b8] sm:$0xff]
    %v2268 = vld [vmem:[#allocation24 + $0x1c0] sm:$0xff]
    %v2269 = vld [vmem:[#allocation24 + $0x1c8] sm:$0xff]
    %v2270 = vld [vmem:[#allocation24 + $0x1d0] sm:$0xff]
    %v2271 = vld [vmem:[#allocation24 + $0x1d8] sm:$0xff]
    %v2272 = vld [vmem:[#allocation24 + $0x1e0] sm:$0xff]
    %v2273 = vld [vmem:[#allocation24 + $0x1e8] sm:$0xff]
    %v2274 = vld [vmem:[#allocation24 + $0x1f0] sm:$0xff]
    %v2275 = vld [vmem:[#allocation24 + $0x1f8] sm:$0xff]
    %v2276 = vld [vmem:[#allocation26] sm:$0xf]
    %v2278 = vlaneseq
    %v2279 = vshrl.u32 %v2278, 7
    %v2280 = vsub.s32 0, %v2279
    %v2281 = vrot.slane %v2276, %v2280
    %v2282 = vlaneseq
    %v2283 = vshrl.u32 %v2282, 7
    %v2284 = vsub.s32 1, %v2283
    %v2285 = vrot.slane %v2276, %v2284
    %v2286 = vlaneseq
    %v2287 = vshrl.u32 %v2286, 7
    %v2288 = vsub.s32 2, %v2287
    %v2289 = vrot.slane %v2276, %v2288
    %v2290 = vlaneseq
    %v2291 = vshrl.u32 %v2290, 7
    %v2292 = vsub.s32 3, %v2291
    %v2293 = vrot.slane %v2276, %v2292
    %2298 = vmatprep.subr.mxu0 %v2213
    %2299 = vmatpush1.msra.mxu0 %v2212
    %2300 = vmatprep.subr.mxu0 %v2217
    %2301 = vmatpush1.msra.mxu0 %v2216
    %2302 = vmatprep.subr.mxu0 %v2221
    %2303 = vmatpush1.msra.mxu0 %v2220
    %2304 = vmatprep.subr.mxu0 %v2225
    %2305 = vmatpush1.msra.mxu0 %v2224
    %2306 = vmatprep.subr.mxu0 %v2229
    %2307 = vmatpush1.msra.mxu0 %v2228
    %2308 = vmatprep.subr.mxu0 %v2233
    %2309 = vmatpush1.msra.mxu0 %v2232
    %2310 = vmatprep.subr.mxu0 %v2237
    %2311 = vmatpush1.msra.mxu0 %v2236
    %2312 = vmatprep.subr.mxu0 %v2241
    %2313 = vmatpush1.msra.mxu0 %v2240
    %2314 = vmatprep.subr.mxu0 %v2245
    %2315 = vmatpush1.msra.mxu0 %v2244
    %2316 = vmatprep.subr.mxu0 %v2249
    %2317 = vmatpush1.msra.mxu0 %v2248
    %2318 = vmatprep.subr.mxu0 %v2253
    %2319 = vmatpush1.msra.mxu0 %v2252
    %2320 = vmatprep.subr.mxu0 %v2257
    %2321 = vmatpush1.msra.mxu0 %v2256
    %2322 = vmatprep.subr.mxu0 %v2261
    %2323 = vmatpush1.msra.mxu0 %v2260
    %2324 = vmatprep.subr.mxu0 %v2265
    %2325 = vmatpush1.msra.mxu0 %v2264
    %2326 = vmatprep.subr.mxu0 %v2269
    %2327 = vmatpush1.msra.mxu0 %v2268
    %2328 = vmatprep.subr.mxu0 %v2273
    %2329 = vmatpush1.msra.mxu0 %v2272
    %2330 = vmatprep.subr.mxu0 0.0
    %2331 = vmatpush1.msra.mxu0 0.0
    %2332 = vmatprep.subr.mxu0 0.0
    %2333 = vmatpush1.msra.mxu0 0.0
    %2334 = vmatprep.subr.mxu0 0.0
    %2335 = vmatpush1.msra.mxu0 0.0
    %2336 = vmatprep.subr.mxu0 0.0
    %2337 = vmatpush1.msra.mxu0 0.0
    %2338 = vmatprep.subr.mxu0 0.0
    %2339 = vmatpush1.msra.mxu0 0.0
    %2340 = vmatprep.subr.mxu0 0.0
    %2341 = vmatpush1.msra.mxu0 0.0
    %2342 = vmatprep.subr.mxu0 0.0
    %2343 = vmatpush1.msra.mxu0 0.0
    %2344 = vmatprep.subr.mxu0 0.0
    %2345 = vmatpush1.msra.mxu0 0.0
    %2346 = vmatprep.subr.mxu0 0.0
    %2347 = vmatpush1.msra.mxu0 0.0
    %2348 = vmatprep.subr.mxu0 0.0
    %2349 = vmatpush1.msra.mxu0 0.0
    %2350 = vmatprep.subr.mxu0 0.0
    %2351 = vmatpush1.msra.mxu0 0.0
    %2352 = vmatprep.subr.mxu0 0.0
    %2353 = vmatpush1.msra.mxu0 0.0
    %2354 = vmatprep.subr.mxu0 0.0
    %2355 = vmatpush1.msra.mxu0 0.0
    %2356 = vmatprep.subr.mxu0 0.0
    %2357 = vmatpush1.msra.mxu0 0.0
    %2358 = vmatprep.subr.mxu0 0.0
    %2359 = vmatpush1.msra.mxu0 0.0
    %2360 = vmatprep.subr.mxu0 0.0
    %2361 = vmatpush1.msra.mxu0 0.0
    %2362 = vmatprep.mubr.f32.mxu0 0.0
    %2363 = vmatmul.mubr.f32.gmra.mrb[0].mxu0 %v2209
    %v2364 = vpop.f32.mrb[0].mxu0
    %v2365 = vadd.f32 %v2281, %v2364
    %v2366 = vpop.f32.mrb[0].mxu0
    %v2367 = vadd.f32 %v2285, %v2366
    %2368 = vdwg.mxu0
    %2369 = vmatprep.subr.mxu0 %v2215
    %2370 = vmatpush1.msra.mxu0 %v2214
    %2371 = vmatprep.subr.mxu0 %v2219
    %2372 = vmatpush1.msra.mxu0 %v2218
    %2373 = vmatprep.subr.mxu0 %v2223
    %2374 = vmatpush1.msra.mxu0 %v2222
    %2375 = vmatprep.subr.mxu0 %v2227
    %2376 = vmatpush1.msra.mxu0 %v2226
    %2377 = vmatprep.subr.mxu0 %v2231
    %2378 = vmatpush1.msra.mxu0 %v2230
    %2379 = vmatprep.subr.mxu0 %v2235
    %2380 = vmatpush1.msra.mxu0 %v2234
    %2381 = vmatprep.subr.mxu0 %v2239
    %2382 = vmatpush1.msra.mxu0 %v2238
    %2383 = vmatprep.subr.mxu0 %v2243
    %2384 = vmatpush1.msra.mxu0 %v2242
    %2385 = vmatprep.subr.mxu0 %v2247
    %2386 = vmatpush1.msra.mxu0 %v2246
    %2387 = vmatprep.subr.mxu0 %v2251
    %2388 = vmatpush1.msra.mxu0 %v2250
    %2389 = vmatprep.subr.mxu0 %v2255
    %2390 = vmatpush1.msra.mxu0 %v2254
    %2391 = vmatprep.subr.mxu0 %v2259
    %2392 = vmatpush1.msra.mxu0 %v2258
    %2393 = vmatprep.subr.mxu0 %v2263
    %2394 = vmatpush1.msra.mxu0 %v2262
    %2395 = vmatprep.subr.mxu0 %v2267
    %2396 = vmatpush1.msra.mxu0 %v2266
    %2397 = vmatprep.subr.mxu0 %v2271
    %2398 = vmatpush1.msra.mxu0 %v2270
    %2399 = vmatprep.subr.mxu0 %v2275
    %2400 = vmatpush1.msra.mxu0 %v2274
    %2401 = vmatprep.subr.mxu0 0.0
    %2402 = vmatpush1.msra.mxu0 0.0
    %2403 = vmatprep.subr.mxu0 0.0
    %2404 = vmatpush1.msra.mxu0 0.0
    %2405 = vmatprep.subr.mxu0 0.0
    %2406 = vmatpush1.msra.mxu0 0.0
    %2407 = vmatprep.subr.mxu0 0.0
    %2408 = vmatpush1.msra.mxu0 0.0
    %2409 = vmatprep.subr.mxu0 0.0
    %2410 = vmatpush1.msra.mxu0 0.0
    %2411 = vmatprep.subr.mxu0 0.0
    %2412 = vmatpush1.msra.mxu0 0.0
    %2413 = vmatprep.subr.mxu0 0.0
    %2414 = vmatpush1.msra.mxu0 0.0
    %2415 = vmatprep.subr.mxu0 0.0
    %2416 = vmatpush1.msra.mxu0 0.0
    %2417 = vmatprep.subr.mxu0 0.0
    %2418 = vmatpush1.msra.mxu0 0.0
    %2419 = vmatprep.subr.mxu0 0.0
    %2420 = vmatpush1.msra.mxu0 0.0
    %2421 = vmatprep.subr.mxu0 0.0
    %2422 = vmatpush1.msra.mxu0 0.0
    %2423 = vmatprep.subr.mxu0 0.0
    %2424 = vmatpush1.msra.mxu0 0.0
    %2425 = vmatprep.subr.mxu0 0.0
    %2426 = vmatpush1.msra.mxu0 0.0
    %2427 = vmatprep.subr.mxu0 0.0
    %2428 = vmatpush1.msra.mxu0 0.0
    %2429 = vmatprep.subr.mxu0 0.0
    %2430 = vmatpush1.msra.mxu0 0.0
    %2431 = vmatprep.subr.mxu0 0.0
    %2432 = vmatpush1.msra.mxu0 0.0
    %2433 = vmatprep.mubr.f32.mxu0 0.0
    %2434 = vmatmul.mubr.f32.gmra.mrb[0].mxu0 %v2209
    %v2435 = vpop.f32.mrb[0].mxu0
    %v2436 = vadd.f32 %v2289, %v2435
    %v2437 = vpop.f32.mrb[0].mxu0
    %v2438 = vadd.f32 %v2293, %v2437
    %2439 = vdwg.mxu0
    %v2440 = vld [vmem:[#allocation20] sm:$0xff]
    %v2441 = vld [vmem:[#allocation20 + $0x8] sm:$0xff]
    %v2442 = vld [vmem:[#allocation20 + $0x10] sm:$0xff]
    %v2443 = vld [vmem:[#allocation20 + $0x18] sm:$0xff]
    %v2444 = vld [vmem:[#allocation20 + $0x20] sm:$0xff]
    %v2445 = vld [vmem:[#allocation20 + $0x28] sm:$0xff]
    %v2446 = vld [vmem:[#allocation20 + $0x30] sm:$0xff]
    %v2447 = vld [vmem:[#allocation20 + $0x38] sm:$0xff]
    %v2448 = vld [vmem:[#allocation20 + $0x40] sm:$0xff]
    %v2449 = vld [vmem:[#allocation20 + $0x48] sm:$0xff]
    %v2450 = vld [vmem:[#allocation20 + $0x50] sm:$0xff]
    %v2451 = vld [vmem:[#allocation20 + $0x58] sm:$0xff]
    %v2452 = vld [vmem:[#allocation20 + $0x60] sm:$0xff]
    %v2453 = vld [vmem:[#allocation20 + $0x68] sm:$0xff]
    %v2454 = vld [vmem:[#allocation20 + $0x70] sm:$0xff]
    %v2455 = vld [vmem:[#allocation20 + $0x78] sm:$0xff]
    %v2456 = vld [vmem:[#allocation20 + $0x80] sm:$0xff]
    %v2457 = vld [vmem:[#allocation20 + $0x88] sm:$0xff]
    %v2458 = vld [vmem:[#allocation20 + $0x90] sm:$0xff]
    %v2459 = vld [vmem:[#allocation20 + $0x98] sm:$0xff]
    %v2460 = vld [vmem:[#allocation20 + $0xa0] sm:$0xff]
    %v2461 = vld [vmem:[#allocation20 + $0xa8] sm:$0xff]
    %v2462 = vld [vmem:[#allocation20 + $0xb0] sm:$0xff]
    %v2463 = vld [vmem:[#allocation20 + $0xb8] sm:$0xff]
    %v2464 = vld [vmem:[#allocation20 + $0xc0] sm:$0xff]
    %v2465 = vld [vmem:[#allocation20 + $0xc8] sm:$0xff]
    %v2466 = vld [vmem:[#allocation20 + $0xd0] sm:$0xff]
    %v2467 = vld [vmem:[#allocation20 + $0xd8] sm:$0xff]
    %v2468 = vld [vmem:[#allocation20 + $0xe0] sm:$0xff]
    %v2469 = vld [vmem:[#allocation20 + $0xe8] sm:$0xff]
    %v2470 = vld [vmem:[#allocation20 + $0xf0] sm:$0xff]
    %v2471 = vld [vmem:[#allocation20 + $0xf8] sm:$0xff]
    %v2472 = vld [vmem:[#allocation20 + $0x100] sm:$0xff]
    %v2473 = vld [vmem:[#allocation20 + $0x108] sm:$0xff]
    %v2474 = vld [vmem:[#allocation20 + $0x110] sm:$0xff]
    %v2475 = vld [vmem:[#allocation20 + $0x118] sm:$0xff]
    %v2476 = vld [vmem:[#allocation20 + $0x120] sm:$0xff]
    %v2477 = vld [vmem:[#allocation20 + $0x128] sm:$0xff]
    %v2478 = vld [vmem:[#allocation20 + $0x130] sm:$0xff]
    %v2479 = vld [vmem:[#allocation20 + $0x138] sm:$0xff]
    %v2480 = vld [vmem:[#allocation20 + $0x140] sm:$0xff]
    %v2481 = vld [vmem:[#allocation20 + $0x148] sm:$0xff]
    %v2482 = vld [vmem:[#allocation20 + $0x150] sm:$0xff]
    %v2483 = vld [vmem:[#allocation20 + $0x158] sm:$0xff]
    %v2484 = vld [vmem:[#allocation20 + $0x160] sm:$0xff]
    %v2485 = vld [vmem:[#allocation20 + $0x168] sm:$0xff]
    %v2486 = vld [vmem:[#allocation20 + $0x170] sm:$0xff]
    %v2487 = vld [vmem:[#allocation20 + $0x178] sm:$0xff]
    %v2488 = vld [vmem:[#allocation20 + $0x180] sm:$0xff]
    %v2489 = vld [vmem:[#allocation20 + $0x188] sm:$0xff]
    %v2490 = vld [vmem:[#allocation20 + $0x190] sm:$0xff]
    %v2491 = vld [vmem:[#allocation20 + $0x198] sm:$0xff]
    %v2492 = vld [vmem:[#allocation20 + $0x1a0] sm:$0xff]
    %v2493 = vld [vmem:[#allocation20 + $0x1a8] sm:$0xff]
    %v2494 = vld [vmem:[#allocation20 + $0x1b0] sm:$0xff]
    %v2495 = vld [vmem:[#allocation20 + $0x1b8] sm:$0xff]
    %v2496 = vld [vmem:[#allocation20 + $0x1c0] sm:$0xff]
    %v2497 = vld [vmem:[#allocation20 + $0x1c8] sm:$0xff]
    %v2498 = vld [vmem:[#allocation20 + $0x1d0] sm:$0xff]
    %v2499 = vld [vmem:[#allocation20 + $0x1d8] sm:$0xff]
    %v2500 = vld [vmem:[#allocation20 + $0x1e0] sm:$0xff]
    %v2501 = vld [vmem:[#allocation20 + $0x1e8] sm:$0xff]
    %v2502 = vld [vmem:[#allocation20 + $0x1f0] sm:$0xff]
    %v2503 = vld [vmem:[#allocation20 + $0x1f8] sm:$0xff]
    %2504 = vmatprep.subr.mxu0 %v2441
    %2505 = vmatpush1.msra.mxu0 %v2440
    %2506 = vmatprep.subr.mxu0 %v2445
    %2507 = vmatpush1.msra.mxu0 %v2444
    %2508 = vmatprep.subr.mxu0 %v2449
    %2509 = vmatpush1.msra.mxu0 %v2448
    %2510 = vmatprep.subr.mxu0 %v2453
    %2511 = vmatpush1.msra.mxu0 %v2452
    %2512 = vmatprep.subr.mxu0 %v2457
    %2513 = vmatpush1.msra.mxu0 %v2456
    %2514 = vmatprep.subr.mxu0 %v2461
    %2515 = vmatpush1.msra.mxu0 %v2460
    %2516 = vmatprep.subr.mxu0 %v2465
    %2517 = vmatpush1.msra.mxu0 %v2464
    %2518 = vmatprep.subr.mxu0 %v2469
    %2519 = vmatpush1.msra.mxu0 %v2468
    %2520 = vmatprep.subr.mxu0 %v2473
    %2521 = vmatpush1.msra.mxu0 %v2472
    %2522 = vmatprep.subr.mxu0 %v2477
    %2523 = vmatpush1.msra.mxu0 %v2476
    %2524 = vmatprep.subr.mxu0 %v2481
    %2525 = vmatpush1.msra.mxu0 %v2480
    %2526 = vmatprep.subr.mxu0 %v2485
    %2527 = vmatpush1.msra.mxu0 %v2484
    %2528 = vmatprep.subr.mxu0 %v2489
    %2529 = vmatpush1.msra.mxu0 %v2488
    %2530 = vmatprep.subr.mxu0 %v2493
    %2531 = vmatpush1.msra.mxu0 %v2492
    %2532 = vmatprep.subr.mxu0 %v2497
    %2533 = vmatpush1.msra.mxu0 %v2496
    %2534 = vmatprep.subr.mxu0 %v2501
    %2535 = vmatpush1.msra.mxu0 %v2500
    %2536 = vmatprep.subr.mxu0 0.0
    %2537 = vmatpush1.msra.mxu0 0.0
    %2538 = vmatprep.subr.mxu0 0.0
    %2539 = vmatpush1.msra.mxu0 0.0
    %2540 = vmatprep.subr.mxu0 0.0
    %2541 = vmatpush1.msra.mxu0 0.0
    %2542 = vmatprep.subr.mxu0 0.0
    %2543 = vmatpush1.msra.mxu0 0.0
    %2544 = vmatprep.subr.mxu0 0.0
    %2545 = vmatpush1.msra.mxu0 0.0
    %2546 = vmatprep.subr.mxu0 0.0
    %2547 = vmatpush1.msra.mxu0 0.0
    %2548 = vmatprep.subr.mxu0 0.0
    %2549 = vmatpush1.msra.mxu0 0.0
    %2550 = vmatprep.subr.mxu0 0.0
    %2551 = vmatpush1.msra.mxu0 0.0
    %2552 = vmatprep.subr.mxu0 0.0
    %2553 = vmatpush1.msra.mxu0 0.0
    %2554 = vmatprep.subr.mxu0 0.0
    %2555 = vmatpush1.msra.mxu0 0.0
    %2556 = vmatprep.subr.mxu0 0.0
    %2557 = vmatpush1.msra.mxu0 0.0
    %2558 = vmatprep.subr.mxu0 0.0
    %2559 = vmatpush1.msra.mxu0 0.0
    %2560 = vmatprep.subr.mxu0 0.0
    %2561 = vmatpush1.msra.mxu0 0.0
    %2562 = vmatprep.subr.mxu0 0.0
    %2563 = vmatpush1.msra.mxu0 0.0
    %2564 = vmatprep.subr.mxu0 0.0
    %2565 = vmatpush1.msra.mxu0 0.0
    %2566 = vmatprep.subr.mxu0 0.0
    %2567 = vmatpush1.msra.mxu0 0.0
    %2568 = vmatprep.mubr.f32.mxu0 0.0
    %2569 = vmatmul.mubr.f32.gmra.mrb[0].mxu0 %v1981
    %v2570 = vpop.f32.mrb[0].mxu0
    %v2571 = vadd.f32 0.0, %v2570
    %v2572 = vpop.f32.mrb[0].mxu0
    %v2573 = vadd.f32 0.0, %v2572
    %2574 = vdwg.mxu0
    %2575 = vmatprep.subr.mxu0 %v2443
    %2576 = vmatpush1.msra.mxu0 %v2442
    %2577 = vmatprep.subr.mxu0 %v2447
    %2578 = vmatpush1.msra.mxu0 %v2446
    %2579 = vmatprep.subr.mxu0 %v2451
    %2580 = vmatpush1.msra.mxu0 %v2450
    %2581 = vmatprep.subr.mxu0 %v2455
    %2582 = vmatpush1.msra.mxu0 %v2454
    %2583 = vmatprep.subr.mxu0 %v2459
    %2584 = vmatpush1.msra.mxu0 %v2458
    %2585 = vmatprep.subr.mxu0 %v2463
    %2586 = vmatpush1.msra.mxu0 %v2462
    %2587 = vmatprep.subr.mxu0 %v2467
    %2588 = vmatpush1.msra.mxu0 %v2466
    %2589 = vmatprep.subr.mxu0 %v2471
    %2590 = vmatpush1.msra.mxu0 %v2470
    %2591 = vmatprep.subr.mxu0 %v2475
    %2592 = vmatpush1.msra.mxu0 %v2474
    %2593 = vmatprep.subr.mxu0 %v2479
    %2594 = vmatpush1.msra.mxu0 %v2478
    %2595 = vmatprep.subr.mxu0 %v2483
    %2596 = vmatpush1.msra.mxu0 %v2482
    %2597 = vmatprep.subr.mxu0 %v2487
    %2598 = vmatpush1.msra.mxu0 %v2486
    %2599 = vmatprep.subr.mxu0 %v2491
    %2600 = vmatpush1.msra.mxu0 %v2490
    %2601 = vmatprep.subr.mxu0 %v2495
    %2602 = vmatpush1.msra.mxu0 %v2494
    %2603 = vmatprep.subr.mxu0 %v2499
    %2604 = vmatpush1.msra.mxu0 %v2498
    %2605 = vmatprep.subr.mxu0 %v2503
    %2606 = vmatpush1.msra.mxu0 %v2502
    %2607 = vmatprep.subr.mxu0 0.0
    %2608 = vmatpush1.msra.mxu0 0.0
    %2609 = vmatprep.subr.mxu0 0.0
    %2610 = vmatpush1.msra.mxu0 0.0
    %2611 = vmatprep.subr.mxu0 0.0
    %2612 = vmatpush1.msra.mxu0 0.0
    %2613 = vmatprep.subr.mxu0 0.0
    %2614 = vmatpush1.msra.mxu0 0.0
    %2615 = vmatprep.subr.mxu0 0.0
    %2616 = vmatpush1.msra.mxu0 0.0
    %2617 = vmatprep.subr.mxu0 0.0
    %2618 = vmatpush1.msra.mxu0 0.0
    %2619 = vmatprep.subr.mxu0 0.0
    %2620 = vmatpush1.msra.mxu0 0.0
    %2621 = vmatprep.subr.mxu0 0.0
    %2622 = vmatpush1.msra.mxu0 0.0
    %2623 = vmatprep.subr.mxu0 0.0
    %2624 = vmatpush1.msra.mxu0 0.0
    %2625 = vmatprep.subr.mxu0 0.0
    %2626 = vmatpush1.msra.mxu0 0.0
    %2627 = vmatprep.subr.mxu0 0.0
    %2628 = vmatpush1.msra.mxu0 0.0
    %2629 = vmatprep.subr.mxu0 0.0
    %2630 = vmatpush1.msra.mxu0 0.0
    %2631 = vmatprep.subr.mxu0 0.0
    %2632 = vmatpush1.msra.mxu0 0.0
    %2633 = vmatprep.subr.mxu0 0.0
    %2634 = vmatpush1.msra.mxu0 0.0
    %2635 = vmatprep.subr.mxu0 0.0
    %2636 = vmatpush1.msra.mxu0 0.0
    %2637 = vmatprep.subr.mxu0 0.0
    %2638 = vmatpush1.msra.mxu0 0.0
    %2639 = vmatprep.mubr.f32.mxu0 0.0
    %2640 = vmatmul.mubr.f32.gmra.mrb[0].mxu0 %v1981
    %v2641 = vpop.f32.mrb[0].mxu0
    %v2642 = vadd.f32 0.0, %v2641
    %v2643 = vpop.f32.mrb[0].mxu0
    %v2644 = vadd.f32 0.0, %v2643
    %2645 = vdwg.mxu0
    %v2646 = vadd.f32 %v766, %v2571
    %v2647 = vadd.f32 %v768, %v2573
    %v2648 = vadd.f32 %v837, %v2642
    %v2649 = vadd.f32 %v839, %v2644
    %v2650 = vmul.f32 %v2646, 0.5
    %v2651 = vtanh.pop %v2650
    %v2652 = vmul.f32 %v2651, 0.5
    %v2653 = vadd.f32 %v2652, 0.5
    %v2654 = vmul.f32 %v2647, 0.5
    %v2655 = vtanh.pop %v2654
    %v2656 = vmul.f32 %v2655, 0.5
    %v2657 = vadd.f32 %v2656, 0.5
    %v2658 = vtanh.pop %v2648
    %v2659 = vmul.f32 %v2649, 0.5
    %v2660 = vtanh.pop %v2659
    %v2661 = vmul.f32 %v2660, 0.5
    %v2662 = vadd.f32 %v2661, 0.5
    %v2663 = vmul.f32 %v2657, %v1979
    %v2664 = vmul.f32 %v2653, %v2658
    %v2665 = vadd.f32 %v2663, %v2664
    %v2666 = vtanh.pop %v2665
    %v2667 = vmul.f32 %v2662, %v2666
    %v2668 = vld [vmem:[#allocation23] sm:$0xff]
    %v2669 = vld [vmem:[#allocation23 + $0x8] sm:$0xff]
    %v2670 = vld [vmem:[#allocation23 + $0x10] sm:$0xff]
    %v2671 = vld [vmem:[#allocation23 + $0x18] sm:$0xff]
    %v2672 = vld [vmem:[#allocation23 + $0x20] sm:$0xff]
    %v2673 = vld [vmem:[#allocation23 + $0x28] sm:$0xff]
    %v2674 = vld [vmem:[#allocation23 + $0x30] sm:$0xff]
    %v2675 = vld [vmem:[#allocation23 + $0x38] sm:$0xff]
    %v2676 = vld [vmem:[#allocation23 + $0x40] sm:$0xff]
    %v2677 = vld [vmem:[#allocation23 + $0x48] sm:$0xff]
    %v2678 = vld [vmem:[#allocation23 + $0x50] sm:$0xff]
    %v2679 = vld [vmem:[#allocation23 + $0x58] sm:$0xff]
    %v2680 = vld [vmem:[#allocation23 + $0x60] sm:$0xff]
    %v2681 = vld [vmem:[#allocation23 + $0x68] sm:$0xff]
    %v2682 = vld [vmem:[#allocation23 + $0x70] sm:$0xff]
    %v2683 = vld [vmem:[#allocation23 + $0x78] sm:$0xff]
    %v2684 = vld [vmem:[#allocation23 + $0x80] sm:$0xff]
    %v2685 = vld [vmem:[#allocation23 + $0x88] sm:$0xff]
    %v2686 = vld [vmem:[#allocation23 + $0x90] sm:$0xff]
    %v2687 = vld [vmem:[#allocation23 + $0x98] sm:$0xff]
    %v2688 = vld [vmem:[#allocation23 + $0xa0] sm:$0xff]
    %v2689 = vld [vmem:[#allocation23 + $0xa8] sm:$0xff]
    %v2690 = vld [vmem:[#allocation23 + $0xb0] sm:$0xff]
    %v2691 = vld [vmem:[#allocation23 + $0xb8] sm:$0xff]
    %v2692 = vld [vmem:[#allocation23 + $0xc0] sm:$0xff]
    %v2693 = vld [vmem:[#allocation23 + $0xc8] sm:$0xff]
    %v2694 = vld [vmem:[#allocation23 + $0xd0] sm:$0xff]
    %v2695 = vld [vmem:[#allocation23 + $0xd8] sm:$0xff]
    %v2696 = vld [vmem:[#allocation23 + $0xe0] sm:$0xff]
    %v2697 = vld [vmem:[#allocation23 + $0xe8] sm:$0xff]
    %v2698 = vld [vmem:[#allocation23 + $0xf0] sm:$0xff]
    %v2699 = vld [vmem:[#allocation23 + $0xf8] sm:$0xff]
    %v2700 = vld [vmem:[#allocation23 + $0x100] sm:$0xff]
    %v2701 = vld [vmem:[#allocation23 + $0x108] sm:$0xff]
    %v2702 = vld [vmem:[#allocation23 + $0x110] sm:$0xff]
    %v2703 = vld [vmem:[#allocation23 + $0x118] sm:$0xff]
    %v2704 = vld [vmem:[#allocation23 + $0x120] sm:$0xff]
    %v2705 = vld [vmem:[#allocation23 + $0x128] sm:$0xff]
    %v2706 = vld [vmem:[#allocation23 + $0x130] sm:$0xff]
    %v2707 = vld [vmem:[#allocation23 + $0x138] sm:$0xff]
    %v2708 = vld [vmem:[#allocation23 + $0x140] sm:$0xff]
    %v2709 = vld [vmem:[#allocation23 + $0x148] sm:$0xff]
    %v2710 = vld [vmem:[#allocation23 + $0x150] sm:$0xff]
    %v2711 = vld [vmem:[#allocation23 + $0x158] sm:$0xff]
    %v2712 = vld [vmem:[#allocation23 + $0x160] sm:$0xff]
    %v2713 = vld [vmem:[#allocation23 + $0x168] sm:$0xff]
    %v2714 = vld [vmem:[#allocation23 + $0x170] sm:$0xff]
    %v2715 = vld [vmem:[#allocation23 + $0x178] sm:$0xff]
    %v2716 = vld [vmem:[#allocation23 + $0x180] sm:$0xff]
    %v2717 = vld [vmem:[#allocation23 + $0x188] sm:$0xff]
    %v2718 = vld [vmem:[#allocation23 + $0x190] sm:$0xff]
    %v2719 = vld [vmem:[#allocation23 + $0x198] sm:$0xff]
    %v2720 = vld [vmem:[#allocation23 + $0x1a0] sm:$0xff]
    %v2721 = vld [vmem:[#allocation23 + $0x1a8] sm:$0xff]
    %v2722 = vld [vmem:[#allocation23 + $0x1b0] sm:$0xff]
    %v2723 = vld [vmem:[#allocation23 + $0x1b8] sm:$0xff]
    %v2724 = vld [vmem:[#allocation23 + $0x1c0] sm:$0xff]
    %v2725 = vld [vmem:[#allocation23 + $0x1c8] sm:$0xff]
    %v2726 = vld [vmem:[#allocation23 + $0x1d0] sm:$0xff]
    %v2727 = vld [vmem:[#allocation23 + $0x1d8] sm:$0xff]
    %v2728 = vld [vmem:[#allocation23 + $0x1e0] sm:$0xff]
    %v2729 = vld [vmem:[#allocation23 + $0x1e8] sm:$0xff]
    %v2730 = vld [vmem:[#allocation23 + $0x1f0] sm:$0xff]
    %v2731 = vld [vmem:[#allocation23 + $0x1f8] sm:$0xff]
    %2732 = vmatprep.subr.mxu0 %v2669
    %2733 = vmatpush1.msra.mxu0 %v2668
    %2734 = vmatprep.subr.mxu0 %v2673
    %2735 = vmatpush1.msra.mxu0 %v2672
    %2736 = vmatprep.subr.mxu0 %v2677
    %2737 = vmatpush1.msra.mxu0 %v2676
    %2738 = vmatprep.subr.mxu0 %v2681
    %2739 = vmatpush1.msra.mxu0 %v2680
    %2740 = vmatprep.subr.mxu0 %v2685
    %2741 = vmatpush1.msra.mxu0 %v2684
    %2742 = vmatprep.subr.mxu0 %v2689
    %2743 = vmatpush1.msra.mxu0 %v2688
    %2744 = vmatprep.subr.mxu0 %v2693
    %2745 = vmatpush1.msra.mxu0 %v2692
    %2746 = vmatprep.subr.mxu0 %v2697
    %2747 = vmatpush1.msra.mxu0 %v2696
    %2748 = vmatprep.subr.mxu0 %v2701
    %2749 = vmatpush1.msra.mxu0 %v2700
    %2750 = vmatprep.subr.mxu0 %v2705
    %2751 = vmatpush1.msra.mxu0 %v2704
    %2752 = vmatprep.subr.mxu0 %v2709
    %2753 = vmatpush1.msra.mxu0 %v2708
    %2754 = vmatprep.subr.mxu0 %v2713
    %2755 = vmatpush1.msra.mxu0 %v2712
    %2756 = vmatprep.subr.mxu0 %v2717
    %2757 = vmatpush1.msra.mxu0 %v2716
    %2758 = vmatprep.subr.mxu0 %v2721
    %2759 = vmatpush1.msra.mxu0 %v2720
    %2760 = vmatprep.subr.mxu0 %v2725
    %2761 = vmatpush1.msra.mxu0 %v2724
    %2762 = vmatprep.subr.mxu0 %v2729
    %2763 = vmatpush1.msra.mxu0 %v2728
    %2764 = vmatprep.subr.mxu0 0.0
    %2765 = vmatpush1.msra.mxu0 0.0
    %2766 = vmatprep.subr.mxu0 0.0
    %2767 = vmatpush1.msra.mxu0 0.0
    %2768 = vmatprep.subr.mxu0 0.0
    %2769 = vmatpush1.msra.mxu0 0.0
    %2770 = vmatprep.subr.mxu0 0.0
    %2771 = vmatpush1.msra.mxu0 0.0
    %2772 = vmatprep.subr.mxu0 0.0
    %2773 = vmatpush1.msra.mxu0 0.0
    %2774 = vmatprep.subr.mxu0 0.0
    %2775 = vmatpush1.msra.mxu0 0.0
    %2776 = vmatprep.subr.mxu0 0.0
    %2777 = vmatpush1.msra.mxu0 0.0
    %2778 = vmatprep.subr.mxu0 0.0
    %2779 = vmatpush1.msra.mxu0 0.0
    %2780 = vmatprep.subr.mxu0 0.0
    %2781 = vmatpush1.msra.mxu0 0.0
    %2782 = vmatprep.subr.mxu0 0.0
    %2783 = vmatpush1.msra.mxu0 0.0
    %2784 = vmatprep.subr.mxu0 0.0
    %2785 = vmatpush1.msra.mxu0 0.0
    %2786 = vmatprep.subr.mxu0 0.0
    %2787 = vmatpush1.msra.mxu0 0.0
    %2788 = vmatprep.subr.mxu0 0.0
    %2789 = vmatpush1.msra.mxu0 0.0
    %2790 = vmatprep.subr.mxu0 0.0
    %2791 = vmatpush1.msra.mxu0 0.0
    %2792 = vmatprep.subr.mxu0 0.0
    %2793 = vmatpush1.msra.mxu0 0.0
    %2794 = vmatprep.subr.mxu0 0.0
    %2795 = vmatpush1.msra.mxu0 0.0
    %2796 = vmatprep.mubr.f32.mxu0 0.0
    %2797 = vmatmul.mubr.f32.gmra.mrb[0].mxu0 %v2667
    %v2798 = vpop.f32.mrb[0].mxu0
    %v2799 = vadd.f32 0.0, %v2798
    %v2800 = vpop.f32.mrb[0].mxu0
    %v2801 = vadd.f32 0.0, %v2800
    %2802 = vdwg.mxu0
    %2803 = vmatprep.subr.mxu0 %v2671
    %2804 = vmatpush1.msra.mxu0 %v2670
    %2805 = vmatprep.subr.mxu0 %v2675
    %2806 = vmatpush1.msra.mxu0 %v2674
    %2807 = vmatprep.subr.mxu0 %v2679
    %2808 = vmatpush1.msra.mxu0 %v2678
    %2809 = vmatprep.subr.mxu0 %v2683
    %2810 = vmatpush1.msra.mxu0 %v2682
    %2811 = vmatprep.subr.mxu0 %v2687
    %2812 = vmatpush1.msra.mxu0 %v2686
    %2813 = vmatprep.subr.mxu0 %v2691
    %2814 = vmatpush1.msra.mxu0 %v2690
    %2815 = vmatprep.subr.mxu0 %v2695
    %2816 = vmatpush1.msra.mxu0 %v2694
    %2817 = vmatprep.subr.mxu0 %v2699
    %2818 = vmatpush1.msra.mxu0 %v2698
    %2819 = vmatprep.subr.mxu0 %v2703
    %2820 = vmatpush1.msra.mxu0 %v2702
    %2821 = vmatprep.subr.mxu0 %v2707
    %2822 = vmatpush1.msra.mxu0 %v2706
    %2823 = vmatprep.subr.mxu0 %v2711
    %2824 = vmatpush1.msra.mxu0 %v2710
    %2825 = vmatprep.subr.mxu0 %v2715
    %2826 = vmatpush1.msra.mxu0 %v2714
    %2827 = vmatprep.subr.mxu0 %v2719
    %2828 = vmatpush1.msra.mxu0 %v2718
    %2829 = vmatprep.subr.mxu0 %v2723
    %2830 = vmatpush1.msra.mxu0 %v2722
    %2831 = vmatprep.subr.mxu0 %v2727
    %2832 = vmatpush1.msra.mxu0 %v2726
    %2833 = vmatprep.subr.mxu0 %v2731
    %2834 = vmatpush1.msra.mxu0 %v2730
    %2835 = vmatprep.subr.mxu0 0.0
    %2836 = vmatpush1.msra.mxu0 0.0
    %2837 = vmatprep.subr.mxu0 0.0
    %2838 = vmatpush1.msra.mxu0 0.0
    %2839 = vmatprep.subr.mxu0 0.0
    %2840 = vmatpush1.msra.mxu0 0.0
    %2841 = vmatprep.subr.mxu0 0.0
    %2842 = vmatpush1.msra.mxu0 0.0
    %2843 = vmatprep.subr.mxu0 0.0
    %2844 = vmatpush1.msra.mxu0 0.0
    %2845 = vmatprep.subr.mxu0 0.0
    %2846 = vmatpush1.msra.mxu0 0.0
    %2847 = vmatprep.subr.mxu0 0.0
    %2848 = vmatpush1.msra.mxu0 0.0
    %2849 = vmatprep.subr.mxu0 0.0
    %2850 = vmatpush1.msra.mxu0 0.0
    %2851 = vmatprep.subr.mxu0 0.0
    %2852 = vmatpush1.msra.mxu0 0.0
    %2853 = vmatprep.subr.mxu0 0.0
    %2854 = vmatpush1.msra.mxu0 0.0
    %2855 = vmatprep.subr.mxu0 0.0
    %2856 = vmatpush1.msra.mxu0 0.0
    %2857 = vmatprep.subr.mxu0 0.0
    %2858 = vmatpush1.msra.mxu0 0.0
    %2859 = vmatprep.subr.mxu0 0.0
    %2860 = vmatpush1.msra.mxu0 0.0
    %2861 = vmatprep.subr.mxu0 0.0
    %2862 = vmatpush1.msra.mxu0 0.0
    %2863 = vmatprep.subr.mxu0 0.0
    %2864 = vmatpush1.msra.mxu0 0.0
    %2865 = vmatprep.subr.mxu0 0.0
    %2866 = vmatpush1.msra.mxu0 0.0
    %2867 = vmatprep.mubr.f32.mxu0 0.0
    %2868 = vmatmul.mubr.f32.gmra.mrb[0].mxu0 %v2667
    %v2869 = vpop.f32.mrb[0].mxu0
    %v2870 = vadd.f32 0.0, %v2869
    %v2871 = vpop.f32.mrb[0].mxu0
    %v2872 = vadd.f32 0.0, %v2871
    %2873 = vdwg.mxu0
    %v2874 = vadd.f32 %v2365, %v2799
    %v2875 = vadd.f32 %v2367, %v2801
    %v2876 = vadd.f32 %v2436, %v2870
    %v2877 = vadd.f32 %v2438, %v2872
    %v2878 = vmul.f32 %v2874, 0.5
    %v2879 = vtanh.pop %v2878
    %v2880 = vmul.f32 %v2879, 0.5
    %v2881 = vadd.f32 %v2880, 0.5
    %v2882 = vmul.f32 %v2875, 0.5
    %v2883 = vtanh.pop %v2882
    %v2884 = vmul.f32 %v2883, 0.5
    %v2885 = vadd.f32 %v2884, 0.5
    %v2886 = vtanh.pop %v2876
    %v2887 = vmul.f32 %v2877, 0.5
    %v2888 = vtanh.pop %v2887
    %v2889 = vmul.f32 %v2888, 0.5
    %v2890 = vadd.f32 %v2889, 0.5
    %v2891 = vmul.f32 %v2885, %v2207
    %v2892 = vmul.f32 %v2881, %v2886
    %v2893 = vadd.f32 %v2891, %v2892
    %v2894 = vtanh.pop %v2893
    %v2895 = vmul.f32 %v2890, %v2894
    %s2896 = scalar_lea.vmem [#allocation2], 16
    %2897 = vst [vmem:[%s2896] sm:$0xff] %v2895
    %v2898 = vld [vmem:[#allocation24] sm:$0xff]
    %v2899 = vld [vmem:[#allocation24 + $0x8] sm:$0xff]
    %v2900 = vld [vmem:[#allocation24 + $0x10] sm:$0xff]
    %v2901 = vld [vmem:[#allocation24 + $0x18] sm:$0xff]
    %v2902 = vld [vmem:[#allocation24 + $0x20] sm:$0xff]
    %v2903 = vld [vmem:[#allocation24 + $0x28] sm:$0xff]
    %v2904 = vld [vmem:[#allocation24 + $0x30] sm:$0xff]
    %v2905 = vld [vmem:[#allocation24 + $0x38] sm:$0xff]
    %v2906 = vld [vmem:[#allocation24 + $0x40] sm:$0xff]
    %v2907 = vld [vmem:[#allocation24 + $0x48] sm:$0xff]
    %v2908 = vld [vmem:[#allocation24 + $0x50] sm:$0xff]
    %v2909 = vld [vmem:[#allocation24 + $0x58] sm:$0xff]
    %v2910 = vld [vmem:[#allocation24 + $0x60] sm:$0xff]
    %v2911 = vld [vmem:[#allocation24 + $0x68] sm:$0xff]
    %v2912 = vld [vmem:[#allocation24 + $0x70] sm:$0xff]
    %v2913 = vld [vmem:[#allocation24 + $0x78] sm:$0xff]
    %v2914 = vld [vmem:[#allocation24 + $0x80] sm:$0xff]
    %v2915 = vld [vmem:[#allocation24 + $0x88] sm:$0xff]
    %v2916 = vld [vmem:[#allocation24 + $0x90] sm:$0xff]
    %v2917 = vld [vmem:[#allocation24 + $0x98] sm:$0xff]
    %v2918 = vld [vmem:[#allocation24 + $0xa0] sm:$0xff]
    %v2919 = vld [vmem:[#allocation24 + $0xa8] sm:$0xff]
    %v2920 = vld [vmem:[#allocation24 + $0xb0] sm:$0xff]
    %v2921 = vld [vmem:[#allocation24 + $0xb8] sm:$0xff]
    %v2922 = vld [vmem:[#allocation24 + $0xc0] sm:$0xff]
    %v2923 = vld [vmem:[#allocation24 + $0xc8] sm:$0xff]
    %v2924 = vld [vmem:[#allocation24 + $0xd0] sm:$0xff]
    %v2925 = vld [vmem:[#allocation24 + $0xd8] sm:$0xff]
    %v2926 = vld [vmem:[#allocation24 + $0xe0] sm:$0xff]
    %v2927 = vld [vmem:[#allocation24 + $0xe8] sm:$0xff]
    %v2928 = vld [vmem:[#allocation24 + $0xf0] sm:$0xff]
    %v2929 = vld [vmem:[#allocation24 + $0xf8] sm:$0xff]
    %v2930 = vld [vmem:[#allocation24 + $0x100] sm:$0xff]
    %v2931 = vld [vmem:[#allocation24 + $0x108] sm:$0xff]
    %v2932 = vld [vmem:[#allocation24 + $0x110] sm:$0xff]
    %v2933 = vld [vmem:[#allocation24 + $0x118] sm:$0xff]
    %v2934 = vld [vmem:[#allocation24 + $0x120] sm:$0xff]
    %v2935 = vld [vmem:[#allocation24 + $0x128] sm:$0xff]
    %v2936 = vld [vmem:[#allocation24 + $0x130] sm:$0xff]
    %v2937 = vld [vmem:[#allocation24 + $0x138] sm:$0xff]
    %v2938 = vld [vmem:[#allocation24 + $0x140] sm:$0xff]
    %v2939 = vld [vmem:[#allocation24 + $0x148] sm:$0xff]
    %v2940 = vld [vmem:[#allocation24 + $0x150] sm:$0xff]
    %v2941 = vld [vmem:[#allocation24 + $0x158] sm:$0xff]
    %v2942 = vld [vmem:[#allocation24 + $0x160] sm:$0xff]
    %v2943 = vld [vmem:[#allocation24 + $0x168] sm:$0xff]
    %v2944 = vld [vmem:[#allocation24 + $0x170] sm:$0xff]
    %v2945 = vld [vmem:[#allocation24 + $0x178] sm:$0xff]
    %v2946 = vld [vmem:[#allocation24 + $0x180] sm:$0xff]
    %v2947 = vld [vmem:[#allocation24 + $0x188] sm:$0xff]
    %v2948 = vld [vmem:[#allocation24 + $0x190] sm:$0xff]
    %v2949 = vld [vmem:[#allocation24 + $0x198] sm:$0xff]
    %v2950 = vld [vmem:[#allocation24 + $0x1a0] sm:$0xff]
    %v2951 = vld [vmem:[#allocation24 + $0x1a8] sm:$0xff]
    %v2952 = vld [vmem:[#allocation24 + $0x1b0] sm:$0xff]
    %v2953 = vld [vmem:[#allocation24 + $0x1b8] sm:$0xff]
    %v2954 = vld [vmem:[#allocation24 + $0x1c0] sm:$0xff]
    %v2955 = vld [vmem:[#allocation24 + $0x1c8] sm:$0xff]
    %v2956 = vld [vmem:[#allocation24 + $0x1d0] sm:$0xff]
    %v2957 = vld [vmem:[#allocation24 + $0x1d8] sm:$0xff]
    %v2958 = vld [vmem:[#allocation24 + $0x1e0] sm:$0xff]
    %v2959 = vld [vmem:[#allocation24 + $0x1e8] sm:$0xff]
    %v2960 = vld [vmem:[#allocation24 + $0x1f0] sm:$0xff]
    %v2961 = vld [vmem:[#allocation24 + $0x1f8] sm:$0xff]
    %v2962 = vld [vmem:[#allocation26] sm:$0xf]
    %v2964 = vlaneseq
    %v2965 = vshrl.u32 %v2964, 7
    %v2966 = vsub.s32 0, %v2965
    %v2967 = vrot.slane %v2962, %v2966
    %v2968 = vlaneseq
    %v2969 = vshrl.u32 %v2968, 7
    %v2970 = vsub.s32 1, %v2969
    %v2971 = vrot.slane %v2962, %v2970
    %v2972 = vlaneseq
    %v2973 = vshrl.u32 %v2972, 7
    %v2974 = vsub.s32 2, %v2973
    %v2975 = vrot.slane %v2962, %v2974
    %v2976 = vlaneseq
    %v2977 = vshrl.u32 %v2976, 7
    %v2978 = vsub.s32 3, %v2977
    %v2979 = vrot.slane %v2962, %v2978
    %2984 = vmatprep.subr.mxu0 %v2899
    %2985 = vmatpush1.msra.mxu0 %v2898
    %2986 = vmatprep.subr.mxu0 %v2903
    %2987 = vmatpush1.msra.mxu0 %v2902
    %2988 = vmatprep.subr.mxu0 %v2907
    %2989 = vmatpush1.msra.mxu0 %v2906
    %2990 = vmatprep.subr.mxu0 %v2911
    %2991 = vmatpush1.msra.mxu0 %v2910
    %2992 = vmatprep.subr.mxu0 %v2915
    %2993 = vmatpush1.msra.mxu0 %v2914
    %2994 = vmatprep.subr.mxu0 %v2919
    %2995 = vmatpush1.msra.mxu0 %v2918
    %2996 = vmatprep.subr.mxu0 %v2923
    %2997 = vmatpush1.msra.mxu0 %v2922
    %2998 = vmatprep.subr.mxu0 %v2927
    %2999 = vmatpush1.msra.mxu0 %v2926
    %3000 = vmatprep.subr.mxu0 %v2931
    %3001 = vmatpush1.msra.mxu0 %v2930
    %3002 = vmatprep.subr.mxu0 %v2935
    %3003 = vmatpush1.msra.mxu0 %v2934
    %3004 = vmatprep.subr.mxu0 %v2939
    %3005 = vmatpush1.msra.mxu0 %v2938
    %3006 = vmatprep.subr.mxu0 %v2943
    %3007 = vmatpush1.msra.mxu0 %v2942
    %3008 = vmatprep.subr.mxu0 %v2947
    %3009 = vmatpush1.msra.mxu0 %v2946
    %3010 = vmatprep.subr.mxu0 %v2951
    %3011 = vmatpush1.msra.mxu0 %v2950
    %3012 = vmatprep.subr.mxu0 %v2955
    %3013 = vmatpush1.msra.mxu0 %v2954
    %3014 = vmatprep.subr.mxu0 %v2959
    %3015 = vmatpush1.msra.mxu0 %v2958
    %3016 = vmatprep.subr.mxu0 0.0
    %3017 = vmatpush1.msra.mxu0 0.0
    %3018 = vmatprep.subr.mxu0 0.0
    %3019 = vmatpush1.msra.mxu0 0.0
    %3020 = vmatprep.subr.mxu0 0.0
    %3021 = vmatpush1.msra.mxu0 0.0
    %3022 = vmatprep.subr.mxu0 0.0
    %3023 = vmatpush1.msra.mxu0 0.0
    %3024 = vmatprep.subr.mxu0 0.0
    %3025 = vmatpush1.msra.mxu0 0.0
    %3026 = vmatprep.subr.mxu0 0.0
    %3027 = vmatpush1.msra.mxu0 0.0
    %3028 = vmatprep.subr.mxu0 0.0
    %3029 = vmatpush1.msra.mxu0 0.0
    %3030 = vmatprep.subr.mxu0 0.0
    %3031 = vmatpush1.msra.mxu0 0.0
    %3032 = vmatprep.subr.mxu0 0.0
    %3033 = vmatpush1.msra.mxu0 0.0
    %3034 = vmatprep.subr.mxu0 0.0
    %3035 = vmatpush1.msra.mxu0 0.0
    %3036 = vmatprep.subr.mxu0 0.0
    %3037 = vmatpush1.msra.mxu0 0.0
    %3038 = vmatprep.subr.mxu0 0.0
    %3039 = vmatpush1.msra.mxu0 0.0
    %3040 = vmatprep.subr.mxu0 0.0
    %3041 = vmatpush1.msra.mxu0 0.0
    %3042 = vmatprep.subr.mxu0 0.0
    %3043 = vmatpush1.msra.mxu0 0.0
    %3044 = vmatprep.subr.mxu0 0.0
    %3045 = vmatpush1.msra.mxu0 0.0
    %3046 = vmatprep.subr.mxu0 0.0
    %3047 = vmatpush1.msra.mxu0 0.0
    %3048 = vmatprep.mubr.f32.mxu0 0.0
    %3049 = vmatmul.mubr.f32.gmra.mrb[0].mxu0 %v2895
    %v3050 = vpop.f32.mrb[0].mxu0
    %v3051 = vadd.f32 %v2967, %v3050
    %v3052 = vpop.f32.mrb[0].mxu0
    %v3053 = vadd.f32 %v2971, %v3052
    %3054 = vdwg.mxu0
    %3055 = vmatprep.subr.mxu0 %v2901
    %3056 = vmatpush1.msra.mxu0 %v2900
    %3057 = vmatprep.subr.mxu0 %v2905
    %3058 = vmatpush1.msra.mxu0 %v2904
    %3059 = vmatprep.subr.mxu0 %v2909
    %3060 = vmatpush1.msra.mxu0 %v2908
    %3061 = vmatprep.subr.mxu0 %v2913
    %3062 = vmatpush1.msra.mxu0 %v2912
    %3063 = vmatprep.subr.mxu0 %v2917
    %3064 = vmatpush1.msra.mxu0 %v2916
    %3065 = vmatprep.subr.mxu0 %v2921
    %3066 = vmatpush1.msra.mxu0 %v2920
    %3067 = vmatprep.subr.mxu0 %v2925
    %3068 = vmatpush1.msra.mxu0 %v2924
    %3069 = vmatprep.subr.mxu0 %v2929
    %3070 = vmatpush1.msra.mxu0 %v2928
    %3071 = vmatprep.subr.mxu0 %v2933
    %3072 = vmatpush1.msra.mxu0 %v2932
    %3073 = vmatprep.subr.mxu0 %v2937
    %3074 = vmatpush1.msra.mxu0 %v2936
    %3075 = vmatprep.subr.mxu0 %v2941
    %3076 = vmatpush1.msra.mxu0 %v2940
    %3077 = vmatprep.subr.mxu0 %v2945
    %3078 = vmatpush1.msra.mxu0 %v2944
    %3079 = vmatprep.subr.mxu0 %v2949
    %3080 = vmatpush1.msra.mxu0 %v2948
    %3081 = vmatprep.subr.mxu0 %v2953
    %3082 = vmatpush1.msra.mxu0 %v2952
    %3083 = vmatprep.subr.mxu0 %v2957
    %3084 = vmatpush1.msra.mxu0 %v2956
    %3085 = vmatprep.subr.mxu0 %v2961
    %3086 = vmatpush1.msra.mxu0 %v2960
    %3087 = vmatprep.subr.mxu0 0.0
    %3088 = vmatpush1.msra.mxu0 0.0
    %3089 = vmatprep.subr.mxu0 0.0
    %3090 = vmatpush1.msra.mxu0 0.0
    %3091 = vmatprep.subr.mxu0 0.0
    %3092 = vmatpush1.msra.mxu0 0.0
    %3093 = vmatprep.subr.mxu0 0.0
    %3094 = vmatpush1.msra.mxu0 0.0
    %3095 = vmatprep.subr.mxu0 0.0
    %3096 = vmatpush1.msra.mxu0 0.0
    %3097 = vmatprep.subr.mxu0 0.0
    %3098 = vmatpush1.msra.mxu0 0.0
    %3099 = vmatprep.subr.mxu0 0.0
    %3100 = vmatpush1.msra.mxu0 0.0
    %3101 = vmatprep.subr.mxu0 0.0
    %3102 = vmatpush1.msra.mxu0 0.0
    %3103 = vmatprep.subr.mxu0 0.0
    %3104 = vmatpush1.msra.mxu0 0.0
    %3105 = vmatprep.subr.mxu0 0.0
    %3106 = vmatpush1.msra.mxu0 0.0
    %3107 = vmatprep.subr.mxu0 0.0
    %3108 = vmatpush1.msra.mxu0 0.0
    %3109 = vmatprep.subr.mxu0 0.0
    %3110 = vmatpush1.msra.mxu0 0.0
    %3111 = vmatprep.subr.mxu0 0.0
    %3112 = vmatpush1.msra.mxu0 0.0
    %3113 = vmatprep.subr.mxu0 0.0
    %3114 = vmatpush1.msra.mxu0 0.0
    %3115 = vmatprep.subr.mxu0 0.0
    %3116 = vmatpush1.msra.mxu0 0.0
    %3117 = vmatprep.subr.mxu0 0.0
    %3118 = vmatpush1.msra.mxu0 0.0
    %3119 = vmatprep.mubr.f32.mxu0 0.0
    %3120 = vmatmul.mubr.f32.gmra.mrb[0].mxu0 %v2895
    %v3121 = vpop.f32.mrb[0].mxu0
    %v3122 = vadd.f32 %v2975, %v3121
    %v3123 = vpop.f32.mrb[0].mxu0
    %v3124 = vadd.f32 %v2979, %v3123
    %3125 = vdwg.mxu0
    %v3126 = vld [vmem:[#allocation20] sm:$0xff]
    %v3127 = vld [vmem:[#allocation20 + $0x8] sm:$0xff]
    %v3128 = vld [vmem:[#allocation20 + $0x10] sm:$0xff]
    %v3129 = vld [vmem:[#allocation20 + $0x18] sm:$0xff]
    %v3130 = vld [vmem:[#allocation20 + $0x20] sm:$0xff]
    %v3131 = vld [vmem:[#allocation20 + $0x28] sm:$0xff]
    %v3132 = vld [vmem:[#allocation20 + $0x30] sm:$0xff]
    %v3133 = vld [vmem:[#allocation20 + $0x38] sm:$0xff]
    %v3134 = vld [vmem:[#allocation20 + $0x40] sm:$0xff]
    %v3135 = vld [vmem:[#allocation20 + $0x48] sm:$0xff]
    %v3136 = vld [vmem:[#allocation20 + $0x50] sm:$0xff]
    %v3137 = vld [vmem:[#allocation20 + $0x58] sm:$0xff]
    %v3138 = vld [vmem:[#allocation20 + $0x60] sm:$0xff]
    %v3139 = vld [vmem:[#allocation20 + $0x68] sm:$0xff]
    %v3140 = vld [vmem:[#allocation20 + $0x70] sm:$0xff]
    %v3141 = vld [vmem:[#allocation20 + $0x78] sm:$0xff]
    %v3142 = vld [vmem:[#allocation20 + $0x80] sm:$0xff]
    %v3143 = vld [vmem:[#allocation20 + $0x88] sm:$0xff]
    %v3144 = vld [vmem:[#allocation20 + $0x90] sm:$0xff]
    %v3145 = vld [vmem:[#allocation20 + $0x98] sm:$0xff]
    %v3146 = vld [vmem:[#allocation20 + $0xa0] sm:$0xff]
    %v3147 = vld [vmem:[#allocation20 + $0xa8] sm:$0xff]
    %v3148 = vld [vmem:[#allocation20 + $0xb0] sm:$0xff]
    %v3149 = vld [vmem:[#allocation20 + $0xb8] sm:$0xff]
    %v3150 = vld [vmem:[#allocation20 + $0xc0] sm:$0xff]
    %v3151 = vld [vmem:[#allocation20 + $0xc8] sm:$0xff]
    %v3152 = vld [vmem:[#allocation20 + $0xd0] sm:$0xff]
    %v3153 = vld [vmem:[#allocation20 + $0xd8] sm:$0xff]
    %v3154 = vld [vmem:[#allocation20 + $0xe0] sm:$0xff]
    %v3155 = vld [vmem:[#allocation20 + $0xe8] sm:$0xff]
    %v3156 = vld [vmem:[#allocation20 + $0xf0] sm:$0xff]
    %v3157 = vld [vmem:[#allocation20 + $0xf8] sm:$0xff]
    %v3158 = vld [vmem:[#allocation20 + $0x100] sm:$0xff]
    %v3159 = vld [vmem:[#allocation20 + $0x108] sm:$0xff]
    %v3160 = vld [vmem:[#allocation20 + $0x110] sm:$0xff]
    %v3161 = vld [vmem:[#allocation20 + $0x118] sm:$0xff]
    %v3162 = vld [vmem:[#allocation20 + $0x120] sm:$0xff]
    %v3163 = vld [vmem:[#allocation20 + $0x128] sm:$0xff]
    %v3164 = vld [vmem:[#allocation20 + $0x130] sm:$0xff]
    %v3165 = vld [vmem:[#allocation20 + $0x138] sm:$0xff]
    %v3166 = vld [vmem:[#allocation20 + $0x140] sm:$0xff]
    %v3167 = vld [vmem:[#allocation20 + $0x148] sm:$0xff]
    %v3168 = vld [vmem:[#allocation20 + $0x150] sm:$0xff]
    %v3169 = vld [vmem:[#allocation20 + $0x158] sm:$0xff]
    %v3170 = vld [vmem:[#allocation20 + $0x160] sm:$0xff]
    %v3171 = vld [vmem:[#allocation20 + $0x168] sm:$0xff]
    %v3172 = vld [vmem:[#allocation20 + $0x170] sm:$0xff]
    %v3173 = vld [vmem:[#allocation20 + $0x178] sm:$0xff]
    %v3174 = vld [vmem:[#allocation20 + $0x180] sm:$0xff]
    %v3175 = vld [vmem:[#allocation20 + $0x188] sm:$0xff]
    %v3176 = vld [vmem:[#allocation20 + $0x190] sm:$0xff]
    %v3177 = vld [vmem:[#allocation20 + $0x198] sm:$0xff]
    %v3178 = vld [vmem:[#allocation20 + $0x1a0] sm:$0xff]
    %v3179 = vld [vmem:[#allocation20 + $0x1a8] sm:$0xff]
    %v3180 = vld [vmem:[#allocation20 + $0x1b0] sm:$0xff]
    %v3181 = vld [vmem:[#allocation20 + $0x1b8] sm:$0xff]
    %v3182 = vld [vmem:[#allocation20 + $0x1c0] sm:$0xff]
    %v3183 = vld [vmem:[#allocation20 + $0x1c8] sm:$0xff]
    %v3184 = vld [vmem:[#allocation20 + $0x1d0] sm:$0xff]
    %v3185 = vld [vmem:[#allocation20 + $0x1d8] sm:$0xff]
    %v3186 = vld [vmem:[#allocation20 + $0x1e0] sm:$0xff]
    %v3187 = vld [vmem:[#allocation20 + $0x1e8] sm:$0xff]
    %v3188 = vld [vmem:[#allocation20 + $0x1f0] sm:$0xff]
    %v3189 = vld [vmem:[#allocation20 + $0x1f8] sm:$0xff]
    %3190 = vmatprep.subr.mxu0 %v3127
    %3191 = vmatpush1.msra.mxu0 %v3126
    %3192 = vmatprep.subr.mxu0 %v3131
    %3193 = vmatpush1.msra.mxu0 %v3130
    %3194 = vmatprep.subr.mxu0 %v3135
    %3195 = vmatpush1.msra.mxu0 %v3134
    %3196 = vmatprep.subr.mxu0 %v3139
    %3197 = vmatpush1.msra.mxu0 %v3138
    %3198 = vmatprep.subr.mxu0 %v3143
    %3199 = vmatpush1.msra.mxu0 %v3142
    %3200 = vmatprep.subr.mxu0 %v3147
    %3201 = vmatpush1.msra.mxu0 %v3146
    %3202 = vmatprep.subr.mxu0 %v3151
    %3203 = vmatpush1.msra.mxu0 %v3150
    %3204 = vmatprep.subr.mxu0 %v3155
    %3205 = vmatpush1.msra.mxu0 %v3154
    %3206 = vmatprep.subr.mxu0 %v3159
    %3207 = vmatpush1.msra.mxu0 %v3158
    %3208 = vmatprep.subr.mxu0 %v3163
    %3209 = vmatpush1.msra.mxu0 %v3162
    %3210 = vmatprep.subr.mxu0 %v3167
    %3211 = vmatpush1.msra.mxu0 %v3166
    %3212 = vmatprep.subr.mxu0 %v3171
    %3213 = vmatpush1.msra.mxu0 %v3170
    %3214 = vmatprep.subr.mxu0 %v3175
    %3215 = vmatpush1.msra.mxu0 %v3174
    %3216 = vmatprep.subr.mxu0 %v3179
    %3217 = vmatpush1.msra.mxu0 %v3178
    %3218 = vmatprep.subr.mxu0 %v3183
    %3219 = vmatpush1.msra.mxu0 %v3182
    %3220 = vmatprep.subr.mxu0 %v3187
    %3221 = vmatpush1.msra.mxu0 %v3186
    %3222 = vmatprep.subr.mxu0 0.0
    %3223 = vmatpush1.msra.mxu0 0.0
    %3224 = vmatprep.subr.mxu0 0.0
    %3225 = vmatpush1.msra.mxu0 0.0
    %3226 = vmatprep.subr.mxu0 0.0
    %3227 = vmatpush1.msra.mxu0 0.0
    %3228 = vmatprep.subr.mxu0 0.0
    %3229 = vmatpush1.msra.mxu0 0.0
    %3230 = vmatprep.subr.mxu0 0.0
    %3231 = vmatpush1.msra.mxu0 0.0
    %3232 = vmatprep.subr.mxu0 0.0
    %3233 = vmatpush1.msra.mxu0 0.0
    %3234 = vmatprep.subr.mxu0 0.0
    %3235 = vmatpush1.msra.mxu0 0.0
    %3236 = vmatprep.subr.mxu0 0.0
    %3237 = vmatpush1.msra.mxu0 0.0
    %3238 = vmatprep.subr.mxu0 0.0
    %3239 = vmatpush1.msra.mxu0 0.0
    %3240 = vmatprep.subr.mxu0 0.0
    %3241 = vmatpush1.msra.mxu0 0.0
    %3242 = vmatprep.subr.mxu0 0.0
    %3243 = vmatpush1.msra.mxu0 0.0
    %3244 = vmatprep.subr.mxu0 0.0
    %3245 = vmatpush1.msra.mxu0 0.0
    %3246 = vmatprep.subr.mxu0 0.0
    %3247 = vmatpush1.msra.mxu0 0.0
    %3248 = vmatprep.subr.mxu0 0.0
    %3249 = vmatpush1.msra.mxu0 0.0
    %3250 = vmatprep.subr.mxu0 0.0
    %3251 = vmatpush1.msra.mxu0 0.0
    %3252 = vmatprep.subr.mxu0 0.0
    %3253 = vmatpush1.msra.mxu0 0.0
    %3254 = vmatprep.mubr.f32.mxu0 0.0
    %3255 = vmatmul.mubr.f32.gmra.mrb[0].mxu0 %v2667
    %v3256 = vpop.f32.mrb[0].mxu0
    %v3257 = vadd.f32 0.0, %v3256
    %v3258 = vpop.f32.mrb[0].mxu0
    %v3259 = vadd.f32 0.0, %v3258
    %3260 = vdwg.mxu0
    %3261 = vmatprep.subr.mxu0 %v3129
    %3262 = vmatpush1.msra.mxu0 %v3128
    %3263 = vmatprep.subr.mxu0 %v3133
    %3264 = vmatpush1.msra.mxu0 %v3132
    %3265 = vmatprep.subr.mxu0 %v3137
    %3266 = vmatpush1.msra.mxu0 %v3136
    %3267 = vmatprep.subr.mxu0 %v3141
    %3268 = vmatpush1.msra.mxu0 %v3140
    %3269 = vmatprep.subr.mxu0 %v3145
    %3270 = vmatpush1.msra.mxu0 %v3144
    %3271 = vmatprep.subr.mxu0 %v3149
    %3272 = vmatpush1.msra.mxu0 %v3148
    %3273 = vmatprep.subr.mxu0 %v3153
    %3274 = vmatpush1.msra.mxu0 %v3152
    %3275 = vmatprep.subr.mxu0 %v3157
    %3276 = vmatpush1.msra.mxu0 %v3156
    %3277 = vmatprep.subr.mxu0 %v3161
    %3278 = vmatpush1.msra.mxu0 %v3160
    %3279 = vmatprep.subr.mxu0 %v3165
    %3280 = vmatpush1.msra.mxu0 %v3164
    %3281 = vmatprep.subr.mxu0 %v3169
    %3282 = vmatpush1.msra.mxu0 %v3168
    %3283 = vmatprep.subr.mxu0 %v3173
    %3284 = vmatpush1.msra.mxu0 %v3172
    %3285 = vmatprep.subr.mxu0 %v3177
    %3286 = vmatpush1.msra.mxu0 %v3176
    %3287 = vmatprep.subr.mxu0 %v3181
    %3288 = vmatpush1.msra.mxu0 %v3180
    %3289 = vmatprep.subr.mxu0 %v3185
    %3290 = vmatpush1.msra.mxu0 %v3184
    %3291 = vmatprep.subr.mxu0 %v3189
    %3292 = vmatpush1.msra.mxu0 %v3188
    %3293 = vmatprep.subr.mxu0 0.0
    %3294 = vmatpush1.msra.mxu0 0.0
    %3295 = vmatprep.subr.mxu0 0.0
    %3296 = vmatpush1.msra.mxu0 0.0
    %3297 = vmatprep.subr.mxu0 0.0
    %3298 = vmatpush1.msra.mxu0 0.0
    %3299 = vmatprep.subr.mxu0 0.0
    %3300 = vmatpush1.msra.mxu0 0.0
    %3301 = vmatprep.subr.mxu0 0.0
    %3302 = vmatpush1.msra.mxu0 0.0
    %3303 = vmatprep.subr.mxu0 0.0
    %3304 = vmatpush1.msra.mxu0 0.0
    %3305 = vmatprep.subr.mxu0 0.0
    %3306 = vmatpush1.msra.mxu0 0.0
    %3307 = vmatprep.subr.mxu0 0.0
    %3308 = vmatpush1.msra.mxu0 0.0
    %3309 = vmatprep.subr.mxu0 0.0
    %3310 = vmatpush1.msra.mxu0 0.0
    %3311 = vmatprep.subr.mxu0 0.0
    %3312 = vmatpush1.msra.mxu0 0.0
    %3313 = vmatprep.subr.mxu0 0.0
    %3314 = vmatpush1.msra.mxu0 0.0
    %3315 = vmatprep.subr.mxu0 0.0
    %3316 = vmatpush1.msra.mxu0 0.0
    %3317 = vmatprep.subr.mxu0 0.0
    %3318 = vmatpush1.msra.mxu0 0.0
    %3319 = vmatprep.subr.mxu0 0.0
    %3320 = vmatpush1.msra.mxu0 0.0
    %3321 = vmatprep.subr.mxu0 0.0
    %3322 = vmatpush1.msra.mxu0 0.0
    %3323 = vmatprep.subr.mxu0 0.0
    %3324 = vmatpush1.msra.mxu0 0.0
    %3325 = vmatprep.mubr.f32.mxu0 0.0
    %3326 = vmatmul.mubr.f32.gmra.mrb[0].mxu0 %v2667
    %v3327 = vpop.f32.mrb[0].mxu0
    %v3328 = vadd.f32 0.0, %v3327
    %v3329 = vpop.f32.mrb[0].mxu0
    %v3330 = vadd.f32 0.0, %v3329
    %3331 = vdwg.mxu0
    %v3332 = vadd.f32 %v766, %v3257
    %v3333 = vadd.f32 %v768, %v3259
    %v3334 = vadd.f32 %v837, %v3328
    %v3335 = vadd.f32 %v839, %v3330
    %v3336 = vmul.f32 %v3332, 0.5
    %v3337 = vtanh.pop %v3336
    %v3338 = vmul.f32 %v3337, 0.5
    %v3339 = vadd.f32 %v3338, 0.5
    %v3340 = vmul.f32 %v3333, 0.5
    %v3341 = vtanh.pop %v3340
    %v3342 = vmul.f32 %v3341, 0.5
    %v3343 = vadd.f32 %v3342, 0.5
    %v3344 = vtanh.pop %v3334
    %v3345 = vmul.f32 %v3335, 0.5
    %v3346 = vtanh.pop %v3345
    %v3347 = vmul.f32 %v3346, 0.5
    %v3348 = vadd.f32 %v3347, 0.5
    %v3349 = vmul.f32 %v3343, %v2665
    %v3350 = vmul.f32 %v3339, %v3344
    %v3351 = vadd.f32 %v3349, %v3350
    %v3352 = vtanh.pop %v3351
    %v3353 = vmul.f32 %v3348, %v3352
    %v3354 = vld [vmem:[#allocation23] sm:$0xff]
    %v3355 = vld [vmem:[#allocation23 + $0x8] sm:$0xff]
    %v3356 = vld [vmem:[#allocation23 + $0x10] sm:$0xff]
    %v3357 = vld [vmem:[#allocation23 + $0x18] sm:$0xff]
    %v3358 = vld [vmem:[#allocation23 + $0x20] sm:$0xff]
    %v3359 = vld [vmem:[#allocation23 + $0x28] sm:$0xff]
    %v3360 = vld [vmem:[#allocation23 + $0x30] sm:$0xff]
    %v3361 = vld [vmem:[#allocation23 + $0x38] sm:$0xff]
    %v3362 = vld [vmem:[#allocation23 + $0x40] sm:$0xff]
    %v3363 = vld [vmem:[#allocation23 + $0x48] sm:$0xff]
    %v3364 = vld [vmem:[#allocation23 + $0x50] sm:$0xff]
    %v3365 = vld [vmem:[#allocation23 + $0x58] sm:$0xff]
    %v3366 = vld [vmem:[#allocation23 + $0x60] sm:$0xff]
    %v3367 = vld [vmem:[#allocation23 + $0x68] sm:$0xff]
    %v3368 = vld [vmem:[#allocation23 + $0x70] sm:$0xff]
    %v3369 = vld [vmem:[#allocation23 + $0x78] sm:$0xff]
    %v3370 = vld [vmem:[#allocation23 + $0x80] sm:$0xff]
    %v3371 = vld [vmem:[#allocation23 + $0x88] sm:$0xff]
    %v3372 = vld [vmem:[#allocation23 + $0x90] sm:$0xff]
    %v3373 = vld [vmem:[#allocation23 + $0x98] sm:$0xff]
    %v3374 = vld [vmem:[#allocation23 + $0xa0] sm:$0xff]
    %v3375 = vld [vmem:[#allocation23 + $0xa8] sm:$0xff]
    %v3376 = vld [vmem:[#allocation23 + $0xb0] sm:$0xff]
    %v3377 = vld [vmem:[#allocation23 + $0xb8] sm:$0xff]
    %v3378 = vld [vmem:[#allocation23 + $0xc0] sm:$0xff]
    %v3379 = vld [vmem:[#allocation23 + $0xc8] sm:$0xff]
    %v3380 = vld [vmem:[#allocation23 + $0xd0] sm:$0xff]
    %v3381 = vld [vmem:[#allocation23 + $0xd8] sm:$0xff]
    %v3382 = vld [vmem:[#allocation23 + $0xe0] sm:$0xff]
    %v3383 = vld [vmem:[#allocation23 + $0xe8] sm:$0xff]
    %v3384 = vld [vmem:[#allocation23 + $0xf0] sm:$0xff]
    %v3385 = vld [vmem:[#allocation23 + $0xf8] sm:$0xff]
    %v3386 = vld [vmem:[#allocation23 + $0x100] sm:$0xff]
    %v3387 = vld [vmem:[#allocation23 + $0x108] sm:$0xff]
    %v3388 = vld [vmem:[#allocation23 + $0x110] sm:$0xff]
    %v3389 = vld [vmem:[#allocation23 + $0x118] sm:$0xff]
    %v3390 = vld [vmem:[#allocation23 + $0x120] sm:$0xff]
    %v3391 = vld [vmem:[#allocation23 + $0x128] sm:$0xff]
    %v3392 = vld [vmem:[#allocation23 + $0x130] sm:$0xff]
    %v3393 = vld [vmem:[#allocation23 + $0x138] sm:$0xff]
    %v3394 = vld [vmem:[#allocation23 + $0x140] sm:$0xff]
    %v3395 = vld [vmem:[#allocation23 + $0x148] sm:$0xff]
    %v3396 = vld [vmem:[#allocation23 + $0x150] sm:$0xff]
    %v3397 = vld [vmem:[#allocation23 + $0x158] sm:$0xff]
    %v3398 = vld [vmem:[#allocation23 + $0x160] sm:$0xff]
    %v3399 = vld [vmem:[#allocation23 + $0x168] sm:$0xff]
    %v3400 = vld [vmem:[#allocation23 + $0x170] sm:$0xff]
    %v3401 = vld [vmem:[#allocation23 + $0x178] sm:$0xff]
    %v3402 = vld [vmem:[#allocation23 + $0x180] sm:$0xff]
    %v3403 = vld [vmem:[#allocation23 + $0x188] sm:$0xff]
    %v3404 = vld [vmem:[#allocation23 + $0x190] sm:$0xff]
    %v3405 = vld [vmem:[#allocation23 + $0x198] sm:$0xff]
    %v3406 = vld [vmem:[#allocation23 + $0x1a0] sm:$0xff]
    %v3407 = vld [vmem:[#allocation23 + $0x1a8] sm:$0xff]
    %v3408 = vld [vmem:[#allocation23 + $0x1b0] sm:$0xff]
    %v3409 = vld [vmem:[#allocation23 + $0x1b8] sm:$0xff]
    %v3410 = vld [vmem:[#allocation23 + $0x1c0] sm:$0xff]
    %v3411 = vld [vmem:[#allocation23 + $0x1c8] sm:$0xff]
    %v3412 = vld [vmem:[#allocation23 + $0x1d0] sm:$0xff]
    %v3413 = vld [vmem:[#allocation23 + $0x1d8] sm:$0xff]
    %v3414 = vld [vmem:[#allocation23 + $0x1e0] sm:$0xff]
    %v3415 = vld [vmem:[#allocation23 + $0x1e8] sm:$0xff]
    %v3416 = vld [vmem:[#allocation23 + $0x1f0] sm:$0xff]
    %v3417 = vld [vmem:[#allocation23 + $0x1f8] sm:$0xff]
    %3418 = vmatprep.subr.mxu0 %v3355
    %3419 = vmatpush1.msra.mxu0 %v3354
    %3420 = vmatprep.subr.mxu0 %v3359
    %3421 = vmatpush1.msra.mxu0 %v3358
    %3422 = vmatprep.subr.mxu0 %v3363
    %3423 = vmatpush1.msra.mxu0 %v3362
    %3424 = vmatprep.subr.mxu0 %v3367
    %3425 = vmatpush1.msra.mxu0 %v3366
    %3426 = vmatprep.subr.mxu0 %v3371
    %3427 = vmatpush1.msra.mxu0 %v3370
    %3428 = vmatprep.subr.mxu0 %v3375
    %3429 = vmatpush1.msra.mxu0 %v3374
    %3430 = vmatprep.subr.mxu0 %v3379
    %3431 = vmatpush1.msra.mxu0 %v3378
    %3432 = vmatprep.subr.mxu0 %v3383
    %3433 = vmatpush1.msra.mxu0 %v3382
    %3434 = vmatprep.subr.mxu0 %v3387
    %3435 = vmatpush1.msra.mxu0 %v3386
    %3436 = vmatprep.subr.mxu0 %v3391
    %3437 = vmatpush1.msra.mxu0 %v3390
    %3438 = vmatprep.subr.mxu0 %v3395
    %3439 = vmatpush1.msra.mxu0 %v3394
    %3440 = vmatprep.subr.mxu0 %v3399
    %3441 = vmatpush1.msra.mxu0 %v3398
    %3442 = vmatprep.subr.mxu0 %v3403
    %3443 = vmatpush1.msra.mxu0 %v3402
    %3444 = vmatprep.subr.mxu0 %v3407
    %3445 = vmatpush1.msra.mxu0 %v3406
    %3446 = vmatprep.subr.mxu0 %v3411
    %3447 = vmatpush1.msra.mxu0 %v3410
    %3448 = vmatprep.subr.mxu0 %v3415
    %3449 = vmatpush1.msra.mxu0 %v3414
    %3450 = vmatprep.subr.mxu0 0.0
    %3451 = vmatpush1.msra.mxu0 0.0
    %3452 = vmatprep.subr.mxu0 0.0
    %3453 = vmatpush1.msra.mxu0 0.0
    %3454 = vmatprep.subr.mxu0 0.0
    %3455 = vmatpush1.msra.mxu0 0.0
    %3456 = vmatprep.subr.mxu0 0.0
    %3457 = vmatpush1.msra.mxu0 0.0
    %3458 = vmatprep.subr.mxu0 0.0
    %3459 = vmatpush1.msra.mxu0 0.0
    %3460 = vmatprep.subr.mxu0 0.0
    %3461 = vmatpush1.msra.mxu0 0.0
    %3462 = vmatprep.subr.mxu0 0.0
    %3463 = vmatpush1.msra.mxu0 0.0
    %3464 = vmatprep.subr.mxu0 0.0
    %3465 = vmatpush1.msra.mxu0 0.0
    %3466 = vmatprep.subr.mxu0 0.0
    %3467 = vmatpush1.msra.mxu0 0.0
    %3468 = vmatprep.subr.mxu0 0.0
    %3469 = vmatpush1.msra.mxu0 0.0
    %3470 = vmatprep.subr.mxu0 0.0
    %3471 = vmatpush1.msra.mxu0 0.0
    %3472 = vmatprep.subr.mxu0 0.0
    %3473 = vmatpush1.msra.mxu0 0.0
    %3474 = vmatprep.subr.mxu0 0.0
    %3475 = vmatpush1.msra.mxu0 0.0
    %3476 = vmatprep.subr.mxu0 0.0
    %3477 = vmatpush1.msra.mxu0 0.0
    %3478 = vmatprep.subr.mxu0 0.0
    %3479 = vmatpush1.msra.mxu0 0.0
    %3480 = vmatprep.subr.mxu0 0.0
    %3481 = vmatpush1.msra.mxu0 0.0
    %3482 = vmatprep.mubr.f32.mxu0 0.0
    %3483 = vmatmul.mubr.f32.gmra.mrb[0].mxu0 %v3353
    %v3484 = vpop.f32.mrb[0].mxu0
    %v3485 = vadd.f32 0.0, %v3484
    %v3486 = vpop.f32.mrb[0].mxu0
    %v3487 = vadd.f32 0.0, %v3486
    %3488 = vdwg.mxu0
    %3489 = vmatprep.subr.mxu0 %v3357
    %3490 = vmatpush1.msra.mxu0 %v3356
    %3491 = vmatprep.subr.mxu0 %v3361
    %3492 = vmatpush1.msra.mxu0 %v3360
    %3493 = vmatprep.subr.mxu0 %v3365
    %3494 = vmatpush1.msra.mxu0 %v3364
    %3495 = vmatprep.subr.mxu0 %v3369
    %3496 = vmatpush1.msra.mxu0 %v3368
    %3497 = vmatprep.subr.mxu0 %v3373
    %3498 = vmatpush1.msra.mxu0 %v3372
    %3499 = vmatprep.subr.mxu0 %v3377
    %3500 = vmatpush1.msra.mxu0 %v3376
    %3501 = vmatprep.subr.mxu0 %v3381
    %3502 = vmatpush1.msra.mxu0 %v3380
    %3503 = vmatprep.subr.mxu0 %v3385
    %3504 = vmatpush1.msra.mxu0 %v3384
    %3505 = vmatprep.subr.mxu0 %v3389
    %3506 = vmatpush1.msra.mxu0 %v3388
    %3507 = vmatprep.subr.mxu0 %v3393
    %3508 = vmatpush1.msra.mxu0 %v3392
    %3509 = vmatprep.subr.mxu0 %v3397
    %3510 = vmatpush1.msra.mxu0 %v3396
    %3511 = vmatprep.subr.mxu0 %v3401
    %3512 = vmatpush1.msra.mxu0 %v3400
    %3513 = vmatprep.subr.mxu0 %v3405
    %3514 = vmatpush1.msra.mxu0 %v3404
    %3515 = vmatprep.subr.mxu0 %v3409
    %3516 = vmatpush1.msra.mxu0 %v3408
    %3517 = vmatprep.subr.mxu0 %v3413
    %3518 = vmatpush1.msra.mxu0 %v3412
    %3519 = vmatprep.subr.mxu0 %v3417
    %3520 = vmatpush1.msra.mxu0 %v3416
    %3521 = vmatprep.subr.mxu0 0.0
    %3522 = vmatpush1.msra.mxu0 0.0
    %3523 = vmatprep.subr.mxu0 0.0
    %3524 = vmatpush1.msra.mxu0 0.0
    %3525 = vmatprep.subr.mxu0 0.0
    %3526 = vmatpush1.msra.mxu0 0.0
    %3527 = vmatprep.subr.mxu0 0.0
    %3528 = vmatpush1.msra.mxu0 0.0
    %3529 = vmatprep.subr.mxu0 0.0
    %3530 = vmatpush1.msra.mxu0 0.0
    %3531 = vmatprep.subr.mxu0 0.0
    %3532 = vmatpush1.msra.mxu0 0.0
    %3533 = vmatprep.subr.mxu0 0.0
    %3534 = vmatpush1.msra.mxu0 0.0
    %3535 = vmatprep.subr.mxu0 0.0
    %3536 = vmatpush1.msra.mxu0 0.0
    %3537 = vmatprep.subr.mxu0 0.0
    %3538 = vmatpush1.msra.mxu0 0.0
    %3539 = vmatprep.subr.mxu0 0.0
    %3540 = vmatpush1.msra.mxu0 0.0
    %3541 = vmatprep.subr.mxu0 0.0
    %3542 = vmatpush1.msra.mxu0 0.0
    %3543 = vmatprep.subr.mxu0 0.0
    %3544 = vmatpush1.msra.mxu0 0.0
    %3545 = vmatprep.subr.mxu0 0.0
    %3546 = vmatpush1.msra.mxu0 0.0
    %3547 = vmatprep.subr.mxu0 0.0
    %3548 = vmatpush1.msra.mxu0 0.0
    %3549 = vmatprep.subr.mxu0 0.0
    %3550 = vmatpush1.msra.mxu0 0.0
    %3551 = vmatprep.subr.mxu0 0.0
    %3552 = vmatpush1.msra.mxu0 0.0
    %3553 = vmatprep.mubr.f32.mxu0 0.0
    %3554 = vmatmul.mubr.f32.gmra.mrb[0].mxu0 %v3353
    %v3555 = vpop.f32.mrb[0].mxu0
    %v3556 = vadd.f32 0.0, %v3555
    %v3557 = vpop.f32.mrb[0].mxu0
    %v3558 = vadd.f32 0.0, %v3557
    %3559 = vdwg.mxu0
    %v3560 = vadd.f32 %v3051, %v3485
    %v3561 = vadd.f32 %v3053, %v3487
    %v3562 = vadd.f32 %v3122, %v3556
    %v3563 = vadd.f32 %v3124, %v3558
    %v3564 = vmul.f32 %v3560, 0.5
    %v3565 = vtanh.pop %v3564
    %v3566 = vmul.f32 %v3565, 0.5
    %v3567 = vadd.f32 %v3566, 0.5
    %v3568 = vmul.f32 %v3561, 0.5
    %v3569 = vtanh.pop %v3568
    %v3570 = vmul.f32 %v3569, 0.5
    %v3571 = vadd.f32 %v3570, 0.5
    %v3572 = vtanh.pop %v3562
    %v3573 = vmul.f32 %v3563, 0.5
    %v3574 = vtanh.pop %v3573
    %v3575 = vmul.f32 %v3574, 0.5
    %v3576 = vadd.f32 %v3575, 0.5
    %v3577 = vmul.f32 %v3571, %v2893
    %v3578 = vmul.f32 %v3567, %v3572
    %v3579 = vadd.f32 %v3577, %v3578
    %v3580 = vtanh.pop %v3579
    %v3581 = vmul.f32 %v3576, %v3580
    %s3582 = scalar_lea.vmem [#allocation2], 24
    %3583 = vst [vmem:[%s3582] sm:$0xff] %v3581
    %v3584 = vld [vmem:[#allocation24] sm:$0xff]
    %v3585 = vld [vmem:[#allocation24 + $0x8] sm:$0xff]
    %v3586 = vld [vmem:[#allocation24 + $0x10] sm:$0xff]
    %v3587 = vld [vmem:[#allocation24 + $0x18] sm:$0xff]
    %v3588 = vld [vmem:[#allocation24 + $0x20] sm:$0xff]
    %v3589 = vld [vmem:[#allocation24 + $0x28] sm:$0xff]
    %v3590 = vld [vmem:[#allocation24 + $0x30] sm:$0xff]
    %v3591 = vld [vmem:[#allocation24 + $0x38] sm:$0xff]
    %v3592 = vld [vmem:[#allocation24 + $0x40] sm:$0xff]
    %v3593 = vld [vmem:[#allocation24 + $0x48] sm:$0xff]
    %v3594 = vld [vmem:[#allocation24 + $0x50] sm:$0xff]
    %v3595 = vld [vmem:[#allocation24 + $0x58] sm:$0xff]
    %v3596 = vld [vmem:[#allocation24 + $0x60] sm:$0xff]
    %v3597 = vld [vmem:[#allocation24 + $0x68] sm:$0xff]
    %v3598 = vld [vmem:[#allocation24 + $0x70] sm:$0xff]
    %v3599 = vld [vmem:[#allocation24 + $0x78] sm:$0xff]
    %v3600 = vld [vmem:[#allocation24 + $0x80] sm:$0xff]
    %v3601 = vld [vmem:[#allocation24 + $0x88] sm:$0xff]
    %v3602 = vld [vmem:[#allocation24 + $0x90] sm:$0xff]
    %v3603 = vld [vmem:[#allocation24 + $0x98] sm:$0xff]
    %v3604 = vld [vmem:[#allocation24 + $0xa0] sm:$0xff]
    %v3605 = vld [vmem:[#allocation24 + $0xa8] sm:$0xff]
    %v3606 = vld [vmem:[#allocation24 + $0xb0] sm:$0xff]
    %v3607 = vld [vmem:[#allocation24 + $0xb8] sm:$0xff]
    %v3608 = vld [vmem:[#allocation24 + $0xc0] sm:$0xff]
    %v3609 = vld [vmem:[#allocation24 + $0xc8] sm:$0xff]
    %v3610 = vld [vmem:[#allocation24 + $0xd0] sm:$0xff]
    %v3611 = vld [vmem:[#allocation24 + $0xd8] sm:$0xff]
    %v3612 = vld [vmem:[#allocation24 + $0xe0] sm:$0xff]
    %v3613 = vld [vmem:[#allocation24 + $0xe8] sm:$0xff]
    %v3614 = vld [vmem:[#allocation24 + $0xf0] sm:$0xff]
    %v3615 = vld [vmem:[#allocation24 + $0xf8] sm:$0xff]
    %v3616 = vld [vmem:[#allocation24 + $0x100] sm:$0xff]
    %v3617 = vld [vmem:[#allocation24 + $0x108] sm:$0xff]
    %v3618 = vld [vmem:[#allocation24 + $0x110] sm:$0xff]
    %v3619 = vld [vmem:[#allocation24 + $0x118] sm:$0xff]
    %v3620 = vld [vmem:[#allocation24 + $0x120] sm:$0xff]
    %v3621 = vld [vmem:[#allocation24 + $0x128] sm:$0xff]
    %v3622 = vld [vmem:[#allocation24 + $0x130] sm:$0xff]
    %v3623 = vld [vmem:[#allocation24 + $0x138] sm:$0xff]
    %v3624 = vld [vmem:[#allocation24 + $0x140] sm:$0xff]
    %v3625 = vld [vmem:[#allocation24 + $0x148] sm:$0xff]
    %v3626 = vld [vmem:[#allocation24 + $0x150] sm:$0xff]
    %v3627 = vld [vmem:[#allocation24 + $0x158] sm:$0xff]
    %v3628 = vld [vmem:[#allocation24 + $0x160] sm:$0xff]
    %v3629 = vld [vmem:[#allocation24 + $0x168] sm:$0xff]
    %v3630 = vld [vmem:[#allocation24 + $0x170] sm:$0xff]
    %v3631 = vld [vmem:[#allocation24 + $0x178] sm:$0xff]
    %v3632 = vld [vmem:[#allocation24 + $0x180] sm:$0xff]
    %v3633 = vld [vmem:[#allocation24 + $0x188] sm:$0xff]
    %v3634 = vld [vmem:[#allocation24 + $0x190] sm:$0xff]
    %v3635 = vld [vmem:[#allocation24 + $0x198] sm:$0xff]
    %v3636 = vld [vmem:[#allocation24 + $0x1a0] sm:$0xff]
    %v3637 = vld [vmem:[#allocation24 + $0x1a8] sm:$0xff]
    %v3638 = vld [vmem:[#allocation24 + $0x1b0] sm:$0xff]
    %v3639 = vld [vmem:[#allocation24 + $0x1b8] sm:$0xff]
    %v3640 = vld [vmem:[#allocation24 + $0x1c0] sm:$0xff]
    %v3641 = vld [vmem:[#allocation24 + $0x1c8] sm:$0xff]
    %v3642 = vld [vmem:[#allocation24 + $0x1d0] sm:$0xff]
    %v3643 = vld [vmem:[#allocation24 + $0x1d8] sm:$0xff]
    %v3644 = vld [vmem:[#allocation24 + $0x1e0] sm:$0xff]
    %v3645 = vld [vmem:[#allocation24 + $0x1e8] sm:$0xff]
    %v3646 = vld [vmem:[#allocation24 + $0x1f0] sm:$0xff]
    %v3647 = vld [vmem:[#allocation24 + $0x1f8] sm:$0xff]
    %v3648 = vld [vmem:[#allocation26] sm:$0xf]
    %v3650 = vlaneseq
    %v3651 = vshrl.u32 %v3650, 7
    %v3652 = vsub.s32 0, %v3651
    %v3653 = vrot.slane %v3648, %v3652
    %v3654 = vlaneseq
    %v3655 = vshrl.u32 %v3654, 7
    %v3656 = vsub.s32 1, %v3655
    %v3657 = vrot.slane %v3648, %v3656
    %v3658 = vlaneseq
    %v3659 = vshrl.u32 %v3658, 7
    %v3660 = vsub.s32 2, %v3659
    %v3661 = vrot.slane %v3648, %v3660
    %v3662 = vlaneseq
    %v3663 = vshrl.u32 %v3662, 7
    %v3664 = vsub.s32 3, %v3663
    %v3665 = vrot.slane %v3648, %v3664
    %3670 = vmatprep.subr.mxu0 %v3585
    %3671 = vmatpush1.msra.mxu0 %v3584
    %3672 = vmatprep.subr.mxu0 %v3589
    %3673 = vmatpush1.msra.mxu0 %v3588
    %3674 = vmatprep.subr.mxu0 %v3593
    %3675 = vmatpush1.msra.mxu0 %v3592
    %3676 = vmatprep.subr.mxu0 %v3597
    %3677 = vmatpush1.msra.mxu0 %v3596
    %3678 = vmatprep.subr.mxu0 %v3601
    %3679 = vmatpush1.msra.mxu0 %v3600
    %3680 = vmatprep.subr.mxu0 %v3605
    %3681 = vmatpush1.msra.mxu0 %v3604
    %3682 = vmatprep.subr.mxu0 %v3609
    %3683 = vmatpush1.msra.mxu0 %v3608
    %3684 = vmatprep.subr.mxu0 %v3613
    %3685 = vmatpush1.msra.mxu0 %v3612
    %3686 = vmatprep.subr.mxu0 %v3617
    %3687 = vmatpush1.msra.mxu0 %v3616
    %3688 = vmatprep.subr.mxu0 %v3621
    %3689 = vmatpush1.msra.mxu0 %v3620
    %3690 = vmatprep.subr.mxu0 %v3625
    %3691 = vmatpush1.msra.mxu0 %v3624
    %3692 = vmatprep.subr.mxu0 %v3629
    %3693 = vmatpush1.msra.mxu0 %v3628
    %3694 = vmatprep.subr.mxu0 %v3633
    %3695 = vmatpush1.msra.mxu0 %v3632
    %3696 = vmatprep.subr.mxu0 %v3637
    %3697 = vmatpush1.msra.mxu0 %v3636
    %3698 = vmatprep.subr.mxu0 %v3641
    %3699 = vmatpush1.msra.mxu0 %v3640
    %3700 = vmatprep.subr.mxu0 %v3645
    %3701 = vmatpush1.msra.mxu0 %v3644
    %3702 = vmatprep.subr.mxu0 0.0
    %3703 = vmatpush1.msra.mxu0 0.0
    %3704 = vmatprep.subr.mxu0 0.0
    %3705 = vmatpush1.msra.mxu0 0.0
    %3706 = vmatprep.subr.mxu0 0.0
    %3707 = vmatpush1.msra.mxu0 0.0
    %3708 = vmatprep.subr.mxu0 0.0
    %3709 = vmatpush1.msra.mxu0 0.0
    %3710 = vmatprep.subr.mxu0 0.0
    %3711 = vmatpush1.msra.mxu0 0.0
    %3712 = vmatprep.subr.mxu0 0.0
    %3713 = vmatpush1.msra.mxu0 0.0
    %3714 = vmatprep.subr.mxu0 0.0
    %3715 = vmatpush1.msra.mxu0 0.0
    %3716 = vmatprep.subr.mxu0 0.0
    %3717 = vmatpush1.msra.mxu0 0.0
    %3718 = vmatprep.subr.mxu0 0.0
    %3719 = vmatpush1.msra.mxu0 0.0
    %3720 = vmatprep.subr.mxu0 0.0
    %3721 = vmatpush1.msra.mxu0 0.0
    %3722 = vmatprep.subr.mxu0 0.0
    %3723 = vmatpush1.msra.mxu0 0.0
    %3724 = vmatprep.subr.mxu0 0.0
    %3725 = vmatpush1.msra.mxu0 0.0
    %3726 = vmatprep.subr.mxu0 0.0
    %3727 = vmatpush1.msra.mxu0 0.0
    %3728 = vmatprep.subr.mxu0 0.0
    %3729 = vmatpush1.msra.mxu0 0.0
    %3730 = vmatprep.subr.mxu0 0.0
    %3731 = vmatpush1.msra.mxu0 0.0
    %3732 = vmatprep.subr.mxu0 0.0
    %3733 = vmatpush1.msra.mxu0 0.0
    %3734 = vmatprep.mubr.f32.mxu0 0.0
    %3735 = vmatmul.mubr.f32.gmra.mrb[0].mxu0 %v3581
    %v3736 = vpop.f32.mrb[0].mxu0
    %v3737 = vadd.f32 %v3653, %v3736
    %v3738 = vpop.f32.mrb[0].mxu0
    %v3739 = vadd.f32 %v3657, %v3738
    %3740 = vdwg.mxu0
    %3741 = vmatprep.subr.mxu0 %v3587
    %3742 = vmatpush1.msra.mxu0 %v3586
    %3743 = vmatprep.subr.mxu0 %v3591
    %3744 = vmatpush1.msra.mxu0 %v3590
    %3745 = vmatprep.subr.mxu0 %v3595
    %3746 = vmatpush1.msra.mxu0 %v3594
    %3747 = vmatprep.subr.mxu0 %v3599
    %3748 = vmatpush1.msra.mxu0 %v3598
    %3749 = vmatprep.subr.mxu0 %v3603
    %3750 = vmatpush1.msra.mxu0 %v3602
    %3751 = vmatprep.subr.mxu0 %v3607
    %3752 = vmatpush1.msra.mxu0 %v3606
    %3753 = vmatprep.subr.mxu0 %v3611
    %3754 = vmatpush1.msra.mxu0 %v3610
    %3755 = vmatprep.subr.mxu0 %v3615
    %3756 = vmatpush1.msra.mxu0 %v3614
    %3757 = vmatprep.subr.mxu0 %v3619
    %3758 = vmatpush1.msra.mxu0 %v3618
    %3759 = vmatprep.subr.mxu0 %v3623
    %3760 = vmatpush1.msra.mxu0 %v3622
    %3761 = vmatprep.subr.mxu0 %v3627
    %3762 = vmatpush1.msra.mxu0 %v3626
    %3763 = vmatprep.subr.mxu0 %v3631
    %3764 = vmatpush1.msra.mxu0 %v3630
    %3765 = vmatprep.subr.mxu0 %v3635
    %3766 = vmatpush1.msra.mxu0 %v3634
    %3767 = vmatprep.subr.mxu0 %v3639
    %3768 = vmatpush1.msra.mxu0 %v3638
    %3769 = vmatprep.subr.mxu0 %v3643
    %3770 = vmatpush1.msra.mxu0 %v3642
    %3771 = vmatprep.subr.mxu0 %v3647
    %3772 = vmatpush1.msra.mxu0 %v3646
    %3773 = vmatprep.subr.mxu0 0.0
    %3774 = vmatpush1.msra.mxu0 0.0
    %3775 = vmatprep.subr.mxu0 0.0
    %3776 = vmatpush1.msra.mxu0 0.0
    %3777 = vmatprep.subr.mxu0 0.0
    %3778 = vmatpush1.msra.mxu0 0.0
    %3779 = vmatprep.subr.mxu0 0.0
    %3780 = vmatpush1.msra.mxu0 0.0
    %3781 = vmatprep.subr.mxu0 0.0
    %3782 = vmatpush1.msra.mxu0 0.0
    %3783 = vmatprep.subr.mxu0 0.0
    %3784 = vmatpush1.msra.mxu0 0.0
    %3785 = vmatprep.subr.mxu0 0.0
    %3786 = vmatpush1.msra.mxu0 0.0
    %3787 = vmatprep.subr.mxu0 0.0
    %3788 = vmatpush1.msra.mxu0 0.0
    %3789 = vmatprep.subr.mxu0 0.0
    %3790 = vmatpush1.msra.mxu0 0.0
    %3791 = vmatprep.subr.mxu0 0.0
    %3792 = vmatpush1.msra.mxu0 0.0
    %3793 = vmatprep.subr.mxu0 0.0
    %3794 = vmatpush1.msra.mxu0 0.0
    %3795 = vmatprep.subr.mxu0 0.0
    %3796 = vmatpush1.msra.mxu0 0.0
    %3797 = vmatprep.subr.mxu0 0.0
    %3798 = vmatpush1.msra.mxu0 0.0
    %3799 = vmatprep.subr.mxu0 0.0
    %3800 = vmatpush1.msra.mxu0 0.0
    %3801 = vmatprep.subr.mxu0 0.0
    %3802 = vmatpush1.msra.mxu0 0.0
    %3803 = vmatprep.subr.mxu0 0.0
    %3804 = vmatpush1.msra.mxu0 0.0
    %3805 = vmatprep.mubr.f32.mxu0 0.0
    %3806 = vmatmul.mubr.f32.gmra.mrb[0].mxu0 %v3581
    %v3807 = vpop.f32.mrb[0].mxu0
    %v3808 = vadd.f32 %v3661, %v3807
    %v3809 = vpop.f32.mrb[0].mxu0
    %v3810 = vadd.f32 %v3665, %v3809
    %3811 = vdwg.mxu0
    %v3812 = vld [vmem:[#allocation20] sm:$0xff]
    %v3813 = vld [vmem:[#allocation20 + $0x8] sm:$0xff]
    %v3814 = vld [vmem:[#allocation20 + $0x10] sm:$0xff]
    %v3815 = vld [vmem:[#allocation20 + $0x18] sm:$0xff]
    %v3816 = vld [vmem:[#allocation20 + $0x20] sm:$0xff]
    %v3817 = vld [vmem:[#allocation20 + $0x28] sm:$0xff]
    %v3818 = vld [vmem:[#allocation20 + $0x30] sm:$0xff]
    %v3819 = vld [vmem:[#allocation20 + $0x38] sm:$0xff]
    %v3820 = vld [vmem:[#allocation20 + $0x40] sm:$0xff]
    %v3821 = vld [vmem:[#allocation20 + $0x48] sm:$0xff]
    %v3822 = vld [vmem:[#allocation20 + $0x50] sm:$0xff]
    %v3823 = vld [vmem:[#allocation20 + $0x58] sm:$0xff]
    %v3824 = vld [vmem:[#allocation20 + $0x60] sm:$0xff]
    %v3825 = vld [vmem:[#allocation20 + $0x68] sm:$0xff]
    %v3826 = vld [vmem:[#allocation20 + $0x70] sm:$0xff]
    %v3827 = vld [vmem:[#allocation20 + $0x78] sm:$0xff]
    %v3828 = vld [vmem:[#allocation20 + $0x80] sm:$0xff]
    %v3829 = vld [vmem:[#allocation20 + $0x88] sm:$0xff]
    %v3830 = vld [vmem:[#allocation20 + $0x90] sm:$0xff]
    %v3831 = vld [vmem:[#allocation20 + $0x98] sm:$0xff]
    %v3832 = vld [vmem:[#allocation20 + $0xa0] sm:$0xff]
    %v3833 = vld [vmem:[#allocation20 + $0xa8] sm:$0xff]
    %v3834 = vld [vmem:[#allocation20 + $0xb0] sm:$0xff]
    %v3835 = vld [vmem:[#allocation20 + $0xb8] sm:$0xff]
    %v3836 = vld [vmem:[#allocation20 + $0xc0] sm:$0xff]
    %v3837 = vld [vmem:[#allocation20 + $0xc8] sm:$0xff]
    %v3838 = vld [vmem:[#allocation20 + $0xd0] sm:$0xff]
    %v3839 = vld [vmem:[#allocation20 + $0xd8] sm:$0xff]
    %v3840 = vld [vmem:[#allocation20 + $0xe0] sm:$0xff]
    %v3841 = vld [vmem:[#allocation20 + $0xe8] sm:$0xff]
    %v3842 = vld [vmem:[#allocation20 + $0xf0] sm:$0xff]
    %v3843 = vld [vmem:[#allocation20 + $0xf8] sm:$0xff]
    %v3844 = vld [vmem:[#allocation20 + $0x100] sm:$0xff]
    %v3845 = vld [vmem:[#allocation20 + $0x108] sm:$0xff]
    %v3846 = vld [vmem:[#allocation20 + $0x110] sm:$0xff]
    %v3847 = vld [vmem:[#allocation20 + $0x118] sm:$0xff]
    %v3848 = vld [vmem:[#allocation20 + $0x120] sm:$0xff]
    %v3849 = vld [vmem:[#allocation20 + $0x128] sm:$0xff]
    %v3850 = vld [vmem:[#allocation20 + $0x130] sm:$0xff]
    %v3851 = vld [vmem:[#allocation20 + $0x138] sm:$0xff]
    %v3852 = vld [vmem:[#allocation20 + $0x140] sm:$0xff]
    %v3853 = vld [vmem:[#allocation20 + $0x148] sm:$0xff]
    %v3854 = vld [vmem:[#allocation20 + $0x150] sm:$0xff]
    %v3855 = vld [vmem:[#allocation20 + $0x158] sm:$0xff]
    %v3856 = vld [vmem:[#allocation20 + $0x160] sm:$0xff]
    %v3857 = vld [vmem:[#allocation20 + $0x168] sm:$0xff]
    %v3858 = vld [vmem:[#allocation20 + $0x170] sm:$0xff]
    %v3859 = vld [vmem:[#allocation20 + $0x178] sm:$0xff]
    %v3860 = vld [vmem:[#allocation20 + $0x180] sm:$0xff]
    %v3861 = vld [vmem:[#allocation20 + $0x188] sm:$0xff]
    %v3862 = vld [vmem:[#allocation20 + $0x190] sm:$0xff]
    %v3863 = vld [vmem:[#allocation20 + $0x198] sm:$0xff]
    %v3864 = vld [vmem:[#allocation20 + $0x1a0] sm:$0xff]
    %v3865 = vld [vmem:[#allocation20 + $0x1a8] sm:$0xff]
    %v3866 = vld [vmem:[#allocation20 + $0x1b0] sm:$0xff]
    %v3867 = vld [vmem:[#allocation20 + $0x1b8] sm:$0xff]
    %v3868 = vld [vmem:[#allocation20 + $0x1c0] sm:$0xff]
    %v3869 = vld [vmem:[#allocation20 + $0x1c8] sm:$0xff]
    %v3870 = vld [vmem:[#allocation20 + $0x1d0] sm:$0xff]
    %v3871 = vld [vmem:[#allocation20 + $0x1d8] sm:$0xff]
    %v3872 = vld [vmem:[#allocation20 + $0x1e0] sm:$0xff]
    %v3873 = vld [vmem:[#allocation20 + $0x1e8] sm:$0xff]
    %v3874 = vld [vmem:[#allocation20 + $0x1f0] sm:$0xff]
    %v3875 = vld [vmem:[#allocation20 + $0x1f8] sm:$0xff]
    %3876 = vmatprep.subr.mxu0 %v3813
    %3877 = vmatpush1.msra.mxu0 %v3812
    %3878 = vmatprep.subr.mxu0 %v3817
    %3879 = vmatpush1.msra.mxu0 %v3816
    %3880 = vmatprep.subr.mxu0 %v3821
    %3881 = vmatpush1.msra.mxu0 %v3820
    %3882 = vmatprep.subr.mxu0 %v3825
    %3883 = vmatpush1.msra.mxu0 %v3824
    %3884 = vmatprep.subr.mxu0 %v3829
    %3885 = vmatpush1.msra.mxu0 %v3828
    %3886 = vmatprep.subr.mxu0 %v3833
    %3887 = vmatpush1.msra.mxu0 %v3832
    %3888 = vmatprep.subr.mxu0 %v3837
    %3889 = vmatpush1.msra.mxu0 %v3836
    %3890 = vmatprep.subr.mxu0 %v3841
    %3891 = vmatpush1.msra.mxu0 %v3840
    %3892 = vmatprep.subr.mxu0 %v3845
    %3893 = vmatpush1.msra.mxu0 %v3844
    %3894 = vmatprep.subr.mxu0 %v3849
    %3895 = vmatpush1.msra.mxu0 %v3848
    %3896 = vmatprep.subr.mxu0 %v3853
    %3897 = vmatpush1.msra.mxu0 %v3852
    %3898 = vmatprep.subr.mxu0 %v3857
    %3899 = vmatpush1.msra.mxu0 %v3856
    %3900 = vmatprep.subr.mxu0 %v3861
    %3901 = vmatpush1.msra.mxu0 %v3860
    %3902 = vmatprep.subr.mxu0 %v3865
    %3903 = vmatpush1.msra.mxu0 %v3864
    %3904 = vmatprep.subr.mxu0 %v3869
    %3905 = vmatpush1.msra.mxu0 %v3868
    %3906 = vmatprep.subr.mxu0 %v3873
    %3907 = vmatpush1.msra.mxu0 %v3872
    %3908 = vmatprep.subr.mxu0 0.0
    %3909 = vmatpush1.msra.mxu0 0.0
    %3910 = vmatprep.subr.mxu0 0.0
    %3911 = vmatpush1.msra.mxu0 0.0
    %3912 = vmatprep.subr.mxu0 0.0
    %3913 = vmatpush1.msra.mxu0 0.0
    %3914 = vmatprep.subr.mxu0 0.0
    %3915 = vmatpush1.msra.mxu0 0.0
    %3916 = vmatprep.subr.mxu0 0.0
    %3917 = vmatpush1.msra.mxu0 0.0
    %3918 = vmatprep.subr.mxu0 0.0
    %3919 = vmatpush1.msra.mxu0 0.0
    %3920 = vmatprep.subr.mxu0 0.0
    %3921 = vmatpush1.msra.mxu0 0.0
    %3922 = vmatprep.subr.mxu0 0.0
    %3923 = vmatpush1.msra.mxu0 0.0
    %3924 = vmatprep.subr.mxu0 0.0
    %3925 = vmatpush1.msra.mxu0 0.0
    %3926 = vmatprep.subr.mxu0 0.0
    %3927 = vmatpush1.msra.mxu0 0.0
    %3928 = vmatprep.subr.mxu0 0.0
    %3929 = vmatpush1.msra.mxu0 0.0
    %3930 = vmatprep.subr.mxu0 0.0
    %3931 = vmatpush1.msra.mxu0 0.0
    %3932 = vmatprep.subr.mxu0 0.0
    %3933 = vmatpush1.msra.mxu0 0.0
    %3934 = vmatprep.subr.mxu0 0.0
    %3935 = vmatpush1.msra.mxu0 0.0
    %3936 = vmatprep.subr.mxu0 0.0
    %3937 = vmatpush1.msra.mxu0 0.0
    %3938 = vmatprep.subr.mxu0 0.0
    %3939 = vmatpush1.msra.mxu0 0.0
    %3940 = vmatprep.mubr.f32.mxu0 0.0
    %3941 = vmatmul.mubr.f32.gmra.mrb[0].mxu0 %v3353
    %v3942 = vpop.f32.mrb[0].mxu0
    %v3943 = vadd.f32 0.0, %v3942
    %v3944 = vpop.f32.mrb[0].mxu0
    %v3945 = vadd.f32 0.0, %v3944
    %3946 = vdwg.mxu0
    %3947 = vmatprep.subr.mxu0 %v3815
    %3948 = vmatpush1.msra.mxu0 %v3814
    %3949 = vmatprep.subr.mxu0 %v3819
    %3950 = vmatpush1.msra.mxu0 %v3818
    %3951 = vmatprep.subr.mxu0 %v3823
    %3952 = vmatpush1.msra.mxu0 %v3822
    %3953 = vmatprep.subr.mxu0 %v3827
    %3954 = vmatpush1.msra.mxu0 %v3826
    %3955 = vmatprep.subr.mxu0 %v3831
    %3956 = vmatpush1.msra.mxu0 %v3830
    %3957 = vmatprep.subr.mxu0 %v3835
    %3958 = vmatpush1.msra.mxu0 %v3834
    %3959 = vmatprep.subr.mxu0 %v3839
    %3960 = vmatpush1.msra.mxu0 %v3838
    %3961 = vmatprep.subr.mxu0 %v3843
    %3962 = vmatpush1.msra.mxu0 %v3842
    %3963 = vmatprep.subr.mxu0 %v3847
    %3964 = vmatpush1.msra.mxu0 %v3846
    %3965 = vmatprep.subr.mxu0 %v3851
    %3966 = vmatpush1.msra.mxu0 %v3850
    %3967 = vmatprep.subr.mxu0 %v3855
    %3968 = vmatpush1.msra.mxu0 %v3854
    %3969 = vmatprep.subr.mxu0 %v3859
    %3970 = vmatpush1.msra.mxu0 %v3858
    %3971 = vmatprep.subr.mxu0 %v3863
    %3972 = vmatpush1.msra.mxu0 %v3862
    %3973 = vmatprep.subr.mxu0 %v3867
    %3974 = vmatpush1.msra.mxu0 %v3866
    %3975 = vmatprep.subr.mxu0 %v3871
    %3976 = vmatpush1.msra.mxu0 %v3870
    %3977 = vmatprep.subr.mxu0 %v3875
    %3978 = vmatpush1.msra.mxu0 %v3874
    %3979 = vmatprep.subr.mxu0 0.0
    %3980 = vmatpush1.msra.mxu0 0.0
    %3981 = vmatprep.subr.mxu0 0.0
    %3982 = vmatpush1.msra.mxu0 0.0
    %3983 = vmatprep.subr.mxu0 0.0
    %3984 = vmatpush1.msra.mxu0 0.0
    %3985 = vmatprep.subr.mxu0 0.0
    %3986 = vmatpush1.msra.mxu0 0.0
    %3987 = vmatprep.subr.mxu0 0.0
    %3988 = vmatpush1.msra.mxu0 0.0
    %3989 = vmatprep.subr.mxu0 0.0
    %3990 = vmatpush1.msra.mxu0 0.0
    %3991 = vmatprep.subr.mxu0 0.0
    %3992 = vmatpush1.msra.mxu0 0.0
    %3993 = vmatprep.subr.mxu0 0.0
    %3994 = vmatpush1.msra.mxu0 0.0
    %3995 = vmatprep.subr.mxu0 0.0
    %3996 = vmatpush1.msra.mxu0 0.0
    %3997 = vmatprep.subr.mxu0 0.0
    %3998 = vmatpush1.msra.mxu0 0.0
    %3999 = vmatprep.subr.mxu0 0.0
    %4000 = vmatpush1.msra.mxu0 0.0
    %4001 = vmatprep.subr.mxu0 0.0
    %4002 = vmatpush1.msra.mxu0 0.0
    %4003 = vmatprep.subr.mxu0 0.0
    %4004 = vmatpush1.msra.mxu0 0.0
    %4005 = vmatprep.subr.mxu0 0.0
    %4006 = vmatpush1.msra.mxu0 0.0
    %4007 = vmatprep.subr.mxu0 0.0
    %4008 = vmatpush1.msra.mxu0 0.0
    %4009 = vmatprep.subr.mxu0 0.0
    %4010 = vmatpush1.msra.mxu0 0.0
    %4011 = vmatprep.mubr.f32.mxu0 0.0
    %4012 = vmatmul.mubr.f32.gmra.mrb[0].mxu0 %v3353
    %v4013 = vpop.f32.mrb[0].mxu0
    %v4014 = vadd.f32 0.0, %v4013
    %v4015 = vpop.f32.mrb[0].mxu0
    %v4016 = vadd.f32 0.0, %v4015
    %4017 = vdwg.mxu0
    %v4018 = vadd.f32 %v766, %v3943
    %v4019 = vadd.f32 %v768, %v3945
    %v4020 = vadd.f32 %v837, %v4014
    %v4021 = vadd.f32 %v839, %v4016
    %v4022 = vmul.f32 %v4018, 0.5
    %v4023 = vtanh.pop %v4022
    %v4024 = vmul.f32 %v4023, 0.5
    %v4025 = vadd.f32 %v4024, 0.5
    %v4026 = vmul.f32 %v4019, 0.5
    %v4027 = vtanh.pop %v4026
    %v4028 = vmul.f32 %v4027, 0.5
    %v4029 = vadd.f32 %v4028, 0.5
    %v4030 = vtanh.pop %v4020
    %v4031 = vmul.f32 %v4021, 0.5
    %v4032 = vtanh.pop %v4031
    %v4033 = vmul.f32 %v4032, 0.5
    %v4034 = vadd.f32 %v4033, 0.5
    %v4035 = vmul.f32 %v4029, %v3351
    %v4036 = vmul.f32 %v4025, %v4030
    %v4037 = vadd.f32 %v4035, %v4036
    %v4038 = vtanh.pop %v4037
    %v4039 = vmul.f32 %v4034, %v4038
    %v4040 = vld [vmem:[#allocation23] sm:$0xff]
    %v4041 = vld [vmem:[#allocation23 + $0x8] sm:$0xff]
    %v4042 = vld [vmem:[#allocation23 + $0x10] sm:$0xff]
    %v4043 = vld [vmem:[#allocation23 + $0x18] sm:$0xff]
    %v4044 = vld [vmem:[#allocation23 + $0x20] sm:$0xff]
    %v4045 = vld [vmem:[#allocation23 + $0x28] sm:$0xff]
    %v4046 = vld [vmem:[#allocation23 + $0x30] sm:$0xff]
    %v4047 = vld [vmem:[#allocation23 + $0x38] sm:$0xff]
    %v4048 = vld [vmem:[#allocation23 + $0x40] sm:$0xff]
    %v4049 = vld [vmem:[#allocation23 + $0x48] sm:$0xff]
    %v4050 = vld [vmem:[#allocation23 + $0x50] sm:$0xff]
    %v4051 = vld [vmem:[#allocation23 + $0x58] sm:$0xff]
    %v4052 = vld [vmem:[#allocation23 + $0x60] sm:$0xff]
    %v4053 = vld [vmem:[#allocation23 + $0x68] sm:$0xff]
    %v4054 = vld [vmem:[#allocation23 + $0x70] sm:$0xff]
    %v4055 = vld [vmem:[#allocation23 + $0x78] sm:$0xff]
    %v4056 = vld [vmem:[#allocation23 + $0x80] sm:$0xff]
    %v4057 = vld [vmem:[#allocation23 + $0x88] sm:$0xff]
    %v4058 = vld [vmem:[#allocation23 + $0x90] sm:$0xff]
    %v4059 = vld [vmem:[#allocation23 + $0x98] sm:$0xff]
    %v4060 = vld [vmem:[#allocation23 + $0xa0] sm:$0xff]
    %v4061 = vld [vmem:[#allocation23 + $0xa8] sm:$0xff]
    %v4062 = vld [vmem:[#allocation23 + $0xb0] sm:$0xff]
    %v4063 = vld [vmem:[#allocation23 + $0xb8] sm:$0xff]
    %v4064 = vld [vmem:[#allocation23 + $0xc0] sm:$0xff]
    %v4065 = vld [vmem:[#allocation23 + $0xc8] sm:$0xff]
    %v4066 = vld [vmem:[#allocation23 + $0xd0] sm:$0xff]
    %v4067 = vld [vmem:[#allocation23 + $0xd8] sm:$0xff]
    %v4068 = vld [vmem:[#allocation23 + $0xe0] sm:$0xff]
    %v4069 = vld [vmem:[#allocation23 + $0xe8] sm:$0xff]
    %v4070 = vld [vmem:[#allocation23 + $0xf0] sm:$0xff]
    %v4071 = vld [vmem:[#allocation23 + $0xf8] sm:$0xff]
    %v4072 = vld [vmem:[#allocation23 + $0x100] sm:$0xff]
    %v4073 = vld [vmem:[#allocation23 + $0x108] sm:$0xff]
    %v4074 = vld [vmem:[#allocation23 + $0x110] sm:$0xff]
    %v4075 = vld [vmem:[#allocation23 + $0x118] sm:$0xff]
    %v4076 = vld [vmem:[#allocation23 + $0x120] sm:$0xff]
    %v4077 = vld [vmem:[#allocation23 + $0x128] sm:$0xff]
    %v4078 = vld [vmem:[#allocation23 + $0x130] sm:$0xff]
    %v4079 = vld [vmem:[#allocation23 + $0x138] sm:$0xff]
    %v4080 = vld [vmem:[#allocation23 + $0x140] sm:$0xff]
    %v4081 = vld [vmem:[#allocation23 + $0x148] sm:$0xff]
    %v4082 = vld [vmem:[#allocation23 + $0x150] sm:$0xff]
    %v4083 = vld [vmem:[#allocation23 + $0x158] sm:$0xff]
    %v4084 = vld [vmem:[#allocation23 + $0x160] sm:$0xff]
    %v4085 = vld [vmem:[#allocation23 + $0x168] sm:$0xff]
    %v4086 = vld [vmem:[#allocation23 + $0x170] sm:$0xff]
    %v4087 = vld [vmem:[#allocation23 + $0x178] sm:$0xff]
    %v4088 = vld [vmem:[#allocation23 + $0x180] sm:$0xff]
    %v4089 = vld [vmem:[#allocation23 + $0x188] sm:$0xff]
    %v4090 = vld [vmem:[#allocation23 + $0x190] sm:$0xff]
    %v4091 = vld [vmem:[#allocation23 + $0x198] sm:$0xff]
    %v4092 = vld [vmem:[#allocation23 + $0x1a0] sm:$0xff]
    %v4093 = vld [vmem:[#allocation23 + $0x1a8] sm:$0xff]
    %v4094 = vld [vmem:[#allocation23 + $0x1b0] sm:$0xff]
    %v4095 = vld [vmem:[#allocation23 + $0x1b8] sm:$0xff]
    %v4096 = vld [vmem:[#allocation23 + $0x1c0] sm:$0xff]
    %v4097 = vld [vmem:[#allocation23 + $0x1c8] sm:$0xff]
    %v4098 = vld [vmem:[#allocation23 + $0x1d0] sm:$0xff]
    %v4099 = vld [vmem:[#allocation23 + $0x1d8] sm:$0xff]
    %v4100 = vld [vmem:[#allocation23 + $0x1e0] sm:$0xff]
    %v4101 = vld [vmem:[#allocation23 + $0x1e8] sm:$0xff]
    %v4102 = vld [vmem:[#allocation23 + $0x1f0] sm:$0xff]
    %v4103 = vld [vmem:[#allocation23 + $0x1f8] sm:$0xff]
    %4104 = vmatprep.subr.mxu0 %v4041
    %4105 = vmatpush1.msra.mxu0 %v4040
    %4106 = vmatprep.subr.mxu0 %v4045
    %4107 = vmatpush1.msra.mxu0 %v4044
    %4108 = vmatprep.subr.mxu0 %v4049
    %4109 = vmatpush1.msra.mxu0 %v4048
    %4110 = vmatprep.subr.mxu0 %v4053
    %4111 = vmatpush1.msra.mxu0 %v4052
    %4112 = vmatprep.subr.mxu0 %v4057
    %4113 = vmatpush1.msra.mxu0 %v4056
    %4114 = vmatprep.subr.mxu0 %v4061
    %4115 = vmatpush1.msra.mxu0 %v4060
    %4116 = vmatprep.subr.mxu0 %v4065
    %4117 = vmatpush1.msra.mxu0 %v4064
    %4118 = vmatprep.subr.mxu0 %v4069
    %4119 = vmatpush1.msra.mxu0 %v4068
    %4120 = vmatprep.subr.mxu0 %v4073
    %4121 = vmatpush1.msra.mxu0 %v4072
    %4122 = vmatprep.subr.mxu0 %v4077
    %4123 = vmatpush1.msra.mxu0 %v4076
    %4124 = vmatprep.subr.mxu0 %v4081
    %4125 = vmatpush1.msra.mxu0 %v4080
    %4126 = vmatprep.subr.mxu0 %v4085
    %4127 = vmatpush1.msra.mxu0 %v4084
    %4128 = vmatprep.subr.mxu0 %v4089
    %4129 = vmatpush1.msra.mxu0 %v4088
    %4130 = vmatprep.subr.mxu0 %v4093
    %4131 = vmatpush1.msra.mxu0 %v4092
    %4132 = vmatprep.subr.mxu0 %v4097
    %4133 = vmatpush1.msra.mxu0 %v4096
    %4134 = vmatprep.subr.mxu0 %v4101
    %4135 = vmatpush1.msra.mxu0 %v4100
    %4136 = vmatprep.subr.mxu0 0.0
    %4137 = vmatpush1.msra.mxu0 0.0
    %4138 = vmatprep.subr.mxu0 0.0
    %4139 = vmatpush1.msra.mxu0 0.0
    %4140 = vmatprep.subr.mxu0 0.0
    %4141 = vmatpush1.msra.mxu0 0.0
    %4142 = vmatprep.subr.mxu0 0.0
    %4143 = vmatpush1.msra.mxu0 0.0
    %4144 = vmatprep.subr.mxu0 0.0
    %4145 = vmatpush1.msra.mxu0 0.0
    %4146 = vmatprep.subr.mxu0 0.0
    %4147 = vmatpush1.msra.mxu0 0.0
    %4148 = vmatprep.subr.mxu0 0.0
    %4149 = vmatpush1.msra.mxu0 0.0
    %4150 = vmatprep.subr.mxu0 0.0
    %4151 = vmatpush1.msra.mxu0 0.0
    %4152 = vmatprep.subr.mxu0 0.0
    %4153 = vmatpush1.msra.mxu0 0.0
    %4154 = vmatprep.subr.mxu0 0.0
    %4155 = vmatpush1.msra.mxu0 0.0
    %4156 = vmatprep.subr.mxu0 0.0
    %4157 = vmatpush1.msra.mxu0 0.0
    %4158 = vmatprep.subr.mxu0 0.0
    %4159 = vmatpush1.msra.mxu0 0.0
    %4160 = vmatprep.subr.mxu0 0.0
    %4161 = vmatpush1.msra.mxu0 0.0
    %4162 = vmatprep.subr.mxu0 0.0
    %4163 = vmatpush1.msra.mxu0 0.0
    %4164 = vmatprep.subr.mxu0 0.0
    %4165 = vmatpush1.msra.mxu0 0.0
    %4166 = vmatprep.subr.mxu0 0.0
    %4167 = vmatpush1.msra.mxu0 0.0
    %4168 = vmatprep.mubr.f32.mxu0 0.0
    %4169 = vmatmul.mubr.f32.gmra.mrb[0].mxu0 %v4039
    %v4170 = vpop.f32.mrb[0].mxu0
    %v4171 = vadd.f32 0.0, %v4170
    %v4172 = vpop.f32.mrb[0].mxu0
    %v4173 = vadd.f32 0.0, %v4172
    %4174 = vdwg.mxu0
    %4175 = vmatprep.subr.mxu0 %v4043
    %4176 = vmatpush1.msra.mxu0 %v4042
    %4177 = vmatprep.subr.mxu0 %v4047
    %4178 = vmatpush1.msra.mxu0 %v4046
    %4179 = vmatprep.subr.mxu0 %v4051
    %4180 = vmatpush1.msra.mxu0 %v4050
    %4181 = vmatprep.subr.mxu0 %v4055
    %4182 = vmatpush1.msra.mxu0 %v4054
    %4183 = vmatprep.subr.mxu0 %v4059
    %4184 = vmatpush1.msra.mxu0 %v4058
    %4185 = vmatprep.subr.mxu0 %v4063
    %4186 = vmatpush1.msra.mxu0 %v4062
    %4187 = vmatprep.subr.mxu0 %v4067
    %4188 = vmatpush1.msra.mxu0 %v4066
    %4189 = vmatprep.subr.mxu0 %v4071
    %4190 = vmatpush1.msra.mxu0 %v4070
    %4191 = vmatprep.subr.mxu0 %v4075
    %4192 = vmatpush1.msra.mxu0 %v4074
    %4193 = vmatprep.subr.mxu0 %v4079
    %4194 = vmatpush1.msra.mxu0 %v4078
    %4195 = vmatprep.subr.mxu0 %v4083
    %4196 = vmatpush1.msra.mxu0 %v4082
    %4197 = vmatprep.subr.mxu0 %v4087
    %4198 = vmatpush1.msra.mxu0 %v4086
    %4199 = vmatprep.subr.mxu0 %v4091
    %4200 = vmatpush1.msra.mxu0 %v4090
    %4201 = vmatprep.subr.mxu0 %v4095
    %4202 = vmatpush1.msra.mxu0 %v4094
    %4203 = vmatprep.subr.mxu0 %v4099
    %4204 = vmatpush1.msra.mxu0 %v4098
    %4205 = vmatprep.subr.mxu0 %v4103
    %4206 = vmatpush1.msra.mxu0 %v4102
    %4207 = vmatprep.subr.mxu0 0.0
    %4208 = vmatpush1.msra.mxu0 0.0
    %4209 = vmatprep.subr.mxu0 0.0
    %4210 = vmatpush1.msra.mxu0 0.0
    %4211 = vmatprep.subr.mxu0 0.0
    %4212 = vmatpush1.msra.mxu0 0.0
    %4213 = vmatprep.subr.mxu0 0.0
    %4214 = vmatpush1.msra.mxu0 0.0
    %4215 = vmatprep.subr.mxu0 0.0
    %4216 = vmatpush1.msra.mxu0 0.0
    %4217 = vmatprep.subr.mxu0 0.0
    %4218 = vmatpush1.msra.mxu0 0.0
    %4219 = vmatprep.subr.mxu0 0.0
    %4220 = vmatpush1.msra.mxu0 0.0
    %4221 = vmatprep.subr.mxu0 0.0
    %4222 = vmatpush1.msra.mxu0 0.0
    %4223 = vmatprep.subr.mxu0 0.0
    %4224 = vmatpush1.msra.mxu0 0.0
    %4225 = vmatprep.subr.mxu0 0.0
    %4226 = vmatpush1.msra.mxu0 0.0
    %4227 = vmatprep.subr.mxu0 0.0
    %4228 = vmatpush1.msra.mxu0 0.0
    %4229 = vmatprep.subr.mxu0 0.0
    %4230 = vmatpush1.msra.mxu0 0.0
    %4231 = vmatprep.subr.mxu0 0.0
    %4232 = vmatpush1.msra.mxu0 0.0
    %4233 = vmatprep.subr.mxu0 0.0
    %4234 = vmatpush1.msra.mxu0 0.0
    %4235 = vmatprep.subr.mxu0 0.0
    %4236 = vmatpush1.msra.mxu0 0.0
    %4237 = vmatprep.subr.mxu0 0.0
    %4238 = vmatpush1.msra.mxu0 0.0
    %4239 = vmatprep.mubr.f32.mxu0 0.0
    %4240 = vmatmul.mubr.f32.gmra.mrb[0].mxu0 %v4039
    %v4241 = vpop.f32.mrb[0].mxu0
    %v4242 = vadd.f32 0.0, %v4241
    %v4243 = vpop.f32.mrb[0].mxu0
    %v4244 = vadd.f32 0.0, %v4243
    %4245 = vdwg.mxu0
    %v4246 = vadd.f32 %v3737, %v4171
    %v4247 = vadd.f32 %v3739, %v4173
    %v4248 = vadd.f32 %v3808, %v4242
    %v4249 = vadd.f32 %v3810, %v4244
    %v4250 = vmul.f32 %v4246, 0.5
    %v4251 = vtanh.pop %v4250
    %v4252 = vmul.f32 %v4251, 0.5
    %v4253 = vadd.f32 %v4252, 0.5
    %v4254 = vmul.f32 %v4247, 0.5
    %v4255 = vtanh.pop %v4254
    %v4256 = vmul.f32 %v4255, 0.5
    %v4257 = vadd.f32 %v4256, 0.5
    %v4258 = vtanh.pop %v4248
    %v4259 = vmul.f32 %v4249, 0.5
    %v4260 = vtanh.pop %v4259
    %v4261 = vmul.f32 %v4260, 0.5
    %v4262 = vadd.f32 %v4261, 0.5
    %v4263 = vmul.f32 %v4257, %v3579
    %v4264 = vmul.f32 %v4253, %v4258
    %v4265 = vadd.f32 %v4263, %v4264
    %v4266 = vtanh.pop %v4265
    %v4267 = vmul.f32 %v4262, %v4266
    %s4268 = scalar_lea.vmem [#allocation2], 32
    %4269 = vst [vmem:[%s4268] sm:$0xff] %v4267
    %v4270 = vld [vmem:[#allocation24] sm:$0xff]
    %v4271 = vld [vmem:[#allocation24 + $0x8] sm:$0xff]
    %v4272 = vld [vmem:[#allocation24 + $0x10] sm:$0xff]
    %v4273 = vld [vmem:[#allocation24 + $0x18] sm:$0xff]
    %v4274 = vld [vmem:[#allocation24 + $0x20] sm:$0xff]
    %v4275 = vld [vmem:[#allocation24 + $0x28] sm:$0xff]
    %v4276 = vld [vmem:[#allocation24 + $0x30] sm:$0xff]
    %v4277 = vld [vmem:[#allocation24 + $0x38] sm:$0xff]
    %v4278 = vld [vmem:[#allocation24 + $0x40] sm:$0xff]
    %v4279 = vld [vmem:[#allocation24 + $0x48] sm:$0xff]
    %v4280 = vld [vmem:[#allocation24 + $0x50] sm:$0xff]
    %v4281 = vld [vmem:[#allocation24 + $0x58] sm:$0xff]
    %v4282 = vld [vmem:[#allocation24 + $0x60] sm:$0xff]
    %v4283 = vld [vmem:[#allocation24 + $0x68] sm:$0xff]
    %v4284 = vld [vmem:[#allocation24 + $0x70] sm:$0xff]
    %v4285 = vld [vmem:[#allocation24 + $0x78] sm:$0xff]
    %v4286 = vld [vmem:[#allocation24 + $0x80] sm:$0xff]
    %v4287 = vld [vmem:[#allocation24 + $0x88] sm:$0xff]
    %v4288 = vld [vmem:[#allocation24 + $0x90] sm:$0xff]
    %v4289 = vld [vmem:[#allocation24 + $0x98] sm:$0xff]
    %v4290 = vld [vmem:[#allocation24 + $0xa0] sm:$0xff]
    %v4291 = vld [vmem:[#allocation24 + $0xa8] sm:$0xff]
    %v4292 = vld [vmem:[#allocation24 + $0xb0] sm:$0xff]
    %v4293 = vld [vmem:[#allocation24 + $0xb8] sm:$0xff]
    %v4294 = vld [vmem:[#allocation24 + $0xc0] sm:$0xff]
    %v4295 = vld [vmem:[#allocation24 + $0xc8] sm:$0xff]
    %v4296 = vld [vmem:[#allocation24 + $0xd0] sm:$0xff]
    %v4297 = vld [vmem:[#allocation24 + $0xd8] sm:$0xff]
    %v4298 = vld [vmem:[#allocation24 + $0xe0] sm:$0xff]
    %v4299 = vld [vmem:[#allocation24 + $0xe8] sm:$0xff]
    %v4300 = vld [vmem:[#allocation24 + $0xf0] sm:$0xff]
    %v4301 = vld [vmem:[#allocation24 + $0xf8] sm:$0xff]
    %v4302 = vld [vmem:[#allocation24 + $0x100] sm:$0xff]
    %v4303 = vld [vmem:[#allocation24 + $0x108] sm:$0xff]
    %v4304 = vld [vmem:[#allocation24 + $0x110] sm:$0xff]
    %v4305 = vld [vmem:[#allocation24 + $0x118] sm:$0xff]
    %v4306 = vld [vmem:[#allocation24 + $0x120] sm:$0xff]
    %v4307 = vld [vmem:[#allocation24 + $0x128] sm:$0xff]
    %v4308 = vld [vmem:[#allocation24 + $0x130] sm:$0xff]
    %v4309 = vld [vmem:[#allocation24 + $0x138] sm:$0xff]
    %v4310 = vld [vmem:[#allocation24 + $0x140] sm:$0xff]
    %v4311 = vld [vmem:[#allocation24 + $0x148] sm:$0xff]
    %v4312 = vld [vmem:[#allocation24 + $0x150] sm:$0xff]
    %v4313 = vld [vmem:[#allocation24 + $0x158] sm:$0xff]
    %v4314 = vld [vmem:[#allocation24 + $0x160] sm:$0xff]
    %v4315 = vld [vmem:[#allocation24 + $0x168] sm:$0xff]
    %v4316 = vld [vmem:[#allocation24 + $0x170] sm:$0xff]
    %v4317 = vld [vmem:[#allocation24 + $0x178] sm:$0xff]
    %v4318 = vld [vmem:[#allocation24 + $0x180] sm:$0xff]
    %v4319 = vld [vmem:[#allocation24 + $0x188] sm:$0xff]
    %v4320 = vld [vmem:[#allocation24 + $0x190] sm:$0xff]
    %v4321 = vld [vmem:[#allocation24 + $0x198] sm:$0xff]
    %v4322 = vld [vmem:[#allocation24 + $0x1a0] sm:$0xff]
    %v4323 = vld [vmem:[#allocation24 + $0x1a8] sm:$0xff]
    %v4324 = vld [vmem:[#allocation24 + $0x1b0] sm:$0xff]
    %v4325 = vld [vmem:[#allocation24 + $0x1b8] sm:$0xff]
    %v4326 = vld [vmem:[#allocation24 + $0x1c0] sm:$0xff]
    %v4327 = vld [vmem:[#allocation24 + $0x1c8] sm:$0xff]
    %v4328 = vld [vmem:[#allocation24 + $0x1d0] sm:$0xff]
    %v4329 = vld [vmem:[#allocation24 + $0x1d8] sm:$0xff]
    %v4330 = vld [vmem:[#allocation24 + $0x1e0] sm:$0xff]
    %v4331 = vld [vmem:[#allocation24 + $0x1e8] sm:$0xff]
    %v4332 = vld [vmem:[#allocation24 + $0x1f0] sm:$0xff]
    %v4333 = vld [vmem:[#allocation24 + $0x1f8] sm:$0xff]
    %v4334 = vld [vmem:[#allocation26] sm:$0xf]
    %v4336 = vlaneseq
    %v4337 = vshrl.u32 %v4336, 7
    %v4338 = vsub.s32 0, %v4337
    %v4339 = vrot.slane %v4334, %v4338
    %v4340 = vlaneseq
    %v4341 = vshrl.u32 %v4340, 7
    %v4342 = vsub.s32 1, %v4341
    %v4343 = vrot.slane %v4334, %v4342
    %v4344 = vlaneseq
    %v4345 = vshrl.u32 %v4344, 7
    %v4346 = vsub.s32 2, %v4345
    %v4347 = vrot.slane %v4334, %v4346
    %v4348 = vlaneseq
    %v4349 = vshrl.u32 %v4348, 7
    %v4350 = vsub.s32 3, %v4349
    %v4351 = vrot.slane %v4334, %v4350
    %4356 = vmatprep.subr.mxu0 %v4271
    %4357 = vmatpush1.msra.mxu0 %v4270
    %4358 = vmatprep.subr.mxu0 %v4275
    %4359 = vmatpush1.msra.mxu0 %v4274
    %4360 = vmatprep.subr.mxu0 %v4279
    %4361 = vmatpush1.msra.mxu0 %v4278
    %4362 = vmatprep.subr.mxu0 %v4283
    %4363 = vmatpush1.msra.mxu0 %v4282
    %4364 = vmatprep.subr.mxu0 %v4287
    %4365 = vmatpush1.msra.mxu0 %v4286
    %4366 = vmatprep.subr.mxu0 %v4291
    %4367 = vmatpush1.msra.mxu0 %v4290
    %4368 = vmatprep.subr.mxu0 %v4295
    %4369 = vmatpush1.msra.mxu0 %v4294
    %4370 = vmatprep.subr.mxu0 %v4299
    %4371 = vmatpush1.msra.mxu0 %v4298
    %4372 = vmatprep.subr.mxu0 %v4303
    %4373 = vmatpush1.msra.mxu0 %v4302
    %4374 = vmatprep.subr.mxu0 %v4307
    %4375 = vmatpush1.msra.mxu0 %v4306
    %4376 = vmatprep.subr.mxu0 %v4311
    %4377 = vmatpush1.msra.mxu0 %v4310
    %4378 = vmatprep.subr.mxu0 %v4315
    %4379 = vmatpush1.msra.mxu0 %v4314
    %4380 = vmatprep.subr.mxu0 %v4319
    %4381 = vmatpush1.msra.mxu0 %v4318
    %4382 = vmatprep.subr.mxu0 %v4323
    %4383 = vmatpush1.msra.mxu0 %v4322
    %4384 = vmatprep.subr.mxu0 %v4327
    %4385 = vmatpush1.msra.mxu0 %v4326
    %4386 = vmatprep.subr.mxu0 %v4331
    %4387 = vmatpush1.msra.mxu0 %v4330
    %4388 = vmatprep.subr.mxu0 0.0
    %4389 = vmatpush1.msra.mxu0 0.0
    %4390 = vmatprep.subr.mxu0 0.0
    %4391 = vmatpush1.msra.mxu0 0.0
    %4392 = vmatprep.subr.mxu0 0.0
    %4393 = vmatpush1.msra.mxu0 0.0
    %4394 = vmatprep.subr.mxu0 0.0
    %4395 = vmatpush1.msra.mxu0 0.0
    %4396 = vmatprep.subr.mxu0 0.0
    %4397 = vmatpush1.msra.mxu0 0.0
    %4398 = vmatprep.subr.mxu0 0.0
    %4399 = vmatpush1.msra.mxu0 0.0
    %4400 = vmatprep.subr.mxu0 0.0
    %4401 = vmatpush1.msra.mxu0 0.0
    %4402 = vmatprep.subr.mxu0 0.0
    %4403 = vmatpush1.msra.mxu0 0.0
    %4404 = vmatprep.subr.mxu0 0.0
    %4405 = vmatpush1.msra.mxu0 0.0
    %4406 = vmatprep.subr.mxu0 0.0
    %4407 = vmatpush1.msra.mxu0 0.0
    %4408 = vmatprep.subr.mxu0 0.0
    %4409 = vmatpush1.msra.mxu0 0.0
    %4410 = vmatprep.subr.mxu0 0.0
    %4411 = vmatpush1.msra.mxu0 0.0
    %4412 = vmatprep.subr.mxu0 0.0
    %4413 = vmatpush1.msra.mxu0 0.0
    %4414 = vmatprep.subr.mxu0 0.0
    %4415 = vmatpush1.msra.mxu0 0.0
    %4416 = vmatprep.subr.mxu0 0.0
    %4417 = vmatpush1.msra.mxu0 0.0
    %4418 = vmatprep.subr.mxu0 0.0
    %4419 = vmatpush1.msra.mxu0 0.0
    %4420 = vmatprep.mubr.f32.mxu0 0.0
    %4421 = vmatmul.mubr.f32.gmra.mrb[0].mxu0 %v4267
    %v4422 = vpop.f32.mrb[0].mxu0
    %v4423 = vadd.f32 %v4339, %v4422
    %v4424 = vpop.f32.mrb[0].mxu0
    %v4425 = vadd.f32 %v4343, %v4424
    %4426 = vdwg.mxu0
    %4427 = vmatprep.subr.mxu0 %v4273
    %4428 = vmatpush1.msra.mxu0 %v4272
    %4429 = vmatprep.subr.mxu0 %v4277
    %4430 = vmatpush1.msra.mxu0 %v4276
    %4431 = vmatprep.subr.mxu0 %v4281
    %4432 = vmatpush1.msra.mxu0 %v4280
    %4433 = vmatprep.subr.mxu0 %v4285
    %4434 = vmatpush1.msra.mxu0 %v4284
    %4435 = vmatprep.subr.mxu0 %v4289
    %4436 = vmatpush1.msra.mxu0 %v4288
    %4437 = vmatprep.subr.mxu0 %v4293
    %4438 = vmatpush1.msra.mxu0 %v4292
    %4439 = vmatprep.subr.mxu0 %v4297
    %4440 = vmatpush1.msra.mxu0 %v4296
    %4441 = vmatprep.subr.mxu0 %v4301
    %4442 = vmatpush1.msra.mxu0 %v4300
    %4443 = vmatprep.subr.mxu0 %v4305
    %4444 = vmatpush1.msra.mxu0 %v4304
    %4445 = vmatprep.subr.mxu0 %v4309
    %4446 = vmatpush1.msra.mxu0 %v4308
    %4447 = vmatprep.subr.mxu0 %v4313
    %4448 = vmatpush1.msra.mxu0 %v4312
    %4449 = vmatprep.subr.mxu0 %v4317
    %4450 = vmatpush1.msra.mxu0 %v4316
    %4451 = vmatprep.subr.mxu0 %v4321
    %4452 = vmatpush1.msra.mxu0 %v4320
    %4453 = vmatprep.subr.mxu0 %v4325
    %4454 = vmatpush1.msra.mxu0 %v4324
    %4455 = vmatprep.subr.mxu0 %v4329
    %4456 = vmatpush1.msra.mxu0 %v4328
    %4457 = vmatprep.subr.mxu0 %v4333
    %4458 = vmatpush1.msra.mxu0 %v4332
    %4459 = vmatprep.subr.mxu0 0.0
    %4460 = vmatpush1.msra.mxu0 0.0
    %4461 = vmatprep.subr.mxu0 0.0
    %4462 = vmatpush1.msra.mxu0 0.0
    %4463 = vmatprep.subr.mxu0 0.0
    %4464 = vmatpush1.msra.mxu0 0.0
    %4465 = vmatprep.subr.mxu0 0.0
    %4466 = vmatpush1.msra.mxu0 0.0
    %4467 = vmatprep.subr.mxu0 0.0
    %4468 = vmatpush1.msra.mxu0 0.0
    %4469 = vmatprep.subr.mxu0 0.0
    %4470 = vmatpush1.msra.mxu0 0.0
    %4471 = vmatprep.subr.mxu0 0.0
    %4472 = vmatpush1.msra.mxu0 0.0
    %4473 = vmatprep.subr.mxu0 0.0
    %4474 = vmatpush1.msra.mxu0 0.0
    %4475 = vmatprep.subr.mxu0 0.0
    %4476 = vmatpush1.msra.mxu0 0.0
    %4477 = vmatprep.subr.mxu0 0.0
    %4478 = vmatpush1.msra.mxu0 0.0
    %4479 = vmatprep.subr.mxu0 0.0
    %4480 = vmatpush1.msra.mxu0 0.0
    %4481 = vmatprep.subr.mxu0 0.0
    %4482 = vmatpush1.msra.mxu0 0.0
    %4483 = vmatprep.subr.mxu0 0.0
    %4484 = vmatpush1.msra.mxu0 0.0
    %4485 = vmatprep.subr.mxu0 0.0
    %4486 = vmatpush1.msra.mxu0 0.0
    %4487 = vmatprep.subr.mxu0 0.0
    %4488 = vmatpush1.msra.mxu0 0.0
    %4489 = vmatprep.subr.mxu0 0.0
    %4490 = vmatpush1.msra.mxu0 0.0
    %4491 = vmatprep.mubr.f32.mxu0 0.0
    %4492 = vmatmul.mubr.f32.gmra.mrb[0].mxu0 %v4267
    %v4493 = vpop.f32.mrb[0].mxu0
    %v4494 = vadd.f32 %v4347, %v4493
    %v4495 = vpop.f32.mrb[0].mxu0
    %v4496 = vadd.f32 %v4351, %v4495
    %4497 = vdwg.mxu0
    %v4498 = vld [vmem:[#allocation20] sm:$0xff]
    %v4499 = vld [vmem:[#allocation20 + $0x8] sm:$0xff]
    %v4500 = vld [vmem:[#allocation20 + $0x10] sm:$0xff]
    %v4501 = vld [vmem:[#allocation20 + $0x18] sm:$0xff]
    %v4502 = vld [vmem:[#allocation20 + $0x20] sm:$0xff]
    %v4503 = vld [vmem:[#allocation20 + $0x28] sm:$0xff]
    %v4504 = vld [vmem:[#allocation20 + $0x30] sm:$0xff]
    %v4505 = vld [vmem:[#allocation20 + $0x38] sm:$0xff]
    %v4506 = vld [vmem:[#allocation20 + $0x40] sm:$0xff]
    %v4507 = vld [vmem:[#allocation20 + $0x48] sm:$0xff]
    %v4508 = vld [vmem:[#allocation20 + $0x50] sm:$0xff]
    %v4509 = vld [vmem:[#allocation20 + $0x58] sm:$0xff]
    %v4510 = vld [vmem:[#allocation20 + $0x60] sm:$0xff]
    %v4511 = vld [vmem:[#allocation20 + $0x68] sm:$0xff]
    %v4512 = vld [vmem:[#allocation20 + $0x70] sm:$0xff]
    %v4513 = vld [vmem:[#allocation20 + $0x78] sm:$0xff]
    %v4514 = vld [vmem:[#allocation20 + $0x80] sm:$0xff]
    %v4515 = vld [vmem:[#allocation20 + $0x88] sm:$0xff]
    %v4516 = vld [vmem:[#allocation20 + $0x90] sm:$0xff]
    %v4517 = vld [vmem:[#allocation20 + $0x98] sm:$0xff]
    %v4518 = vld [vmem:[#allocation20 + $0xa0] sm:$0xff]
    %v4519 = vld [vmem:[#allocation20 + $0xa8] sm:$0xff]
    %v4520 = vld [vmem:[#allocation20 + $0xb0] sm:$0xff]
    %v4521 = vld [vmem:[#allocation20 + $0xb8] sm:$0xff]
    %v4522 = vld [vmem:[#allocation20 + $0xc0] sm:$0xff]
    %v4523 = vld [vmem:[#allocation20 + $0xc8] sm:$0xff]
    %v4524 = vld [vmem:[#allocation20 + $0xd0] sm:$0xff]
    %v4525 = vld [vmem:[#allocation20 + $0xd8] sm:$0xff]
    %v4526 = vld [vmem:[#allocation20 + $0xe0] sm:$0xff]
    %v4527 = vld [vmem:[#allocation20 + $0xe8] sm:$0xff]
    %v4528 = vld [vmem:[#allocation20 + $0xf0] sm:$0xff]
    %v4529 = vld [vmem:[#allocation20 + $0xf8] sm:$0xff]
    %v4530 = vld [vmem:[#allocation20 + $0x100] sm:$0xff]
    %v4531 = vld [vmem:[#allocation20 + $0x108] sm:$0xff]
    %v4532 = vld [vmem:[#allocation20 + $0x110] sm:$0xff]
    %v4533 = vld [vmem:[#allocation20 + $0x118] sm:$0xff]
    %v4534 = vld [vmem:[#allocation20 + $0x120] sm:$0xff]
    %v4535 = vld [vmem:[#allocation20 + $0x128] sm:$0xff]
    %v4536 = vld [vmem:[#allocation20 + $0x130] sm:$0xff]
    %v4537 = vld [vmem:[#allocation20 + $0x138] sm:$0xff]
    %v4538 = vld [vmem:[#allocation20 + $0x140] sm:$0xff]
    %v4539 = vld [vmem:[#allocation20 + $0x148] sm:$0xff]
    %v4540 = vld [vmem:[#allocation20 + $0x150] sm:$0xff]
    %v4541 = vld [vmem:[#allocation20 + $0x158] sm:$0xff]
    %v4542 = vld [vmem:[#allocation20 + $0x160] sm:$0xff]
    %v4543 = vld [vmem:[#allocation20 + $0x168] sm:$0xff]
    %v4544 = vld [vmem:[#allocation20 + $0x170] sm:$0xff]
    %v4545 = vld [vmem:[#allocation20 + $0x178] sm:$0xff]
    %v4546 = vld [vmem:[#allocation20 + $0x180] sm:$0xff]
    %v4547 = vld [vmem:[#allocation20 + $0x188] sm:$0xff]
    %v4548 = vld [vmem:[#allocation20 + $0x190] sm:$0xff]
    %v4549 = vld [vmem:[#allocation20 + $0x198] sm:$0xff]
    %v4550 = vld [vmem:[#allocation20 + $0x1a0] sm:$0xff]
    %v4551 = vld [vmem:[#allocation20 + $0x1a8] sm:$0xff]
    %v4552 = vld [vmem:[#allocation20 + $0x1b0] sm:$0xff]
    %v4553 = vld [vmem:[#allocation20 + $0x1b8] sm:$0xff]
    %v4554 = vld [vmem:[#allocation20 + $0x1c0] sm:$0xff]
    %v4555 = vld [vmem:[#allocation20 + $0x1c8] sm:$0xff]
    %v4556 = vld [vmem:[#allocation20 + $0x1d0] sm:$0xff]
    %v4557 = vld [vmem:[#allocation20 + $0x1d8] sm:$0xff]
    %v4558 = vld [vmem:[#allocation20 + $0x1e0] sm:$0xff]
    %v4559 = vld [vmem:[#allocation20 + $0x1e8] sm:$0xff]
    %v4560 = vld [vmem:[#allocation20 + $0x1f0] sm:$0xff]
    %v4561 = vld [vmem:[#allocation20 + $0x1f8] sm:$0xff]
    %4562 = vmatprep.subr.mxu0 %v4499
    %4563 = vmatpush1.msra.mxu0 %v4498
    %4564 = vmatprep.subr.mxu0 %v4503
    %4565 = vmatpush1.msra.mxu0 %v4502
    %4566 = vmatprep.subr.mxu0 %v4507
    %4567 = vmatpush1.msra.mxu0 %v4506
    %4568 = vmatprep.subr.mxu0 %v4511
    %4569 = vmatpush1.msra.mxu0 %v4510
    %4570 = vmatprep.subr.mxu0 %v4515
    %4571 = vmatpush1.msra.mxu0 %v4514
    %4572 = vmatprep.subr.mxu0 %v4519
    %4573 = vmatpush1.msra.mxu0 %v4518
    %4574 = vmatprep.subr.mxu0 %v4523
    %4575 = vmatpush1.msra.mxu0 %v4522
    %4576 = vmatprep.subr.mxu0 %v4527
    %4577 = vmatpush1.msra.mxu0 %v4526
    %4578 = vmatprep.subr.mxu0 %v4531
    %4579 = vmatpush1.msra.mxu0 %v4530
    %4580 = vmatprep.subr.mxu0 %v4535
    %4581 = vmatpush1.msra.mxu0 %v4534
    %4582 = vmatprep.subr.mxu0 %v4539
    %4583 = vmatpush1.msra.mxu0 %v4538
    %4584 = vmatprep.subr.mxu0 %v4543
    %4585 = vmatpush1.msra.mxu0 %v4542
    %4586 = vmatprep.subr.mxu0 %v4547
    %4587 = vmatpush1.msra.mxu0 %v4546
    %4588 = vmatprep.subr.mxu0 %v4551
    %4589 = vmatpush1.msra.mxu0 %v4550
    %4590 = vmatprep.subr.mxu0 %v4555
    %4591 = vmatpush1.msra.mxu0 %v4554
    %4592 = vmatprep.subr.mxu0 %v4559
    %4593 = vmatpush1.msra.mxu0 %v4558
    %4594 = vmatprep.subr.mxu0 0.0
    %4595 = vmatpush1.msra.mxu0 0.0
    %4596 = vmatprep.subr.mxu0 0.0
    %4597 = vmatpush1.msra.mxu0 0.0
    %4598 = vmatprep.subr.mxu0 0.0
    %4599 = vmatpush1.msra.mxu0 0.0
    %4600 = vmatprep.subr.mxu0 0.0
    %4601 = vmatpush1.msra.mxu0 0.0
    %4602 = vmatprep.subr.mxu0 0.0
    %4603 = vmatpush1.msra.mxu0 0.0
    %4604 = vmatprep.subr.mxu0 0.0
    %4605 = vmatpush1.msra.mxu0 0.0
    %4606 = vmatprep.subr.mxu0 0.0
    %4607 = vmatpush1.msra.mxu0 0.0
    %4608 = vmatprep.subr.mxu0 0.0
    %4609 = vmatpush1.msra.mxu0 0.0
    %4610 = vmatprep.subr.mxu0 0.0
    %4611 = vmatpush1.msra.mxu0 0.0
    %4612 = vmatprep.subr.mxu0 0.0
    %4613 = vmatpush1.msra.mxu0 0.0
    %4614 = vmatprep.subr.mxu0 0.0
    %4615 = vmatpush1.msra.mxu0 0.0
    %4616 = vmatprep.subr.mxu0 0.0
    %4617 = vmatpush1.msra.mxu0 0.0
    %4618 = vmatprep.subr.mxu0 0.0
    %4619 = vmatpush1.msra.mxu0 0.0
    %4620 = vmatprep.subr.mxu0 0.0
    %4621 = vmatpush1.msra.mxu0 0.0
    %4622 = vmatprep.subr.mxu0 0.0
    %4623 = vmatpush1.msra.mxu0 0.0
    %4624 = vmatprep.subr.mxu0 0.0
    %4625 = vmatpush1.msra.mxu0 0.0
    %4626 = vmatprep.mubr.f32.mxu0 0.0
    %4627 = vmatmul.mubr.f32.gmra.mrb[0].mxu0 %v4039
    %v4628 = vpop.f32.mrb[0].mxu0
    %v4629 = vadd.f32 0.0, %v4628
    %v4630 = vpop.f32.mrb[0].mxu0
    %v4631 = vadd.f32 0.0, %v4630
    %4632 = vdwg.mxu0
    %4633 = vmatprep.subr.mxu0 %v4501
    %4634 = vmatpush1.msra.mxu0 %v4500
    %4635 = vmatprep.subr.mxu0 %v4505
    %4636 = vmatpush1.msra.mxu0 %v4504
    %4637 = vmatprep.subr.mxu0 %v4509
    %4638 = vmatpush1.msra.mxu0 %v4508
    %4639 = vmatprep.subr.mxu0 %v4513
    %4640 = vmatpush1.msra.mxu0 %v4512
    %4641 = vmatprep.subr.mxu0 %v4517
    %4642 = vmatpush1.msra.mxu0 %v4516
    %4643 = vmatprep.subr.mxu0 %v4521
    %4644 = vmatpush1.msra.mxu0 %v4520
    %4645 = vmatprep.subr.mxu0 %v4525
    %4646 = vmatpush1.msra.mxu0 %v4524
    %4647 = vmatprep.subr.mxu0 %v4529
    %4648 = vmatpush1.msra.mxu0 %v4528
    %4649 = vmatprep.subr.mxu0 %v4533
    %4650 = vmatpush1.msra.mxu0 %v4532
    %4651 = vmatprep.subr.mxu0 %v4537
    %4652 = vmatpush1.msra.mxu0 %v4536
    %4653 = vmatprep.subr.mxu0 %v4541
    %4654 = vmatpush1.msra.mxu0 %v4540
    %4655 = vmatprep.subr.mxu0 %v4545
    %4656 = vmatpush1.msra.mxu0 %v4544
    %4657 = vmatprep.subr.mxu0 %v4549
    %4658 = vmatpush1.msra.mxu0 %v4548
    %4659 = vmatprep.subr.mxu0 %v4553
    %4660 = vmatpush1.msra.mxu0 %v4552
    %4661 = vmatprep.subr.mxu0 %v4557
    %4662 = vmatpush1.msra.mxu0 %v4556
    %4663 = vmatprep.subr.mxu0 %v4561
    %4664 = vmatpush1.msra.mxu0 %v4560
    %4665 = vmatprep.subr.mxu0 0.0
    %4666 = vmatpush1.msra.mxu0 0.0
    %4667 = vmatprep.subr.mxu0 0.0
    %4668 = vmatpush1.msra.mxu0 0.0
    %4669 = vmatprep.subr.mxu0 0.0
    %4670 = vmatpush1.msra.mxu0 0.0
    %4671 = vmatprep.subr.mxu0 0.0
    %4672 = vmatpush1.msra.mxu0 0.0
    %4673 = vmatprep.subr.mxu0 0.0
    %4674 = vmatpush1.msra.mxu0 0.0
    %4675 = vmatprep.subr.mxu0 0.0
    %4676 = vmatpush1.msra.mxu0 0.0
    %4677 = vmatprep.subr.mxu0 0.0
    %4678 = vmatpush1.msra.mxu0 0.0
    %4679 = vmatprep.subr.mxu0 0.0
    %4680 = vmatpush1.msra.mxu0 0.0
    %4681 = vmatprep.subr.mxu0 0.0
    %4682 = vmatpush1.msra.mxu0 0.0
    %4683 = vmatprep.subr.mxu0 0.0
    %4684 = vmatpush1.msra.mxu0 0.0
    %4685 = vmatprep.subr.mxu0 0.0
    %4686 = vmatpush1.msra.mxu0 0.0
    %4687 = vmatprep.subr.mxu0 0.0
    %4688 = vmatpush1.msra.mxu0 0.0
    %4689 = vmatprep.subr.mxu0 0.0
    %4690 = vmatpush1.msra.mxu0 0.0
    %4691 = vmatprep.subr.mxu0 0.0
    %4692 = vmatpush1.msra.mxu0 0.0
    %4693 = vmatprep.subr.mxu0 0.0
    %4694 = vmatpush1.msra.mxu0 0.0
    %4695 = vmatprep.subr.mxu0 0.0
    %4696 = vmatpush1.msra.mxu0 0.0
    %4697 = vmatprep.mubr.f32.mxu0 0.0
    %4698 = vmatmul.mubr.f32.gmra.mrb[0].mxu0 %v4039
    %v4699 = vpop.f32.mrb[0].mxu0
    %v4700 = vadd.f32 0.0, %v4699
    %v4701 = vpop.f32.mrb[0].mxu0
    %v4702 = vadd.f32 0.0, %v4701
    %4703 = vdwg.mxu0
    %v4704 = vadd.f32 %v766, %v4629
    %v4705 = vadd.f32 %v768, %v4631
    %v4706 = vadd.f32 %v837, %v4700
    %v4707 = vadd.f32 %v839, %v4702
    %v4708 = vmul.f32 %v4704, 0.5
    %v4709 = vtanh.pop %v4708
    %v4710 = vmul.f32 %v4709, 0.5
    %v4711 = vadd.f32 %v4710, 0.5
    %v4712 = vmul.f32 %v4705, 0.5
    %v4713 = vtanh.pop %v4712
    %v4714 = vmul.f32 %v4713, 0.5
    %v4715 = vadd.f32 %v4714, 0.5
    %v4716 = vtanh.pop %v4706
    %v4717 = vmul.f32 %v4707, 0.5
    %v4718 = vtanh.pop %v4717
    %v4719 = vmul.f32 %v4718, 0.5
    %v4720 = vadd.f32 %v4719, 0.5
    %v4721 = vmul.f32 %v4715, %v4037
    %v4722 = vmul.f32 %v4711, %v4716
    %v4723 = vadd.f32 %v4721, %v4722
    %v4724 = vtanh.pop %v4723
    %v4725 = vmul.f32 %v4720, %v4724
    %v4726 = vld [vmem:[#allocation23] sm:$0xff]
    %v4727 = vld [vmem:[#allocation23 + $0x8] sm:$0xff]
    %v4728 = vld [vmem:[#allocation23 + $0x10] sm:$0xff]
    %v4729 = vld [vmem:[#allocation23 + $0x18] sm:$0xff]
    %v4730 = vld [vmem:[#allocation23 + $0x20] sm:$0xff]
    %v4731 = vld [vmem:[#allocation23 + $0x28] sm:$0xff]
    %v4732 = vld [vmem:[#allocation23 + $0x30] sm:$0xff]
    %v4733 = vld [vmem:[#allocation23 + $0x38] sm:$0xff]
    %v4734 = vld [vmem:[#allocation23 + $0x40] sm:$0xff]
    %v4735 = vld [vmem:[#allocation23 + $0x48] sm:$0xff]
    %v4736 = vld [vmem:[#allocation23 + $0x50] sm:$0xff]
    %v4737 = vld [vmem:[#allocation23 + $0x58] sm:$0xff]
    %v4738 = vld [vmem:[#allocation23 + $0x60] sm:$0xff]
    %v4739 = vld [vmem:[#allocation23 + $0x68] sm:$0xff]
    %v4740 = vld [vmem:[#allocation23 + $0x70] sm:$0xff]
    %v4741 = vld [vmem:[#allocation23 + $0x78] sm:$0xff]
    %v4742 = vld [vmem:[#allocation23 + $0x80] sm:$0xff]
    %v4743 = vld [vmem:[#allocation23 + $0x88] sm:$0xff]
    %v4744 = vld [vmem:[#allocation23 + $0x90] sm:$0xff]
    %v4745 = vld [vmem:[#allocation23 + $0x98] sm:$0xff]
    %v4746 = vld [vmem:[#allocation23 + $0xa0] sm:$0xff]
    %v4747 = vld [vmem:[#allocation23 + $0xa8] sm:$0xff]
    %v4748 = vld [vmem:[#allocation23 + $0xb0] sm:$0xff]
    %v4749 = vld [vmem:[#allocation23 + $0xb8] sm:$0xff]
    %v4750 = vld [vmem:[#allocation23 + $0xc0] sm:$0xff]
    %v4751 = vld [vmem:[#allocation23 + $0xc8] sm:$0xff]
    %v4752 = vld [vmem:[#allocation23 + $0xd0] sm:$0xff]
    %v4753 = vld [vmem:[#allocation23 + $0xd8] sm:$0xff]
    %v4754 = vld [vmem:[#allocation23 + $0xe0] sm:$0xff]
    %v4755 = vld [vmem:[#allocation23 + $0xe8] sm:$0xff]
    %v4756 = vld [vmem:[#allocation23 + $0xf0] sm:$0xff]
    %v4757 = vld [vmem:[#allocation23 + $0xf8] sm:$0xff]
    %v4758 = vld [vmem:[#allocation23 + $0x100] sm:$0xff]
    %v4759 = vld [vmem:[#allocation23 + $0x108] sm:$0xff]
    %v4760 = vld [vmem:[#allocation23 + $0x110] sm:$0xff]
    %v4761 = vld [vmem:[#allocation23 + $0x118] sm:$0xff]
    %v4762 = vld [vmem:[#allocation23 + $0x120] sm:$0xff]
    %v4763 = vld [vmem:[#allocation23 + $0x128] sm:$0xff]
    %v4764 = vld [vmem:[#allocation23 + $0x130] sm:$0xff]
    %v4765 = vld [vmem:[#allocation23 + $0x138] sm:$0xff]
    %v4766 = vld [vmem:[#allocation23 + $0x140] sm:$0xff]
    %v4767 = vld [vmem:[#allocation23 + $0x148] sm:$0xff]
    %v4768 = vld [vmem:[#allocation23 + $0x150] sm:$0xff]
    %v4769 = vld [vmem:[#allocation23 + $0x158] sm:$0xff]
    %v4770 = vld [vmem:[#allocation23 + $0x160] sm:$0xff]
    %v4771 = vld [vmem:[#allocation23 + $0x168] sm:$0xff]
    %v4772 = vld [vmem:[#allocation23 + $0x170] sm:$0xff]
    %v4773 = vld [vmem:[#allocation23 + $0x178] sm:$0xff]
    %v4774 = vld [vmem:[#allocation23 + $0x180] sm:$0xff]
    %v4775 = vld [vmem:[#allocation23 + $0x188] sm:$0xff]
    %v4776 = vld [vmem:[#allocation23 + $0x190] sm:$0xff]
    %v4777 = vld [vmem:[#allocation23 + $0x198] sm:$0xff]
    %v4778 = vld [vmem:[#allocation23 + $0x1a0] sm:$0xff]
    %v4779 = vld [vmem:[#allocation23 + $0x1a8] sm:$0xff]
    %v4780 = vld [vmem:[#allocation23 + $0x1b0] sm:$0xff]
    %v4781 = vld [vmem:[#allocation23 + $0x1b8] sm:$0xff]
    %v4782 = vld [vmem:[#allocation23 + $0x1c0] sm:$0xff]
    %v4783 = vld [vmem:[#allocation23 + $0x1c8] sm:$0xff]
    %v4784 = vld [vmem:[#allocation23 + $0x1d0] sm:$0xff]
    %v4785 = vld [vmem:[#allocation23 + $0x1d8] sm:$0xff]
    %v4786 = vld [vmem:[#allocation23 + $0x1e0] sm:$0xff]
    %v4787 = vld [vmem:[#allocation23 + $0x1e8] sm:$0xff]
    %v4788 = vld [vmem:[#allocation23 + $0x1f0] sm:$0xff]
    %v4789 = vld [vmem:[#allocation23 + $0x1f8] sm:$0xff]
    %4790 = vmatprep.subr.mxu0 %v4727
    %4791 = vmatpush1.msra.mxu0 %v4726
    %4792 = vmatprep.subr.mxu0 %v4731
    %4793 = vmatpush1.msra.mxu0 %v4730
    %4794 = vmatprep.subr.mxu0 %v4735
    %4795 = vmatpush1.msra.mxu0 %v4734
    %4796 = vmatprep.subr.mxu0 %v4739
    %4797 = vmatpush1.msra.mxu0 %v4738
    %4798 = vmatprep.subr.mxu0 %v4743
    %4799 = vmatpush1.msra.mxu0 %v4742
    %4800 = vmatprep.subr.mxu0 %v4747
    %4801 = vmatpush1.msra.mxu0 %v4746
    %4802 = vmatprep.subr.mxu0 %v4751
    %4803 = vmatpush1.msra.mxu0 %v4750
    %4804 = vmatprep.subr.mxu0 %v4755
    %4805 = vmatpush1.msra.mxu0 %v4754
    %4806 = vmatprep.subr.mxu0 %v4759
    %4807 = vmatpush1.msra.mxu0 %v4758
    %4808 = vmatprep.subr.mxu0 %v4763
    %4809 = vmatpush1.msra.mxu0 %v4762
    %4810 = vmatprep.subr.mxu0 %v4767
    %4811 = vmatpush1.msra.mxu0 %v4766
    %4812 = vmatprep.subr.mxu0 %v4771
    %4813 = vmatpush1.msra.mxu0 %v4770
    %4814 = vmatprep.subr.mxu0 %v4775
    %4815 = vmatpush1.msra.mxu0 %v4774
    %4816 = vmatprep.subr.mxu0 %v4779
    %4817 = vmatpush1.msra.mxu0 %v4778
    %4818 = vmatprep.subr.mxu0 %v4783
    %4819 = vmatpush1.msra.mxu0 %v4782
    %4820 = vmatprep.subr.mxu0 %v4787
    %4821 = vmatpush1.msra.mxu0 %v4786
    %4822 = vmatprep.subr.mxu0 0.0
    %4823 = vmatpush1.msra.mxu0 0.0
    %4824 = vmatprep.subr.mxu0 0.0
    %4825 = vmatpush1.msra.mxu0 0.0
    %4826 = vmatprep.subr.mxu0 0.0
    %4827 = vmatpush1.msra.mxu0 0.0
    %4828 = vmatprep.subr.mxu0 0.0
    %4829 = vmatpush1.msra.mxu0 0.0
    %4830 = vmatprep.subr.mxu0 0.0
    %4831 = vmatpush1.msra.mxu0 0.0
    %4832 = vmatprep.subr.mxu0 0.0
    %4833 = vmatpush1.msra.mxu0 0.0
    %4834 = vmatprep.subr.mxu0 0.0
    %4835 = vmatpush1.msra.mxu0 0.0
    %4836 = vmatprep.subr.mxu0 0.0
    %4837 = vmatpush1.msra.mxu0 0.0
    %4838 = vmatprep.subr.mxu0 0.0
    %4839 = vmatpush1.msra.mxu0 0.0
    %4840 = vmatprep.subr.mxu0 0.0
    %4841 = vmatpush1.msra.mxu0 0.0
    %4842 = vmatprep.subr.mxu0 0.0
    %4843 = vmatpush1.msra.mxu0 0.0
    %4844 = vmatprep.subr.mxu0 0.0
    %4845 = vmatpush1.msra.mxu0 0.0
    %4846 = vmatprep.subr.mxu0 0.0
    %4847 = vmatpush1.msra.mxu0 0.0
    %4848 = vmatprep.subr.mxu0 0.0
    %4849 = vmatpush1.msra.mxu0 0.0
    %4850 = vmatprep.subr.mxu0 0.0
    %4851 = vmatpush1.msra.mxu0 0.0
    %4852 = vmatprep.subr.mxu0 0.0
    %4853 = vmatpush1.msra.mxu0 0.0
    %4854 = vmatprep.mubr.f32.mxu0 0.0
    %4855 = vmatmul.mubr.f32.gmra.mrb[0].mxu0 %v4725
    %v4856 = vpop.f32.mrb[0].mxu0
    %v4857 = vadd.f32 0.0, %v4856
    %v4858 = vpop.f32.mrb[0].mxu0
    %v4859 = vadd.f32 0.0, %v4858
    %4860 = vdwg.mxu0
    %4861 = vmatprep.subr.mxu0 %v4729
    %4862 = vmatpush1.msra.mxu0 %v4728
    %4863 = vmatprep.subr.mxu0 %v4733
    %4864 = vmatpush1.msra.mxu0 %v4732
    %4865 = vmatprep.subr.mxu0 %v4737
    %4866 = vmatpush1.msra.mxu0 %v4736
    %4867 = vmatprep.subr.mxu0 %v4741
    %4868 = vmatpush1.msra.mxu0 %v4740
    %4869 = vmatprep.subr.mxu0 %v4745
    %4870 = vmatpush1.msra.mxu0 %v4744
    %4871 = vmatprep.subr.mxu0 %v4749
    %4872 = vmatpush1.msra.mxu0 %v4748
    %4873 = vmatprep.subr.mxu0 %v4753
    %4874 = vmatpush1.msra.mxu0 %v4752
    %4875 = vmatprep.subr.mxu0 %v4757
    %4876 = vmatpush1.msra.mxu0 %v4756
    %4877 = vmatprep.subr.mxu0 %v4761
    %4878 = vmatpush1.msra.mxu0 %v4760
    %4879 = vmatprep.subr.mxu0 %v4765
    %4880 = vmatpush1.msra.mxu0 %v4764
    %4881 = vmatprep.subr.mxu0 %v4769
    %4882 = vmatpush1.msra.mxu0 %v4768
    %4883 = vmatprep.subr.mxu0 %v4773
    %4884 = vmatpush1.msra.mxu0 %v4772
    %4885 = vmatprep.subr.mxu0 %v4777
    %4886 = vmatpush1.msra.mxu0 %v4776
    %4887 = vmatprep.subr.mxu0 %v4781
    %4888 = vmatpush1.msra.mxu0 %v4780
    %4889 = vmatprep.subr.mxu0 %v4785
    %4890 = vmatpush1.msra.mxu0 %v4784
    %4891 = vmatprep.subr.mxu0 %v4789
    %4892 = vmatpush1.msra.mxu0 %v4788
    %4893 = vmatprep.subr.mxu0 0.0
    %4894 = vmatpush1.msra.mxu0 0.0
    %4895 = vmatprep.subr.mxu0 0.0
    %4896 = vmatpush1.msra.mxu0 0.0
    %4897 = vmatprep.subr.mxu0 0.0
    %4898 = vmatpush1.msra.mxu0 0.0
    %4899 = vmatprep.subr.mxu0 0.0
    %4900 = vmatpush1.msra.mxu0 0.0
    %4901 = vmatprep.subr.mxu0 0.0
    %4902 = vmatpush1.msra.mxu0 0.0
    %4903 = vmatprep.subr.mxu0 0.0
    %4904 = vmatpush1.msra.mxu0 0.0
    %4905 = vmatprep.subr.mxu0 0.0
    %4906 = vmatpush1.msra.mxu0 0.0
    %4907 = vmatprep.subr.mxu0 0.0
    %4908 = vmatpush1.msra.mxu0 0.0
    %4909 = vmatprep.subr.mxu0 0.0
    %4910 = vmatpush1.msra.mxu0 0.0
    %4911 = vmatprep.subr.mxu0 0.0
    %4912 = vmatpush1.msra.mxu0 0.0
    %4913 = vmatprep.subr.mxu0 0.0
    %4914 = vmatpush1.msra.mxu0 0.0
    %4915 = vmatprep.subr.mxu0 0.0
    %4916 = vmatpush1.msra.mxu0 0.0
    %4917 = vmatprep.subr.mxu0 0.0
    %4918 = vmatpush1.msra.mxu0 0.0
    %4919 = vmatprep.subr.mxu0 0.0
    %4920 = vmatpush1.msra.mxu0 0.0
    %4921 = vmatprep.subr.mxu0 0.0
    %4922 = vmatpush1.msra.mxu0 0.0
    %4923 = vmatprep.subr.mxu0 0.0
    %4924 = vmatpush1.msra.mxu0 0.0
    %4925 = vmatprep.mubr.f32.mxu0 0.0
    %4926 = vmatmul.mubr.f32.gmra.mrb[0].mxu0 %v4725
    %v4927 = vpop.f32.mrb[0].mxu0
    %v4928 = vadd.f32 0.0, %v4927
    %v4929 = vpop.f32.mrb[0].mxu0
    %v4930 = vadd.f32 0.0, %v4929
    %4931 = vdwg.mxu0
    %v4932 = vadd.f32 %v4423, %v4857
    %v4933 = vadd.f32 %v4425, %v4859
    %v4934 = vadd.f32 %v4494, %v4928
    %v4935 = vadd.f32 %v4496, %v4930
    %v4936 = vmul.f32 %v4932, 0.5
    %v4937 = vtanh.pop %v4936
    %v4938 = vmul.f32 %v4937, 0.5
    %v4939 = vadd.f32 %v4938, 0.5
    %v4940 = vmul.f32 %v4933, 0.5
    %v4941 = vtanh.pop %v4940
    %v4942 = vmul.f32 %v4941, 0.5
    %v4943 = vadd.f32 %v4942, 0.5
    %v4944 = vtanh.pop %v4934
    %v4945 = vmul.f32 %v4935, 0.5
    %v4946 = vtanh.pop %v4945
    %v4947 = vmul.f32 %v4946, 0.5
    %v4948 = vadd.f32 %v4947, 0.5
    %v4949 = vmul.f32 %v4943, %v4265
    %v4950 = vmul.f32 %v4939, %v4944
    %v4951 = vadd.f32 %v4949, %v4950
    %v4952 = vtanh.pop %v4951
    %v4953 = vmul.f32 %v4948, %v4952
    %s4954 = scalar_lea.vmem [#allocation2], 40
    %4955 = vst [vmem:[%s4954] sm:$0xff] %v4953
    %v4956 = vld [vmem:[#allocation24] sm:$0xff]
    %v4957 = vld [vmem:[#allocation24 + $0x8] sm:$0xff]
    %v4958 = vld [vmem:[#allocation24 + $0x10] sm:$0xff]
    %v4959 = vld [vmem:[#allocation24 + $0x18] sm:$0xff]
    %v4960 = vld [vmem:[#allocation24 + $0x20] sm:$0xff]
    %v4961 = vld [vmem:[#allocation24 + $0x28] sm:$0xff]
    %v4962 = vld [vmem:[#allocation24 + $0x30] sm:$0xff]
    %v4963 = vld [vmem:[#allocation24 + $0x38] sm:$0xff]
    %v4964 = vld [vmem:[#allocation24 + $0x40] sm:$0xff]
    %v4965 = vld [vmem:[#allocation24 + $0x48] sm:$0xff]
    %v4966 = vld [vmem:[#allocation24 + $0x50] sm:$0xff]
    %v4967 = vld [vmem:[#allocation24 + $0x58] sm:$0xff]
    %v4968 = vld [vmem:[#allocation24 + $0x60] sm:$0xff]
    %v4969 = vld [vmem:[#allocation24 + $0x68] sm:$0xff]
    %v4970 = vld [vmem:[#allocation24 + $0x70] sm:$0xff]
    %v4971 = vld [vmem:[#allocation24 + $0x78] sm:$0xff]
    %v4972 = vld [vmem:[#allocation24 + $0x80] sm:$0xff]
    %v4973 = vld [vmem:[#allocation24 + $0x88] sm:$0xff]
    %v4974 = vld [vmem:[#allocation24 + $0x90] sm:$0xff]
    %v4975 = vld [vmem:[#allocation24 + $0x98] sm:$0xff]
    %v4976 = vld [vmem:[#allocation24 + $0xa0] sm:$0xff]
    %v4977 = vld [vmem:[#allocation24 + $0xa8] sm:$0xff]
    %v4978 = vld [vmem:[#allocation24 + $0xb0] sm:$0xff]
    %v4979 = vld [vmem:[#allocation24 + $0xb8] sm:$0xff]
    %v4980 = vld [vmem:[#allocation24 + $0xc0] sm:$0xff]
    %v4981 = vld [vmem:[#allocation24 + $0xc8] sm:$0xff]
    %v4982 = vld [vmem:[#allocation24 + $0xd0] sm:$0xff]
    %v4983 = vld [vmem:[#allocation24 + $0xd8] sm:$0xff]
    %v4984 = vld [vmem:[#allocation24 + $0xe0] sm:$0xff]
    %v4985 = vld [vmem:[#allocation24 + $0xe8] sm:$0xff]
    %v4986 = vld [vmem:[#allocation24 + $0xf0] sm:$0xff]
    %v4987 = vld [vmem:[#allocation24 + $0xf8] sm:$0xff]
    %v4988 = vld [vmem:[#allocation24 + $0x100] sm:$0xff]
    %v4989 = vld [vmem:[#allocation24 + $0x108] sm:$0xff]
    %v4990 = vld [vmem:[#allocation24 + $0x110] sm:$0xff]
    %v4991 = vld [vmem:[#allocation24 + $0x118] sm:$0xff]
    %v4992 = vld [vmem:[#allocation24 + $0x120] sm:$0xff]
    %v4993 = vld [vmem:[#allocation24 + $0x128] sm:$0xff]
    %v4994 = vld [vmem:[#allocation24 + $0x130] sm:$0xff]
    %v4995 = vld [vmem:[#allocation24 + $0x138] sm:$0xff]
    %v4996 = vld [vmem:[#allocation24 + $0x140] sm:$0xff]
    %v4997 = vld [vmem:[#allocation24 + $0x148] sm:$0xff]
    %v4998 = vld [vmem:[#allocation24 + $0x150] sm:$0xff]
    %v4999 = vld [vmem:[#allocation24 + $0x158] sm:$0xff]
    %v5000 = vld [vmem:[#allocation24 + $0x160] sm:$0xff]
    %v5001 = vld [vmem:[#allocation24 + $0x168] sm:$0xff]
    %v5002 = vld [vmem:[#allocation24 + $0x170] sm:$0xff]
    %v5003 = vld [vmem:[#allocation24 + $0x178] sm:$0xff]
    %v5004 = vld [vmem:[#allocation24 + $0x180] sm:$0xff]
    %v5005 = vld [vmem:[#allocation24 + $0x188] sm:$0xff]
    %v5006 = vld [vmem:[#allocation24 + $0x190] sm:$0xff]
    %v5007 = vld [vmem:[#allocation24 + $0x198] sm:$0xff]
    %v5008 = vld [vmem:[#allocation24 + $0x1a0] sm:$0xff]
    %v5009 = vld [vmem:[#allocation24 + $0x1a8] sm:$0xff]
    %v5010 = vld [vmem:[#allocation24 + $0x1b0] sm:$0xff]
    %v5011 = vld [vmem:[#allocation24 + $0x1b8] sm:$0xff]
    %v5012 = vld [vmem:[#allocation24 + $0x1c0] sm:$0xff]
    %v5013 = vld [vmem:[#allocation24 + $0x1c8] sm:$0xff]
    %v5014 = vld [vmem:[#allocation24 + $0x1d0] sm:$0xff]
    %v5015 = vld [vmem:[#allocation24 + $0x1d8] sm:$0xff]
    %v5016 = vld [vmem:[#allocation24 + $0x1e0] sm:$0xff]
    %v5017 = vld [vmem:[#allocation24 + $0x1e8] sm:$0xff]
    %v5018 = vld [vmem:[#allocation24 + $0x1f0] sm:$0xff]
    %v5019 = vld [vmem:[#allocation24 + $0x1f8] sm:$0xff]
    %v5020 = vld [vmem:[#allocation26] sm:$0xf]
    %v5022 = vlaneseq
    %v5023 = vshrl.u32 %v5022, 7
    %v5024 = vsub.s32 0, %v5023
    %v5025 = vrot.slane %v5020, %v5024
    %v5026 = vlaneseq
    %v5027 = vshrl.u32 %v5026, 7
    %v5028 = vsub.s32 1, %v5027
    %v5029 = vrot.slane %v5020, %v5028
    %v5030 = vlaneseq
    %v5031 = vshrl.u32 %v5030, 7
    %v5032 = vsub.s32 2, %v5031
    %v5033 = vrot.slane %v5020, %v5032
    %v5034 = vlaneseq
    %v5035 = vshrl.u32 %v5034, 7
    %v5036 = vsub.s32 3, %v5035
    %v5037 = vrot.slane %v5020, %v5036
    %5042 = vmatprep.subr.mxu0 %v4957
    %5043 = vmatpush1.msra.mxu0 %v4956
    %5044 = vmatprep.subr.mxu0 %v4961
    %5045 = vmatpush1.msra.mxu0 %v4960
    %5046 = vmatprep.subr.mxu0 %v4965
    %5047 = vmatpush1.msra.mxu0 %v4964
    %5048 = vmatprep.subr.mxu0 %v4969
    %5049 = vmatpush1.msra.mxu0 %v4968
    %5050 = vmatprep.subr.mxu0 %v4973
    %5051 = vmatpush1.msra.mxu0 %v4972
    %5052 = vmatprep.subr.mxu0 %v4977
    %5053 = vmatpush1.msra.mxu0 %v4976
    %5054 = vmatprep.subr.mxu0 %v4981
    %5055 = vmatpush1.msra.mxu0 %v4980
    %5056 = vmatprep.subr.mxu0 %v4985
    %5057 = vmatpush1.msra.mxu0 %v4984
    %5058 = vmatprep.subr.mxu0 %v4989
    %5059 = vmatpush1.msra.mxu0 %v4988
    %5060 = vmatprep.subr.mxu0 %v4993
    %5061 = vmatpush1.msra.mxu0 %v4992
    %5062 = vmatprep.subr.mxu0 %v4997
    %5063 = vmatpush1.msra.mxu0 %v4996
    %5064 = vmatprep.subr.mxu0 %v5001
    %5065 = vmatpush1.msra.mxu0 %v5000
    %5066 = vmatprep.subr.mxu0 %v5005
    %5067 = vmatpush1.msra.mxu0 %v5004
    %5068 = vmatprep.subr.mxu0 %v5009
    %5069 = vmatpush1.msra.mxu0 %v5008
    %5070 = vmatprep.subr.mxu0 %v5013
    %5071 = vmatpush1.msra.mxu0 %v5012
    %5072 = vmatprep.subr.mxu0 %v5017
    %5073 = vmatpush1.msra.mxu0 %v5016
    %5074 = vmatprep.subr.mxu0 0.0
    %5075 = vmatpush1.msra.mxu0 0.0
    %5076 = vmatprep.subr.mxu0 0.0
    %5077 = vmatpush1.msra.mxu0 0.0
    %5078 = vmatprep.subr.mxu0 0.0
    %5079 = vmatpush1.msra.mxu0 0.0
    %5080 = vmatprep.subr.mxu0 0.0
    %5081 = vmatpush1.msra.mxu0 0.0
    %5082 = vmatprep.subr.mxu0 0.0
    %5083 = vmatpush1.msra.mxu0 0.0
    %5084 = vmatprep.subr.mxu0 0.0
    %5085 = vmatpush1.msra.mxu0 0.0
    %5086 = vmatprep.subr.mxu0 0.0
    %5087 = vmatpush1.msra.mxu0 0.0
    %5088 = vmatprep.subr.mxu0 0.0
    %5089 = vmatpush1.msra.mxu0 0.0
    %5090 = vmatprep.subr.mxu0 0.0
    %5091 = vmatpush1.msra.mxu0 0.0
    %5092 = vmatprep.subr.mxu0 0.0
    %5093 = vmatpush1.msra.mxu0 0.0
    %5094 = vmatprep.subr.mxu0 0.0
    %5095 = vmatpush1.msra.mxu0 0.0
    %5096 = vmatprep.subr.mxu0 0.0
    %5097 = vmatpush1.msra.mxu0 0.0
    %5098 = vmatprep.subr.mxu0 0.0
    %5099 = vmatpush1.msra.mxu0 0.0
    %5100 = vmatprep.subr.mxu0 0.0
    %5101 = vmatpush1.msra.mxu0 0.0
    %5102 = vmatprep.subr.mxu0 0.0
    %5103 = vmatpush1.msra.mxu0 0.0
    %5104 = vmatprep.subr.mxu0 0.0
    %5105 = vmatpush1.msra.mxu0 0.0
    %5106 = vmatprep.mubr.f32.mxu0 0.0
    %5107 = vmatmul.mubr.f32.gmra.mrb[0].mxu0 %v4953
    %v5108 = vpop.f32.mrb[0].mxu0
    %v5109 = vadd.f32 %v5025, %v5108
    %v5110 = vpop.f32.mrb[0].mxu0
    %v5111 = vadd.f32 %v5029, %v5110
    %5112 = vdwg.mxu0
    %5113 = vmatprep.subr.mxu0 %v4959
    %5114 = vmatpush1.msra.mxu0 %v4958
    %5115 = vmatprep.subr.mxu0 %v4963
    %5116 = vmatpush1.msra.mxu0 %v4962
    %5117 = vmatprep.subr.mxu0 %v4967
    %5118 = vmatpush1.msra.mxu0 %v4966
    %5119 = vmatprep.subr.mxu0 %v4971
    %5120 = vmatpush1.msra.mxu0 %v4970
    %5121 = vmatprep.subr.mxu0 %v4975
    %5122 = vmatpush1.msra.mxu0 %v4974
    %5123 = vmatprep.subr.mxu0 %v4979
    %5124 = vmatpush1.msra.mxu0 %v4978
    %5125 = vmatprep.subr.mxu0 %v4983
    %5126 = vmatpush1.msra.mxu0 %v4982
    %5127 = vmatprep.subr.mxu0 %v4987
    %5128 = vmatpush1.msra.mxu0 %v4986
    %5129 = vmatprep.subr.mxu0 %v4991
    %5130 = vmatpush1.msra.mxu0 %v4990
    %5131 = vmatprep.subr.mxu0 %v4995
    %5132 = vmatpush1.msra.mxu0 %v4994
    %5133 = vmatprep.subr.mxu0 %v4999
    %5134 = vmatpush1.msra.mxu0 %v4998
    %5135 = vmatprep.subr.mxu0 %v5003
    %5136 = vmatpush1.msra.mxu0 %v5002
    %5137 = vmatprep.subr.mxu0 %v5007
    %5138 = vmatpush1.msra.mxu0 %v5006
    %5139 = vmatprep.subr.mxu0 %v5011
    %5140 = vmatpush1.msra.mxu0 %v5010
    %5141 = vmatprep.subr.mxu0 %v5015
    %5142 = vmatpush1.msra.mxu0 %v5014
    %5143 = vmatprep.subr.mxu0 %v5019
    %5144 = vmatpush1.msra.mxu0 %v5018
    %5145 = vmatprep.subr.mxu0 0.0
    %5146 = vmatpush1.msra.mxu0 0.0
    %5147 = vmatprep.subr.mxu0 0.0
    %5148 = vmatpush1.msra.mxu0 0.0
    %5149 = vmatprep.subr.mxu0 0.0
    %5150 = vmatpush1.msra.mxu0 0.0
    %5151 = vmatprep.subr.mxu0 0.0
    %5152 = vmatpush1.msra.mxu0 0.0
    %5153 = vmatprep.subr.mxu0 0.0
    %5154 = vmatpush1.msra.mxu0 0.0
    %5155 = vmatprep.subr.mxu0 0.0
    %5156 = vmatpush1.msra.mxu0 0.0
    %5157 = vmatprep.subr.mxu0 0.0
    %5158 = vmatpush1.msra.mxu0 0.0
    %5159 = vmatprep.subr.mxu0 0.0
    %5160 = vmatpush1.msra.mxu0 0.0
    %5161 = vmatprep.subr.mxu0 0.0
    %5162 = vmatpush1.msra.mxu0 0.0
    %5163 = vmatprep.subr.mxu0 0.0
    %5164 = vmatpush1.msra.mxu0 0.0
    %5165 = vmatprep.subr.mxu0 0.0
    %5166 = vmatpush1.msra.mxu0 0.0
    %5167 = vmatprep.subr.mxu0 0.0
    %5168 = vmatpush1.msra.mxu0 0.0
    %5169 = vmatprep.subr.mxu0 0.0
    %5170 = vmatpush1.msra.mxu0 0.0
    %5171 = vmatprep.subr.mxu0 0.0
    %5172 = vmatpush1.msra.mxu0 0.0
    %5173 = vmatprep.subr.mxu0 0.0
    %5174 = vmatpush1.msra.mxu0 0.0
    %5175 = vmatprep.subr.mxu0 0.0
    %5176 = vmatpush1.msra.mxu0 0.0
    %5177 = vmatprep.mubr.f32.mxu0 0.0
    %5178 = vmatmul.mubr.f32.gmra.mrb[0].mxu0 %v4953
    %v5179 = vpop.f32.mrb[0].mxu0
    %v5180 = vadd.f32 %v5033, %v5179
    %v5181 = vpop.f32.mrb[0].mxu0
    %v5182 = vadd.f32 %v5037, %v5181
    %5183 = vdwg.mxu0
    %v5184 = vld [vmem:[#allocation20] sm:$0xff]
    %v5185 = vld [vmem:[#allocation20 + $0x8] sm:$0xff]
    %v5186 = vld [vmem:[#allocation20 + $0x10] sm:$0xff]
    %v5187 = vld [vmem:[#allocation20 + $0x18] sm:$0xff]
    %v5188 = vld [vmem:[#allocation20 + $0x20] sm:$0xff]
    %v5189 = vld [vmem:[#allocation20 + $0x28] sm:$0xff]
    %v5190 = vld [vmem:[#allocation20 + $0x30] sm:$0xff]
    %v5191 = vld [vmem:[#allocation20 + $0x38] sm:$0xff]
    %v5192 = vld [vmem:[#allocation20 + $0x40] sm:$0xff]
    %v5193 = vld [vmem:[#allocation20 + $0x48] sm:$0xff]
    %v5194 = vld [vmem:[#allocation20 + $0x50] sm:$0xff]
    %v5195 = vld [vmem:[#allocation20 + $0x58] sm:$0xff]
    %v5196 = vld [vmem:[#allocation20 + $0x60] sm:$0xff]
    %v5197 = vld [vmem:[#allocation20 + $0x68] sm:$0xff]
    %v5198 = vld [vmem:[#allocation20 + $0x70] sm:$0xff]
    %v5199 = vld [vmem:[#allocation20 + $0x78] sm:$0xff]
    %v5200 = vld [vmem:[#allocation20 + $0x80] sm:$0xff]
    %v5201 = vld [vmem:[#allocation20 + $0x88] sm:$0xff]
    %v5202 = vld [vmem:[#allocation20 + $0x90] sm:$0xff]
    %v5203 = vld [vmem:[#allocation20 + $0x98] sm:$0xff]
    %v5204 = vld [vmem:[#allocation20 + $0xa0] sm:$0xff]
    %v5205 = vld [vmem:[#allocation20 + $0xa8] sm:$0xff]
    %v5206 = vld [vmem:[#allocation20 + $0xb0] sm:$0xff]
    %v5207 = vld [vmem:[#allocation20 + $0xb8] sm:$0xff]
    %v5208 = vld [vmem:[#allocation20 + $0xc0] sm:$0xff]
    %v5209 = vld [vmem:[#allocation20 + $0xc8] sm:$0xff]
    %v5210 = vld [vmem:[#allocation20 + $0xd0] sm:$0xff]
    %v5211 = vld [vmem:[#allocation20 + $0xd8] sm:$0xff]
    %v5212 = vld [vmem:[#allocation20 + $0xe0] sm:$0xff]
    %v5213 = vld [vmem:[#allocation20 + $0xe8] sm:$0xff]
    %v5214 = vld [vmem:[#allocation20 + $0xf0] sm:$0xff]
    %v5215 = vld [vmem:[#allocation20 + $0xf8] sm:$0xff]
    %v5216 = vld [vmem:[#allocation20 + $0x100] sm:$0xff]
    %v5217 = vld [vmem:[#allocation20 + $0x108] sm:$0xff]
    %v5218 = vld [vmem:[#allocation20 + $0x110] sm:$0xff]
    %v5219 = vld [vmem:[#allocation20 + $0x118] sm:$0xff]
    %v5220 = vld [vmem:[#allocation20 + $0x120] sm:$0xff]
    %v5221 = vld [vmem:[#allocation20 + $0x128] sm:$0xff]
    %v5222 = vld [vmem:[#allocation20 + $0x130] sm:$0xff]
    %v5223 = vld [vmem:[#allocation20 + $0x138] sm:$0xff]
    %v5224 = vld [vmem:[#allocation20 + $0x140] sm:$0xff]
    %v5225 = vld [vmem:[#allocation20 + $0x148] sm:$0xff]
    %v5226 = vld [vmem:[#allocation20 + $0x150] sm:$0xff]
    %v5227 = vld [vmem:[#allocation20 + $0x158] sm:$0xff]
    %v5228 = vld [vmem:[#allocation20 + $0x160] sm:$0xff]
    %v5229 = vld [vmem:[#allocation20 + $0x168] sm:$0xff]
    %v5230 = vld [vmem:[#allocation20 + $0x170] sm:$0xff]
    %v5231 = vld [vmem:[#allocation20 + $0x178] sm:$0xff]
    %v5232 = vld [vmem:[#allocation20 + $0x180] sm:$0xff]
    %v5233 = vld [vmem:[#allocation20 + $0x188] sm:$0xff]
    %v5234 = vld [vmem:[#allocation20 + $0x190] sm:$0xff]
    %v5235 = vld [vmem:[#allocation20 + $0x198] sm:$0xff]
    %v5236 = vld [vmem:[#allocation20 + $0x1a0] sm:$0xff]
    %v5237 = vld [vmem:[#allocation20 + $0x1a8] sm:$0xff]
    %v5238 = vld [vmem:[#allocation20 + $0x1b0] sm:$0xff]
    %v5239 = vld [vmem:[#allocation20 + $0x1b8] sm:$0xff]
    %v5240 = vld [vmem:[#allocation20 + $0x1c0] sm:$0xff]
    %v5241 = vld [vmem:[#allocation20 + $0x1c8] sm:$0xff]
    %v5242 = vld [vmem:[#allocation20 + $0x1d0] sm:$0xff]
    %v5243 = vld [vmem:[#allocation20 + $0x1d8] sm:$0xff]
    %v5244 = vld [vmem:[#allocation20 + $0x1e0] sm:$0xff]
    %v5245 = vld [vmem:[#allocation20 + $0x1e8] sm:$0xff]
    %v5246 = vld [vmem:[#allocation20 + $0x1f0] sm:$0xff]
    %v5247 = vld [vmem:[#allocation20 + $0x1f8] sm:$0xff]
    %5248 = vmatprep.subr.mxu0 %v5185
    %5249 = vmatpush1.msra.mxu0 %v5184
    %5250 = vmatprep.subr.mxu0 %v5189
    %5251 = vmatpush1.msra.mxu0 %v5188
    %5252 = vmatprep.subr.mxu0 %v5193
    %5253 = vmatpush1.msra.mxu0 %v5192
    %5254 = vmatprep.subr.mxu0 %v5197
    %5255 = vmatpush1.msra.mxu0 %v5196
    %5256 = vmatprep.subr.mxu0 %v5201
    %5257 = vmatpush1.msra.mxu0 %v5200
    %5258 = vmatprep.subr.mxu0 %v5205
    %5259 = vmatpush1.msra.mxu0 %v5204
    %5260 = vmatprep.subr.mxu0 %v5209
    %5261 = vmatpush1.msra.mxu0 %v5208
    %5262 = vmatprep.subr.mxu0 %v5213
    %5263 = vmatpush1.msra.mxu0 %v5212
    %5264 = vmatprep.subr.mxu0 %v5217
    %5265 = vmatpush1.msra.mxu0 %v5216
    %5266 = vmatprep.subr.mxu0 %v5221
    %5267 = vmatpush1.msra.mxu0 %v5220
    %5268 = vmatprep.subr.mxu0 %v5225
    %5269 = vmatpush1.msra.mxu0 %v5224
    %5270 = vmatprep.subr.mxu0 %v5229
    %5271 = vmatpush1.msra.mxu0 %v5228
    %5272 = vmatprep.subr.mxu0 %v5233
    %5273 = vmatpush1.msra.mxu0 %v5232
    %5274 = vmatprep.subr.mxu0 %v5237
    %5275 = vmatpush1.msra.mxu0 %v5236
    %5276 = vmatprep.subr.mxu0 %v5241
    %5277 = vmatpush1.msra.mxu0 %v5240
    %5278 = vmatprep.subr.mxu0 %v5245
    %5279 = vmatpush1.msra.mxu0 %v5244
    %5280 = vmatprep.subr.mxu0 0.0
    %5281 = vmatpush1.msra.mxu0 0.0
    %5282 = vmatprep.subr.mxu0 0.0
    %5283 = vmatpush1.msra.mxu0 0.0
    %5284 = vmatprep.subr.mxu0 0.0
    %5285 = vmatpush1.msra.mxu0 0.0
    %5286 = vmatprep.subr.mxu0 0.0
    %5287 = vmatpush1.msra.mxu0 0.0
    %5288 = vmatprep.subr.mxu0 0.0
    %5289 = vmatpush1.msra.mxu0 0.0
    %5290 = vmatprep.subr.mxu0 0.0
    %5291 = vmatpush1.msra.mxu0 0.0
    %5292 = vmatprep.subr.mxu0 0.0
    %5293 = vmatpush1.msra.mxu0 0.0
    %5294 = vmatprep.subr.mxu0 0.0
    %5295 = vmatpush1.msra.mxu0 0.0
    %5296 = vmatprep.subr.mxu0 0.0
    %5297 = vmatpush1.msra.mxu0 0.0
    %5298 = vmatprep.subr.mxu0 0.0
    %5299 = vmatpush1.msra.mxu0 0.0
    %5300 = vmatprep.subr.mxu0 0.0
    %5301 = vmatpush1.msra.mxu0 0.0
    %5302 = vmatprep.subr.mxu0 0.0
    %5303 = vmatpush1.msra.mxu0 0.0
    %5304 = vmatprep.subr.mxu0 0.0
    %5305 = vmatpush1.msra.mxu0 0.0
    %5306 = vmatprep.subr.mxu0 0.0
    %5307 = vmatpush1.msra.mxu0 0.0
    %5308 = vmatprep.subr.mxu0 0.0
    %5309 = vmatpush1.msra.mxu0 0.0
    %5310 = vmatprep.subr.mxu0 0.0
    %5311 = vmatpush1.msra.mxu0 0.0
    %5312 = vmatprep.mubr.f32.mxu0 0.0
    %5313 = vmatmul.mubr.f32.gmra.mrb[0].mxu0 %v4725
    %v5314 = vpop.f32.mrb[0].mxu0
    %v5315 = vadd.f32 0.0, %v5314
    %v5316 = vpop.f32.mrb[0].mxu0
    %v5317 = vadd.f32 0.0, %v5316
    %5318 = vdwg.mxu0
    %5319 = vmatprep.subr.mxu0 %v5187
    %5320 = vmatpush1.msra.mxu0 %v5186
    %5321 = vmatprep.subr.mxu0 %v5191
    %5322 = vmatpush1.msra.mxu0 %v5190
    %5323 = vmatprep.subr.mxu0 %v5195
    %5324 = vmatpush1.msra.mxu0 %v5194
    %5325 = vmatprep.subr.mxu0 %v5199
    %5326 = vmatpush1.msra.mxu0 %v5198
    %5327 = vmatprep.subr.mxu0 %v5203
    %5328 = vmatpush1.msra.mxu0 %v5202
    %5329 = vmatprep.subr.mxu0 %v5207
    %5330 = vmatpush1.msra.mxu0 %v5206
    %5331 = vmatprep.subr.mxu0 %v5211
    %5332 = vmatpush1.msra.mxu0 %v5210
    %5333 = vmatprep.subr.mxu0 %v5215
    %5334 = vmatpush1.msra.mxu0 %v5214
    %5335 = vmatprep.subr.mxu0 %v5219
    %5336 = vmatpush1.msra.mxu0 %v5218
    %5337 = vmatprep.subr.mxu0 %v5223
    %5338 = vmatpush1.msra.mxu0 %v5222
    %5339 = vmatprep.subr.mxu0 %v5227
    %5340 = vmatpush1.msra.mxu0 %v5226
    %5341 = vmatprep.subr.mxu0 %v5231
    %5342 = vmatpush1.msra.mxu0 %v5230
    %5343 = vmatprep.subr.mxu0 %v5235
    %5344 = vmatpush1.msra.mxu0 %v5234
    %5345 = vmatprep.subr.mxu0 %v5239
    %5346 = vmatpush1.msra.mxu0 %v5238
    %5347 = vmatprep.subr.mxu0 %v5243
    %5348 = vmatpush1.msra.mxu0 %v5242
    %5349 = vmatprep.subr.mxu0 %v5247
    %5350 = vmatpush1.msra.mxu0 %v5246
    %5351 = vmatprep.subr.mxu0 0.0
    %5352 = vmatpush1.msra.mxu0 0.0
    %5353 = vmatprep.subr.mxu0 0.0
    %5354 = vmatpush1.msra.mxu0 0.0
    %5355 = vmatprep.subr.mxu0 0.0
    %5356 = vmatpush1.msra.mxu0 0.0
    %5357 = vmatprep.subr.mxu0 0.0
    %5358 = vmatpush1.msra.mxu0 0.0
    %5359 = vmatprep.subr.mxu0 0.0
    %5360 = vmatpush1.msra.mxu0 0.0
    %5361 = vmatprep.subr.mxu0 0.0
    %5362 = vmatpush1.msra.mxu0 0.0
    %5363 = vmatprep.subr.mxu0 0.0
    %5364 = vmatpush1.msra.mxu0 0.0
    %5365 = vmatprep.subr.mxu0 0.0
    %5366 = vmatpush1.msra.mxu0 0.0
    %5367 = vmatprep.subr.mxu0 0.0
    %5368 = vmatpush1.msra.mxu0 0.0
    %5369 = vmatprep.subr.mxu0 0.0
    %5370 = vmatpush1.msra.mxu0 0.0
    %5371 = vmatprep.subr.mxu0 0.0
    %5372 = vmatpush1.msra.mxu0 0.0
    %5373 = vmatprep.subr.mxu0 0.0
    %5374 = vmatpush1.msra.mxu0 0.0
    %5375 = vmatprep.subr.mxu0 0.0
    %5376 = vmatpush1.msra.mxu0 0.0
    %5377 = vmatprep.subr.mxu0 0.0
    %5378 = vmatpush1.msra.mxu0 0.0
    %5379 = vmatprep.subr.mxu0 0.0
    %5380 = vmatpush1.msra.mxu0 0.0
    %5381 = vmatprep.subr.mxu0 0.0
    %5382 = vmatpush1.msra.mxu0 0.0
    %5383 = vmatprep.mubr.f32.mxu0 0.0
    %5384 = vmatmul.mubr.f32.gmra.mrb[0].mxu0 %v4725
    %v5385 = vpop.f32.mrb[0].mxu0
    %v5386 = vadd.f32 0.0, %v5385
    %v5387 = vpop.f32.mrb[0].mxu0
    %v5388 = vadd.f32 0.0, %v5387
    %5389 = vdwg.mxu0
    %v5390 = vadd.f32 %v766, %v5315
    %v5391 = vadd.f32 %v768, %v5317
    %v5392 = vadd.f32 %v837, %v5386
    %v5393 = vadd.f32 %v839, %v5388
    %v5394 = vmul.f32 %v5390, 0.5
    %v5395 = vtanh.pop %v5394
    %v5396 = vmul.f32 %v5395, 0.5
    %v5397 = vadd.f32 %v5396, 0.5
    %v5398 = vmul.f32 %v5391, 0.5
    %v5399 = vtanh.pop %v5398
    %v5400 = vmul.f32 %v5399, 0.5
    %v5401 = vadd.f32 %v5400, 0.5
    %v5402 = vtanh.pop %v5392
    %v5403 = vmul.f32 %v5393, 0.5
    %v5404 = vtanh.pop %v5403
    %v5405 = vmul.f32 %v5404, 0.5
    %v5406 = vadd.f32 %v5405, 0.5
    %v5407 = vmul.f32 %v5401, %v4723
    %v5408 = vmul.f32 %v5397, %v5402
    %v5409 = vadd.f32 %v5407, %v5408
    %v5410 = vtanh.pop %v5409
    %v5411 = vmul.f32 %v5406, %v5410
    %v5412 = vld [vmem:[#allocation23] sm:$0xff]
    %v5413 = vld [vmem:[#allocation23 + $0x8] sm:$0xff]
    %v5414 = vld [vmem:[#allocation23 + $0x10] sm:$0xff]
    %v5415 = vld [vmem:[#allocation23 + $0x18] sm:$0xff]
    %v5416 = vld [vmem:[#allocation23 + $0x20] sm:$0xff]
    %v5417 = vld [vmem:[#allocation23 + $0x28] sm:$0xff]
    %v5418 = vld [vmem:[#allocation23 + $0x30] sm:$0xff]
    %v5419 = vld [vmem:[#allocation23 + $0x38] sm:$0xff]
    %v5420 = vld [vmem:[#allocation23 + $0x40] sm:$0xff]
    %v5421 = vld [vmem:[#allocation23 + $0x48] sm:$0xff]
    %v5422 = vld [vmem:[#allocation23 + $0x50] sm:$0xff]
    %v5423 = vld [vmem:[#allocation23 + $0x58] sm:$0xff]
    %v5424 = vld [vmem:[#allocation23 + $0x60] sm:$0xff]
    %v5425 = vld [vmem:[#allocation23 + $0x68] sm:$0xff]
    %v5426 = vld [vmem:[#allocation23 + $0x70] sm:$0xff]
    %v5427 = vld [vmem:[#allocation23 + $0x78] sm:$0xff]
    %v5428 = vld [vmem:[#allocation23 + $0x80] sm:$0xff]
    %v5429 = vld [vmem:[#allocation23 + $0x88] sm:$0xff]
    %v5430 = vld [vmem:[#allocation23 + $0x90] sm:$0xff]
    %v5431 = vld [vmem:[#allocation23 + $0x98] sm:$0xff]
    %v5432 = vld [vmem:[#allocation23 + $0xa0] sm:$0xff]
    %v5433 = vld [vmem:[#allocation23 + $0xa8] sm:$0xff]
    %v5434 = vld [vmem:[#allocation23 + $0xb0] sm:$0xff]
    %v5435 = vld [vmem:[#allocation23 + $0xb8] sm:$0xff]
    %v5436 = vld [vmem:[#allocation23 + $0xc0] sm:$0xff]
    %v5437 = vld [vmem:[#allocation23 + $0xc8] sm:$0xff]
    %v5438 = vld [vmem:[#allocation23 + $0xd0] sm:$0xff]
    %v5439 = vld [vmem:[#allocation23 + $0xd8] sm:$0xff]
    %v5440 = vld [vmem:[#allocation23 + $0xe0] sm:$0xff]
    %v5441 = vld [vmem:[#allocation23 + $0xe8] sm:$0xff]
    %v5442 = vld [vmem:[#allocation23 + $0xf0] sm:$0xff]
    %v5443 = vld [vmem:[#allocation23 + $0xf8] sm:$0xff]
    %v5444 = vld [vmem:[#allocation23 + $0x100] sm:$0xff]
    %v5445 = vld [vmem:[#allocation23 + $0x108] sm:$0xff]
    %v5446 = vld [vmem:[#allocation23 + $0x110] sm:$0xff]
    %v5447 = vld [vmem:[#allocation23 + $0x118] sm:$0xff]
    %v5448 = vld [vmem:[#allocation23 + $0x120] sm:$0xff]
    %v5449 = vld [vmem:[#allocation23 + $0x128] sm:$0xff]
    %v5450 = vld [vmem:[#allocation23 + $0x130] sm:$0xff]
    %v5451 = vld [vmem:[#allocation23 + $0x138] sm:$0xff]
    %v5452 = vld [vmem:[#allocation23 + $0x140] sm:$0xff]
    %v5453 = vld [vmem:[#allocation23 + $0x148] sm:$0xff]
    %v5454 = vld [vmem:[#allocation23 + $0x150] sm:$0xff]
    %v5455 = vld [vmem:[#allocation23 + $0x158] sm:$0xff]
    %v5456 = vld [vmem:[#allocation23 + $0x160] sm:$0xff]
    %v5457 = vld [vmem:[#allocation23 + $0x168] sm:$0xff]
    %v5458 = vld [vmem:[#allocation23 + $0x170] sm:$0xff]
    %v5459 = vld [vmem:[#allocation23 + $0x178] sm:$0xff]
    %v5460 = vld [vmem:[#allocation23 + $0x180] sm:$0xff]
    %v5461 = vld [vmem:[#allocation23 + $0x188] sm:$0xff]
    %v5462 = vld [vmem:[#allocation23 + $0x190] sm:$0xff]
    %v5463 = vld [vmem:[#allocation23 + $0x198] sm:$0xff]
    %v5464 = vld [vmem:[#allocation23 + $0x1a0] sm:$0xff]
    %v5465 = vld [vmem:[#allocation23 + $0x1a8] sm:$0xff]
    %v5466 = vld [vmem:[#allocation23 + $0x1b0] sm:$0xff]
    %v5467 = vld [vmem:[#allocation23 + $0x1b8] sm:$0xff]
    %v5468 = vld [vmem:[#allocation23 + $0x1c0] sm:$0xff]
    %v5469 = vld [vmem:[#allocation23 + $0x1c8] sm:$0xff]
    %v5470 = vld [vmem:[#allocation23 + $0x1d0] sm:$0xff]
    %v5471 = vld [vmem:[#allocation23 + $0x1d8] sm:$0xff]
    %v5472 = vld [vmem:[#allocation23 + $0x1e0] sm:$0xff]
    %v5473 = vld [vmem:[#allocation23 + $0x1e8] sm:$0xff]
    %v5474 = vld [vmem:[#allocation23 + $0x1f0] sm:$0xff]
    %v5475 = vld [vmem:[#allocation23 + $0x1f8] sm:$0xff]
    %5476 = vmatprep.subr.mxu0 %v5413
    %5477 = vmatpush1.msra.mxu0 %v5412
    %5478 = vmatprep.subr.mxu0 %v5417
    %5479 = vmatpush1.msra.mxu0 %v5416
    %5480 = vmatprep.subr.mxu0 %v5421
    %5481 = vmatpush1.msra.mxu0 %v5420
    %5482 = vmatprep.subr.mxu0 %v5425
    %5483 = vmatpush1.msra.mxu0 %v5424
    %5484 = vmatprep.subr.mxu0 %v5429
    %5485 = vmatpush1.msra.mxu0 %v5428
    %5486 = vmatprep.subr.mxu0 %v5433
    %5487 = vmatpush1.msra.mxu0 %v5432
    %5488 = vmatprep.subr.mxu0 %v5437
    %5489 = vmatpush1.msra.mxu0 %v5436
    %5490 = vmatprep.subr.mxu0 %v5441
    %5491 = vmatpush1.msra.mxu0 %v5440
    %5492 = vmatprep.subr.mxu0 %v5445
    %5493 = vmatpush1.msra.mxu0 %v5444
    %5494 = vmatprep.subr.mxu0 %v5449
    %5495 = vmatpush1.msra.mxu0 %v5448
    %5496 = vmatprep.subr.mxu0 %v5453
    %5497 = vmatpush1.msra.mxu0 %v5452
    %5498 = vmatprep.subr.mxu0 %v5457
    %5499 = vmatpush1.msra.mxu0 %v5456
    %5500 = vmatprep.subr.mxu0 %v5461
    %5501 = vmatpush1.msra.mxu0 %v5460
    %5502 = vmatprep.subr.mxu0 %v5465
    %5503 = vmatpush1.msra.mxu0 %v5464
    %5504 = vmatprep.subr.mxu0 %v5469
    %5505 = vmatpush1.msra.mxu0 %v5468
    %5506 = vmatprep.subr.mxu0 %v5473
    %5507 = vmatpush1.msra.mxu0 %v5472
    %5508 = vmatprep.subr.mxu0 0.0
    %5509 = vmatpush1.msra.mxu0 0.0
    %5510 = vmatprep.subr.mxu0 0.0
    %5511 = vmatpush1.msra.mxu0 0.0
    %5512 = vmatprep.subr.mxu0 0.0
    %5513 = vmatpush1.msra.mxu0 0.0
    %5514 = vmatprep.subr.mxu0 0.0
    %5515 = vmatpush1.msra.mxu0 0.0
    %5516 = vmatprep.subr.mxu0 0.0
    %5517 = vmatpush1.msra.mxu0 0.0
    %5518 = vmatprep.subr.mxu0 0.0
    %5519 = vmatpush1.msra.mxu0 0.0
    %5520 = vmatprep.subr.mxu0 0.0
    %5521 = vmatpush1.msra.mxu0 0.0
    %5522 = vmatprep.subr.mxu0 0.0
    %5523 = vmatpush1.msra.mxu0 0.0
    %5524 = vmatprep.subr.mxu0 0.0
    %5525 = vmatpush1.msra.mxu0 0.0
    %5526 = vmatprep.subr.mxu0 0.0
    %5527 = vmatpush1.msra.mxu0 0.0
    %5528 = vmatprep.subr.mxu0 0.0
    %5529 = vmatpush1.msra.mxu0 0.0
    %5530 = vmatprep.subr.mxu0 0.0
    %5531 = vmatpush1.msra.mxu0 0.0
    %5532 = vmatprep.subr.mxu0 0.0
    %5533 = vmatpush1.msra.mxu0 0.0
    %5534 = vmatprep.subr.mxu0 0.0
    %5535 = vmatpush1.msra.mxu0 0.0
    %5536 = vmatprep.subr.mxu0 0.0
    %5537 = vmatpush1.msra.mxu0 0.0
    %5538 = vmatprep.subr.mxu0 0.0
    %5539 = vmatpush1.msra.mxu0 0.0
    %5540 = vmatprep.mubr.f32.mxu0 0.0
    %5541 = vmatmul.mubr.f32.gmra.mrb[0].mxu0 %v5411
    %v5542 = vpop.f32.mrb[0].mxu0
    %v5543 = vadd.f32 0.0, %v5542
    %v5544 = vpop.f32.mrb[0].mxu0
    %v5545 = vadd.f32 0.0, %v5544
    %5546 = vdwg.mxu0
    %5547 = vmatprep.subr.mxu0 %v5415
    %5548 = vmatpush1.msra.mxu0 %v5414
    %5549 = vmatprep.subr.mxu0 %v5419
    %5550 = vmatpush1.msra.mxu0 %v5418
    %5551 = vmatprep.subr.mxu0 %v5423
    %5552 = vmatpush1.msra.mxu0 %v5422
    %5553 = vmatprep.subr.mxu0 %v5427
    %5554 = vmatpush1.msra.mxu0 %v5426
    %5555 = vmatprep.subr.mxu0 %v5431
    %5556 = vmatpush1.msra.mxu0 %v5430
    %5557 = vmatprep.subr.mxu0 %v5435
    %5558 = vmatpush1.msra.mxu0 %v5434
    %5559 = vmatprep.subr.mxu0 %v5439
    %5560 = vmatpush1.msra.mxu0 %v5438
    %5561 = vmatprep.subr.mxu0 %v5443
    %5562 = vmatpush1.msra.mxu0 %v5442
    %5563 = vmatprep.subr.mxu0 %v5447
    %5564 = vmatpush1.msra.mxu0 %v5446
    %5565 = vmatprep.subr.mxu0 %v5451
    %5566 = vmatpush1.msra.mxu0 %v5450
    %5567 = vmatprep.subr.mxu0 %v5455
    %5568 = vmatpush1.msra.mxu0 %v5454
    %5569 = vmatprep.subr.mxu0 %v5459
    %5570 = vmatpush1.msra.mxu0 %v5458
    %5571 = vmatprep.subr.mxu0 %v5463
    %5572 = vmatpush1.msra.mxu0 %v5462
    %5573 = vmatprep.subr.mxu0 %v5467
    %5574 = vmatpush1.msra.mxu0 %v5466
    %5575 = vmatprep.subr.mxu0 %v5471
    %5576 = vmatpush1.msra.mxu0 %v5470
    %5577 = vmatprep.subr.mxu0 %v5475
    %5578 = vmatpush1.msra.mxu0 %v5474
    %5579 = vmatprep.subr.mxu0 0.0
    %5580 = vmatpush1.msra.mxu0 0.0
    %5581 = vmatprep.subr.mxu0 0.0
    %5582 = vmatpush1.msra.mxu0 0.0
    %5583 = vmatprep.subr.mxu0 0.0
    %5584 = vmatpush1.msra.mxu0 0.0
    %5585 = vmatprep.subr.mxu0 0.0
    %5586 = vmatpush1.msra.mxu0 0.0
    %5587 = vmatprep.subr.mxu0 0.0
    %5588 = vmatpush1.msra.mxu0 0.0
    %5589 = vmatprep.subr.mxu0 0.0
    %5590 = vmatpush1.msra.mxu0 0.0
    %5591 = vmatprep.subr.mxu0 0.0
    %5592 = vmatpush1.msra.mxu0 0.0
    %5593 = vmatprep.subr.mxu0 0.0
    %5594 = vmatpush1.msra.mxu0 0.0
    %5595 = vmatprep.subr.mxu0 0.0
    %5596 = vmatpush1.msra.mxu0 0.0
    %5597 = vmatprep.subr.mxu0 0.0
    %5598 = vmatpush1.msra.mxu0 0.0
    %5599 = vmatprep.subr.mxu0 0.0
    %5600 = vmatpush1.msra.mxu0 0.0
    %5601 = vmatprep.subr.mxu0 0.0
    %5602 = vmatpush1.msra.mxu0 0.0
    %5603 = vmatprep.subr.mxu0 0.0
    %5604 = vmatpush1.msra.mxu0 0.0
    %5605 = vmatprep.subr.mxu0 0.0
    %5606 = vmatpush1.msra.mxu0 0.0
    %5607 = vmatprep.subr.mxu0 0.0
    %5608 = vmatpush1.msra.mxu0 0.0
    %5609 = vmatprep.subr.mxu0 0.0
    %5610 = vmatpush1.msra.mxu0 0.0
    %5611 = vmatprep.mubr.f32.mxu0 0.0
    %5612 = vmatmul.mubr.f32.gmra.mrb[0].mxu0 %v5411
    %v5613 = vpop.f32.mrb[0].mxu0
    %v5614 = vadd.f32 0.0, %v5613
    %v5615 = vpop.f32.mrb[0].mxu0
    %v5616 = vadd.f32 0.0, %v5615
    %5617 = vdwg.mxu0
    %v5618 = vadd.f32 %v5109, %v5543
    %v5619 = vadd.f32 %v5111, %v5545
    %v5620 = vadd.f32 %v5180, %v5614
    %v5621 = vadd.f32 %v5182, %v5616
    %v5622 = vmul.f32 %v5618, 0.5
    %v5623 = vtanh.pop %v5622
    %v5624 = vmul.f32 %v5623, 0.5
    %v5625 = vadd.f32 %v5624, 0.5
    %v5626 = vmul.f32 %v5619, 0.5
    %v5627 = vtanh.pop %v5626
    %v5628 = vmul.f32 %v5627, 0.5
    %v5629 = vadd.f32 %v5628, 0.5
    %v5630 = vtanh.pop %v5620
    %v5631 = vmul.f32 %v5621, 0.5
    %v5632 = vtanh.pop %v5631
    %v5633 = vmul.f32 %v5632, 0.5
    %v5634 = vadd.f32 %v5633, 0.5
    %v5635 = vmul.f32 %v5629, %v4951
    %v5636 = vmul.f32 %v5625, %v5630
    %v5637 = vadd.f32 %v5635, %v5636
    %v5638 = vtanh.pop %v5637
    %v5639 = vmul.f32 %v5634, %v5638
    %s5640 = scalar_lea.vmem [#allocation2], 48
    %5641 = vst [vmem:[%s5640] sm:$0xff] %v5639
    %v5642 = vld [vmem:[#allocation24] sm:$0xff]
    %v5643 = vld [vmem:[#allocation24 + $0x8] sm:$0xff]
    %v5644 = vld [vmem:[#allocation24 + $0x10] sm:$0xff]
    %v5645 = vld [vmem:[#allocation24 + $0x18] sm:$0xff]
    %v5646 = vld [vmem:[#allocation24 + $0x20] sm:$0xff]
    %v5647 = vld [vmem:[#allocation24 + $0x28] sm:$0xff]
    %v5648 = vld [vmem:[#allocation24 + $0x30] sm:$0xff]
    %v5649 = vld [vmem:[#allocation24 + $0x38] sm:$0xff]
    %v5650 = vld [vmem:[#allocation24 + $0x40] sm:$0xff]
    %v5651 = vld [vmem:[#allocation24 + $0x48] sm:$0xff]
    %v5652 = vld [vmem:[#allocation24 + $0x50] sm:$0xff]
    %v5653 = vld [vmem:[#allocation24 + $0x58] sm:$0xff]
    %v5654 = vld [vmem:[#allocation24 + $0x60] sm:$0xff]
    %v5655 = vld [vmem:[#allocation24 + $0x68] sm:$0xff]
    %v5656 = vld [vmem:[#allocation24 + $0x70] sm:$0xff]
    %v5657 = vld [vmem:[#allocation24 + $0x78] sm:$0xff]
    %v5658 = vld [vmem:[#allocation24 + $0x80] sm:$0xff]
    %v5659 = vld [vmem:[#allocation24 + $0x88] sm:$0xff]
    %v5660 = vld [vmem:[#allocation24 + $0x90] sm:$0xff]
    %v5661 = vld [vmem:[#allocation24 + $0x98] sm:$0xff]
    %v5662 = vld [vmem:[#allocation24 + $0xa0] sm:$0xff]
    %v5663 = vld [vmem:[#allocation24 + $0xa8] sm:$0xff]
    %v5664 = vld [vmem:[#allocation24 + $0xb0] sm:$0xff]
    %v5665 = vld [vmem:[#allocation24 + $0xb8] sm:$0xff]
    %v5666 = vld [vmem:[#allocation24 + $0xc0] sm:$0xff]
    %v5667 = vld [vmem:[#allocation24 + $0xc8] sm:$0xff]
    %v5668 = vld [vmem:[#allocation24 + $0xd0] sm:$0xff]
    %v5669 = vld [vmem:[#allocation24 + $0xd8] sm:$0xff]
    %v5670 = vld [vmem:[#allocation24 + $0xe0] sm:$0xff]
    %v5671 = vld [vmem:[#allocation24 + $0xe8] sm:$0xff]
    %v5672 = vld [vmem:[#allocation24 + $0xf0] sm:$0xff]
    %v5673 = vld [vmem:[#allocation24 + $0xf8] sm:$0xff]
    %v5674 = vld [vmem:[#allocation24 + $0x100] sm:$0xff]
    %v5675 = vld [vmem:[#allocation24 + $0x108] sm:$0xff]
    %v5676 = vld [vmem:[#allocation24 + $0x110] sm:$0xff]
    %v5677 = vld [vmem:[#allocation24 + $0x118] sm:$0xff]
    %v5678 = vld [vmem:[#allocation24 + $0x120] sm:$0xff]
    %v5679 = vld [vmem:[#allocation24 + $0x128] sm:$0xff]
    %v5680 = vld [vmem:[#allocation24 + $0x130] sm:$0xff]
    %v5681 = vld [vmem:[#allocation24 + $0x138] sm:$0xff]
    %v5682 = vld [vmem:[#allocation24 + $0x140] sm:$0xff]
    %v5683 = vld [vmem:[#allocation24 + $0x148] sm:$0xff]
    %v5684 = vld [vmem:[#allocation24 + $0x150] sm:$0xff]
    %v5685 = vld [vmem:[#allocation24 + $0x158] sm:$0xff]
    %v5686 = vld [vmem:[#allocation24 + $0x160] sm:$0xff]
    %v5687 = vld [vmem:[#allocation24 + $0x168] sm:$0xff]
    %v5688 = vld [vmem:[#allocation24 + $0x170] sm:$0xff]
    %v5689 = vld [vmem:[#allocation24 + $0x178] sm:$0xff]
    %v5690 = vld [vmem:[#allocation24 + $0x180] sm:$0xff]
    %v5691 = vld [vmem:[#allocation24 + $0x188] sm:$0xff]
    %v5692 = vld [vmem:[#allocation24 + $0x190] sm:$0xff]
    %v5693 = vld [vmem:[#allocation24 + $0x198] sm:$0xff]
    %v5694 = vld [vmem:[#allocation24 + $0x1a0] sm:$0xff]
    %v5695 = vld [vmem:[#allocation24 + $0x1a8] sm:$0xff]
    %v5696 = vld [vmem:[#allocation24 + $0x1b0] sm:$0xff]
    %v5697 = vld [vmem:[#allocation24 + $0x1b8] sm:$0xff]
    %v5698 = vld [vmem:[#allocation24 + $0x1c0] sm:$0xff]
    %v5699 = vld [vmem:[#allocation24 + $0x1c8] sm:$0xff]
    %v5700 = vld [vmem:[#allocation24 + $0x1d0] sm:$0xff]
    %v5701 = vld [vmem:[#allocation24 + $0x1d8] sm:$0xff]
    %v5702 = vld [vmem:[#allocation24 + $0x1e0] sm:$0xff]
    %v5703 = vld [vmem:[#allocation24 + $0x1e8] sm:$0xff]
    %v5704 = vld [vmem:[#allocation24 + $0x1f0] sm:$0xff]
    %v5705 = vld [vmem:[#allocation24 + $0x1f8] sm:$0xff]
    %v5706 = vld [vmem:[#allocation26] sm:$0xf]
    %v5708 = vlaneseq
    %v5709 = vshrl.u32 %v5708, 7
    %v5710 = vsub.s32 0, %v5709
    %v5711 = vrot.slane %v5706, %v5710
    %v5712 = vlaneseq
    %v5713 = vshrl.u32 %v5712, 7
    %v5714 = vsub.s32 1, %v5713
    %v5715 = vrot.slane %v5706, %v5714
    %v5716 = vlaneseq
    %v5717 = vshrl.u32 %v5716, 7
    %v5718 = vsub.s32 2, %v5717
    %v5719 = vrot.slane %v5706, %v5718
    %v5720 = vlaneseq
    %v5721 = vshrl.u32 %v5720, 7
    %v5722 = vsub.s32 3, %v5721
    %v5723 = vrot.slane %v5706, %v5722
    %5728 = vmatprep.subr.mxu0 %v5643
    %5729 = vmatpush1.msra.mxu0 %v5642
    %5730 = vmatprep.subr.mxu0 %v5647
    %5731 = vmatpush1.msra.mxu0 %v5646
    %5732 = vmatprep.subr.mxu0 %v5651
    %5733 = vmatpush1.msra.mxu0 %v5650
    %5734 = vmatprep.subr.mxu0 %v5655
    %5735 = vmatpush1.msra.mxu0 %v5654
    %5736 = vmatprep.subr.mxu0 %v5659
    %5737 = vmatpush1.msra.mxu0 %v5658
    %5738 = vmatprep.subr.mxu0 %v5663
    %5739 = vmatpush1.msra.mxu0 %v5662
    %5740 = vmatprep.subr.mxu0 %v5667
    %5741 = vmatpush1.msra.mxu0 %v5666
    %5742 = vmatprep.subr.mxu0 %v5671
    %5743 = vmatpush1.msra.mxu0 %v5670
    %5744 = vmatprep.subr.mxu0 %v5675
    %5745 = vmatpush1.msra.mxu0 %v5674
    %5746 = vmatprep.subr.mxu0 %v5679
    %5747 = vmatpush1.msra.mxu0 %v5678
    %5748 = vmatprep.subr.mxu0 %v5683
    %5749 = vmatpush1.msra.mxu0 %v5682
    %5750 = vmatprep.subr.mxu0 %v5687
    %5751 = vmatpush1.msra.mxu0 %v5686
    %5752 = vmatprep.subr.mxu0 %v5691
    %5753 = vmatpush1.msra.mxu0 %v5690
    %5754 = vmatprep.subr.mxu0 %v5695
    %5755 = vmatpush1.msra.mxu0 %v5694
    %5756 = vmatprep.subr.mxu0 %v5699
    %5757 = vmatpush1.msra.mxu0 %v5698
    %5758 = vmatprep.subr.mxu0 %v5703
    %5759 = vmatpush1.msra.mxu0 %v5702
    %5760 = vmatprep.subr.mxu0 0.0
    %5761 = vmatpush1.msra.mxu0 0.0
    %5762 = vmatprep.subr.mxu0 0.0
    %5763 = vmatpush1.msra.mxu0 0.0
    %5764 = vmatprep.subr.mxu0 0.0
    %5765 = vmatpush1.msra.mxu0 0.0
    %5766 = vmatprep.subr.mxu0 0.0
    %5767 = vmatpush1.msra.mxu0 0.0
    %5768 = vmatprep.subr.mxu0 0.0
    %5769 = vmatpush1.msra.mxu0 0.0
    %5770 = vmatprep.subr.mxu0 0.0
    %5771 = vmatpush1.msra.mxu0 0.0
    %5772 = vmatprep.subr.mxu0 0.0
    %5773 = vmatpush1.msra.mxu0 0.0
    %5774 = vmatprep.subr.mxu0 0.0
    %5775 = vmatpush1.msra.mxu0 0.0
    %5776 = vmatprep.subr.mxu0 0.0
    %5777 = vmatpush1.msra.mxu0 0.0
    %5778 = vmatprep.subr.mxu0 0.0
    %5779 = vmatpush1.msra.mxu0 0.0
    %5780 = vmatprep.subr.mxu0 0.0
    %5781 = vmatpush1.msra.mxu0 0.0
    %5782 = vmatprep.subr.mxu0 0.0
    %5783 = vmatpush1.msra.mxu0 0.0
    %5784 = vmatprep.subr.mxu0 0.0
    %5785 = vmatpush1.msra.mxu0 0.0
    %5786 = vmatprep.subr.mxu0 0.0
    %5787 = vmatpush1.msra.mxu0 0.0
    %5788 = vmatprep.subr.mxu0 0.0
    %5789 = vmatpush1.msra.mxu0 0.0
    %5790 = vmatprep.subr.mxu0 0.0
    %5791 = vmatpush1.msra.mxu0 0.0
    %5792 = vmatprep.mubr.f32.mxu0 0.0
    %5793 = vmatmul.mubr.f32.gmra.mrb[0].mxu0 %v5639
    %v5794 = vpop.f32.mrb[0].mxu0
    %v5795 = vadd.f32 %v5711, %v5794
    %v5796 = vpop.f32.mrb[0].mxu0
    %v5797 = vadd.f32 %v5715, %v5796
    %5798 = vdwg.mxu0
    %5799 = vmatprep.subr.mxu0 %v5645
    %5800 = vmatpush1.msra.mxu0 %v5644
    %5801 = vmatprep.subr.mxu0 %v5649
    %5802 = vmatpush1.msra.mxu0 %v5648
    %5803 = vmatprep.subr.mxu0 %v5653
    %5804 = vmatpush1.msra.mxu0 %v5652
    %5805 = vmatprep.subr.mxu0 %v5657
    %5806 = vmatpush1.msra.mxu0 %v5656
    %5807 = vmatprep.subr.mxu0 %v5661
    %5808 = vmatpush1.msra.mxu0 %v5660
    %5809 = vmatprep.subr.mxu0 %v5665
    %5810 = vmatpush1.msra.mxu0 %v5664
    %5811 = vmatprep.subr.mxu0 %v5669
    %5812 = vmatpush1.msra.mxu0 %v5668
    %5813 = vmatprep.subr.mxu0 %v5673
    %5814 = vmatpush1.msra.mxu0 %v5672
    %5815 = vmatprep.subr.mxu0 %v5677
    %5816 = vmatpush1.msra.mxu0 %v5676
    %5817 = vmatprep.subr.mxu0 %v5681
    %5818 = vmatpush1.msra.mxu0 %v5680
    %5819 = vmatprep.subr.mxu0 %v5685
    %5820 = vmatpush1.msra.mxu0 %v5684
    %5821 = vmatprep.subr.mxu0 %v5689
    %5822 = vmatpush1.msra.mxu0 %v5688
    %5823 = vmatprep.subr.mxu0 %v5693
    %5824 = vmatpush1.msra.mxu0 %v5692
    %5825 = vmatprep.subr.mxu0 %v5697
    %5826 = vmatpush1.msra.mxu0 %v5696
    %5827 = vmatprep.subr.mxu0 %v5701
    %5828 = vmatpush1.msra.mxu0 %v5700
    %5829 = vmatprep.subr.mxu0 %v5705
    %5830 = vmatpush1.msra.mxu0 %v5704
    %5831 = vmatprep.subr.mxu0 0.0
    %5832 = vmatpush1.msra.mxu0 0.0
    %5833 = vmatprep.subr.mxu0 0.0
    %5834 = vmatpush1.msra.mxu0 0.0
    %5835 = vmatprep.subr.mxu0 0.0
    %5836 = vmatpush1.msra.mxu0 0.0
    %5837 = vmatprep.subr.mxu0 0.0
    %5838 = vmatpush1.msra.mxu0 0.0
    %5839 = vmatprep.subr.mxu0 0.0
    %5840 = vmatpush1.msra.mxu0 0.0
    %5841 = vmatprep.subr.mxu0 0.0
    %5842 = vmatpush1.msra.mxu0 0.0
    %5843 = vmatprep.subr.mxu0 0.0
    %5844 = vmatpush1.msra.mxu0 0.0
    %5845 = vmatprep.subr.mxu0 0.0
    %5846 = vmatpush1.msra.mxu0 0.0
    %5847 = vmatprep.subr.mxu0 0.0
    %5848 = vmatpush1.msra.mxu0 0.0
    %5849 = vmatprep.subr.mxu0 0.0
    %5850 = vmatpush1.msra.mxu0 0.0
    %5851 = vmatprep.subr.mxu0 0.0
    %5852 = vmatpush1.msra.mxu0 0.0
    %5853 = vmatprep.subr.mxu0 0.0
    %5854 = vmatpush1.msra.mxu0 0.0
    %5855 = vmatprep.subr.mxu0 0.0
    %5856 = vmatpush1.msra.mxu0 0.0
    %5857 = vmatprep.subr.mxu0 0.0
    %5858 = vmatpush1.msra.mxu0 0.0
    %5859 = vmatprep.subr.mxu0 0.0
    %5860 = vmatpush1.msra.mxu0 0.0
    %5861 = vmatprep.subr.mxu0 0.0
    %5862 = vmatpush1.msra.mxu0 0.0
    %5863 = vmatprep.mubr.f32.mxu0 0.0
    %5864 = vmatmul.mubr.f32.gmra.mrb[0].mxu0 %v5639
    %v5865 = vpop.f32.mrb[0].mxu0
    %v5866 = vadd.f32 %v5719, %v5865
    %v5867 = vpop.f32.mrb[0].mxu0
    %v5868 = vadd.f32 %v5723, %v5867
    %5869 = vdwg.mxu0
    %v5870 = vld [vmem:[#allocation20] sm:$0xff]
    %v5871 = vld [vmem:[#allocation20 + $0x8] sm:$0xff]
    %v5872 = vld [vmem:[#allocation20 + $0x10] sm:$0xff]
    %v5873 = vld [vmem:[#allocation20 + $0x18] sm:$0xff]
    %v5874 = vld [vmem:[#allocation20 + $0x20] sm:$0xff]
    %v5875 = vld [vmem:[#allocation20 + $0x28] sm:$0xff]
    %v5876 = vld [vmem:[#allocation20 + $0x30] sm:$0xff]
    %v5877 = vld [vmem:[#allocation20 + $0x38] sm:$0xff]
    %v5878 = vld [vmem:[#allocation20 + $0x40] sm:$0xff]
    %v5879 = vld [vmem:[#allocation20 + $0x48] sm:$0xff]
    %v5880 = vld [vmem:[#allocation20 + $0x50] sm:$0xff]
    %v5881 = vld [vmem:[#allocation20 + $0x58] sm:$0xff]
    %v5882 = vld [vmem:[#allocation20 + $0x60] sm:$0xff]
    %v5883 = vld [vmem:[#allocation20 + $0x68] sm:$0xff]
    %v5884 = vld [vmem:[#allocation20 + $0x70] sm:$0xff]
    %v5885 = vld [vmem:[#allocation20 + $0x78] sm:$0xff]
    %v5886 = vld [vmem:[#allocation20 + $0x80] sm:$0xff]
    %v5887 = vld [vmem:[#allocation20 + $0x88] sm:$0xff]
    %v5888 = vld [vmem:[#allocation20 + $0x90] sm:$0xff]
    %v5889 = vld [vmem:[#allocation20 + $0x98] sm:$0xff]
    %v5890 = vld [vmem:[#allocation20 + $0xa0] sm:$0xff]
    %v5891 = vld [vmem:[#allocation20 + $0xa8] sm:$0xff]
    %v5892 = vld [vmem:[#allocation20 + $0xb0] sm:$0xff]
    %v5893 = vld [vmem:[#allocation20 + $0xb8] sm:$0xff]
    %v5894 = vld [vmem:[#allocation20 + $0xc0] sm:$0xff]
    %v5895 = vld [vmem:[#allocation20 + $0xc8] sm:$0xff]
    %v5896 = vld [vmem:[#allocation20 + $0xd0] sm:$0xff]
    %v5897 = vld [vmem:[#allocation20 + $0xd8] sm:$0xff]
    %v5898 = vld [vmem:[#allocation20 + $0xe0] sm:$0xff]
    %v5899 = vld [vmem:[#allocation20 + $0xe8] sm:$0xff]
    %v5900 = vld [vmem:[#allocation20 + $0xf0] sm:$0xff]
    %v5901 = vld [vmem:[#allocation20 + $0xf8] sm:$0xff]
    %v5902 = vld [vmem:[#allocation20 + $0x100] sm:$0xff]
    %v5903 = vld [vmem:[#allocation20 + $0x108] sm:$0xff]
    %v5904 = vld [vmem:[#allocation20 + $0x110] sm:$0xff]
    %v5905 = vld [vmem:[#allocation20 + $0x118] sm:$0xff]
    %v5906 = vld [vmem:[#allocation20 + $0x120] sm:$0xff]
    %v5907 = vld [vmem:[#allocation20 + $0x128] sm:$0xff]
    %v5908 = vld [vmem:[#allocation20 + $0x130] sm:$0xff]
    %v5909 = vld [vmem:[#allocation20 + $0x138] sm:$0xff]
    %v5910 = vld [vmem:[#allocation20 + $0x140] sm:$0xff]
    %v5911 = vld [vmem:[#allocation20 + $0x148] sm:$0xff]
    %v5912 = vld [vmem:[#allocation20 + $0x150] sm:$0xff]
    %v5913 = vld [vmem:[#allocation20 + $0x158] sm:$0xff]
    %v5914 = vld [vmem:[#allocation20 + $0x160] sm:$0xff]
    %v5915 = vld [vmem:[#allocation20 + $0x168] sm:$0xff]
    %v5916 = vld [vmem:[#allocation20 + $0x170] sm:$0xff]
    %v5917 = vld [vmem:[#allocation20 + $0x178] sm:$0xff]
    %v5918 = vld [vmem:[#allocation20 + $0x180] sm:$0xff]
    %v5919 = vld [vmem:[#allocation20 + $0x188] sm:$0xff]
    %v5920 = vld [vmem:[#allocation20 + $0x190] sm:$0xff]
    %v5921 = vld [vmem:[#allocation20 + $0x198] sm:$0xff]
    %v5922 = vld [vmem:[#allocation20 + $0x1a0] sm:$0xff]
    %v5923 = vld [vmem:[#allocation20 + $0x1a8] sm:$0xff]
    %v5924 = vld [vmem:[#allocation20 + $0x1b0] sm:$0xff]
    %v5925 = vld [vmem:[#allocation20 + $0x1b8] sm:$0xff]
    %v5926 = vld [vmem:[#allocation20 + $0x1c0] sm:$0xff]
    %v5927 = vld [vmem:[#allocation20 + $0x1c8] sm:$0xff]
    %v5928 = vld [vmem:[#allocation20 + $0x1d0] sm:$0xff]
    %v5929 = vld [vmem:[#allocation20 + $0x1d8] sm:$0xff]
    %v5930 = vld [vmem:[#allocation20 + $0x1e0] sm:$0xff]
    %v5931 = vld [vmem:[#allocation20 + $0x1e8] sm:$0xff]
    %v5932 = vld [vmem:[#allocation20 + $0x1f0] sm:$0xff]
    %v5933 = vld [vmem:[#allocation20 + $0x1f8] sm:$0xff]
    %5934 = vmatprep.subr.mxu0 %v5871
    %5935 = vmatpush1.msra.mxu0 %v5870
    %5936 = vmatprep.subr.mxu0 %v5875
    %5937 = vmatpush1.msra.mxu0 %v5874
    %5938 = vmatprep.subr.mxu0 %v5879
    %5939 = vmatpush1.msra.mxu0 %v5878
    %5940 = vmatprep.subr.mxu0 %v5883
    %5941 = vmatpush1.msra.mxu0 %v5882
    %5942 = vmatprep.subr.mxu0 %v5887
    %5943 = vmatpush1.msra.mxu0 %v5886
    %5944 = vmatprep.subr.mxu0 %v5891
    %5945 = vmatpush1.msra.mxu0 %v5890
    %5946 = vmatprep.subr.mxu0 %v5895
    %5947 = vmatpush1.msra.mxu0 %v5894
    %5948 = vmatprep.subr.mxu0 %v5899
    %5949 = vmatpush1.msra.mxu0 %v5898
    %5950 = vmatprep.subr.mxu0 %v5903
    %5951 = vmatpush1.msra.mxu0 %v5902
    %5952 = vmatprep.subr.mxu0 %v5907
    %5953 = vmatpush1.msra.mxu0 %v5906
    %5954 = vmatprep.subr.mxu0 %v5911
    %5955 = vmatpush1.msra.mxu0 %v5910
    %5956 = vmatprep.subr.mxu0 %v5915
    %5957 = vmatpush1.msra.mxu0 %v5914
    %5958 = vmatprep.subr.mxu0 %v5919
    %5959 = vmatpush1.msra.mxu0 %v5918
    %5960 = vmatprep.subr.mxu0 %v5923
    %5961 = vmatpush1.msra.mxu0 %v5922
    %5962 = vmatprep.subr.mxu0 %v5927
    %5963 = vmatpush1.msra.mxu0 %v5926
    %5964 = vmatprep.subr.mxu0 %v5931
    %5965 = vmatpush1.msra.mxu0 %v5930
    %5966 = vmatprep.subr.mxu0 0.0
    %5967 = vmatpush1.msra.mxu0 0.0
    %5968 = vmatprep.subr.mxu0 0.0
    %5969 = vmatpush1.msra.mxu0 0.0
    %5970 = vmatprep.subr.mxu0 0.0
    %5971 = vmatpush1.msra.mxu0 0.0
    %5972 = vmatprep.subr.mxu0 0.0
    %5973 = vmatpush1.msra.mxu0 0.0
    %5974 = vmatprep.subr.mxu0 0.0
    %5975 = vmatpush1.msra.mxu0 0.0
    %5976 = vmatprep.subr.mxu0 0.0
    %5977 = vmatpush1.msra.mxu0 0.0
    %5978 = vmatprep.subr.mxu0 0.0
    %5979 = vmatpush1.msra.mxu0 0.0
    %5980 = vmatprep.subr.mxu0 0.0
    %5981 = vmatpush1.msra.mxu0 0.0
    %5982 = vmatprep.subr.mxu0 0.0
    %5983 = vmatpush1.msra.mxu0 0.0
    %5984 = vmatprep.subr.mxu0 0.0
    %5985 = vmatpush1.msra.mxu0 0.0
    %5986 = vmatprep.subr.mxu0 0.0
    %5987 = vmatpush1.msra.mxu0 0.0
    %5988 = vmatprep.subr.mxu0 0.0
    %5989 = vmatpush1.msra.mxu0 0.0
    %5990 = vmatprep.subr.mxu0 0.0
    %5991 = vmatpush1.msra.mxu0 0.0
    %5992 = vmatprep.subr.mxu0 0.0
    %5993 = vmatpush1.msra.mxu0 0.0
    %5994 = vmatprep.subr.mxu0 0.0
    %5995 = vmatpush1.msra.mxu0 0.0
    %5996 = vmatprep.subr.mxu0 0.0
    %5997 = vmatpush1.msra.mxu0 0.0
    %5998 = vmatprep.mubr.f32.mxu0 0.0
    %5999 = vmatmul.mubr.f32.gmra.mrb[0].mxu0 %v5411
    %v6000 = vpop.f32.mrb[0].mxu0
    %v6001 = vadd.f32 0.0, %v6000
    %v6002 = vpop.f32.mrb[0].mxu0
    %v6003 = vadd.f32 0.0, %v6002
    %6004 = vdwg.mxu0
    %6005 = vmatprep.subr.mxu0 %v5873
    %6006 = vmatpush1.msra.mxu0 %v5872
    %6007 = vmatprep.subr.mxu0 %v5877
    %6008 = vmatpush1.msra.mxu0 %v5876
    %6009 = vmatprep.subr.mxu0 %v5881
    %6010 = vmatpush1.msra.mxu0 %v5880
    %6011 = vmatprep.subr.mxu0 %v5885
    %6012 = vmatpush1.msra.mxu0 %v5884
    %6013 = vmatprep.subr.mxu0 %v5889
    %6014 = vmatpush1.msra.mxu0 %v5888
    %6015 = vmatprep.subr.mxu0 %v5893
    %6016 = vmatpush1.msra.mxu0 %v5892
    %6017 = vmatprep.subr.mxu0 %v5897
    %6018 = vmatpush1.msra.mxu0 %v5896
    %6019 = vmatprep.subr.mxu0 %v5901
    %6020 = vmatpush1.msra.mxu0 %v5900
    %6021 = vmatprep.subr.mxu0 %v5905
    %6022 = vmatpush1.msra.mxu0 %v5904
    %6023 = vmatprep.subr.mxu0 %v5909
    %6024 = vmatpush1.msra.mxu0 %v5908
    %6025 = vmatprep.subr.mxu0 %v5913
    %6026 = vmatpush1.msra.mxu0 %v5912
    %6027 = vmatprep.subr.mxu0 %v5917
    %6028 = vmatpush1.msra.mxu0 %v5916
    %6029 = vmatprep.subr.mxu0 %v5921
    %6030 = vmatpush1.msra.mxu0 %v5920
    %6031 = vmatprep.subr.mxu0 %v5925
    %6032 = vmatpush1.msra.mxu0 %v5924
    %6033 = vmatprep.subr.mxu0 %v5929
    %6034 = vmatpush1.msra.mxu0 %v5928
    %6035 = vmatprep.subr.mxu0 %v5933
    %6036 = vmatpush1.msra.mxu0 %v5932
    %6037 = vmatprep.subr.mxu0 0.0
    %6038 = vmatpush1.msra.mxu0 0.0
    %6039 = vmatprep.subr.mxu0 0.0
    %6040 = vmatpush1.msra.mxu0 0.0
    %6041 = vmatprep.subr.mxu0 0.0
    %6042 = vmatpush1.msra.mxu0 0.0
    %6043 = vmatprep.subr.mxu0 0.0
    %6044 = vmatpush1.msra.mxu0 0.0
    %6045 = vmatprep.subr.mxu0 0.0
    %6046 = vmatpush1.msra.mxu0 0.0
    %6047 = vmatprep.subr.mxu0 0.0
    %6048 = vmatpush1.msra.mxu0 0.0
    %6049 = vmatprep.subr.mxu0 0.0
    %6050 = vmatpush1.msra.mxu0 0.0
    %6051 = vmatprep.subr.mxu0 0.0
    %6052 = vmatpush1.msra.mxu0 0.0
    %6053 = vmatprep.subr.mxu0 0.0
    %6054 = vmatpush1.msra.mxu0 0.0
    %6055 = vmatprep.subr.mxu0 0.0
    %6056 = vmatpush1.msra.mxu0 0.0
    %6057 = vmatprep.subr.mxu0 0.0
    %6058 = vmatpush1.msra.mxu0 0.0
    %6059 = vmatprep.subr.mxu0 0.0
    %6060 = vmatpush1.msra.mxu0 0.0
    %6061 = vmatprep.subr.mxu0 0.0
    %6062 = vmatpush1.msra.mxu0 0.0
    %6063 = vmatprep.subr.mxu0 0.0
    %6064 = vmatpush1.msra.mxu0 0.0
    %6065 = vmatprep.subr.mxu0 0.0
    %6066 = vmatpush1.msra.mxu0 0.0
    %6067 = vmatprep.subr.mxu0 0.0
    %6068 = vmatpush1.msra.mxu0 0.0
    %6069 = vmatprep.mubr.f32.mxu0 0.0
    %6070 = vmatmul.mubr.f32.gmra.mrb[0].mxu0 %v5411
    %v6071 = vpop.f32.mrb[0].mxu0
    %v6072 = vadd.f32 0.0, %v6071
    %v6073 = vpop.f32.mrb[0].mxu0
    %v6074 = vadd.f32 0.0, %v6073
    %6075 = vdwg.mxu0
    %v6076 = vadd.f32 %v766, %v6001
    %v6077 = vadd.f32 %v768, %v6003
    %v6078 = vadd.f32 %v837, %v6072
    %v6079 = vadd.f32 %v839, %v6074
    %v6080 = vmul.f32 %v6076, 0.5
    %v6081 = vtanh.pop %v6080
    %v6082 = vmul.f32 %v6081, 0.5
    %v6083 = vadd.f32 %v6082, 0.5
    %v6084 = vmul.f32 %v6077, 0.5
    %v6085 = vtanh.pop %v6084
    %v6086 = vmul.f32 %v6085, 0.5
    %v6087 = vadd.f32 %v6086, 0.5
    %v6088 = vtanh.pop %v6078
    %v6089 = vmul.f32 %v6079, 0.5
    %v6090 = vtanh.pop %v6089
    %v6091 = vmul.f32 %v6090, 0.5
    %v6092 = vadd.f32 %v6091, 0.5
    %v6093 = vmul.f32 %v6087, %v5409
    %v6094 = vmul.f32 %v6083, %v6088
    %v6095 = vadd.f32 %v6093, %v6094
    %v6096 = vtanh.pop %v6095
    %v6097 = vmul.f32 %v6092, %v6096
    %v6098 = vld [vmem:[#allocation23] sm:$0xff]
    %v6099 = vld [vmem:[#allocation23 + $0x8] sm:$0xff]
    %v6100 = vld [vmem:[#allocation23 + $0x10] sm:$0xff]
    %v6101 = vld [vmem:[#allocation23 + $0x18] sm:$0xff]
    %v6102 = vld [vmem:[#allocation23 + $0x20] sm:$0xff]
    %v6103 = vld [vmem:[#allocation23 + $0x28] sm:$0xff]
    %v6104 = vld [vmem:[#allocation23 + $0x30] sm:$0xff]
    %v6105 = vld [vmem:[#allocation23 + $0x38] sm:$0xff]
    %v6106 = vld [vmem:[#allocation23 + $0x40] sm:$0xff]
    %v6107 = vld [vmem:[#allocation23 + $0x48] sm:$0xff]
    %v6108 = vld [vmem:[#allocation23 + $0x50] sm:$0xff]
    %v6109 = vld [vmem:[#allocation23 + $0x58] sm:$0xff]
    %v6110 = vld [vmem:[#allocation23 + $0x60] sm:$0xff]
    %v6111 = vld [vmem:[#allocation23 + $0x68] sm:$0xff]
    %v6112 = vld [vmem:[#allocation23 + $0x70] sm:$0xff]
    %v6113 = vld [vmem:[#allocation23 + $0x78] sm:$0xff]
    %v6114 = vld [vmem:[#allocation23 + $0x80] sm:$0xff]
    %v6115 = vld [vmem:[#allocation23 + $0x88] sm:$0xff]
    %v6116 = vld [vmem:[#allocation23 + $0x90] sm:$0xff]
    %v6117 = vld [vmem:[#allocation23 + $0x98] sm:$0xff]
    %v6118 = vld [vmem:[#allocation23 + $0xa0] sm:$0xff]
    %v6119 = vld [vmem:[#allocation23 + $0xa8] sm:$0xff]
    %v6120 = vld [vmem:[#allocation23 + $0xb0] sm:$0xff]
    %v6121 = vld [vmem:[#allocation23 + $0xb8] sm:$0xff]
    %v6122 = vld [vmem:[#allocation23 + $0xc0] sm:$0xff]
    %v6123 = vld [vmem:[#allocation23 + $0xc8] sm:$0xff]
    %v6124 = vld [vmem:[#allocation23 + $0xd0] sm:$0xff]
    %v6125 = vld [vmem:[#allocation23 + $0xd8] sm:$0xff]
    %v6126 = vld [vmem:[#allocation23 + $0xe0] sm:$0xff]
    %v6127 = vld [vmem:[#allocation23 + $0xe8] sm:$0xff]
    %v6128 = vld [vmem:[#allocation23 + $0xf0] sm:$0xff]
    %v6129 = vld [vmem:[#allocation23 + $0xf8] sm:$0xff]
    %v6130 = vld [vmem:[#allocation23 + $0x100] sm:$0xff]
    %v6131 = vld [vmem:[#allocation23 + $0x108] sm:$0xff]
    %v6132 = vld [vmem:[#allocation23 + $0x110] sm:$0xff]
    %v6133 = vld [vmem:[#allocation23 + $0x118] sm:$0xff]
    %v6134 = vld [vmem:[#allocation23 + $0x120] sm:$0xff]
    %v6135 = vld [vmem:[#allocation23 + $0x128] sm:$0xff]
    %v6136 = vld [vmem:[#allocation23 + $0x130] sm:$0xff]
    %v6137 = vld [vmem:[#allocation23 + $0x138] sm:$0xff]
    %v6138 = vld [vmem:[#allocation23 + $0x140] sm:$0xff]
    %v6139 = vld [vmem:[#allocation23 + $0x148] sm:$0xff]
    %v6140 = vld [vmem:[#allocation23 + $0x150] sm:$0xff]
    %v6141 = vld [vmem:[#allocation23 + $0x158] sm:$0xff]
    %v6142 = vld [vmem:[#allocation23 + $0x160] sm:$0xff]
    %v6143 = vld [vmem:[#allocation23 + $0x168] sm:$0xff]
    %v6144 = vld [vmem:[#allocation23 + $0x170] sm:$0xff]
    %v6145 = vld [vmem:[#allocation23 + $0x178] sm:$0xff]
    %v6146 = vld [vmem:[#allocation23 + $0x180] sm:$0xff]
    %v6147 = vld [vmem:[#allocation23 + $0x188] sm:$0xff]
    %v6148 = vld [vmem:[#allocation23 + $0x190] sm:$0xff]
    %v6149 = vld [vmem:[#allocation23 + $0x198] sm:$0xff]
    %v6150 = vld [vmem:[#allocation23 + $0x1a0] sm:$0xff]
    %v6151 = vld [vmem:[#allocation23 + $0x1a8] sm:$0xff]
    %v6152 = vld [vmem:[#allocation23 + $0x1b0] sm:$0xff]
    %v6153 = vld [vmem:[#allocation23 + $0x1b8] sm:$0xff]
    %v6154 = vld [vmem:[#allocation23 + $0x1c0] sm:$0xff]
    %v6155 = vld [vmem:[#allocation23 + $0x1c8] sm:$0xff]
    %v6156 = vld [vmem:[#allocation23 + $0x1d0] sm:$0xff]
    %v6157 = vld [vmem:[#allocation23 + $0x1d8] sm:$0xff]
    %v6158 = vld [vmem:[#allocation23 + $0x1e0] sm:$0xff]
    %v6159 = vld [vmem:[#allocation23 + $0x1e8] sm:$0xff]
    %v6160 = vld [vmem:[#allocation23 + $0x1f0] sm:$0xff]
    %v6161 = vld [vmem:[#allocation23 + $0x1f8] sm:$0xff]
    %6162 = vmatprep.subr.mxu0 %v6099
    %6163 = vmatpush1.msra.mxu0 %v6098
    %6164 = vmatprep.subr.mxu0 %v6103
    %6165 = vmatpush1.msra.mxu0 %v6102
    %6166 = vmatprep.subr.mxu0 %v6107
    %6167 = vmatpush1.msra.mxu0 %v6106
    %6168 = vmatprep.subr.mxu0 %v6111
    %6169 = vmatpush1.msra.mxu0 %v6110
    %6170 = vmatprep.subr.mxu0 %v6115
    %6171 = vmatpush1.msra.mxu0 %v6114
    %6172 = vmatprep.subr.mxu0 %v6119
    %6173 = vmatpush1.msra.mxu0 %v6118
    %6174 = vmatprep.subr.mxu0 %v6123
    %6175 = vmatpush1.msra.mxu0 %v6122
    %6176 = vmatprep.subr.mxu0 %v6127
    %6177 = vmatpush1.msra.mxu0 %v6126
    %6178 = vmatprep.subr.mxu0 %v6131
    %6179 = vmatpush1.msra.mxu0 %v6130
    %6180 = vmatprep.subr.mxu0 %v6135
    %6181 = vmatpush1.msra.mxu0 %v6134
    %6182 = vmatprep.subr.mxu0 %v6139
    %6183 = vmatpush1.msra.mxu0 %v6138
    %6184 = vmatprep.subr.mxu0 %v6143
    %6185 = vmatpush1.msra.mxu0 %v6142
    %6186 = vmatprep.subr.mxu0 %v6147
    %6187 = vmatpush1.msra.mxu0 %v6146
    %6188 = vmatprep.subr.mxu0 %v6151
    %6189 = vmatpush1.msra.mxu0 %v6150
    %6190 = vmatprep.subr.mxu0 %v6155
    %6191 = vmatpush1.msra.mxu0 %v6154
    %6192 = vmatprep.subr.mxu0 %v6159
    %6193 = vmatpush1.msra.mxu0 %v6158
    %6194 = vmatprep.subr.mxu0 0.0
    %6195 = vmatpush1.msra.mxu0 0.0
    %6196 = vmatprep.subr.mxu0 0.0
    %6197 = vmatpush1.msra.mxu0 0.0
    %6198 = vmatprep.subr.mxu0 0.0
    %6199 = vmatpush1.msra.mxu0 0.0
    %6200 = vmatprep.subr.mxu0 0.0
    %6201 = vmatpush1.msra.mxu0 0.0
    %6202 = vmatprep.subr.mxu0 0.0
    %6203 = vmatpush1.msra.mxu0 0.0
    %6204 = vmatprep.subr.mxu0 0.0
    %6205 = vmatpush1.msra.mxu0 0.0
    %6206 = vmatprep.subr.mxu0 0.0
    %6207 = vmatpush1.msra.mxu0 0.0
    %6208 = vmatprep.subr.mxu0 0.0
    %6209 = vmatpush1.msra.mxu0 0.0
    %6210 = vmatprep.subr.mxu0 0.0
    %6211 = vmatpush1.msra.mxu0 0.0
    %6212 = vmatprep.subr.mxu0 0.0
    %6213 = vmatpush1.msra.mxu0 0.0
    %6214 = vmatprep.subr.mxu0 0.0
    %6215 = vmatpush1.msra.mxu0 0.0
    %6216 = vmatprep.subr.mxu0 0.0
    %6217 = vmatpush1.msra.mxu0 0.0
    %6218 = vmatprep.subr.mxu0 0.0
    %6219 = vmatpush1.msra.mxu0 0.0
    %6220 = vmatprep.subr.mxu0 0.0
    %6221 = vmatpush1.msra.mxu0 0.0
    %6222 = vmatprep.subr.mxu0 0.0
    %6223 = vmatpush1.msra.mxu0 0.0
    %6224 = vmatprep.subr.mxu0 0.0
    %6225 = vmatpush1.msra.mxu0 0.0
    %6226 = vmatprep.mubr.f32.mxu0 0.0
    %6227 = vmatmul.mubr.f32.gmra.mrb[0].mxu0 %v6097
    %v6228 = vpop.f32.mrb[0].mxu0
    %v6229 = vadd.f32 0.0, %v6228
    %v6230 = vpop.f32.mrb[0].mxu0
    %v6231 = vadd.f32 0.0, %v6230
    %6232 = vdwg.mxu0
    %6233 = vmatprep.subr.mxu0 %v6101
    %6234 = vmatpush1.msra.mxu0 %v6100
    %6235 = vmatprep.subr.mxu0 %v6105
    %6236 = vmatpush1.msra.mxu0 %v6104
    %6237 = vmatprep.subr.mxu0 %v6109
    %6238 = vmatpush1.msra.mxu0 %v6108
    %6239 = vmatprep.subr.mxu0 %v6113
    %6240 = vmatpush1.msra.mxu0 %v6112
    %6241 = vmatprep.subr.mxu0 %v6117
    %6242 = vmatpush1.msra.mxu0 %v6116
    %6243 = vmatprep.subr.mxu0 %v6121
    %6244 = vmatpush1.msra.mxu0 %v6120
    %6245 = vmatprep.subr.mxu0 %v6125
    %6246 = vmatpush1.msra.mxu0 %v6124
    %6247 = vmatprep.subr.mxu0 %v6129
    %6248 = vmatpush1.msra.mxu0 %v6128
    %6249 = vmatprep.subr.mxu0 %v6133
    %6250 = vmatpush1.msra.mxu0 %v6132
    %6251 = vmatprep.subr.mxu0 %v6137
    %6252 = vmatpush1.msra.mxu0 %v6136
    %6253 = vmatprep.subr.mxu0 %v6141
    %6254 = vmatpush1.msra.mxu0 %v6140
    %6255 = vmatprep.subr.mxu0 %v6145
    %6256 = vmatpush1.msra.mxu0 %v6144
    %6257 = vmatprep.subr.mxu0 %v6149
    %6258 = vmatpush1.msra.mxu0 %v6148
    %6259 = vmatprep.subr.mxu0 %v6153
    %6260 = vmatpush1.msra.mxu0 %v6152
    %6261 = vmatprep.subr.mxu0 %v6157
    %6262 = vmatpush1.msra.mxu0 %v6156
    %6263 = vmatprep.subr.mxu0 %v6161
    %6264 = vmatpush1.msra.mxu0 %v6160
    %6265 = vmatprep.subr.mxu0 0.0
    %6266 = vmatpush1.msra.mxu0 0.0
    %6267 = vmatprep.subr.mxu0 0.0
    %6268 = vmatpush1.msra.mxu0 0.0
    %6269 = vmatprep.subr.mxu0 0.0
    %6270 = vmatpush1.msra.mxu0 0.0
    %6271 = vmatprep.subr.mxu0 0.0
    %6272 = vmatpush1.msra.mxu0 0.0
    %6273 = vmatprep.subr.mxu0 0.0
    %6274 = vmatpush1.msra.mxu0 0.0
    %6275 = vmatprep.subr.mxu0 0.0
    %6276 = vmatpush1.msra.mxu0 0.0
    %6277 = vmatprep.subr.mxu0 0.0
    %6278 = vmatpush1.msra.mxu0 0.0
    %6279 = vmatprep.subr.mxu0 0.0
    %6280 = vmatpush1.msra.mxu0 0.0
    %6281 = vmatprep.subr.mxu0 0.0
    %6282 = vmatpush1.msra.mxu0 0.0
    %6283 = vmatprep.subr.mxu0 0.0
    %6284 = vmatpush1.msra.mxu0 0.0
    %6285 = vmatprep.subr.mxu0 0.0
    %6286 = vmatpush1.msra.mxu0 0.0
    %6287 = vmatprep.subr.mxu0 0.0
    %6288 = vmatpush1.msra.mxu0 0.0
    %6289 = vmatprep.subr.mxu0 0.0
    %6290 = vmatpush1.msra.mxu0 0.0
    %6291 = vmatprep.subr.mxu0 0.0
    %6292 = vmatpush1.msra.mxu0 0.0
    %6293 = vmatprep.subr.mxu0 0.0
    %6294 = vmatpush1.msra.mxu0 0.0
    %6295 = vmatprep.subr.mxu0 0.0
    %6296 = vmatpush1.msra.mxu0 0.0
    %6297 = vmatprep.mubr.f32.mxu0 0.0
    %6298 = vmatmul.mubr.f32.gmra.mrb[0].mxu0 %v6097
    %v6299 = vpop.f32.mrb[0].mxu0
    %v6300 = vadd.f32 0.0, %v6299
    %v6301 = vpop.f32.mrb[0].mxu0
    %v6302 = vadd.f32 0.0, %v6301
    %6303 = vdwg.mxu0
    %v6304 = vadd.f32 %v5795, %v6229
    %v6305 = vadd.f32 %v5797, %v6231
    %v6306 = vadd.f32 %v5866, %v6300
    %v6307 = vadd.f32 %v5868, %v6302
    %v6308 = vmul.f32 %v6304, 0.5
    %v6309 = vtanh.pop %v6308
    %v6310 = vmul.f32 %v6309, 0.5
    %v6311 = vadd.f32 %v6310, 0.5
    %v6312 = vmul.f32 %v6305, 0.5
    %v6313 = vtanh.pop %v6312
    %v6314 = vmul.f32 %v6313, 0.5
    %v6315 = vadd.f32 %v6314, 0.5
    %v6316 = vtanh.pop %v6306
    %v6317 = vmul.f32 %v6307, 0.5
    %v6318 = vtanh.pop %v6317
    %v6319 = vmul.f32 %v6318, 0.5
    %v6320 = vadd.f32 %v6319, 0.5
    %v6321 = vmul.f32 %v6315, %v5637
    %v6322 = vmul.f32 %v6311, %v6316
    %v6323 = vadd.f32 %v6321, %v6322
    %v6324 = vtanh.pop %v6323
    %v6325 = vmul.f32 %v6320, %v6324
    %s6326 = scalar_lea.vmem [#allocation2], 56
    %6327 = vst [vmem:[%s6326] sm:$0xff] %v6325
    %v6328 = vld [vmem:[#allocation2] sm:$0xff]
    %v6329 = vld [vmem:[#allocation2 + $0x8] sm:$0xff]
    %v6330 = vld [vmem:[#allocation2 + $0x10] sm:$0xff]
    %v6331 = vld [vmem:[#allocation2 + $0x18] sm:$0xff]
    %v6332 = vld [vmem:[#allocation2 + $0x20] sm:$0xff]
    %v6333 = vld [vmem:[#allocation2 + $0x28] sm:$0xff]
    %v6334 = vld [vmem:[#allocation2 + $0x30] sm:$0xff]
    %v6335 = vld [vmem:[#allocation2 + $0x38] sm:$0xff]
    %v6336 = vld [vmem:[#allocation27] sm:$0xff]
    %v6337 = vld [vmem:[#allocation27 + $0x8] sm:$0xff]
    %v6338 = vld [vmem:[#allocation27 + $0x10] sm:$0xff]
    %v6339 = vld [vmem:[#allocation27 + $0x18] sm:$0xff]
    %v6340 = vld [vmem:[#allocation27 + $0x20] sm:$0xff]
    %v6341 = vld [vmem:[#allocation27 + $0x28] sm:$0xff]
    %v6342 = vld [vmem:[#allocation27 + $0x30] sm:$0xff]
    %v6343 = vld [vmem:[#allocation27 + $0x38] sm:$0xff]
    %v6344 = vld [vmem:[#allocation27 + $0x40] sm:$0xff]
    %v6345 = vld [vmem:[#allocation27 + $0x48] sm:$0xff]
    %v6346 = vld [vmem:[#allocation27 + $0x50] sm:$0xff]
    %v6347 = vld [vmem:[#allocation27 + $0x58] sm:$0xff]
    %v6348 = vld [vmem:[#allocation27 + $0x60] sm:$0xff]
    %v6349 = vld [vmem:[#allocation27 + $0x68] sm:$0xff]
    %v6350 = vld [vmem:[#allocation27 + $0x70] sm:$0xff]
    %v6351 = vld [vmem:[#allocation27 + $0x78] sm:$0xff]
    %v6352 = vld [vmem:[#allocation29] sm:$0x1]
    %v6354 = vlaneseq
    %v6355 = vshrl.u32 %v6354, 7
    %v6356 = vsub.s32 0, %v6355
    %v6357 = vrot.slane %v6352, %v6356
    %6359 = vmatprep.subr.mxu0 0.0
    %6360 = vmatpush1.msra.mxu0 %v6336
    %6361 = vmatprep.subr.mxu0 0.0
    %6362 = vmatpush1.msra.mxu0 %v6337
    %6363 = vmatprep.subr.mxu0 0.0
    %6364 = vmatpush1.msra.mxu0 %v6338
    %6365 = vmatprep.subr.mxu0 0.0
    %6366 = vmatpush1.msra.mxu0 %v6339
    %6367 = vmatprep.subr.mxu0 0.0
    %6368 = vmatpush1.msra.mxu0 %v6340
    %6369 = vmatprep.subr.mxu0 0.0
    %6370 = vmatpush1.msra.mxu0 %v6341
    %6371 = vmatprep.subr.mxu0 0.0
    %6372 = vmatpush1.msra.mxu0 %v6342
    %6373 = vmatprep.subr.mxu0 0.0
    %6374 = vmatpush1.msra.mxu0 %v6343
    %6375 = vmatprep.subr.mxu0 0.0
    %6376 = vmatpush1.msra.mxu0 %v6344
    %6377 = vmatprep.subr.mxu0 0.0
    %6378 = vmatpush1.msra.mxu0 %v6345
    %6379 = vmatprep.subr.mxu0 0.0
    %6380 = vmatpush1.msra.mxu0 %v6346
    %6381 = vmatprep.subr.mxu0 0.0
    %6382 = vmatpush1.msra.mxu0 %v6347
    %6383 = vmatprep.subr.mxu0 0.0
    %6384 = vmatpush1.msra.mxu0 %v6348
    %6385 = vmatprep.subr.mxu0 0.0
    %6386 = vmatpush1.msra.mxu0 %v6349
    %6387 = vmatprep.subr.mxu0 0.0
    %6388 = vmatpush1.msra.mxu0 %v6350
    %6389 = vmatprep.subr.mxu0 0.0
    %6390 = vmatpush1.msra.mxu0 %v6351
    %6391 = vmatprep.subr.mxu0 0.0
    %6392 = vmatpush1.msra.mxu0 0.0
    %6393 = vmatprep.subr.mxu0 0.0
    %6394 = vmatpush1.msra.mxu0 0.0
    %6395 = vmatprep.subr.mxu0 0.0
    %6396 = vmatpush1.msra.mxu0 0.0
    %6397 = vmatprep.subr.mxu0 0.0
    %6398 = vmatpush1.msra.mxu0 0.0
    %6399 = vmatprep.subr.mxu0 0.0
    %6400 = vmatpush1.msra.mxu0 0.0
    %6401 = vmatprep.subr.mxu0 0.0
    %6402 = vmatpush1.msra.mxu0 0.0
    %6403 = vmatprep.subr.mxu0 0.0
    %6404 = vmatpush1.msra.mxu0 0.0
    %6405 = vmatprep.subr.mxu0 0.0
    %6406 = vmatpush1.msra.mxu0 0.0
    %6407 = vmatprep.subr.mxu0 0.0
    %6408 = vmatpush1.msra.mxu0 0.0
    %6409 = vmatprep.subr.mxu0 0.0
    %6410 = vmatpush1.msra.mxu0 0.0
    %6411 = vmatprep.subr.mxu0 0.0
    %6412 = vmatpush1.msra.mxu0 0.0
    %6413 = vmatprep.subr.mxu0 0.0
    %6414 = vmatpush1.msra.mxu0 0.0
    %6415 = vmatprep.subr.mxu0 0.0
    %6416 = vmatpush1.msra.mxu0 0.0
    %6417 = vmatprep.subr.mxu0 0.0
    %6418 = vmatpush1.msra.mxu0 0.0
    %6419 = vmatprep.subr.mxu0 0.0
    %6420 = vmatpush1.msra.mxu0 0.0
    %6421 = vmatprep.subr.mxu0 0.0
    %6422 = vmatpush1.msra.mxu0 0.0
    %6423 = vmatprep.mubr.f32.mxu0 0.0
    %6424 = vmatmul.mubr.f32.gmra.mrb[0].mxu0 %v6328
    %v6425 = vpop.f32.mrb[0].mxu0
    %v6426 = vadd.f32 %v6357, %v6425
    %v6427 = vpop.f32.mrb[0].mxu0
    %6428 = vmatprep.mubr.f32.mxu0 0.0
    %6429 = vmatmul.mubr.f32.gmra.mrb[0].mxu0 %v6329
    %v6430 = vpop.f32.mrb[0].mxu0
    %v6431 = vadd.f32 %v6357, %v6430
    %v6432 = vpop.f32.mrb[0].mxu0
    %6433 = vmatprep.mubr.f32.mxu0 0.0
    %6434 = vmatmul.mubr.f32.gmra.mrb[0].mxu0 %v6330
    %v6435 = vpop.f32.mrb[0].mxu0
    %v6436 = vadd.f32 %v6357, %v6435
    %v6437 = vpop.f32.mrb[0].mxu0
    %6438 = vmatprep.mubr.f32.mxu0 0.0
    %6439 = vmatmul.mubr.f32.gmra.mrb[0].mxu0 %v6331
    %v6440 = vpop.f32.mrb[0].mxu0
    %v6441 = vadd.f32 %v6357, %v6440
    %v6442 = vpop.f32.mrb[0].mxu0
    %6443 = vmatprep.mubr.f32.mxu0 0.0
    %6444 = vmatmul.mubr.f32.gmra.mrb[0].mxu0 %v6332
    %v6445 = vpop.f32.mrb[0].mxu0
    %v6446 = vadd.f32 %v6357, %v6445
    %v6447 = vpop.f32.mrb[0].mxu0
    %6448 = vmatprep.mubr.f32.mxu0 0.0
    %6449 = vmatmul.mubr.f32.gmra.mrb[0].mxu0 %v6333
    %v6450 = vpop.f32.mrb[0].mxu0
    %v6451 = vadd.f32 %v6357, %v6450
    %v6452 = vpop.f32.mrb[0].mxu0
    %6453 = vmatprep.mubr.f32.mxu0 0.0
    %6454 = vmatmul.mubr.f32.gmra.mrb[0].mxu0 %v6334
    %v6455 = vpop.f32.mrb[0].mxu0
    %v6456 = vadd.f32 %v6357, %v6455
    %v6457 = vpop.f32.mrb[0].mxu0
    %6458 = vmatprep.mubr.f32.mxu0 0.0
    %6459 = vmatmul.mubr.f32.gmra.mrb[0].mxu0 %v6335
    %v6460 = vpop.f32.mrb[0].mxu0
    %v6461 = vadd.f32 %v6357, %v6460
    %v6462 = vpop.f32.mrb[0].mxu0
    %6463 = vdwg.mxu0
    %v6464 = vtanh.pop %v6426
    %v6465 = vtanh.pop %v6431
    %v6466 = vtanh.pop %v6436
    %v6467 = vtanh.pop %v6441
    %v6468 = vtanh.pop %v6446
    %v6469 = vtanh.pop %v6451
    %v6470 = vtanh.pop %v6456
    %v6471 = vtanh.pop %v6461
    %6472 = vst [vmem:[#allocation30] sm:$0xff] %v6464
    %6473 = vst [vmem:[#allocation30 + $0x8] sm:$0xff] %v6465
    %6474 = vst [vmem:[#allocation30 + $0x10] sm:$0xff] %v6466
    %6475 = vst [vmem:[#allocation30 + $0x18] sm:$0xff] %v6467
    %6476 = vst [vmem:[#allocation30 + $0x20] sm:$0xff] %v6468
    %6477 = vst [vmem:[#allocation30 + $0x28] sm:$0xff] %v6469
    %6478 = vst [vmem:[#allocation30 + $0x30] sm:$0xff] %v6470
    %6479 = vst [vmem:[#allocation30 + $0x38] sm:$0xff] %v6471
    // Predicated region
    $region138: #{tpu_custom_call.1} parent=1 // pred_check
      _
    $region139: #{tpu_custom_call.1} parent=1 // pred_check_branch
      %6481 = sbr.rel (0) target = $region141
    $region140: #{tpu_custom_call.1} parent=1 // pred_region
      %s6483 = ssub.s32 1024, 1024
      %6484 = vsyncadd [#allocation5], %s6483
      %s6485 = sshll.u32 [#allocation30], 4
      %s6486 = int_to_ptr.vmem [resolvable:$true] %s6485
      %6491 = dma.vmem_to_hbm [thread:$0]  %s6486, 1024, %s17, [#allocation5], 128, 128, 8
    $region141: #{tpu_custom_call.1} parent=1 // pred_fallthru
      _
    // Predicated region
    $region142: #{tpu_custom_call.1} parent=1 // pred_check
      _
    $region143: #{tpu_custom_call.1} parent=1 // pred_check_branch
      %6493 = sbr.rel (0) target = $region145
    $region144: #{tpu_custom_call.1} parent=1 // pred_region
      %6494 = dma.done [#allocation5], 1024
    $region145: #{tpu_custom_call.1} parent=1 // pred_fallthru
      _
    %6495 = vsyncpa [#allocation4], 1
    %6496 = vsyncpa [#allocation7], 1
    %6497 = vsyncpa [#allocation10], 1
    %6498 = vsyncpa [#allocation13], 1
    %6499 = vsyncpa [#allocation16], 1
    %6500 = vsyncpa [#allocation19], 1
    %6501 = vsyncpa [#allocation22], 1
    %6502 = vsyncpa [#allocation25], 1
    %6503 = vsyncpa [#allocation28], 1
    %6504 = vsyncpa [#allocation5], 1

</llo_original>
